<compile_context>
chip_gen: v7x
topology: tpu7x:2x2x1
jax: 0.10.0
libtpu: 0.0.40
codegen_flags: <defaults>
</compile_context>

<pallas_src>
import jax
import jax.numpy as jnp
from jax.experimental import pallas as pl
from jax.experimental.pallas import tpu as pltpu

NEG_SLOPE = 0.2
BN_EPS = 1e-5


def _leaky(y):
    return jnp.where(y > 0, y, NEG_SLOPE * y)


# ------------------------------ fused kernel ------------------------------- #

def _disc_kernel(col_e_ref, col_o_ref, w1_ref, w2_ref, fc1w_ref, fc1b_ref,
                 bn2g_ref, bn2b_ref, bn3g_ref, bn3b_ref, fc2w_ref, fc2b_ref,
                 o_ref, ebuf_ref, obuf_ref, h2_ref):
    B = o_ref.shape[0]
    B7 = 7 * B

    # ---- conv1 (5x5, s=2, p=2, no BN) + LeakyReLU ------------------------- #
    # One matmul per output-row parity: (7B,160) x (160,448); rows are
    # (row_index, batch), cols are (x, out_channel).  f32 MXU accumulation,
    # f32 LeakyReLU on the VPU.
    h1e = _leaky(jnp.dot(col_e_ref[...], w1_ref[...],
                         preferred_element_type=jnp.float32))
    h1o = _leaky(jnp.dot(col_o_ref[...], w1_ref[...],
                         preferred_element_type=jnp.float32))

    # Parity-split, spatially padded copies of h1 stay resident in VMEM.
    # Buffer rows = (padded_row_index, batch); cols = (padded_x, channel).
    ebuf_ref[...] = jnp.zeros_like(ebuf_ref)
    obuf_ref[...] = jnp.zeros_like(obuf_ref)
    ebuf_ref[B:8 * B, 64:512] = h1e        # padded even rows 2..14
    obuf_ref[B:8 * B, 64:512] = h1o        # padded odd  rows 3..15

    # ---- conv2 (5x5, s=2, p=2) as 5 dense (7B,576)x(576,448) matmuls ------ #
    # Tap row kh reads 7 contiguous row-blocks of the parity buffer; the x
    # selection + tap weights are folded into the packed weight w2_ref[kh].
    bufs = (ebuf_ref, obuf_ref)
    acc2 = jnp.zeros((B7, 448), jnp.float32)
    for kh in range(5):
        lhs = bufs[kh % 2][(kh // 2) * B:(kh // 2 + 7) * B, :]
        acc2 = acc2 + jnp.dot(lhs.astype(jnp.bfloat16), w2_ref[kh],
                              preferred_element_type=jnp.float32)

    # ---- BatchNorm2d(64) over (B, 7, 7) + LeakyReLU ----------------------- #
    # acc2 cols are (ox, channel) blocks of 64; reduce rows, then the 7 ox
    # blocks, to get per-channel batch statistics.
    s1 = jnp.sum(acc2, axis=0, keepdims=True)
    s2 = jnp.sum(acc2 * acc2, axis=0, keepdims=True)
    csum = s1[:, 0:64]
    csq = s2[:, 0:64]
    for ox in range(1, 7):
        csum = csum + s1[:, ox * 64:(ox + 1) * 64]
        csq = csq + s2[:, ox * 64:(ox + 1) * 64]
    cnt = jnp.float32(B * 49)
    mean = csum / cnt
    var = csq / cnt - mean * mean                     # biased variance
    inv = jax.lax.rsqrt(var + BN_EPS)
    mean448 = jnp.concatenate([mean] * 7, axis=1)
    inv448 = jnp.concatenate([inv] * 7, axis=1)
    h2 = _leaky(bn2g_ref[...] * (acc2 - mean448) * inv448 + bn2b_ref[...])
    h2_ref[...] = h2                                   # (7B, 448), rows (oy, b)

    # ---- fc1 (3136 -> 512) + BatchNorm1d(512) + LeakyReLU ----------------- #
    # The 3136-wide contraction is done as 7 chunks of 448 (one per oy); the
    # weight rows were pre-permuted to match PyTorch's (C,H,W) flatten.
    f1 = jnp.zeros((B, 512), jnp.float32)
    for oy in range(7):
        f1 = f1 + jnp.dot(h2_ref[oy * B:(oy + 1) * B, :].astype(jnp.bfloat16),
                          fc1w_ref[oy * 448:(oy + 1) * 448, :],
                          preferred_element_type=jnp.float32)
    f1 = f1 + fc1b_ref[...]
    m1 = jnp.mean(f1, axis=0, keepdims=True)
    v1 = jnp.mean(f1 * f1, axis=0, keepdims=True) - m1 * m1
    f1n = _leaky(bn3g_ref[...] * (f1 - m1) * jax.lax.rsqrt(v1 + BN_EPS)
                 + bn3b_ref[...])

    # ---- fc2 (512 -> 1): VPU multiply + lane reduction -------------------- #
    o_ref[...] = (jnp.sum(f1n * fc2w_ref[...], axis=-1, keepdims=True)
                  + fc2b_ref[...])


# --------------------------- pallas_call plumbing --------------------------- #

def _full_spec(shape):
    zeros = (0,) * len(shape)
    return pl.BlockSpec(shape, lambda i: zeros)


# -------------------------------- JAX glue ---------------------------------- #

def _row_strips(x_nhwc):
    """Build the conv1 row-strip matrices, split by output-row parity.

    Row (yidx, b) of the even/odd matrix holds the flattened 5x32xC input
    strip needed for conv1 output row y = 2*yidx (+1 for odd) of image b,
    ordered so that rows are (yidx-major, batch-minor).
    """
    B, H, W, C = x_nhwc.shape
    xp = jnp.pad(x_nhwc, ((0, 0), (2, 2), (2, 2), (0, 0)))          # (B,32,32,C)
    strips = jnp.stack([xp[:, 2 * y:2 * y + 5, :, :] for y in range(14)],
                       axis=1)                                      # (B,14,5,32,C)
    col = strips.reshape(B, 14, 5 * 32 * C)
    col_e = jnp.transpose(col[:, 0::2, :], (1, 0, 2)).reshape(7 * B, 5 * 32 * C)
    col_o = jnp.transpose(col[:, 1::2, :], (1, 0, 2)).reshape(7 * B, 5 * 32 * C)
    return col_e, col_o


def init_params(key, channels):
    """PyTorch-layout parameters (conv weights in HWIO, fc weights transposed)."""
    ks = jax.random.split(key, 6)
    return dict(
        w1=jax.random.normal(ks[0], (5, 5, channels, 32), jnp.float32) * 0.05,
        w2=jax.random.normal(ks[1], (5, 5, 32, 64), jnp.float32) * 0.02,
        fc1_w=jax.random.normal(ks[2], (64 * 7 * 7, 512), jnp.float32) * 0.02,
        fc1_b=jax.random.normal(ks[3], (1, 512), jnp.float32) * 0.01,
        bn2_gamma=jnp.ones((64,), jnp.float32),
        bn2_beta=jnp.zeros((64,), jnp.float32),
        bn3_gamma=jnp.ones((512,), jnp.float32),
        bn3_beta=jnp.zeros((512,), jnp.float32),
        fc2_w=jax.random.normal(ks[4], (1, 512), jnp.float32) * 0.02,
        fc2_b=jax.random.normal(ks[5], (1, 1), jnp.float32) * 0.01,
    )


def pack_params(p):
    """One-time repack of the weights into the kernel's matmul-friendly layout."""
    w1 = p["w1"]
    C = w1.shape[2]
    # conv1 row-strip weight: (kh, padded_x_col, c) x (x, out_channel)
    W1row = jnp.zeros((5, 32, C, 14, 32), jnp.float32)
    for x in range(14):
        W1row = W1row.at[:, 2 * x:2 * x + 5, :, x, :].set(w1)
    W1row = W1row.reshape(5 * 32 * C, 14 * 32)

    # conv2 per-tap-row weight: (padded_x, c) x (ox, out_channel), one per kh
    W2big = jnp.zeros((5, 18, 32, 7, 64), jnp.float32)
    for ox in range(7):
        W2big = W2big.at[:, 2 * ox:2 * ox + 5, :, ox, :].set(p["w2"])
    W2big = W2big.reshape(5, 18 * 32, 7 * 64)

    # fc1 rows permuted from PyTorch's (channel, oy, ox) flatten order to the
    # kernel's (oy, ox, channel) feature order.
    oy, ox, n = jnp.meshgrid(jnp.arange(7), jnp.arange(7), jnp.arange(64),
                             indexing="ij")
    perm = (n * 49 + oy * 7 + ox).reshape(-1)
    fc1_w_perm = p["fc1_w"][perm, :]

    return dict(
        w1=W1row.astype(jnp.bfloat16),
        w2=W2big.astype(jnp.bfloat16),
        fc1_w=fc1_w_perm.astype(jnp.bfloat16),
        fc1_b=p["fc1_b"].astype(jnp.float32),
        bn2_gamma=jnp.tile(p["bn2_gamma"], 7).reshape(1, 448).astype(jnp.float32),
        bn2_beta=jnp.tile(p["bn2_beta"], 7).reshape(1, 448).astype(jnp.float32),
        bn3_gamma=p["bn3_gamma"].reshape(1, 512).astype(jnp.float32),
        bn3_beta=p["bn3_beta"].reshape(1, 512).astype(jnp.float32),
        fc2_w=p["fc2_w"].astype(jnp.float32),
        fc2_b=p["fc2_b"].astype(jnp.float32),
    )


def discriminator_forward(img_nchw, packed):
    B, C, H, W = img_nchw.shape
    assert H == 28 and W == 28, "module's .view(B, 64*7*7) requires 28x28 input"

    x = jnp.transpose(img_nchw, (0, 2, 3, 1))          # NCHW -> NHWC (tiny)
    col_e, col_o = _row_strips(x)
    col_e = col_e.astype(jnp.bfloat16)
    col_o = col_o.astype(jnp.bfloat16)

    args = (col_e, col_o, packed["w1"], packed["w2"], packed["fc1_w"],
            packed["fc1_b"], packed["bn2_gamma"], packed["bn2_beta"],
            packed["bn3_gamma"], packed["bn3_beta"], packed["fc2_w"],
            packed["fc2_b"])

    out = pl.pallas_call(
        _disc_kernel,
        out_shape=jax.ShapeDtypeStruct((B, 1), jnp.float32),
        grid=(1,),
        in_specs=[_full_spec(a.shape) for a in args],
        out_specs=_full_spec((B, 1)),
        scratch_shapes=[
            pltpu.VMEM((9 * B, 576), jnp.float32),   # even-parity padded h1
            pltpu.VMEM((9 * B, 576), jnp.float32),   # odd-parity padded h1
            pltpu.VMEM((7 * B, 448), jnp.float32),   # normalized conv2 output
        ],
        compiler_params=pltpu.CompilerParams(
            dimension_semantics=("arbitrary",)),
    )(*args)

    # NOTE: BN uses batch statistics (training mode); B must be >= 2, matching
    # PyTorch's BatchNorm1d requirement.
    return out.reshape(B, 1, 1, 1)       # unsqueeze(2).unsqueeze(3)


if __name__ == "__main__":
    key = jax.random.PRNGKey(0)
    k_img, k_par = jax.random.split(key)
    B, channels = 2, 1
    img = jax.random.normal(k_img, (B, channels, 28, 28), jnp.float32)

    params = init_params(k_par, channels)
    packed = pack_params(params)

    out = jax.jit(discriminator_forward)(img, packed)
    out = jax.block_until_ready(out)
    assert out.shape == (B, 1, 1, 1) and out.dtype == jnp.float32
    assert bool(jnp.all(jnp.isfinite(out)))
    print("KERNEL_OK")
</pallas_src>

<mosaic_0001>
module attributes {stable_mosaic.version = 11 : i64} {
  func.func @_disc_kernel(%arg0: i32, %arg1: memref<14x160xbf16, #tpu.memory_space<vmem>>, %arg2: memref<14x160xbf16, #tpu.memory_space<vmem>>, %arg3: memref<160x448xbf16, #tpu.memory_space<vmem>>, %arg4: memref<5x576x448xbf16, #tpu.memory_space<vmem>>, %arg5: memref<3136x512xbf16, #tpu.memory_space<vmem>>, %arg6: memref<1x512xf32, #tpu.memory_space<vmem>>, %arg7: memref<1x448xf32, #tpu.memory_space<vmem>>, %arg8: memref<1x448xf32, #tpu.memory_space<vmem>>, %arg9: memref<1x512xf32, #tpu.memory_space<vmem>>, %arg10: memref<1x512xf32, #tpu.memory_space<vmem>>, %arg11: memref<1x512xf32, #tpu.memory_space<vmem>>, %arg12: memref<1x1xf32, #tpu.memory_space<vmem>>, %arg13: memref<2x1xf32, #tpu.memory_space<vmem>>, %arg14: memref<18x576xf32, #tpu.memory_space<vmem>>, %arg15: memref<18x576xf32, #tpu.memory_space<vmem>>, %arg16: memref<14x448xf32, #tpu.memory_space<vmem>>) attributes {dimension_semantics = [#tpu.dimension_semantics<arbitrary>], iteration_bounds = array<i64: 1>, scalar_prefetch = 0 : i64, scratch_operands = 3 : i64, tpu.core_type = #tpu.core_type<tc>, window_params = [{pipeline_mode = #tpu.pipeline_mode<synchronous>, transform_indices = @transform_0, window_bounds = array<i64: 14, 160>}, {pipeline_mode = #tpu.pipeline_mode<synchronous>, transform_indices = @transform_1, window_bounds = array<i64: 14, 160>}, {pipeline_mode = #tpu.pipeline_mode<synchronous>, transform_indices = @transform_2, window_bounds = array<i64: 160, 448>}, {pipeline_mode = #tpu.pipeline_mode<synchronous>, transform_indices = @transform_3, window_bounds = array<i64: 5, 576, 448>}, {pipeline_mode = #tpu.pipeline_mode<synchronous>, transform_indices = @transform_4, window_bounds = array<i64: 3136, 512>}, {pipeline_mode = #tpu.pipeline_mode<synchronous>, transform_indices = @transform_5, window_bounds = array<i64: 1, 512>}, {pipeline_mode = #tpu.pipeline_mode<synchronous>, transform_indices = @transform_6, window_bounds = array<i64: 1, 448>}, {pipeline_mode = #tpu.pipeline_mode<synchronous>, transform_indices = @transform_7, window_bounds = array<i64: 1, 448>}, {pipeline_mode = #tpu.pipeline_mode<synchronous>, transform_indices = @transform_8, window_bounds = array<i64: 1, 512>}, {pipeline_mode = #tpu.pipeline_mode<synchronous>, transform_indices = @transform_9, window_bounds = array<i64: 1, 512>}, {pipeline_mode = #tpu.pipeline_mode<synchronous>, transform_indices = @transform_10, window_bounds = array<i64: 1, 512>}, {pipeline_mode = #tpu.pipeline_mode<synchronous>, transform_indices = @transform_11, window_bounds = array<i64: 1, 1>}, {pipeline_mode = #tpu.pipeline_mode<synchronous>, transform_indices = @transform_12, window_bounds = array<i64: 2, 1>}]} {
    %c0 = arith.constant 0 : index
    %c0_0 = arith.constant 0 : index
    %0 = vector.load %arg1[%c0, %c0_0] : memref<14x160xbf16, #tpu.memory_space<vmem>>, vector<14x160xbf16>
    %c0_1 = arith.constant 0 : index
    %c0_2 = arith.constant 0 : index
    %1 = vector.load %arg3[%c0_1, %c0_2] : memref<160x448xbf16, #tpu.memory_space<vmem>>, vector<160x448xbf16>
    %cst = arith.constant dense<0.000000e+00> : vector<14x448xf32>
    %2 = tpu.matmul %0, %1, %cst {dimension_numbers = #tpu.dot_dimension_numbers<[1], [0], [0], [1], [0, 0, 1, 1], [], []>} : vector<14x160xbf16>, vector<160x448xbf16>, vector<14x448xf32> -> vector<14x448xf32>
    %cst_3 = arith.constant 0.000000e+00 : f32
    %3 = vector.broadcast %cst_3 : f32 to vector<14x448xf32>
    %4 = arith.cmpf ogt, %2, %3 : vector<14x448xf32>
    %cst_4 = arith.constant 2.000000e-01 : f32
    %5 = vector.broadcast %cst_4 : f32 to vector<14x448xf32>
    %6 = arith.mulf %5, %2 : vector<14x448xf32>
    %7 = arith.select %4, %2, %6 : vector<14x448xi1>, vector<14x448xf32>
    %c0_5 = arith.constant 0 : index
    %c0_6 = arith.constant 0 : index
    %8 = vector.load %arg2[%c0_5, %c0_6] : memref<14x160xbf16, #tpu.memory_space<vmem>>, vector<14x160xbf16>
    %c0_7 = arith.constant 0 : index
    %c0_8 = arith.constant 0 : index
    %9 = vector.load %arg3[%c0_7, %c0_8] : memref<160x448xbf16, #tpu.memory_space<vmem>>, vector<160x448xbf16>
    %cst_9 = arith.constant dense<0.000000e+00> : vector<14x448xf32>
    %10 = tpu.matmul %8, %9, %cst_9 {dimension_numbers = #tpu.dot_dimension_numbers<[1], [0], [0], [1], [0, 0, 1, 1], [], []>} : vector<14x160xbf16>, vector<160x448xbf16>, vector<14x448xf32> -> vector<14x448xf32>
    %cst_10 = arith.constant 0.000000e+00 : f32
    %11 = vector.broadcast %cst_10 : f32 to vector<14x448xf32>
    %12 = arith.cmpf ogt, %10, %11 : vector<14x448xf32>
    %cst_11 = arith.constant 2.000000e-01 : f32
    %13 = vector.broadcast %cst_11 : f32 to vector<14x448xf32>
    %14 = arith.mulf %13, %10 : vector<14x448xf32>
    %15 = arith.select %12, %10, %14 : vector<14x448xi1>, vector<14x448xf32>
    %cst_12 = arith.constant 0.000000e+00 : f32
    %16 = vector.broadcast %cst_12 : f32 to vector<18x576xf32>
    %c0_13 = arith.constant 0 : index
    %c0_14 = arith.constant 0 : index
    %17 = vector.load %arg14[%c0_13, %c0_14] : memref<18x576xf32, #tpu.memory_space<vmem>>, vector<18x576xf32>
    tpu.vector_store %arg14[%c0_13, %c0_14], %16 {strides = array<i32>} : memref<18x576xf32, #tpu.memory_space<vmem>>, vector<18x576xf32>,
    %cst_15 = arith.constant 0.000000e+00 : f32
    %18 = vector.broadcast %cst_15 : f32 to vector<18x576xf32>
    %c0_16 = arith.constant 0 : index
    %c0_17 = arith.constant 0 : index
    %19 = vector.load %arg15[%c0_16, %c0_17] : memref<18x576xf32, #tpu.memory_space<vmem>>, vector<18x576xf32>
    tpu.vector_store %arg15[%c0_16, %c0_17], %18 {strides = array<i32>} : memref<18x576xf32, #tpu.memory_space<vmem>>, vector<18x576xf32>,
    %c2 = arith.constant 2 : index
    %c64 = arith.constant 64 : index
    %20 = vector.load %arg14[%c2, %c64] : memref<18x576xf32, #tpu.memory_space<vmem>>, vector<14x448xf32>
    tpu.vector_store %arg14[%c2, %c64], %7 {strides = array<i32>} : memref<18x576xf32, #tpu.memory_space<vmem>>, vector<14x448xf32>,
    %c2_18 = arith.constant 2 : index
    %c64_19 = arith.constant 64 : index
    %21 = vector.load %arg15[%c2_18, %c64_19] : memref<18x576xf32, #tpu.memory_space<vmem>>, vector<14x448xf32>
    tpu.vector_store %arg15[%c2_18, %c64_19], %15 {strides = array<i32>} : memref<18x576xf32, #tpu.memory_space<vmem>>, vector<14x448xf32>,
    %cst_20 = arith.constant 0.000000e+00 : f32
    %22 = vector.broadcast %cst_20 : f32 to vector<14x448xf32>
    %c0_21 = arith.constant 0 : index
    %c0_22 = arith.constant 0 : index
    %23 = vector.load %arg14[%c0_21, %c0_22] : memref<18x576xf32, #tpu.memory_space<vmem>>, vector<14x576xf32>
    %24 = arith.truncf %23 : vector<14x576xf32> to vector<14x576xbf16>
    %c0_23 = arith.constant 0 : index
    %c0_24 = arith.constant 0 : index
    %c0_25 = arith.constant 0 : index
    %25 = vector.load %arg4[%c0_23, %c0_24, %c0_25] : memref<5x576x448xbf16, #tpu.memory_space<vmem>>, vector<1x576x448xbf16>
    %26 = vector.shape_cast %25 : vector<1x576x448xbf16> to vector<576x448xbf16>
    %cst_26 = arith.constant dense<0.000000e+00> : vector<14x448xf32>
    %27 = tpu.matmul %24, %26, %cst_26 {dimension_numbers = #tpu.dot_dimension_numbers<[1], [0], [0], [1], [0, 0, 1, 1], [], []>} : vector<14x576xbf16>, vector<576x448xbf16>, vector<14x448xf32> -> vector<14x448xf32>
    %28 = arith.addf %22, %27 : vector<14x448xf32>
    %c0_27 = arith.constant 0 : index
    %c0_28 = arith.constant 0 : index
    %29 = vector.load %arg15[%c0_27, %c0_28] : memref<18x576xf32, #tpu.memory_space<vmem>>, vector<14x576xf32>
    %30 = arith.truncf %29 : vector<14x576xf32> to vector<14x576xbf16>
    %c1 = arith.constant 1 : index
    %c0_29 = arith.constant 0 : index
    %c0_30 = arith.constant 0 : index
    %31 = vector.load %arg4[%c1, %c0_29, %c0_30] : memref<5x576x448xbf16, #tpu.memory_space<vmem>>, vector<1x576x448xbf16>
    %32 = vector.shape_cast %31 : vector<1x576x448xbf16> to vector<576x448xbf16>
    %cst_31 = arith.constant dense<0.000000e+00> : vector<14x448xf32>
    %33 = tpu.matmul %30, %32, %cst_31 {dimension_numbers = #tpu.dot_dimension_numbers<[1], [0], [0], [1], [0, 0, 1, 1], [], []>} : vector<14x576xbf16>, vector<576x448xbf16>, vector<14x448xf32> -> vector<14x448xf32>
    %34 = arith.addf %28, %33 : vector<14x448xf32>
    %c2_32 = arith.constant 2 : index
    %c0_33 = arith.constant 0 : index
    %35 = vector.load %arg14[%c2_32, %c0_33] : memref<18x576xf32, #tpu.memory_space<vmem>>, vector<14x576xf32>
    %36 = arith.truncf %35 : vector<14x576xf32> to vector<14x576xbf16>
    %c2_34 = arith.constant 2 : index
    %c0_35 = arith.constant 0 : index
    %c0_36 = arith.constant 0 : index
    %37 = vector.load %arg4[%c2_34, %c0_35, %c0_36] : memref<5x576x448xbf16, #tpu.memory_space<vmem>>, vector<1x576x448xbf16>
    %38 = vector.shape_cast %37 : vector<1x576x448xbf16> to vector<576x448xbf16>
    %cst_37 = arith.constant dense<0.000000e+00> : vector<14x448xf32>
    %39 = tpu.matmul %36, %38, %cst_37 {dimension_numbers = #tpu.dot_dimension_numbers<[1], [0], [0], [1], [0, 0, 1, 1], [], []>} : vector<14x576xbf16>, vector<576x448xbf16>, vector<14x448xf32> -> vector<14x448xf32>
    %40 = arith.addf %34, %39 : vector<14x448xf32>
    %c2_38 = arith.constant 2 : index
    %c0_39 = arith.constant 0 : index
    %41 = vector.load %arg15[%c2_38, %c0_39] : memref<18x576xf32, #tpu.memory_space<vmem>>, vector<14x576xf32>
    %42 = arith.truncf %41 : vector<14x576xf32> to vector<14x576xbf16>
    %c3 = arith.constant 3 : index
    %c0_40 = arith.constant 0 : index
    %c0_41 = arith.constant 0 : index
    %43 = vector.load %arg4[%c3, %c0_40, %c0_41] : memref<5x576x448xbf16, #tpu.memory_space<vmem>>, vector<1x576x448xbf16>
    %44 = vector.shape_cast %43 : vector<1x576x448xbf16> to vector<576x448xbf16>
    %cst_42 = arith.constant dense<0.000000e+00> : vector<14x448xf32>
    %45 = tpu.matmul %42, %44, %cst_42 {dimension_numbers = #tpu.dot_dimension_numbers<[1], [0], [0], [1], [0, 0, 1, 1], [], []>} : vector<14x576xbf16>, vector<576x448xbf16>, vector<14x448xf32> -> vector<14x448xf32>
    %46 = arith.addf %40, %45 : vector<14x448xf32>
    %c4 = arith.constant 4 : index
    %c0_43 = arith.constant 0 : index
    %47 = vector.load %arg14[%c4, %c0_43] : memref<18x576xf32, #tpu.memory_space<vmem>>, vector<14x576xf32>
    %48 = arith.truncf %47 : vector<14x576xf32> to vector<14x576xbf16>
    %c4_44 = arith.constant 4 : index
    %c0_45 = arith.constant 0 : index
    %c0_46 = arith.constant 0 : index
    %49 = vector.load %arg4[%c4_44, %c0_45, %c0_46] : memref<5x576x448xbf16, #tpu.memory_space<vmem>>, vector<1x576x448xbf16>
    %50 = vector.shape_cast %49 : vector<1x576x448xbf16> to vector<576x448xbf16>
    %cst_47 = arith.constant dense<0.000000e+00> : vector<14x448xf32>
    %51 = tpu.matmul %48, %50, %cst_47 {dimension_numbers = #tpu.dot_dimension_numbers<[1], [0], [0], [1], [0, 0, 1, 1], [], []>} : vector<14x576xbf16>, vector<576x448xbf16>, vector<14x448xf32> -> vector<14x448xf32>
    %52 = arith.addf %46, %51 : vector<14x448xf32>
    %cst_48 = arith.constant dense<0.000000e+00> : vector<448xf32>
    %53 = vector.multi_reduction <add>, %52, %cst_48 [0] : vector<14x448xf32> to vector<448xf32>
    %54 = vector.shape_cast %53 : vector<448xf32> to vector<1x448xf32>
    %55 = arith.mulf %52, %52 : vector<14x448xf32>
    %cst_49 = arith.constant dense<0.000000e+00> : vector<448xf32>
    %56 = vector.multi_reduction <add>, %55, %cst_49 [0] : vector<14x448xf32> to vector<448xf32>
    %57 = vector.shape_cast %56 : vector<448xf32> to vector<1x448xf32>
    %58 = vector.extract_strided_slice %54 {offsets = [0, 0], sizes = [1, 64], strides = [1, 1]} : vector<1x448xf32> to vector<1x64xf32>
    %59 = vector.extract_strided_slice %57 {offsets = [0, 0], sizes = [1, 64], strides = [1, 1]} : vector<1x448xf32> to vector<1x64xf32>
    %60 = vector.extract_strided_slice %54 {offsets = [0, 64], sizes = [1, 64], strides = [1, 1]} : vector<1x448xf32> to vector<1x64xf32>
    %61 = arith.addf %58, %60 : vector<1x64xf32>
    %62 = vector.extract_strided_slice %57 {offsets = [0, 64], sizes = [1, 64], strides = [1, 1]} : vector<1x448xf32> to vector<1x64xf32>
    %63 = arith.addf %59, %62 : vector<1x64xf32>
    %64 = vector.extract_strided_slice %54 {offsets = [0, 128], sizes = [1, 64], strides = [1, 1]} : vector<1x448xf32> to vector<1x64xf32>
    %65 = arith.addf %61, %64 : vector<1x64xf32>
    %66 = vector.extract_strided_slice %57 {offsets = [0, 128], sizes = [1, 64], strides = [1, 1]} : vector<1x448xf32> to vector<1x64xf32>
    %67 = arith.addf %63, %66 : vector<1x64xf32>
    %68 = vector.extract_strided_slice %54 {offsets = [0, 192], sizes = [1, 64], strides = [1, 1]} : vector<1x448xf32> to vector<1x64xf32>
    %69 = arith.addf %65, %68 : vector<1x64xf32>
    %70 = vector.extract_strided_slice %57 {offsets = [0, 192], sizes = [1, 64], strides = [1, 1]} : vector<1x448xf32> to vector<1x64xf32>
    %71 = arith.addf %67, %70 : vector<1x64xf32>
    %72 = vector.extract_strided_slice %54 {offsets = [0, 256], sizes = [1, 64], strides = [1, 1]} : vector<1x448xf32> to vector<1x64xf32>
    %73 = arith.addf %69, %72 : vector<1x64xf32>
    %74 = vector.extract_strided_slice %57 {offsets = [0, 256], sizes = [1, 64], strides = [1, 1]} : vector<1x448xf32> to vector<1x64xf32>
    %75 = arith.addf %71, %74 : vector<1x64xf32>
    %76 = vector.extract_strided_slice %54 {offsets = [0, 320], sizes = [1, 64], strides = [1, 1]} : vector<1x448xf32> to vector<1x64xf32>
    %77 = arith.addf %73, %76 : vector<1x64xf32>
    %78 = vector.extract_strided_slice %57 {offsets = [0, 320], sizes = [1, 64], strides = [1, 1]} : vector<1x448xf32> to vector<1x64xf32>
    %79 = arith.addf %75, %78 : vector<1x64xf32>
    %80 = vector.extract_strided_slice %54 {offsets = [0, 384], sizes = [1, 64], strides = [1, 1]} : vector<1x448xf32> to vector<1x64xf32>
    %81 = arith.addf %77, %80 : vector<1x64xf32>
    %82 = vector.extract_strided_slice %57 {offsets = [0, 384], sizes = [1, 64], strides = [1, 1]} : vector<1x448xf32> to vector<1x64xf32>
    %83 = arith.addf %79, %82 : vector<1x64xf32>
    %cst_50 = arith.constant 9.800000e+01 : f32
    %84 = vector.broadcast %cst_50 : f32 to vector<1x64xf32>
    %85 = arith.divf %81, %84 : vector<1x64xf32>
    %cst_51 = arith.constant 9.800000e+01 : f32
    %86 = vector.broadcast %cst_51 : f32 to vector<1x64xf32>
    %87 = arith.divf %83, %86 : vector<1x64xf32>
    %88 = arith.mulf %85, %85 : vector<1x64xf32>
    %89 = arith.subf %87, %88 : vector<1x64xf32>
    %cst_52 = arith.constant 9.99999974E-6 : f32
    %90 = vector.broadcast %cst_52 : f32 to vector<1x64xf32>
    %91 = arith.addf %89, %90 : vector<1x64xf32>
    %92 = math.rsqrt %91 : vector<1x64xf32>
    %93 = tpu.concatenate %85, %85, %85, %85, %85, %85, %85 in 1 : vector<1x64xf32>, vector<1x64xf32>, vector<1x64xf32>, vector<1x64xf32>, vector<1x64xf32>, vector<1x64xf32>, vector<1x64xf32> -> vector<1x448xf32>
    %94 = tpu.concatenate %92, %92, %92, %92, %92, %92, %92 in 1 : vector<1x64xf32>, vector<1x64xf32>, vector<1x64xf32>, vector<1x64xf32>, vector<1x64xf32>, vector<1x64xf32>, vector<1x64xf32> -> vector<1x448xf32>
    %c0_53 = arith.constant 0 : index
    %c0_54 = arith.constant 0 : index
    %95 = vector.load %arg7[%c0_53, %c0_54] : memref<1x448xf32, #tpu.memory_space<vmem>>, vector<1x448xf32>
    %96 = vector.broadcast %93 : vector<1x448xf32> to vector<14x448xf32>
    %97 = arith.subf %52, %96 : vector<14x448xf32>
    %98 = vector.broadcast %95 : vector<1x448xf32> to vector<14x448xf32>
    %99 = arith.mulf %98, %97 : vector<14x448xf32>
    %100 = vector.broadcast %94 : vector<1x448xf32> to vector<14x448xf32>
    %101 = arith.mulf %99, %100 : vector<14x448xf32>
    %c0_55 = arith.constant 0 : index
    %c0_56 = arith.constant 0 : index
    %102 = vector.load %arg8[%c0_55, %c0_56] : memref<1x448xf32, #tpu.memory_space<vmem>>, vector<1x448xf32>
    %103 = vector.broadcast %102 : vector<1x448xf32> to vector<14x448xf32>
    %104 = arith.addf %101, %103 : vector<14x448xf32>
    %cst_57 = arith.constant 0.000000e+00 : f32
    %105 = vector.broadcast %cst_57 : f32 to vector<14x448xf32>
    %106 = arith.cmpf ogt, %104, %105 : vector<14x448xf32>
    %cst_58 = arith.constant 2.000000e-01 : f32
    %107 = vector.broadcast %cst_58 : f32 to vector<14x448xf32>
    %108 = arith.mulf %107, %104 : vector<14x448xf32>
    %109 = arith.select %106, %104, %108 : vector<14x448xi1>, vector<14x448xf32>
    %c0_59 = arith.constant 0 : index
    %c0_60 = arith.constant 0 : index
    %110 = vector.load %arg16[%c0_59, %c0_60] : memref<14x448xf32, #tpu.memory_space<vmem>>, vector<14x448xf32>
    tpu.vector_store %arg16[%c0_59, %c0_60], %109 {strides = array<i32>} : memref<14x448xf32, #tpu.memory_space<vmem>>, vector<14x448xf32>,
    %cst_61 = arith.constant 0.000000e+00 : f32
    %111 = vector.broadcast %cst_61 : f32 to vector<2x512xf32>
    %c0_62 = arith.constant 0 : index
    %c0_63 = arith.constant 0 : index
    %112 = vector.load %arg16[%c0_62, %c0_63] : memref<14x448xf32, #tpu.memory_space<vmem>>, vector<2x448xf32>
    %113 = arith.truncf %112 : vector<2x448xf32> to vector<2x448xbf16>
    %c0_64 = arith.constant 0 : index
    %c0_65 = arith.constant 0 : index
    %114 = vector.load %arg5[%c0_64, %c0_65] : memref<3136x512xbf16, #tpu.memory_space<vmem>>, vector<448x512xbf16>
    %cst_66 = arith.constant dense<0.000000e+00> : vector<2x512xf32>
    %115 = tpu.matmul %113, %114, %cst_66 {dimension_numbers = #tpu.dot_dimension_numbers<[1], [0], [0], [1], [0, 0, 1, 1], [], []>} : vector<2x448xbf16>, vector<448x512xbf16>, vector<2x512xf32> -> vector<2x512xf32>
    %116 = arith.addf %111, %115 : vector<2x512xf32>
    %c2_67 = arith.constant 2 : index
    %c0_68 = arith.constant 0 : index
    %117 = vector.load %arg16[%c2_67, %c0_68] : memref<14x448xf32, #tpu.memory_space<vmem>>, vector<2x448xf32>
    %118 = arith.truncf %117 : vector<2x448xf32> to vector<2x448xbf16>
    %c448 = arith.constant 448 : index
    %c0_69 = arith.constant 0 : index
    %119 = vector.load %arg5[%c448, %c0_69] : memref<3136x512xbf16, #tpu.memory_space<vmem>>, vector<448x512xbf16>
    %cst_70 = arith.constant dense<0.000000e+00> : vector<2x512xf32>
    %120 = tpu.matmul %118, %119, %cst_70 {dimension_numbers = #tpu.dot_dimension_numbers<[1], [0], [0], [1], [0, 0, 1, 1], [], []>} : vector<2x448xbf16>, vector<448x512xbf16>, vector<2x512xf32> -> vector<2x512xf32>
    %121 = arith.addf %116, %120 : vector<2x512xf32>
    %c4_71 = arith.constant 4 : index
    %c0_72 = arith.constant 0 : index
    %122 = vector.load %arg16[%c4_71, %c0_72] : memref<14x448xf32, #tpu.memory_space<vmem>>, vector<2x448xf32>
    %123 = arith.truncf %122 : vector<2x448xf32> to vector<2x448xbf16>
    %c896 = arith.constant 896 : index
    %c0_73 = arith.constant 0 : index
    %124 = vector.load %arg5[%c896, %c0_73] : memref<3136x512xbf16, #tpu.memory_space<vmem>>, vector<448x512xbf16>
    %cst_74 = arith.constant dense<0.000000e+00> : vector<2x512xf32>
    %125 = tpu.matmul %123, %124, %cst_74 {dimension_numbers = #tpu.dot_dimension_numbers<[1], [0], [0], [1], [0, 0, 1, 1], [], []>} : vector<2x448xbf16>, vector<448x512xbf16>, vector<2x512xf32> -> vector<2x512xf32>
    %126 = arith.addf %121, %125 : vector<2x512xf32>
    %c6 = arith.constant 6 : index
    %c0_75 = arith.constant 0 : index
    %127 = vector.load %arg16[%c6, %c0_75] : memref<14x448xf32, #tpu.memory_space<vmem>>, vector<2x448xf32>
    %128 = arith.truncf %127 : vector<2x448xf32> to vector<2x448xbf16>
    %c1344 = arith.constant 1344 : index
    %c0_76 = arith.constant 0 : index
    %129 = vector.load %arg5[%c1344, %c0_76] : memref<3136x512xbf16, #tpu.memory_space<vmem>>, vector<448x512xbf16>
    %cst_77 = arith.constant dense<0.000000e+00> : vector<2x512xf32>
    %130 = tpu.matmul %128, %129, %cst_77 {dimension_numbers = #tpu.dot_dimension_numbers<[1], [0], [0], [1], [0, 0, 1, 1], [], []>} : vector<2x448xbf16>, vector<448x512xbf16>, vector<2x512xf32> -> vector<2x512xf32>
    %131 = arith.addf %126, %130 : vector<2x512xf32>
    %c8 = arith.constant 8 : index
    %c0_78 = arith.constant 0 : index
    %132 = vector.load %arg16[%c8, %c0_78] : memref<14x448xf32, #tpu.memory_space<vmem>>, vector<2x448xf32>
    %133 = arith.truncf %132 : vector<2x448xf32> to vector<2x448xbf16>
    %c1792 = arith.constant 1792 : index
    %c0_79 = arith.constant 0 : index
    %134 = vector.load %arg5[%c1792, %c0_79] : memref<3136x512xbf16, #tpu.memory_space<vmem>>, vector<448x512xbf16>
    %cst_80 = arith.constant dense<0.000000e+00> : vector<2x512xf32>
    %135 = tpu.matmul %133, %134, %cst_80 {dimension_numbers = #tpu.dot_dimension_numbers<[1], [0], [0], [1], [0, 0, 1, 1], [], []>} : vector<2x448xbf16>, vector<448x512xbf16>, vector<2x512xf32> -> vector<2x512xf32>
    %136 = arith.addf %131, %135 : vector<2x512xf32>
    %c10 = arith.constant 10 : index
    %c0_81 = arith.constant 0 : index
    %137 = vector.load %arg16[%c10, %c0_81] : memref<14x448xf32, #tpu.memory_space<vmem>>, vector<2x448xf32>
    %138 = arith.truncf %137 : vector<2x448xf32> to vector<2x448xbf16>
    %c2240 = arith.constant 2240 : index
    %c0_82 = arith.constant 0 : index
    %139 = vector.load %arg5[%c2240, %c0_82] : memref<3136x512xbf16, #tpu.memory_space<vmem>>, vector<448x512xbf16>
    %cst_83 = arith.constant dense<0.000000e+00> : vector<2x512xf32>
    %140 = tpu.matmul %138, %139, %cst_83 {dimension_numbers = #tpu.dot_dimension_numbers<[1], [0], [0], [1], [0, 0, 1, 1], [], []>} : vector<2x448xbf16>, vector<448x512xbf16>, vector<2x512xf32> -> vector<2x512xf32>
    %141 = arith.addf %136, %140 : vector<2x512xf32>
    %c12 = arith.constant 12 : index
    %c0_84 = arith.constant 0 : index
    %142 = vector.load %arg16[%c12, %c0_84] : memref<14x448xf32, #tpu.memory_space<vmem>>, vector<2x448xf32>
    %143 = arith.truncf %142 : vector<2x448xf32> to vector<2x448xbf16>
    %c2688 = arith.constant 2688 : index
    %c0_85 = arith.constant 0 : index
    %144 = vector.load %arg5[%c2688, %c0_85] : memref<3136x512xbf16, #tpu.memory_space<vmem>>, vector<448x512xbf16>
    %cst_86 = arith.constant dense<0.000000e+00> : vector<2x512xf32>
    %145 = tpu.matmul %143, %144, %cst_86 {dimension_numbers = #tpu.dot_dimension_numbers<[1], [0], [0], [1], [0, 0, 1, 1], [], []>} : vector<2x448xbf16>, vector<448x512xbf16>, vector<2x512xf32> -> vector<2x512xf32>
    %146 = arith.addf %141, %145 : vector<2x512xf32>
    %c0_87 = arith.constant 0 : index
    %c0_88 = arith.constant 0 : index
    %147 = vector.load %arg6[%c0_87, %c0_88] : memref<1x512xf32, #tpu.memory_space<vmem>>, vector<1x512xf32>
    %148 = vector.broadcast %147 : vector<1x512xf32> to vector<2x512xf32>
    %149 = arith.addf %146, %148 : vector<2x512xf32>
    %cst_89 = arith.constant dense<0.000000e+00> : vector<512xf32>
    %150 = vector.multi_reduction <add>, %149, %cst_89 [0] : vector<2x512xf32> to vector<512xf32>
    %151 = vector.shape_cast %150 : vector<512xf32> to vector<1x512xf32>
    %cst_90 = arith.constant 2.000000e+00 : f32
    %152 = vector.broadcast %cst_90 : f32 to vector<1x512xf32>
    %153 = arith.divf %151, %152 : vector<1x512xf32>
    %154 = arith.mulf %149, %149 : vector<2x512xf32>
    %cst_91 = arith.constant dense<0.000000e+00> : vector<512xf32>
    %155 = vector.multi_reduction <add>, %154, %cst_91 [0] : vector<2x512xf32> to vector<512xf32>
    %156 = vector.shape_cast %155 : vector<512xf32> to vector<1x512xf32>
    %cst_92 = arith.constant 2.000000e+00 : f32
    %157 = vector.broadcast %cst_92 : f32 to vector<1x512xf32>
    %158 = arith.divf %156, %157 : vector<1x512xf32>
    %159 = arith.mulf %153, %153 : vector<1x512xf32>
    %160 = arith.subf %158, %159 : vector<1x512xf32>
    %c0_93 = arith.constant 0 : index
    %c0_94 = arith.constant 0 : index
    %161 = vector.load %arg9[%c0_93, %c0_94] : memref<1x512xf32, #tpu.memory_space<vmem>>, vector<1x512xf32>
    %162 = vector.broadcast %153 : vector<1x512xf32> to vector<2x512xf32>
    %163 = arith.subf %149, %162 : vector<2x512xf32>
    %164 = vector.broadcast %161 : vector<1x512xf32> to vector<2x512xf32>
    %165 = arith.mulf %164, %163 : vector<2x512xf32>
    %cst_95 = arith.constant 9.99999974E-6 : f32
    %166 = vector.broadcast %cst_95 : f32 to vector<1x512xf32>
    %167 = arith.addf %160, %166 : vector<1x512xf32>
    %168 = math.rsqrt %167 : vector<1x512xf32>
    %169 = vector.broadcast %168 : vector<1x512xf32> to vector<2x512xf32>
    %170 = arith.mulf %165, %169 : vector<2x512xf32>
    %c0_96 = arith.constant 0 : index
    %c0_97 = arith.constant 0 : index
    %171 = vector.load %arg10[%c0_96, %c0_97] : memref<1x512xf32, #tpu.memory_space<vmem>>, vector<1x512xf32>
    %172 = vector.broadcast %171 : vector<1x512xf32> to vector<2x512xf32>
    %173 = arith.addf %170, %172 : vector<2x512xf32>
    %cst_98 = arith.constant 0.000000e+00 : f32
    %174 = vector.broadcast %cst_98 : f32 to vector<2x512xf32>
    %175 = arith.cmpf ogt, %173, %174 : vector<2x512xf32>
    %cst_99 = arith.constant 2.000000e-01 : f32
    %176 = vector.broadcast %cst_99 : f32 to vector<2x512xf32>
    %177 = arith.mulf %176, %173 : vector<2x512xf32>
    %178 = arith.select %175, %173, %177 : vector<2x512xi1>, vector<2x512xf32>
    %c0_100 = arith.constant 0 : index
    %c0_101 = arith.constant 0 : index
    %179 = vector.load %arg11[%c0_100, %c0_101] : memref<1x512xf32, #tpu.memory_space<vmem>>, vector<1x512xf32>
    %180 = vector.broadcast %179 : vector<1x512xf32> to vector<2x512xf32>
    %181 = arith.mulf %178, %180 : vector<2x512xf32>
    %cst_102 = arith.constant dense<0.000000e+00> : vector<2xf32>
    %182 = vector.multi_reduction <add>, %181, %cst_102 [1] : vector<2x512xf32> to vector<2xf32>
    %183 = vector.shape_cast %182 : vector<2xf32> to vector<2x1xf32>
    %c0_103 = arith.constant 0 : index
    %c0_104 = arith.constant 0 : index
    %184 = vector.load %arg12[%c0_103, %c0_104] : memref<1x1xf32, #tpu.memory_space<vmem>>, vector<1x1xf32>
    %185 = vector.broadcast %184 : vector<1x1xf32> to vector<2x1xf32>
    %186 = arith.addf %183, %185 : vector<2x1xf32>
    %c0_105 = arith.constant 0 : index
    %c0_106 = arith.constant 0 : index
    %187 = vector.load %arg13[%c0_105, %c0_106] : memref<2x1xf32, #tpu.memory_space<vmem>>, vector<2x1xf32>
    tpu.vector_store %arg13[%c0_105, %c0_106], %186 {strides = array<i32>} : memref<2x1xf32, #tpu.memory_space<vmem>>, vector<2x1xf32>,
    return
  }
  func.func @transform_0(%arg0: i32) -> (i32, i32) {
    %c0_i32 = arith.constant 0 : i32
    %c0_i32_0 = arith.constant 0 : i32
    %c0_i32_1 = arith.constant 0 : i32
    return %c0_i32, %c0_i32_0 : i32, i32
  }
  func.func @transform_1(%arg0: i32) -> (i32, i32) {
    %c0_i32 = arith.constant 0 : i32
    %c0_i32_0 = arith.constant 0 : i32
    %c0_i32_1 = arith.constant 0 : i32
    return %c0_i32, %c0_i32_0 : i32, i32
  }
  func.func @transform_2(%arg0: i32) -> (i32, i32) {
    %c0_i32 = arith.constant 0 : i32
    %c0_i32_0 = arith.constant 0 : i32
    %c0_i32_1 = arith.constant 0 : i32
    return %c0_i32, %c0_i32_0 : i32, i32
  }
  func.func @transform_3(%arg0: i32) -> (i32, i32, i32) {
    %c0_i32 = arith.constant 0 : i32
    %c0_i32_0 = arith.constant 0 : i32
    %c0_i32_1 = arith.constant 0 : i32
    %c0_i32_2 = arith.constant 0 : i32
    return %c0_i32, %c0_i32_0, %c0_i32_1 : i32, i32, i32
  }
  func.func @transform_4(%arg0: i32) -> (i32, i32) {
    %c0_i32 = arith.constant 0 : i32
    %c0_i32_0 = arith.constant 0 : i32
    %c0_i32_1 = arith.constant 0 : i32
    return %c0_i32, %c0_i32_0 : i32, i32
  }
  func.func @transform_5(%arg0: i32) -> (i32, i32) {
    %c0_i32 = arith.constant 0 : i32
    %c0_i32_0 = arith.constant 0 : i32
    %c0_i32_1 = arith.constant 0 : i32
    return %c0_i32, %c0_i32_0 : i32, i32
  }
  func.func @transform_6(%arg0: i32) -> (i32, i32) {
    %c0_i32 = arith.constant 0 : i32
    %c0_i32_0 = arith.constant 0 : i32
    %c0_i32_1 = arith.constant 0 : i32
    return %c0_i32, %c0_i32_0 : i32, i32
  }
  func.func @transform_7(%arg0: i32) -> (i32, i32) {
    %c0_i32 = arith.constant 0 : i32
    %c0_i32_0 = arith.constant 0 : i32
    %c0_i32_1 = arith.constant 0 : i32
    return %c0_i32, %c0_i32_0 : i32, i32
  }
  func.func @transform_8(%arg0: i32) -> (i32, i32) {
    %c0_i32 = arith.constant 0 : i32
    %c0_i32_0 = arith.constant 0 : i32
    %c0_i32_1 = arith.constant 0 : i32
    return %c0_i32, %c0_i32_0 : i32, i32
  }
  func.func @transform_9(%arg0: i32) -> (i32, i32) {
    %c0_i32 = arith.constant 0 : i32
    %c0_i32_0 = arith.constant 0 : i32
    %c0_i32_1 = arith.constant 0 : i32
    return %c0_i32, %c0_i32_0 : i32, i32
  }
  func.func @transform_10(%arg0: i32) -> (i32, i32) {
    %c0_i32 = arith.constant 0 : i32
    %c0_i32_0 = arith.constant 0 : i32
    %c0_i32_1 = arith.constant 0 : i32
    return %c0_i32, %c0_i32_0 : i32, i32
  }
  func.func @transform_11(%arg0: i32) -> (i32, i32) {
    %c0_i32 = arith.constant 0 : i32
    %c0_i32_0 = arith.constant 0 : i32
    %c0_i32_1 = arith.constant 0 : i32
    return %c0_i32, %c0_i32_0 : i32, i32
  }
  func.func @transform_12(%arg0: i32) -> (i32, i32) {
    %c0_i32 = arith.constant 0 : i32
    %c0_i32_0 = arith.constant 0 : i32
    %c0_i32_1 = arith.constant 0 : i32
    return %c0_i32, %c0_i32_0 : i32, i32
  }
}

</mosaic_0001>

<llo_original>
// kernel: discriminator_forward.1
$region0: #{discriminator_forward.1}
  #allocation0 [shape = 'u32[]', space=smem, size = 0x4, offset = 0x4, fixed_abs, tag = 'smem constant byte address 0x4 - core index']
  #allocation1 [shape = 'u32[144,128]{1,0:T(1,128)}', space=vmem, size = 0x12000, scoped, tag = 'internal scratch']
  #allocation2 [shape = 'f32[18,576]{1,0:T(8,128)}', space=vmem, size = 0xf000, scoped, tag = 'scratch operand']
  #allocation3 [shape = 'f32[18,576]{1,0:T(8,128)}', space=vmem, size = 0xf000, scoped, tag = 'scratch operand']
  #allocation4 [shape = 'f32[14,448]{1,0:T(8,128)}', space=vmem, size = 0x8000, scoped, tag = 'scratch operand']
  #allocation5 [shape = 'f32[1,1]{1,0:T(1,128)S(1)}', space=vmem, size = 0x200, scoped, tag = 'scoped memory for discriminator_forward.1']
  %s0 = inlined_call_operand.vmem [shape: bf16[14,160], index: 0, kind: input, shape index: {}]
  %s1 = inlined_call_operand.vmem [shape: bf16[14,160], index: 1, kind: input, shape index: {}]
  %s2 = inlined_call_operand.vmem [shape: bf16[160,448], index: 2, kind: input, shape index: {}]
  %s3 = inlined_call_operand.vmem [shape: bf16[5,576,448], index: 3, kind: input, shape index: {}]
  %s4 = inlined_call_operand.vmem [shape: bf16[3136,512], index: 4, kind: input, shape index: {}]
  %s5 = inlined_call_operand.vmem [shape: f32[1,512], index: 5, kind: input, shape index: {}]
  %s6 = inlined_call_operand.vmem [shape: f32[1,448], index: 6, kind: input, shape index: {}]
  %s7 = inlined_call_operand.vmem [shape: f32[1,448], index: 7, kind: input, shape index: {}]
  %s8 = inlined_call_operand.vmem [shape: f32[1,512], index: 8, kind: input, shape index: {}]
  %s9 = inlined_call_operand.vmem [shape: f32[1,512], index: 9, kind: input, shape index: {}]
  %s10 = inlined_call_operand.vmem [shape: f32[1,512], index: 10, kind: input, shape index: {}]
  %s11 = inlined_call_operand.<no memory space> [shape: f32[1,1], index: 11, kind: input, shape index: {}]
  %s12 = inlined_call_operand.vmem [shape: f32[2,1], index: 12, kind: output, shape index: {}]
  %s13 = sld [smem:[#allocation0]]
  $region58: #{discriminator_forward.1} parent=0
    _
  %s15 = ssub.s32 1, %s13
  %s16 = scalar_select 0, %s15, %s13
  %v17 = vstv %s11
  %18 = vst [vmem:[#allocation5] sm:$0x1] %v17
  // Predicated region
  $region2: #{discriminator_forward.1} parent=0 // pred_check
    _
  $region3: #{discriminator_forward.1} parent=0 // pred_check_branch
    %20 = sbr.rel (0) target = $region5
  $region4: #{discriminator_forward.1} parent=0 // pred_region
    _
  $region5: #{discriminator_forward.1} parent=0 // pred_fallthru
    _
  // Predicated region
  $region6: #{discriminator_forward.1} parent=0 // pred_check
    _
  $region7: #{discriminator_forward.1} parent=0 // pred_check_branch
    %22 = sbr.rel (0) target = $region9
  $region8: #{discriminator_forward.1} parent=0 // pred_region
    _
  $region9: #{discriminator_forward.1} parent=0 // pred_fallthru
    _
  // Predicated region
  $region10: #{discriminator_forward.1} parent=0 // pred_check
    _
  $region11: #{discriminator_forward.1} parent=0 // pred_check_branch
    %24 = sbr.rel (0) target = $region13
  $region12: #{discriminator_forward.1} parent=0 // pred_region
    _
  $region13: #{discriminator_forward.1} parent=0 // pred_fallthru
    _
  // Predicated region
  $region14: #{discriminator_forward.1} parent=0 // pred_check
    _
  $region15: #{discriminator_forward.1} parent=0 // pred_check_branch
    %26 = sbr.rel (0) target = $region17
  $region16: #{discriminator_forward.1} parent=0 // pred_region
    _
  $region17: #{discriminator_forward.1} parent=0 // pred_fallthru
    _
  // Predicated region
  $region18: #{discriminator_forward.1} parent=0 // pred_check
    _
  $region19: #{discriminator_forward.1} parent=0 // pred_check_branch
    %28 = sbr.rel (0) target = $region21
  $region20: #{discriminator_forward.1} parent=0 // pred_region
    _
  $region21: #{discriminator_forward.1} parent=0 // pred_fallthru
    _
  // Predicated region
  $region22: #{discriminator_forward.1} parent=0 // pred_check
    _
  $region23: #{discriminator_forward.1} parent=0 // pred_check_branch
    %30 = sbr.rel (0) target = $region25
  $region24: #{discriminator_forward.1} parent=0 // pred_region
    _
  $region25: #{discriminator_forward.1} parent=0 // pred_fallthru
    _
  // Predicated region
  $region26: #{discriminator_forward.1} parent=0 // pred_check
    _
  $region27: #{discriminator_forward.1} parent=0 // pred_check_branch
    %32 = sbr.rel (0) target = $region29
  $region28: #{discriminator_forward.1} parent=0 // pred_region
    _
  $region29: #{discriminator_forward.1} parent=0 // pred_fallthru
    _
  // Predicated region
  $region30: #{discriminator_forward.1} parent=0 // pred_check
    _
  $region31: #{discriminator_forward.1} parent=0 // pred_check_branch
    %34 = sbr.rel (0) target = $region33
  $region32: #{discriminator_forward.1} parent=0 // pred_region
    _
  $region33: #{discriminator_forward.1} parent=0 // pred_fallthru
    _
  // Predicated region
  $region34: #{discriminator_forward.1} parent=0 // pred_check
    _
  $region35: #{discriminator_forward.1} parent=0 // pred_check_branch
    %36 = sbr.rel (0) target = $region37
  $region36: #{discriminator_forward.1} parent=0 // pred_region
    _
  $region37: #{discriminator_forward.1} parent=0 // pred_fallthru
    _
  // Predicated region
  $region38: #{discriminator_forward.1} parent=0 // pred_check
    _
  $region39: #{discriminator_forward.1} parent=0 // pred_check_branch
    %38 = sbr.rel (0) target = $region41
  $region40: #{discriminator_forward.1} parent=0 // pred_region
    _
  $region41: #{discriminator_forward.1} parent=0 // pred_fallthru
    _
  // Predicated region
  $region42: #{discriminator_forward.1} parent=0 // pred_check
    _
  $region43: #{discriminator_forward.1} parent=0 // pred_check_branch
    %40 = sbr.rel (0) target = $region45
  $region44: #{discriminator_forward.1} parent=0 // pred_region
    _
  $region45: #{discriminator_forward.1} parent=0 // pred_fallthru
    _
  // Predicated region
  $region46: #{discriminator_forward.1} parent=0 // pred_check
    _
  $region47: #{discriminator_forward.1} parent=0 // pred_check_branch
    %42 = sbr.rel (0) target = $region49
  $region48: #{discriminator_forward.1} parent=0 // pred_region
    _
  $region49: #{discriminator_forward.1} parent=0 // pred_fallthru
    _
  %v44 = vld [vmem:[%s0] sm:$0xff]
  %v45 = vld [vmem:[%s0 + $0x8] sm:$0x77]
  %v46 = vld [vmem:[%s2] sm:$0xff]
  %v47 = vld [vmem:[%s2 + $0x8] sm:$0xff]
  %v48 = vld [vmem:[%s2 + $0x10] sm:$0xff]
  %v49 = vld [vmem:[%s2 + $0x18] sm:$0xff]
  %v50 = vld [vmem:[%s2 + $0x20] sm:$0xff]
  %v51 = vld [vmem:[%s2 + $0x28] sm:$0xff]
  %v52 = vld [vmem:[%s2 + $0x30] sm:$0xff]
  %v53 = vld [vmem:[%s2 + $0x38] sm:$0xff]
  %v54 = vld [vmem:[%s2 + $0x40] sm:$0xff]
  %v55 = vld [vmem:[%s2 + $0x48] sm:$0xff]
  %v56 = vld [vmem:[%s2 + $0x50] sm:$0xff]
  %v57 = vld [vmem:[%s2 + $0x58] sm:$0xff]
  %v58 = vld [vmem:[%s2 + $0x60] sm:$0xff]
  %v59 = vld [vmem:[%s2 + $0x68] sm:$0xff]
  %v60 = vld [vmem:[%s2 + $0x70] sm:$0xff]
  %v61 = vld [vmem:[%s2 + $0x78] sm:$0xff]
  %v62 = vld [vmem:[%s2 + $0x80] sm:$0xff]
  %v63 = vld [vmem:[%s2 + $0x88] sm:$0xff]
  %v64 = vld [vmem:[%s2 + $0x90] sm:$0xff]
  %v65 = vld [vmem:[%s2 + $0x98] sm:$0xff]
  %v66 = vld [vmem:[%s2 + $0xa0] sm:$0xff]
  %v67 = vld [vmem:[%s2 + $0xa8] sm:$0xff]
  %v68 = vld [vmem:[%s2 + $0xb0] sm:$0xff]
  %v69 = vld [vmem:[%s2 + $0xb8] sm:$0xff]
  %v70 = vld [vmem:[%s2 + $0xc0] sm:$0xff]
  %v71 = vld [vmem:[%s2 + $0xc8] sm:$0xff]
  %v72 = vld [vmem:[%s2 + $0xd0] sm:$0xff]
  %v73 = vld [vmem:[%s2 + $0xd8] sm:$0xff]
  %v74 = vld [vmem:[%s2 + $0xe0] sm:$0xff]
  %v75 = vld [vmem:[%s2 + $0xe8] sm:$0xff]
  %v76 = vld [vmem:[%s2 + $0xf0] sm:$0xff]
  %v77 = vld [vmem:[%s2 + $0xf8] sm:$0xff]
  %v78 = vld [vmem:[%s2 + $0x100] sm:$0xff]
  %v79 = vld [vmem:[%s2 + $0x108] sm:$0xff]
  %v80 = vld [vmem:[%s2 + $0x110] sm:$0xff]
  %v81 = vld [vmem:[%s2 + $0x118] sm:$0xff]
  %v82 = vld [vmem:[%s2 + $0x120] sm:$0xff]
  %v83 = vld [vmem:[%s2 + $0x128] sm:$0xff]
  %v84 = vld [vmem:[%s2 + $0x130] sm:$0xff]
  %v85 = vld [vmem:[%s2 + $0x138] sm:$0xff]
  %v88 = vunpack.c.l.b16 %v44
  %v89 = vunpack.c.h.b16 %v44
  %v90 = vunpack.c.l.b16 %v45
  %v91 = vunpack.c.h.b16 %v45
  %v92 = vpack.c.b16 %v90, %v88
  %v93 = vpack.c.b16 %v91, %v89
  %v135 = vunpack.c.l.b16 %v46
  %v136 = vunpack.c.h.b16 %v46
  %v137 = vunpack.c.l.b16 %v47
  %v138 = vunpack.c.h.b16 %v47
  %v139 = vunpack.c.l.b16 %v48
  %v140 = vunpack.c.h.b16 %v48
  %v141 = vunpack.c.l.b16 %v49
  %v142 = vunpack.c.h.b16 %v49
  %v143 = vunpack.c.l.b16 %v50
  %v144 = vunpack.c.h.b16 %v50
  %v145 = vunpack.c.l.b16 %v51
  %v146 = vunpack.c.h.b16 %v51
  %v147 = vunpack.c.l.b16 %v52
  %v148 = vunpack.c.h.b16 %v52
  %v149 = vunpack.c.l.b16 %v53
  %v150 = vunpack.c.h.b16 %v53
  %v151 = vunpack.c.l.b16 %v54
  %v152 = vunpack.c.h.b16 %v54
  %v153 = vunpack.c.l.b16 %v55
  %v154 = vunpack.c.h.b16 %v55
  %v155 = vunpack.c.l.b16 %v56
  %v156 = vunpack.c.h.b16 %v56
  %v157 = vunpack.c.l.b16 %v57
  %v158 = vunpack.c.h.b16 %v57
  %v159 = vunpack.c.l.b16 %v58
  %v160 = vunpack.c.h.b16 %v58
  %v161 = vunpack.c.l.b16 %v59
  %v162 = vunpack.c.h.b16 %v59
  %v163 = vunpack.c.l.b16 %v60
  %v164 = vunpack.c.h.b16 %v60
  %v165 = vunpack.c.l.b16 %v61
  %v166 = vunpack.c.h.b16 %v61
  %v167 = vunpack.c.l.b16 %v62
  %v168 = vunpack.c.h.b16 %v62
  %v169 = vunpack.c.l.b16 %v63
  %v170 = vunpack.c.h.b16 %v63
  %v171 = vunpack.c.l.b16 %v64
  %v172 = vunpack.c.h.b16 %v64
  %v173 = vunpack.c.l.b16 %v65
  %v174 = vunpack.c.h.b16 %v65
  %v175 = vunpack.c.l.b16 %v66
  %v176 = vunpack.c.h.b16 %v66
  %v177 = vunpack.c.l.b16 %v67
  %v178 = vunpack.c.h.b16 %v67
  %v179 = vunpack.c.l.b16 %v68
  %v180 = vunpack.c.h.b16 %v68
  %v181 = vunpack.c.l.b16 %v69
  %v182 = vunpack.c.h.b16 %v69
  %v183 = vunpack.c.l.b16 %v70
  %v184 = vunpack.c.h.b16 %v70
  %v185 = vunpack.c.l.b16 %v71
  %v186 = vunpack.c.h.b16 %v71
  %v187 = vunpack.c.l.b16 %v72
  %v188 = vunpack.c.h.b16 %v72
  %v189 = vunpack.c.l.b16 %v73
  %v190 = vunpack.c.h.b16 %v73
  %v191 = vunpack.c.l.b16 %v74
  %v192 = vunpack.c.h.b16 %v74
  %v193 = vunpack.c.l.b16 %v75
  %v194 = vunpack.c.h.b16 %v75
  %v195 = vunpack.c.l.b16 %v76
  %v196 = vunpack.c.h.b16 %v76
  %v197 = vunpack.c.l.b16 %v77
  %v198 = vunpack.c.h.b16 %v77
  %v199 = vunpack.c.l.b16 %v78
  %v200 = vunpack.c.h.b16 %v78
  %v201 = vunpack.c.l.b16 %v79
  %v202 = vunpack.c.h.b16 %v79
  %v203 = vunpack.c.l.b16 %v80
  %v204 = vunpack.c.h.b16 %v80
  %v205 = vunpack.c.l.b16 %v81
  %v206 = vunpack.c.h.b16 %v81
  %v207 = vunpack.c.l.b16 %v82
  %v208 = vunpack.c.h.b16 %v82
  %v209 = vunpack.c.l.b16 %v83
  %v210 = vunpack.c.h.b16 %v83
  %v211 = vunpack.c.l.b16 %v84
  %v212 = vunpack.c.h.b16 %v84
  %v213 = vunpack.c.l.b16 %v85
  %v214 = vunpack.c.h.b16 %v85
  %v215 = vpack.c.b16 %v139, %v135
  %v216 = vpack.c.b16 %v140, %v136
  %v217 = vpack.c.b16 %v141, %v137
  %v218 = vpack.c.b16 %v142, %v138
  %v219 = vpack.c.b16 %v147, %v143
  %v220 = vpack.c.b16 %v148, %v144
  %v221 = vpack.c.b16 %v149, %v145
  %v222 = vpack.c.b16 %v150, %v146
  %v223 = vpack.c.b16 %v155, %v151
  %v224 = vpack.c.b16 %v156, %v152
  %v225 = vpack.c.b16 %v157, %v153
  %v226 = vpack.c.b16 %v158, %v154
  %v227 = vpack.c.b16 %v163, %v159
  %v228 = vpack.c.b16 %v164, %v160
  %v229 = vpack.c.b16 %v165, %v161
  %v230 = vpack.c.b16 %v166, %v162
  %v231 = vpack.c.b16 %v171, %v167
  %v232 = vpack.c.b16 %v172, %v168
  %v233 = vpack.c.b16 %v173, %v169
  %v234 = vpack.c.b16 %v174, %v170
  %v235 = vpack.c.b16 %v179, %v175
  %v236 = vpack.c.b16 %v180, %v176
  %v237 = vpack.c.b16 %v181, %v177
  %v238 = vpack.c.b16 %v182, %v178
  %v239 = vpack.c.b16 %v187, %v183
  %v240 = vpack.c.b16 %v188, %v184
  %v241 = vpack.c.b16 %v189, %v185
  %v242 = vpack.c.b16 %v190, %v186
  %v243 = vpack.c.b16 %v195, %v191
  %v244 = vpack.c.b16 %v196, %v192
  %v245 = vpack.c.b16 %v197, %v193
  %v246 = vpack.c.b16 %v198, %v194
  %v247 = vpack.c.b16 %v203, %v199
  %v248 = vpack.c.b16 %v204, %v200
  %v249 = vpack.c.b16 %v205, %v201
  %v250 = vpack.c.b16 %v206, %v202
  %v251 = vpack.c.b16 %v211, %v207
  %v252 = vpack.c.b16 %v212, %v208
  %v253 = vpack.c.b16 %v213, %v209
  %v254 = vpack.c.b16 %v214, %v210
  %vm295 = vcmask 261120
  %v297 = vsel %vm295, %v93, 0
  %299 = vmatprep.subr.bf16.mxu0 %v216
  %300 = vmatpush1.bf16.msra.mxu0 %v215
  %301 = vmatprep.subr.bf16.mxu0 %v220
  %302 = vmatpush1.bf16.msra.mxu0 %v219
  %303 = vmatprep.subr.bf16.mxu0 %v224
  %304 = vmatpush1.bf16.msra.mxu0 %v223
  %305 = vmatprep.subr.bf16.mxu0 %v228
  %306 = vmatpush1.bf16.msra.mxu0 %v227
  %307 = vmatprep.subr.bf16.mxu0 %v232
  %308 = vmatpush1.bf16.msra.mxu0 %v231
  %309 = vmatprep.subr.bf16.mxu0 %v236
  %310 = vmatpush1.bf16.msra.mxu0 %v235
  %311 = vmatprep.subr.bf16.mxu0 %v240
  %312 = vmatpush1.bf16.msra.mxu0 %v239
  %313 = vmatprep.subr.bf16.mxu0 %v244
  %314 = vmatpush1.bf16.msra.mxu0 %v243
  %315 = vmatprep.subr.bf16.mxu0 %v248
  %316 = vmatpush1.bf16.msra.mxu0 %v247
  %317 = vmatprep.subr.bf16.mxu0 %v252
  %318 = vmatpush1.bf16.msra.mxu0 %v251
  %319 = vmatprep.subr.bf16.mxu0 0
  %320 = vmatpush1.bf16.msra.mxu0 0
  %321 = vmatprep.subr.bf16.mxu0 0
  %322 = vmatpush1.bf16.msra.mxu0 0
  %323 = vmatprep.subr.bf16.mxu0 0
  %324 = vmatpush1.bf16.msra.mxu0 0
  %325 = vmatprep.subr.bf16.mxu0 0
  %326 = vmatpush1.bf16.msra.mxu0 0
  %327 = vmatprep.subr.bf16.mxu0 0
  %328 = vmatpush1.bf16.msra.mxu0 0
  %329 = vmatprep.subr.bf16.mxu0 0
  %330 = vmatpush1.bf16.msra.mxu0 0
  %331 = vmatprep.mubr.bf16.mxu0 %v297
  %332 = vmatmul.mubr.bf16.gmra.mrb[0].mxu0 %v92
  %v333 = vpop.f32.mrb[0].mxu0
  %v334 = vadd.f32 0.0, %v333
  %v335 = vpop.f32.mrb[0].mxu0
  %v336 = vadd.f32 0.0, %v335
  %v337 = vpop.f32.mrb[0].mxu0
  %v338 = vadd.f32 0.0, %v337
  %v339 = vpop.f32.mrb[0].mxu0
  %v340 = vadd.f32 0.0, %v339
  %341 = vdwg.mxu0
  %342 = vmatprep.subr.bf16.mxu0 %v218
  %343 = vmatpush1.bf16.msra.mxu0 %v217
  %344 = vmatprep.subr.bf16.mxu0 %v222
  %345 = vmatpush1.bf16.msra.mxu0 %v221
  %346 = vmatprep.subr.bf16.mxu0 %v226
  %347 = vmatpush1.bf16.msra.mxu0 %v225
  %348 = vmatprep.subr.bf16.mxu0 %v230
  %349 = vmatpush1.bf16.msra.mxu0 %v229
  %350 = vmatprep.subr.bf16.mxu0 %v234
  %351 = vmatpush1.bf16.msra.mxu0 %v233
  %352 = vmatprep.subr.bf16.mxu0 %v238
  %353 = vmatpush1.bf16.msra.mxu0 %v237
  %354 = vmatprep.subr.bf16.mxu0 %v242
  %355 = vmatpush1.bf16.msra.mxu0 %v241
  %356 = vmatprep.subr.bf16.mxu0 %v246
  %357 = vmatpush1.bf16.msra.mxu0 %v245
  %358 = vmatprep.subr.bf16.mxu0 %v250
  %359 = vmatpush1.bf16.msra.mxu0 %v249
  %360 = vmatprep.subr.bf16.mxu0 %v254
  %361 = vmatpush1.bf16.msra.mxu0 %v253
  %362 = vmatprep.subr.bf16.mxu0 0
  %363 = vmatpush1.bf16.msra.mxu0 0
  %364 = vmatprep.subr.bf16.mxu0 0
  %365 = vmatpush1.bf16.msra.mxu0 0
  %366 = vmatprep.subr.bf16.mxu0 0
  %367 = vmatpush1.bf16.msra.mxu0 0
  %368 = vmatprep.subr.bf16.mxu0 0
  %369 = vmatpush1.bf16.msra.mxu0 0
  %370 = vmatprep.subr.bf16.mxu0 0
  %371 = vmatpush1.bf16.msra.mxu0 0
  %372 = vmatprep.subr.bf16.mxu0 0
  %373 = vmatpush1.bf16.msra.mxu0 0
  %374 = vmatprep.mubr.bf16.mxu0 %v297
  %375 = vmatmul.mubr.bf16.gmra.mrb[0].mxu0 %v92
  %v376 = vpop.f32.mrb[0].mxu0
  %v377 = vadd.f32 0.0, %v376
  %v378 = vpop.f32.mrb[0].mxu0
  %v379 = vadd.f32 0.0, %v378
  %v380 = vpop.f32.mrb[0].mxu0
  %v381 = vadd.f32 0.0, %v380
  %v382 = vpop.f32.mrb[0].mxu0
  %v383 = vadd.f32 0.0, %v382
  %384 = vdwg.mxu0
  %vm385 = vcmp.gt.f32.partialorder %v334, 0.0
  %vm386 = vcmp.gt.f32.partialorder %v336, 0.0
  %vm387 = vcmp.gt.f32.partialorder %v377, 0.0
  %vm388 = vcmp.gt.f32.partialorder %v379, 0.0
  %vm389 = vcmp.gt.f32.partialorder %v338, 0.0
  %vm390 = vcmp.gt.f32.partialorder %v340, 0.0
  %vm391 = vcmp.gt.f32.partialorder %v381, 0.0
  %vm392 = vcmp.gt.f32.partialorder %v383, 0.0
  %v393 = vmul.f32 %v334, 0.2
  %v394 = vmul.f32 %v336, 0.2
  %v395 = vmul.f32 %v377, 0.2
  %v396 = vmul.f32 %v379, 0.2
  %v397 = vmul.f32 %v338, 0.2
  %v398 = vmul.f32 %v340, 0.2
  %v399 = vmul.f32 %v381, 0.2
  %v400 = vmul.f32 %v383, 0.2
  %v401 = vsel %vm385, %v334, %v393
  %v402 = vsel %vm386, %v336, %v394
  %v403 = vsel %vm387, %v377, %v395
  %v404 = vsel %vm388, %v379, %v396
  %v405 = vsel %vm389, %v338, %v397
  %v406 = vsel %vm390, %v340, %v398
  %v407 = vsel %vm391, %v381, %v399
  %v408 = vsel %vm392, %v383, %v400
  %v409 = vld [vmem:[%s1] sm:$0xff]
  %v410 = vld [vmem:[%s1 + $0x8] sm:$0x77]
  %v413 = vunpack.c.l.b16 %v409
  %v414 = vunpack.c.h.b16 %v409
  %v415 = vunpack.c.l.b16 %v410
  %v416 = vunpack.c.h.b16 %v410
  %v417 = vpack.c.b16 %v415, %v413
  %v418 = vpack.c.b16 %v416, %v414
  %v421 = vsel %vm295, %v418, 0
  %423 = vmatprep.subr.bf16.mxu0 %v216
  %424 = vmatpush1.bf16.msra.mxu0 %v215
  %425 = vmatprep.subr.bf16.mxu0 %v220
  %426 = vmatpush1.bf16.msra.mxu0 %v219
  %427 = vmatprep.subr.bf16.mxu0 %v224
  %428 = vmatpush1.bf16.msra.mxu0 %v223
  %429 = vmatprep.subr.bf16.mxu0 %v228
  %430 = vmatpush1.bf16.msra.mxu0 %v227
  %431 = vmatprep.subr.bf16.mxu0 %v232
  %432 = vmatpush1.bf16.msra.mxu0 %v231
  %433 = vmatprep.subr.bf16.mxu0 %v236
  %434 = vmatpush1.bf16.msra.mxu0 %v235
  %435 = vmatprep.subr.bf16.mxu0 %v240
  %436 = vmatpush1.bf16.msra.mxu0 %v239
  %437 = vmatprep.subr.bf16.mxu0 %v244
  %438 = vmatpush1.bf16.msra.mxu0 %v243
  %439 = vmatprep.subr.bf16.mxu0 %v248
  %440 = vmatpush1.bf16.msra.mxu0 %v247
  %441 = vmatprep.subr.bf16.mxu0 %v252
  %442 = vmatpush1.bf16.msra.mxu0 %v251
  %443 = vmatprep.subr.bf16.mxu0 0
  %444 = vmatpush1.bf16.msra.mxu0 0
  %445 = vmatprep.subr.bf16.mxu0 0
  %446 = vmatpush1.bf16.msra.mxu0 0
  %447 = vmatprep.subr.bf16.mxu0 0
  %448 = vmatpush1.bf16.msra.mxu0 0
  %449 = vmatprep.subr.bf16.mxu0 0
  %450 = vmatpush1.bf16.msra.mxu0 0
  %451 = vmatprep.subr.bf16.mxu0 0
  %452 = vmatpush1.bf16.msra.mxu0 0
  %453 = vmatprep.subr.bf16.mxu0 0
  %454 = vmatpush1.bf16.msra.mxu0 0
  %455 = vmatprep.mubr.bf16.mxu0 %v421
  %456 = vmatmul.mubr.bf16.gmra.mrb[0].mxu0 %v417
  %v457 = vpop.f32.mrb[0].mxu0
  %v458 = vadd.f32 0.0, %v457
  %v459 = vpop.f32.mrb[0].mxu0
  %v460 = vadd.f32 0.0, %v459
  %v461 = vpop.f32.mrb[0].mxu0
  %v462 = vadd.f32 0.0, %v461
  %v463 = vpop.f32.mrb[0].mxu0
  %v464 = vadd.f32 0.0, %v463
  %465 = vdwg.mxu0
  %466 = vmatprep.subr.bf16.mxu0 %v218
  %467 = vmatpush1.bf16.msra.mxu0 %v217
  %468 = vmatprep.subr.bf16.mxu0 %v222
  %469 = vmatpush1.bf16.msra.mxu0 %v221
  %470 = vmatprep.subr.bf16.mxu0 %v226
  %471 = vmatpush1.bf16.msra.mxu0 %v225
  %472 = vmatprep.subr.bf16.mxu0 %v230
  %473 = vmatpush1.bf16.msra.mxu0 %v229
  %474 = vmatprep.subr.bf16.mxu0 %v234
  %475 = vmatpush1.bf16.msra.mxu0 %v233
  %476 = vmatprep.subr.bf16.mxu0 %v238
  %477 = vmatpush1.bf16.msra.mxu0 %v237
  %478 = vmatprep.subr.bf16.mxu0 %v242
  %479 = vmatpush1.bf16.msra.mxu0 %v241
  %480 = vmatprep.subr.bf16.mxu0 %v246
  %481 = vmatpush1.bf16.msra.mxu0 %v245
  %482 = vmatprep.subr.bf16.mxu0 %v250
  %483 = vmatpush1.bf16.msra.mxu0 %v249
  %484 = vmatprep.subr.bf16.mxu0 %v254
  %485 = vmatpush1.bf16.msra.mxu0 %v253
  %486 = vmatprep.subr.bf16.mxu0 0
  %487 = vmatpush1.bf16.msra.mxu0 0
  %488 = vmatprep.subr.bf16.mxu0 0
  %489 = vmatpush1.bf16.msra.mxu0 0
  %490 = vmatprep.subr.bf16.mxu0 0
  %491 = vmatpush1.bf16.msra.mxu0 0
  %492 = vmatprep.subr.bf16.mxu0 0
  %493 = vmatpush1.bf16.msra.mxu0 0
  %494 = vmatprep.subr.bf16.mxu0 0
  %495 = vmatpush1.bf16.msra.mxu0 0
  %496 = vmatprep.subr.bf16.mxu0 0
  %497 = vmatpush1.bf16.msra.mxu0 0
  %498 = vmatprep.mubr.bf16.mxu0 %v421
  %499 = vmatmul.mubr.bf16.gmra.mrb[0].mxu0 %v417
  %v500 = vpop.f32.mrb[0].mxu0
  %v501 = vadd.f32 0.0, %v500
  %v502 = vpop.f32.mrb[0].mxu0
  %v503 = vadd.f32 0.0, %v502
  %v504 = vpop.f32.mrb[0].mxu0
  %v505 = vadd.f32 0.0, %v504
  %v506 = vpop.f32.mrb[0].mxu0
  %v507 = vadd.f32 0.0, %v506
  %508 = vdwg.mxu0
  %vm509 = vcmp.gt.f32.partialorder %v458, 0.0
  %vm510 = vcmp.gt.f32.partialorder %v460, 0.0
  %vm511 = vcmp.gt.f32.partialorder %v501, 0.0
  %vm512 = vcmp.gt.f32.partialorder %v503, 0.0
  %vm513 = vcmp.gt.f32.partialorder %v462, 0.0
  %vm514 = vcmp.gt.f32.partialorder %v464, 0.0
  %vm515 = vcmp.gt.f32.partialorder %v505, 0.0
  %vm516 = vcmp.gt.f32.partialorder %v507, 0.0
  %v517 = vmul.f32 %v458, 0.2
  %v518 = vmul.f32 %v460, 0.2
  %v519 = vmul.f32 %v501, 0.2
  %v520 = vmul.f32 %v503, 0.2
  %v521 = vmul.f32 %v462, 0.2
  %v522 = vmul.f32 %v464, 0.2
  %v523 = vmul.f32 %v505, 0.2
  %v524 = vmul.f32 %v507, 0.2
  %v525 = vsel %vm509, %v458, %v517
  %v526 = vsel %vm510, %v460, %v518
  %v527 = vsel %vm511, %v501, %v519
  %v528 = vsel %vm512, %v503, %v520
  %v529 = vsel %vm513, %v462, %v521
  %v530 = vsel %vm514, %v464, %v522
  %v531 = vsel %vm515, %v505, %v523
  %v532 = vsel %vm516, %v507, %v524
  %533 = vst [vmem:[#allocation2] sm:$0xff] 0.0
  %534 = vst [vmem:[#allocation2 + $0x8] sm:$0xff] 0.0
  %535 = vst [vmem:[#allocation2 + $0x10] sm:$0xff] 0.0
  %536 = vst [vmem:[#allocation2 + $0x18] sm:$0xff] 0.0
  %vm537 = vcmask 523264
  %538 = vst.msk [vmem:[#allocation2 + $0x20] sm:$0xff] %vm537, 0.0
  %539 = vst [vmem:[#allocation2 + $0x28] sm:$0xff] 0.0
  %540 = vst [vmem:[#allocation2 + $0x30] sm:$0xff] 0.0
  %541 = vst [vmem:[#allocation2 + $0x38] sm:$0xff] 0.0
  %542 = vst [vmem:[#allocation2 + $0x40] sm:$0xff] 0.0
  %543 = vst.msk [vmem:[#allocation2 + $0x48] sm:$0xff] %vm537, 0.0
  %544 = vst [vmem:[#allocation2 + $0x50] sm:$0x3] 0.0
  %545 = vst [vmem:[#allocation2 + $0x58] sm:$0x3] 0.0
  %546 = vst [vmem:[#allocation2 + $0x60] sm:$0x3] 0.0
  %547 = vst [vmem:[#allocation2 + $0x68] sm:$0x3] 0.0
  %vm548 = vcmask 517120
  %549 = vst.msk [vmem:[#allocation2 + $0x70] sm:$0x3] %vm548, 0.0
  %550 = vst [vmem:[#allocation3] sm:$0xff] 0.0
  %551 = vst [vmem:[#allocation3 + $0x8] sm:$0xff] 0.0
  %552 = vst [vmem:[#allocation3 + $0x10] sm:$0xff] 0.0
  %553 = vst [vmem:[#allocation3 + $0x18] sm:$0xff] 0.0
  %554 = vst.msk [vmem:[#allocation3 + $0x20] sm:$0xff] %vm537, 0.0
  %555 = vst [vmem:[#allocation3 + $0x28] sm:$0xff] 0.0
  %556 = vst [vmem:[#allocation3 + $0x30] sm:$0xff] 0.0
  %557 = vst [vmem:[#allocation3 + $0x38] sm:$0xff] 0.0
  %558 = vst [vmem:[#allocation3 + $0x40] sm:$0xff] 0.0
  %559 = vst.msk [vmem:[#allocation3 + $0x48] sm:$0xff] %vm537, 0.0
  %560 = vst [vmem:[#allocation3 + $0x50] sm:$0x3] 0.0
  %561 = vst [vmem:[#allocation3 + $0x58] sm:$0x3] 0.0
  %562 = vst [vmem:[#allocation3 + $0x60] sm:$0x3] 0.0
  %563 = vst [vmem:[#allocation3 + $0x68] sm:$0x3] 0.0
  %564 = vst.msk [vmem:[#allocation3 + $0x70] sm:$0x3] %vm548, 0.0
  %vm573 = vcmask 1041408
  %v574 = vrot.slane %v401, 6
  %v575 = vrot.slane %v402, 6
  %v576 = vrot.slane %v403, 6
  %v577 = vrot.slane %v404, 6
  %v578 = vrot.slane %v405, 6
  %v579 = vsel %vm573, %v574, %v578
  %v580 = vrot.slane %v406, 6
  %v581 = vsel %vm573, %v575, %v580
  %v582 = vrot.slane %v407, 6
  %v583 = vsel %vm573, %v576, %v582
  %v584 = vrot.slane %v408, 6
  %v585 = vsel %vm573, %v577, %v584
  %586 = vrot.lane.b32.xlu0 %v574, 64
  %v587 = vpop.permute.xlu0 %586
  %588 = vrot.lane.b32.xlu0 %v575, 64
  %v589 = vpop.permute.xlu0 %588
  %590 = vrot.lane.b32.xlu0 %v576, 64
  %v591 = vpop.permute.xlu0 %590
  %592 = vrot.lane.b32.xlu0 %v577, 64
  %v593 = vpop.permute.xlu0 %592
  %594 = vrot.lane.b32.xlu0 %v579, 64
  %v595 = vpop.permute.xlu0 %594
  %596 = vrot.lane.b32.xlu0 %v581, 64
  %v597 = vpop.permute.xlu0 %596
  %598 = vrot.lane.b32.xlu0 %v583, 64
  %v599 = vpop.permute.xlu0 %598
  %600 = vrot.lane.b32.xlu0 %v585, 64
  %v601 = vpop.permute.xlu0 %600
  %v602 = vsel %vm537, %v587, %v589
  %v603 = vsel %vm537, %v589, %v591
  %v604 = vsel %vm537, %v591, %v593
  %v605 = vsel %vm537, %v595, %v597
  %v606 = vsel %vm537, %v597, %v599
  %v607 = vsel %vm537, %v599, %v601
  %vm616 = vcmask 1048066
  %617 = vst.msk [vmem:[#allocation2] sm:$0xfc] %vm616, %v587
  %618 = vst [vmem:[#allocation2 + $0x8] sm:$0xfc] %v602
  %619 = vst [vmem:[#allocation2 + $0x10] sm:$0xfc] %v603
  %620 = vst [vmem:[#allocation2 + $0x18] sm:$0xfc] %v604
  %vm621 = vcmask 1048064
  %622 = vst.msk [vmem:[#allocation2 + $0x28] sm:$0xff] %vm621, %v595
  %623 = vst [vmem:[#allocation2 + $0x30] sm:$0xff] %v605
  %624 = vst [vmem:[#allocation2 + $0x38] sm:$0xff] %v606
  %625 = vst [vmem:[#allocation2 + $0x40] sm:$0xff] %v607
  %v634 = vrot.slane %v525, 6
  %v635 = vrot.slane %v526, 6
  %v636 = vrot.slane %v527, 6
  %v637 = vrot.slane %v528, 6
  %v638 = vrot.slane %v529, 6
  %v639 = vsel %vm573, %v634, %v638
  %v640 = vrot.slane %v530, 6
  %v641 = vsel %vm573, %v635, %v640
  %v642 = vrot.slane %v531, 6
  %v643 = vsel %vm573, %v636, %v642
  %v644 = vrot.slane %v532, 6
  %v645 = vsel %vm573, %v637, %v644
  %646 = vrot.lane.b32.xlu0 %v634, 64
  %v647 = vpop.permute.xlu0 %646
  %648 = vrot.lane.b32.xlu0 %v635, 64
  %v649 = vpop.permute.xlu0 %648
  %650 = vrot.lane.b32.xlu0 %v636, 64
  %v651 = vpop.permute.xlu0 %650
  %652 = vrot.lane.b32.xlu0 %v637, 64
  %v653 = vpop.permute.xlu0 %652
  %654 = vrot.lane.b32.xlu0 %v639, 64
  %v655 = vpop.permute.xlu0 %654
  %656 = vrot.lane.b32.xlu0 %v641, 64
  %v657 = vpop.permute.xlu0 %656
  %658 = vrot.lane.b32.xlu0 %v643, 64
  %v659 = vpop.permute.xlu0 %658
  %660 = vrot.lane.b32.xlu0 %v645, 64
  %v661 = vpop.permute.xlu0 %660
  %v662 = vsel %vm537, %v647, %v649
  %v663 = vsel %vm537, %v649, %v651
  %v664 = vsel %vm537, %v651, %v653
  %v665 = vsel %vm537, %v655, %v657
  %v666 = vsel %vm537, %v657, %v659
  %v667 = vsel %vm537, %v659, %v661
  %676 = vst.msk [vmem:[#allocation3] sm:$0xfc] %vm616, %v647
  %677 = vst [vmem:[#allocation3 + $0x8] sm:$0xfc] %v662
  %678 = vst [vmem:[#allocation3 + $0x10] sm:$0xfc] %v663
  %679 = vst [vmem:[#allocation3 + $0x18] sm:$0xfc] %v664
  %680 = vst.msk [vmem:[#allocation3 + $0x28] sm:$0xff] %vm621, %v655
  %681 = vst [vmem:[#allocation3 + $0x30] sm:$0xff] %v665
  %682 = vst [vmem:[#allocation3 + $0x38] sm:$0xff] %v666
  %683 = vst [vmem:[#allocation3 + $0x40] sm:$0xff] %v667
  %v684 = vld [vmem:[#allocation2] sm:$0xff]
  %v685 = vld [vmem:[#allocation2 + $0x8] sm:$0xff]
  %v686 = vld [vmem:[#allocation2 + $0x10] sm:$0xff]
  %v687 = vld [vmem:[#allocation2 + $0x18] sm:$0xff]
  %v688 = vld [vmem:[#allocation2 + $0x20] sm:$0xff]
  %v689 = vld [vmem:[#allocation2 + $0x28] sm:$0x3f]
  %v690 = vld [vmem:[#allocation2 + $0x30] sm:$0x3f]
  %v691 = vld [vmem:[#allocation2 + $0x38] sm:$0x3f]
  %v692 = vld [vmem:[#allocation2 + $0x40] sm:$0x3f]
  %v693 = vld [vmem:[#allocation2 + $0x48] sm:$0x3f]
  %v694 = vpack.c.bf16 %v689, %v684
  %v695 = vpack.c.bf16 %v690, %v685
  %v696 = vpack.c.bf16 %v691, %v686
  %v697 = vpack.c.bf16 %v692, %v687
  %v698 = vpack.c.bf16 %v693, %v688
  %v699 = vld [vmem:[%s3] sm:$0xff]
  %v700 = vld [vmem:[%s3 + $0x8] sm:$0xff]
  %v701 = vld [vmem:[%s3 + $0x10] sm:$0xff]
  %v702 = vld [vmem:[%s3 + $0x18] sm:$0xff]
  %v703 = vld [vmem:[%s3 + $0x20] sm:$0xff]
  %v704 = vld [vmem:[%s3 + $0x28] sm:$0xff]
  %v705 = vld [vmem:[%s3 + $0x30] sm:$0xff]
  %v706 = vld [vmem:[%s3 + $0x38] sm:$0xff]
  %v707 = vld [vmem:[%s3 + $0x40] sm:$0xff]
  %v708 = vld [vmem:[%s3 + $0x48] sm:$0xff]
  %v709 = vld [vmem:[%s3 + $0x50] sm:$0xff]
  %v710 = vld [vmem:[%s3 + $0x58] sm:$0xff]
  %v711 = vld [vmem:[%s3 + $0x60] sm:$0xff]
  %v712 = vld [vmem:[%s3 + $0x68] sm:$0xff]
  %v713 = vld [vmem:[%s3 + $0x70] sm:$0xff]
  %v714 = vld [vmem:[%s3 + $0x78] sm:$0xff]
  %v715 = vld [vmem:[%s3 + $0x80] sm:$0xff]
  %v716 = vld [vmem:[%s3 + $0x88] sm:$0xff]
  %v717 = vld [vmem:[%s3 + $0x90] sm:$0xff]
  %v718 = vld [vmem:[%s3 + $0x98] sm:$0xff]
  %v719 = vld [vmem:[%s3 + $0xa0] sm:$0xff]
  %v720 = vld [vmem:[%s3 + $0xa8] sm:$0xff]
  %v721 = vld [vmem:[%s3 + $0xb0] sm:$0xff]
  %v722 = vld [vmem:[%s3 + $0xb8] sm:$0xff]
  %v723 = vld [vmem:[%s3 + $0xc0] sm:$0xff]
  %v724 = vld [vmem:[%s3 + $0xc8] sm:$0xff]
  %v725 = vld [vmem:[%s3 + $0xd0] sm:$0xff]
  %v726 = vld [vmem:[%s3 + $0xd8] sm:$0xff]
  %v727 = vld [vmem:[%s3 + $0xe0] sm:$0xff]
  %v728 = vld [vmem:[%s3 + $0xe8] sm:$0xff]
  %v729 = vld [vmem:[%s3 + $0xf0] sm:$0xff]
  %v730 = vld [vmem:[%s3 + $0xf8] sm:$0xff]
  %v731 = vld [vmem:[%s3 + $0x100] sm:$0xff]
  %v732 = vld [vmem:[%s3 + $0x108] sm:$0xff]
  %v733 = vld [vmem:[%s3 + $0x110] sm:$0xff]
  %v734 = vld [vmem:[%s3 + $0x118] sm:$0xff]
  %v735 = vld [vmem:[%s3 + $0x120] sm:$0xff]
  %v736 = vld [vmem:[%s3 + $0x128] sm:$0xff]
  %v737 = vld [vmem:[%s3 + $0x130] sm:$0xff]
  %v738 = vld [vmem:[%s3 + $0x138] sm:$0xff]
  %v739 = vld [vmem:[%s3 + $0x140] sm:$0xff]
  %v740 = vld [vmem:[%s3 + $0x148] sm:$0xff]
  %v741 = vld [vmem:[%s3 + $0x150] sm:$0xff]
  %v742 = vld [vmem:[%s3 + $0x158] sm:$0xff]
  %v743 = vld [vmem:[%s3 + $0x160] sm:$0xff]
  %v744 = vld [vmem:[%s3 + $0x168] sm:$0xff]
  %v745 = vld [vmem:[%s3 + $0x170] sm:$0xff]
  %v746 = vld [vmem:[%s3 + $0x178] sm:$0xff]
  %v747 = vld [vmem:[%s3 + $0x180] sm:$0xff]
  %v748 = vld [vmem:[%s3 + $0x188] sm:$0xff]
  %v749 = vld [vmem:[%s3 + $0x190] sm:$0xff]
  %v750 = vld [vmem:[%s3 + $0x198] sm:$0xff]
  %v751 = vld [vmem:[%s3 + $0x1a0] sm:$0xff]
  %v752 = vld [vmem:[%s3 + $0x1a8] sm:$0xff]
  %v753 = vld [vmem:[%s3 + $0x1b0] sm:$0xff]
  %v754 = vld [vmem:[%s3 + $0x1b8] sm:$0xff]
  %v755 = vld [vmem:[%s3 + $0x1c0] sm:$0xff]
  %v756 = vld [vmem:[%s3 + $0x1c8] sm:$0xff]
  %v757 = vld [vmem:[%s3 + $0x1d0] sm:$0xff]
  %v758 = vld [vmem:[%s3 + $0x1d8] sm:$0xff]
  %v759 = vld [vmem:[%s3 + $0x1e0] sm:$0xff]
  %v760 = vld [vmem:[%s3 + $0x1e8] sm:$0xff]
  %v761 = vld [vmem:[%s3 + $0x1f0] sm:$0xff]
  %v762 = vld [vmem:[%s3 + $0x1f8] sm:$0xff]
  %v763 = vld [vmem:[%s3 + $0x200] sm:$0xff]
  %v764 = vld [vmem:[%s3 + $0x208] sm:$0xff]
  %v765 = vld [vmem:[%s3 + $0x210] sm:$0xff]
  %v766 = vld [vmem:[%s3 + $0x218] sm:$0xff]
  %v767 = vld [vmem:[%s3 + $0x220] sm:$0xff]
  %v768 = vld [vmem:[%s3 + $0x228] sm:$0xff]
  %v769 = vld [vmem:[%s3 + $0x230] sm:$0xff]
  %v770 = vld [vmem:[%s3 + $0x238] sm:$0xff]
  %v771 = vld [vmem:[%s3 + $0x240] sm:$0xff]
  %v772 = vld [vmem:[%s3 + $0x248] sm:$0xff]
  %v773 = vld [vmem:[%s3 + $0x250] sm:$0xff]
  %v774 = vld [vmem:[%s3 + $0x258] sm:$0xff]
  %v775 = vld [vmem:[%s3 + $0x260] sm:$0xff]
  %v776 = vld [vmem:[%s3 + $0x268] sm:$0xff]
  %v777 = vld [vmem:[%s3 + $0x270] sm:$0xff]
  %v778 = vld [vmem:[%s3 + $0x278] sm:$0xff]
  %v779 = vld [vmem:[%s3 + $0x280] sm:$0xff]
  %v780 = vld [vmem:[%s3 + $0x288] sm:$0xff]
  %v781 = vld [vmem:[%s3 + $0x290] sm:$0xff]
  %v782 = vld [vmem:[%s3 + $0x298] sm:$0xff]
  %v783 = vld [vmem:[%s3 + $0x2a0] sm:$0xff]
  %v784 = vld [vmem:[%s3 + $0x2a8] sm:$0xff]
  %v785 = vld [vmem:[%s3 + $0x2b0] sm:$0xff]
  %v786 = vld [vmem:[%s3 + $0x2b8] sm:$0xff]
  %v787 = vld [vmem:[%s3 + $0x2c0] sm:$0xff]
  %v788 = vld [vmem:[%s3 + $0x2c8] sm:$0xff]
  %v789 = vld [vmem:[%s3 + $0x2d0] sm:$0xff]
  %v790 = vld [vmem:[%s3 + $0x2d8] sm:$0xff]
  %v791 = vld [vmem:[%s3 + $0x2e0] sm:$0xff]
  %v792 = vld [vmem:[%s3 + $0x2e8] sm:$0xff]
  %v793 = vld [vmem:[%s3 + $0x2f0] sm:$0xff]
  %v794 = vld [vmem:[%s3 + $0x2f8] sm:$0xff]
  %v795 = vld [vmem:[%s3 + $0x300] sm:$0xff]
  %v796 = vld [vmem:[%s3 + $0x308] sm:$0xff]
  %v797 = vld [vmem:[%s3 + $0x310] sm:$0xff]
  %v798 = vld [vmem:[%s3 + $0x318] sm:$0xff]
  %v799 = vld [vmem:[%s3 + $0x320] sm:$0xff]
  %v800 = vld [vmem:[%s3 + $0x328] sm:$0xff]
  %v801 = vld [vmem:[%s3 + $0x330] sm:$0xff]
  %v802 = vld [vmem:[%s3 + $0x338] sm:$0xff]
  %v803 = vld [vmem:[%s3 + $0x340] sm:$0xff]
  %v804 = vld [vmem:[%s3 + $0x348] sm:$0xff]
  %v805 = vld [vmem:[%s3 + $0x350] sm:$0xff]
  %v806 = vld [vmem:[%s3 + $0x358] sm:$0xff]
  %v807 = vld [vmem:[%s3 + $0x360] sm:$0xff]
  %v808 = vld [vmem:[%s3 + $0x368] sm:$0xff]
  %v809 = vld [vmem:[%s3 + $0x370] sm:$0xff]
  %v810 = vld [vmem:[%s3 + $0x378] sm:$0xff]
  %v811 = vld [vmem:[%s3 + $0x380] sm:$0xff]
  %v812 = vld [vmem:[%s3 + $0x388] sm:$0xff]
  %v813 = vld [vmem:[%s3 + $0x390] sm:$0xff]
  %v814 = vld [vmem:[%s3 + $0x398] sm:$0xff]
  %v815 = vld [vmem:[%s3 + $0x3a0] sm:$0xff]
  %v816 = vld [vmem:[%s3 + $0x3a8] sm:$0xff]
  %v817 = vld [vmem:[%s3 + $0x3b0] sm:$0xff]
  %v818 = vld [vmem:[%s3 + $0x3b8] sm:$0xff]
  %v819 = vld [vmem:[%s3 + $0x3c0] sm:$0xff]
  %v820 = vld [vmem:[%s3 + $0x3c8] sm:$0xff]
  %v821 = vld [vmem:[%s3 + $0x3d0] sm:$0xff]
  %v822 = vld [vmem:[%s3 + $0x3d8] sm:$0xff]
  %v823 = vld [vmem:[%s3 + $0x3e0] sm:$0xff]
  %v824 = vld [vmem:[%s3 + $0x3e8] sm:$0xff]
  %v825 = vld [vmem:[%s3 + $0x3f0] sm:$0xff]
  %v826 = vld [vmem:[%s3 + $0x3f8] sm:$0xff]
  %v827 = vld [vmem:[%s3 + $0x400] sm:$0xff]
  %v828 = vld [vmem:[%s3 + $0x408] sm:$0xff]
  %v829 = vld [vmem:[%s3 + $0x410] sm:$0xff]
  %v830 = vld [vmem:[%s3 + $0x418] sm:$0xff]
  %v831 = vld [vmem:[%s3 + $0x420] sm:$0xff]
  %v832 = vld [vmem:[%s3 + $0x428] sm:$0xff]
  %v833 = vld [vmem:[%s3 + $0x430] sm:$0xff]
  %v834 = vld [vmem:[%s3 + $0x438] sm:$0xff]
  %v835 = vld [vmem:[%s3 + $0x440] sm:$0xff]
  %v836 = vld [vmem:[%s3 + $0x448] sm:$0xff]
  %v837 = vld [vmem:[%s3 + $0x450] sm:$0xff]
  %v838 = vld [vmem:[%s3 + $0x458] sm:$0xff]
  %v839 = vld [vmem:[%s3 + $0x460] sm:$0xff]
  %v840 = vld [vmem:[%s3 + $0x468] sm:$0xff]
  %v841 = vld [vmem:[%s3 + $0x470] sm:$0xff]
  %v842 = vld [vmem:[%s3 + $0x478] sm:$0xff]
  %v843 = vld [vmem:[#allocation3] sm:$0xff]
  %v844 = vld [vmem:[#allocation3 + $0x8] sm:$0xff]
  %v845 = vld [vmem:[#allocation3 + $0x10] sm:$0xff]
  %v846 = vld [vmem:[#allocation3 + $0x18] sm:$0xff]
  %v847 = vld [vmem:[#allocation3 + $0x20] sm:$0xff]
  %v848 = vld [vmem:[#allocation3 + $0x28] sm:$0x3f]
  %v849 = vld [vmem:[#allocation3 + $0x30] sm:$0x3f]
  %v850 = vld [vmem:[#allocation3 + $0x38] sm:$0x3f]
  %v851 = vld [vmem:[#allocation3 + $0x40] sm:$0x3f]
  %v852 = vld [vmem:[#allocation3 + $0x48] sm:$0x3f]
  %v853 = vpack.c.bf16 %v848, %v843
  %v854 = vpack.c.bf16 %v849, %v844
  %v855 = vpack.c.bf16 %v850, %v845
  %v856 = vpack.c.bf16 %v851, %v846
  %v857 = vpack.c.bf16 %v852, %v847
  %s858 = scalar_lea.vmem %s3, 1152
  %v859 = vld [vmem:[%s858] sm:$0xff]
  %v860 = vld [vmem:[%s858 + $0x8] sm:$0xff]
  %v861 = vld [vmem:[%s858 + $0x10] sm:$0xff]
  %v862 = vld [vmem:[%s858 + $0x18] sm:$0xff]
  %v863 = vld [vmem:[%s858 + $0x20] sm:$0xff]
  %v864 = vld [vmem:[%s858 + $0x28] sm:$0xff]
  %v865 = vld [vmem:[%s858 + $0x30] sm:$0xff]
  %v866 = vld [vmem:[%s858 + $0x38] sm:$0xff]
  %v867 = vld [vmem:[%s858 + $0x40] sm:$0xff]
  %v868 = vld [vmem:[%s858 + $0x48] sm:$0xff]
  %v869 = vld [vmem:[%s858 + $0x50] sm:$0xff]
  %v870 = vld [vmem:[%s858 + $0x58] sm:$0xff]
  %v871 = vld [vmem:[%s858 + $0x60] sm:$0xff]
  %v872 = vld [vmem:[%s858 + $0x68] sm:$0xff]
  %v873 = vld [vmem:[%s858 + $0x70] sm:$0xff]
  %v874 = vld [vmem:[%s858 + $0x78] sm:$0xff]
  %v875 = vld [vmem:[%s858 + $0x80] sm:$0xff]
  %v876 = vld [vmem:[%s858 + $0x88] sm:$0xff]
  %v877 = vld [vmem:[%s858 + $0x90] sm:$0xff]
  %v878 = vld [vmem:[%s858 + $0x98] sm:$0xff]
  %v879 = vld [vmem:[%s858 + $0xa0] sm:$0xff]
  %v880 = vld [vmem:[%s858 + $0xa8] sm:$0xff]
  %v881 = vld [vmem:[%s858 + $0xb0] sm:$0xff]
  %v882 = vld [vmem:[%s858 + $0xb8] sm:$0xff]
  %v883 = vld [vmem:[%s858 + $0xc0] sm:$0xff]
  %v884 = vld [vmem:[%s858 + $0xc8] sm:$0xff]
  %v885 = vld [vmem:[%s858 + $0xd0] sm:$0xff]
  %v886 = vld [vmem:[%s858 + $0xd8] sm:$0xff]
  %v887 = vld [vmem:[%s858 + $0xe0] sm:$0xff]
  %v888 = vld [vmem:[%s858 + $0xe8] sm:$0xff]
  %v889 = vld [vmem:[%s858 + $0xf0] sm:$0xff]
  %v890 = vld [vmem:[%s858 + $0xf8] sm:$0xff]
  %v891 = vld [vmem:[%s858 + $0x100] sm:$0xff]
  %v892 = vld [vmem:[%s858 + $0x108] sm:$0xff]
  %v893 = vld [vmem:[%s858 + $0x110] sm:$0xff]
  %v894 = vld [vmem:[%s858 + $0x118] sm:$0xff]
  %v895 = vld [vmem:[%s858 + $0x120] sm:$0xff]
  %v896 = vld [vmem:[%s858 + $0x128] sm:$0xff]
  %v897 = vld [vmem:[%s858 + $0x130] sm:$0xff]
  %v898 = vld [vmem:[%s858 + $0x138] sm:$0xff]
  %v899 = vld [vmem:[%s858 + $0x140] sm:$0xff]
  %v900 = vld [vmem:[%s858 + $0x148] sm:$0xff]
  %v901 = vld [vmem:[%s858 + $0x150] sm:$0xff]
  %v902 = vld [vmem:[%s858 + $0x158] sm:$0xff]
  %v903 = vld [vmem:[%s858 + $0x160] sm:$0xff]
  %v904 = vld [vmem:[%s858 + $0x168] sm:$0xff]
  %v905 = vld [vmem:[%s858 + $0x170] sm:$0xff]
  %v906 = vld [vmem:[%s858 + $0x178] sm:$0xff]
  %v907 = vld [vmem:[%s858 + $0x180] sm:$0xff]
  %v908 = vld [vmem:[%s858 + $0x188] sm:$0xff]
  %v909 = vld [vmem:[%s858 + $0x190] sm:$0xff]
  %v910 = vld [vmem:[%s858 + $0x198] sm:$0xff]
  %v911 = vld [vmem:[%s858 + $0x1a0] sm:$0xff]
  %v912 = vld [vmem:[%s858 + $0x1a8] sm:$0xff]
  %v913 = vld [vmem:[%s858 + $0x1b0] sm:$0xff]
  %v914 = vld [vmem:[%s858 + $0x1b8] sm:$0xff]
  %v915 = vld [vmem:[%s858 + $0x1c0] sm:$0xff]
  %v916 = vld [vmem:[%s858 + $0x1c8] sm:$0xff]
  %v917 = vld [vmem:[%s858 + $0x1d0] sm:$0xff]
  %v918 = vld [vmem:[%s858 + $0x1d8] sm:$0xff]
  %v919 = vld [vmem:[%s858 + $0x1e0] sm:$0xff]
  %v920 = vld [vmem:[%s858 + $0x1e8] sm:$0xff]
  %v921 = vld [vmem:[%s858 + $0x1f0] sm:$0xff]
  %v922 = vld [vmem:[%s858 + $0x1f8] sm:$0xff]
  %v923 = vld [vmem:[%s858 + $0x200] sm:$0xff]
  %v924 = vld [vmem:[%s858 + $0x208] sm:$0xff]
  %v925 = vld [vmem:[%s858 + $0x210] sm:$0xff]
  %v926 = vld [vmem:[%s858 + $0x218] sm:$0xff]
  %v927 = vld [vmem:[%s858 + $0x220] sm:$0xff]
  %v928 = vld [vmem:[%s858 + $0x228] sm:$0xff]
  %v929 = vld [vmem:[%s858 + $0x230] sm:$0xff]
  %v930 = vld [vmem:[%s858 + $0x238] sm:$0xff]
  %v931 = vld [vmem:[%s858 + $0x240] sm:$0xff]
  %v932 = vld [vmem:[%s858 + $0x248] sm:$0xff]
  %v933 = vld [vmem:[%s858 + $0x250] sm:$0xff]
  %v934 = vld [vmem:[%s858 + $0x258] sm:$0xff]
  %v935 = vld [vmem:[%s858 + $0x260] sm:$0xff]
  %v936 = vld [vmem:[%s858 + $0x268] sm:$0xff]
  %v937 = vld [vmem:[%s858 + $0x270] sm:$0xff]
  %v938 = vld [vmem:[%s858 + $0x278] sm:$0xff]
  %v939 = vld [vmem:[%s858 + $0x280] sm:$0xff]
  %v940 = vld [vmem:[%s858 + $0x288] sm:$0xff]
  %v941 = vld [vmem:[%s858 + $0x290] sm:$0xff]
  %v942 = vld [vmem:[%s858 + $0x298] sm:$0xff]
  %v943 = vld [vmem:[%s858 + $0x2a0] sm:$0xff]
  %v944 = vld [vmem:[%s858 + $0x2a8] sm:$0xff]
  %v945 = vld [vmem:[%s858 + $0x2b0] sm:$0xff]
  %v946 = vld [vmem:[%s858 + $0x2b8] sm:$0xff]
  %v947 = vld [vmem:[%s858 + $0x2c0] sm:$0xff]
  %v948 = vld [vmem:[%s858 + $0x2c8] sm:$0xff]
  %v949 = vld [vmem:[%s858 + $0x2d0] sm:$0xff]
  %v950 = vld [vmem:[%s858 + $0x2d8] sm:$0xff]
  %v951 = vld [vmem:[%s858 + $0x2e0] sm:$0xff]
  %v952 = vld [vmem:[%s858 + $0x2e8] sm:$0xff]
  %v953 = vld [vmem:[%s858 + $0x2f0] sm:$0xff]
  %v954 = vld [vmem:[%s858 + $0x2f8] sm:$0xff]
  %v955 = vld [vmem:[%s858 + $0x300] sm:$0xff]
  %v956 = vld [vmem:[%s858 + $0x308] sm:$0xff]
  %v957 = vld [vmem:[%s858 + $0x310] sm:$0xff]
  %v958 = vld [vmem:[%s858 + $0x318] sm:$0xff]
  %v959 = vld [vmem:[%s858 + $0x320] sm:$0xff]
  %v960 = vld [vmem:[%s858 + $0x328] sm:$0xff]
  %v961 = vld [vmem:[%s858 + $0x330] sm:$0xff]
  %v962 = vld [vmem:[%s858 + $0x338] sm:$0xff]
  %v963 = vld [vmem:[%s858 + $0x340] sm:$0xff]
  %v964 = vld [vmem:[%s858 + $0x348] sm:$0xff]
  %v965 = vld [vmem:[%s858 + $0x350] sm:$0xff]
  %v966 = vld [vmem:[%s858 + $0x358] sm:$0xff]
  %v967 = vld [vmem:[%s858 + $0x360] sm:$0xff]
  %v968 = vld [vmem:[%s858 + $0x368] sm:$0xff]
  %v969 = vld [vmem:[%s858 + $0x370] sm:$0xff]
  %v970 = vld [vmem:[%s858 + $0x378] sm:$0xff]
  %v971 = vld [vmem:[%s858 + $0x380] sm:$0xff]
  %v972 = vld [vmem:[%s858 + $0x388] sm:$0xff]
  %v973 = vld [vmem:[%s858 + $0x390] sm:$0xff]
  %v974 = vld [vmem:[%s858 + $0x398] sm:$0xff]
  %v975 = vld [vmem:[%s858 + $0x3a0] sm:$0xff]
  %v976 = vld [vmem:[%s858 + $0x3a8] sm:$0xff]
  %v977 = vld [vmem:[%s858 + $0x3b0] sm:$0xff]
  %v978 = vld [vmem:[%s858 + $0x3b8] sm:$0xff]
  %v979 = vld [vmem:[%s858 + $0x3c0] sm:$0xff]
  %v980 = vld [vmem:[%s858 + $0x3c8] sm:$0xff]
  %v981 = vld [vmem:[%s858 + $0x3d0] sm:$0xff]
  %v982 = vld [vmem:[%s858 + $0x3d8] sm:$0xff]
  %v983 = vld [vmem:[%s858 + $0x3e0] sm:$0xff]
  %v984 = vld [vmem:[%s858 + $0x3e8] sm:$0xff]
  %v985 = vld [vmem:[%s858 + $0x3f0] sm:$0xff]
  %v986 = vld [vmem:[%s858 + $0x3f8] sm:$0xff]
  %v987 = vld [vmem:[%s858 + $0x400] sm:$0xff]
  %v988 = vld [vmem:[%s858 + $0x408] sm:$0xff]
  %v989 = vld [vmem:[%s858 + $0x410] sm:$0xff]
  %v990 = vld [vmem:[%s858 + $0x418] sm:$0xff]
  %v991 = vld [vmem:[%s858 + $0x420] sm:$0xff]
  %v992 = vld [vmem:[%s858 + $0x428] sm:$0xff]
  %v993 = vld [vmem:[%s858 + $0x430] sm:$0xff]
  %v994 = vld [vmem:[%s858 + $0x438] sm:$0xff]
  %v995 = vld [vmem:[%s858 + $0x440] sm:$0xff]
  %v996 = vld [vmem:[%s858 + $0x448] sm:$0xff]
  %v997 = vld [vmem:[%s858 + $0x450] sm:$0xff]
  %v998 = vld [vmem:[%s858 + $0x458] sm:$0xff]
  %v999 = vld [vmem:[%s858 + $0x460] sm:$0xff]
  %v1000 = vld [vmem:[%s858 + $0x468] sm:$0xff]
  %v1001 = vld [vmem:[%s858 + $0x470] sm:$0xff]
  %v1002 = vld [vmem:[%s858 + $0x478] sm:$0xff]
  %v1147 = vunpack.c.l.b16 %v859
  %v1148 = vunpack.c.h.b16 %v859
  %v1149 = vunpack.c.l.b16 %v860
  %v1150 = vunpack.c.h.b16 %v860
  %v1151 = vunpack.c.l.b16 %v861
  %v1152 = vunpack.c.h.b16 %v861
  %v1153 = vunpack.c.l.b16 %v862
  %v1154 = vunpack.c.h.b16 %v862
  %v1155 = vunpack.c.l.b16 %v863
  %v1156 = vunpack.c.h.b16 %v863
  %v1157 = vunpack.c.l.b16 %v864
  %v1158 = vunpack.c.h.b16 %v864
  %v1159 = vunpack.c.l.b16 %v865
  %v1160 = vunpack.c.h.b16 %v865
  %v1161 = vunpack.c.l.b16 %v866
  %v1162 = vunpack.c.h.b16 %v866
  %v1163 = vunpack.c.l.b16 %v867
  %v1164 = vunpack.c.h.b16 %v867
  %v1165 = vunpack.c.l.b16 %v868
  %v1166 = vunpack.c.h.b16 %v868
  %v1167 = vunpack.c.l.b16 %v869
  %v1168 = vunpack.c.h.b16 %v869
  %v1169 = vunpack.c.l.b16 %v870
  %v1170 = vunpack.c.h.b16 %v870
  %v1171 = vunpack.c.l.b16 %v871
  %v1172 = vunpack.c.h.b16 %v871
  %v1173 = vunpack.c.l.b16 %v872
  %v1174 = vunpack.c.h.b16 %v872
  %v1175 = vunpack.c.l.b16 %v873
  %v1176 = vunpack.c.h.b16 %v873
  %v1177 = vunpack.c.l.b16 %v874
  %v1178 = vunpack.c.h.b16 %v874
  %v1179 = vunpack.c.l.b16 %v875
  %v1180 = vunpack.c.h.b16 %v875
  %v1181 = vunpack.c.l.b16 %v876
  %v1182 = vunpack.c.h.b16 %v876
  %v1183 = vunpack.c.l.b16 %v877
  %v1184 = vunpack.c.h.b16 %v877
  %v1185 = vunpack.c.l.b16 %v878
  %v1186 = vunpack.c.h.b16 %v878
  %v1187 = vunpack.c.l.b16 %v879
  %v1188 = vunpack.c.h.b16 %v879
  %v1189 = vunpack.c.l.b16 %v880
  %v1190 = vunpack.c.h.b16 %v880
  %v1191 = vunpack.c.l.b16 %v881
  %v1192 = vunpack.c.h.b16 %v881
  %v1193 = vunpack.c.l.b16 %v882
  %v1194 = vunpack.c.h.b16 %v882
  %v1195 = vunpack.c.l.b16 %v883
  %v1196 = vunpack.c.h.b16 %v883
  %v1197 = vunpack.c.l.b16 %v884
  %v1198 = vunpack.c.h.b16 %v884
  %v1199 = vunpack.c.l.b16 %v885
  %v1200 = vunpack.c.h.b16 %v885
  %v1201 = vunpack.c.l.b16 %v886
  %v1202 = vunpack.c.h.b16 %v886
  %v1203 = vunpack.c.l.b16 %v887
  %v1204 = vunpack.c.h.b16 %v887
  %v1205 = vunpack.c.l.b16 %v888
  %v1206 = vunpack.c.h.b16 %v888
  %v1207 = vunpack.c.l.b16 %v889
  %v1208 = vunpack.c.h.b16 %v889
  %v1209 = vunpack.c.l.b16 %v890
  %v1210 = vunpack.c.h.b16 %v890
  %v1211 = vunpack.c.l.b16 %v891
  %v1212 = vunpack.c.h.b16 %v891
  %v1213 = vunpack.c.l.b16 %v892
  %v1214 = vunpack.c.h.b16 %v892
  %v1215 = vunpack.c.l.b16 %v893
  %v1216 = vunpack.c.h.b16 %v893
  %v1217 = vunpack.c.l.b16 %v894
  %v1218 = vunpack.c.h.b16 %v894
  %v1219 = vunpack.c.l.b16 %v895
  %v1220 = vunpack.c.h.b16 %v895
  %v1221 = vunpack.c.l.b16 %v896
  %v1222 = vunpack.c.h.b16 %v896
  %v1223 = vunpack.c.l.b16 %v897
  %v1224 = vunpack.c.h.b16 %v897
  %v1225 = vunpack.c.l.b16 %v898
  %v1226 = vunpack.c.h.b16 %v898
  %v1227 = vunpack.c.l.b16 %v899
  %v1228 = vunpack.c.h.b16 %v899
  %v1229 = vunpack.c.l.b16 %v900
  %v1230 = vunpack.c.h.b16 %v900
  %v1231 = vunpack.c.l.b16 %v901
  %v1232 = vunpack.c.h.b16 %v901
  %v1233 = vunpack.c.l.b16 %v902
  %v1234 = vunpack.c.h.b16 %v902
  %v1235 = vunpack.c.l.b16 %v903
  %v1236 = vunpack.c.h.b16 %v903
  %v1237 = vunpack.c.l.b16 %v904
  %v1238 = vunpack.c.h.b16 %v904
  %v1239 = vunpack.c.l.b16 %v905
  %v1240 = vunpack.c.h.b16 %v905
  %v1241 = vunpack.c.l.b16 %v906
  %v1242 = vunpack.c.h.b16 %v906
  %v1243 = vunpack.c.l.b16 %v907
  %v1244 = vunpack.c.h.b16 %v907
  %v1245 = vunpack.c.l.b16 %v908
  %v1246 = vunpack.c.h.b16 %v908
  %v1247 = vunpack.c.l.b16 %v909
  %v1248 = vunpack.c.h.b16 %v909
  %v1249 = vunpack.c.l.b16 %v910
  %v1250 = vunpack.c.h.b16 %v910
  %v1251 = vunpack.c.l.b16 %v911
  %v1252 = vunpack.c.h.b16 %v911
  %v1253 = vunpack.c.l.b16 %v912
  %v1254 = vunpack.c.h.b16 %v912
  %v1255 = vunpack.c.l.b16 %v913
  %v1256 = vunpack.c.h.b16 %v913
  %v1257 = vunpack.c.l.b16 %v914
  %v1258 = vunpack.c.h.b16 %v914
  %v1259 = vunpack.c.l.b16 %v915
  %v1260 = vunpack.c.h.b16 %v915
  %v1261 = vunpack.c.l.b16 %v916
  %v1262 = vunpack.c.h.b16 %v916
  %v1263 = vunpack.c.l.b16 %v917
  %v1264 = vunpack.c.h.b16 %v917
  %v1265 = vunpack.c.l.b16 %v918
  %v1266 = vunpack.c.h.b16 %v918
  %v1267 = vunpack.c.l.b16 %v919
  %v1268 = vunpack.c.h.b16 %v919
  %v1269 = vunpack.c.l.b16 %v920
  %v1270 = vunpack.c.h.b16 %v920
  %v1271 = vunpack.c.l.b16 %v921
  %v1272 = vunpack.c.h.b16 %v921
  %v1273 = vunpack.c.l.b16 %v922
  %v1274 = vunpack.c.h.b16 %v922
  %v1275 = vunpack.c.l.b16 %v923
  %v1276 = vunpack.c.h.b16 %v923
  %v1277 = vunpack.c.l.b16 %v924
  %v1278 = vunpack.c.h.b16 %v924
  %v1279 = vunpack.c.l.b16 %v925
  %v1280 = vunpack.c.h.b16 %v925
  %v1281 = vunpack.c.l.b16 %v926
  %v1282 = vunpack.c.h.b16 %v926
  %v1283 = vunpack.c.l.b16 %v927
  %v1284 = vunpack.c.h.b16 %v927
  %v1285 = vunpack.c.l.b16 %v928
  %v1286 = vunpack.c.h.b16 %v928
  %v1287 = vunpack.c.l.b16 %v929
  %v1288 = vunpack.c.h.b16 %v929
  %v1289 = vunpack.c.l.b16 %v930
  %v1290 = vunpack.c.h.b16 %v930
  %v1291 = vunpack.c.l.b16 %v931
  %v1292 = vunpack.c.h.b16 %v931
  %v1293 = vunpack.c.l.b16 %v932
  %v1294 = vunpack.c.h.b16 %v932
  %v1295 = vunpack.c.l.b16 %v933
  %v1296 = vunpack.c.h.b16 %v933
  %v1297 = vunpack.c.l.b16 %v934
  %v1298 = vunpack.c.h.b16 %v934
  %v1299 = vunpack.c.l.b16 %v935
  %v1300 = vunpack.c.h.b16 %v935
  %v1301 = vunpack.c.l.b16 %v936
  %v1302 = vunpack.c.h.b16 %v936
  %v1303 = vunpack.c.l.b16 %v937
  %v1304 = vunpack.c.h.b16 %v937
  %v1305 = vunpack.c.l.b16 %v938
  %v1306 = vunpack.c.h.b16 %v938
  %v1307 = vunpack.c.l.b16 %v939
  %v1308 = vunpack.c.h.b16 %v939
  %v1309 = vunpack.c.l.b16 %v940
  %v1310 = vunpack.c.h.b16 %v940
  %v1311 = vunpack.c.l.b16 %v941
  %v1312 = vunpack.c.h.b16 %v941
  %v1313 = vunpack.c.l.b16 %v942
  %v1314 = vunpack.c.h.b16 %v942
  %v1315 = vunpack.c.l.b16 %v943
  %v1316 = vunpack.c.h.b16 %v943
  %v1317 = vunpack.c.l.b16 %v944
  %v1318 = vunpack.c.h.b16 %v944
  %v1319 = vunpack.c.l.b16 %v945
  %v1320 = vunpack.c.h.b16 %v945
  %v1321 = vunpack.c.l.b16 %v946
  %v1322 = vunpack.c.h.b16 %v946
  %v1323 = vunpack.c.l.b16 %v947
  %v1324 = vunpack.c.h.b16 %v947
  %v1325 = vunpack.c.l.b16 %v948
  %v1326 = vunpack.c.h.b16 %v948
  %v1327 = vunpack.c.l.b16 %v949
  %v1328 = vunpack.c.h.b16 %v949
  %v1329 = vunpack.c.l.b16 %v950
  %v1330 = vunpack.c.h.b16 %v950
  %v1331 = vunpack.c.l.b16 %v951
  %v1332 = vunpack.c.h.b16 %v951
  %v1333 = vunpack.c.l.b16 %v952
  %v1334 = vunpack.c.h.b16 %v952
  %v1335 = vunpack.c.l.b16 %v953
  %v1336 = vunpack.c.h.b16 %v953
  %v1337 = vunpack.c.l.b16 %v954
  %v1338 = vunpack.c.h.b16 %v954
  %v1339 = vunpack.c.l.b16 %v955
  %v1340 = vunpack.c.h.b16 %v955
  %v1341 = vunpack.c.l.b16 %v956
  %v1342 = vunpack.c.h.b16 %v956
  %v1343 = vunpack.c.l.b16 %v957
  %v1344 = vunpack.c.h.b16 %v957
  %v1345 = vunpack.c.l.b16 %v958
  %v1346 = vunpack.c.h.b16 %v958
  %v1347 = vunpack.c.l.b16 %v959
  %v1348 = vunpack.c.h.b16 %v959
  %v1349 = vunpack.c.l.b16 %v960
  %v1350 = vunpack.c.h.b16 %v960
  %v1351 = vunpack.c.l.b16 %v961
  %v1352 = vunpack.c.h.b16 %v961
  %v1353 = vunpack.c.l.b16 %v962
  %v1354 = vunpack.c.h.b16 %v962
  %v1355 = vunpack.c.l.b16 %v963
  %v1356 = vunpack.c.h.b16 %v963
  %v1357 = vunpack.c.l.b16 %v964
  %v1358 = vunpack.c.h.b16 %v964
  %v1359 = vunpack.c.l.b16 %v965
  %v1360 = vunpack.c.h.b16 %v965
  %v1361 = vunpack.c.l.b16 %v966
  %v1362 = vunpack.c.h.b16 %v966
  %v1363 = vunpack.c.l.b16 %v967
  %v1364 = vunpack.c.h.b16 %v967
  %v1365 = vunpack.c.l.b16 %v968
  %v1366 = vunpack.c.h.b16 %v968
  %v1367 = vunpack.c.l.b16 %v969
  %v1368 = vunpack.c.h.b16 %v969
  %v1369 = vunpack.c.l.b16 %v970
  %v1370 = vunpack.c.h.b16 %v970
  %v1371 = vunpack.c.l.b16 %v971
  %v1372 = vunpack.c.h.b16 %v971
  %v1373 = vunpack.c.l.b16 %v972
  %v1374 = vunpack.c.h.b16 %v972
  %v1375 = vunpack.c.l.b16 %v973
  %v1376 = vunpack.c.h.b16 %v973
  %v1377 = vunpack.c.l.b16 %v974
  %v1378 = vunpack.c.h.b16 %v974
  %v1379 = vunpack.c.l.b16 %v975
  %v1380 = vunpack.c.h.b16 %v975
  %v1381 = vunpack.c.l.b16 %v976
  %v1382 = vunpack.c.h.b16 %v976
  %v1383 = vunpack.c.l.b16 %v977
  %v1384 = vunpack.c.h.b16 %v977
  %v1385 = vunpack.c.l.b16 %v978
  %v1386 = vunpack.c.h.b16 %v978
  %v1387 = vunpack.c.l.b16 %v979
  %v1388 = vunpack.c.h.b16 %v979
  %v1389 = vunpack.c.l.b16 %v980
  %v1390 = vunpack.c.h.b16 %v980
  %v1391 = vunpack.c.l.b16 %v981
  %v1392 = vunpack.c.h.b16 %v981
  %v1393 = vunpack.c.l.b16 %v982
  %v1394 = vunpack.c.h.b16 %v982
  %v1395 = vunpack.c.l.b16 %v983
  %v1396 = vunpack.c.h.b16 %v983
  %v1397 = vunpack.c.l.b16 %v984
  %v1398 = vunpack.c.h.b16 %v984
  %v1399 = vunpack.c.l.b16 %v985
  %v1400 = vunpack.c.h.b16 %v985
  %v1401 = vunpack.c.l.b16 %v986
  %v1402 = vunpack.c.h.b16 %v986
  %v1403 = vunpack.c.l.b16 %v987
  %v1404 = vunpack.c.h.b16 %v987
  %v1405 = vunpack.c.l.b16 %v988
  %v1406 = vunpack.c.h.b16 %v988
  %v1407 = vunpack.c.l.b16 %v989
  %v1408 = vunpack.c.h.b16 %v989
  %v1409 = vunpack.c.l.b16 %v990
  %v1410 = vunpack.c.h.b16 %v990
  %v1411 = vunpack.c.l.b16 %v991
  %v1412 = vunpack.c.h.b16 %v991
  %v1413 = vunpack.c.l.b16 %v992
  %v1414 = vunpack.c.h.b16 %v992
  %v1415 = vunpack.c.l.b16 %v993
  %v1416 = vunpack.c.h.b16 %v993
  %v1417 = vunpack.c.l.b16 %v994
  %v1418 = vunpack.c.h.b16 %v994
  %v1419 = vunpack.c.l.b16 %v995
  %v1420 = vunpack.c.h.b16 %v995
  %v1421 = vunpack.c.l.b16 %v996
  %v1422 = vunpack.c.h.b16 %v996
  %v1423 = vunpack.c.l.b16 %v997
  %v1424 = vunpack.c.h.b16 %v997
  %v1425 = vunpack.c.l.b16 %v998
  %v1426 = vunpack.c.h.b16 %v998
  %v1427 = vunpack.c.l.b16 %v999
  %v1428 = vunpack.c.h.b16 %v999
  %v1429 = vunpack.c.l.b16 %v1000
  %v1430 = vunpack.c.h.b16 %v1000
  %v1431 = vunpack.c.l.b16 %v1001
  %v1432 = vunpack.c.h.b16 %v1001
  %v1433 = vunpack.c.l.b16 %v1002
  %v1434 = vunpack.c.h.b16 %v1002
  %v1435 = vpack.c.b16 %v1151, %v1147
  %v1436 = vpack.c.b16 %v1152, %v1148
  %v1437 = vpack.c.b16 %v1153, %v1149
  %v1438 = vpack.c.b16 %v1154, %v1150
  %v1439 = vpack.c.b16 %v1159, %v1155
  %v1440 = vpack.c.b16 %v1160, %v1156
  %v1441 = vpack.c.b16 %v1161, %v1157
  %v1442 = vpack.c.b16 %v1162, %v1158
  %v1443 = vpack.c.b16 %v1167, %v1163
  %v1444 = vpack.c.b16 %v1168, %v1164
  %v1445 = vpack.c.b16 %v1169, %v1165
  %v1446 = vpack.c.b16 %v1170, %v1166
  %v1447 = vpack.c.b16 %v1175, %v1171
  %v1448 = vpack.c.b16 %v1176, %v1172
  %v1449 = vpack.c.b16 %v1177, %v1173
  %v1450 = vpack.c.b16 %v1178, %v1174
  %v1451 = vpack.c.b16 %v1183, %v1179
  %v1452 = vpack.c.b16 %v1184, %v1180
  %v1453 = vpack.c.b16 %v1185, %v1181
  %v1454 = vpack.c.b16 %v1186, %v1182
  %v1455 = vpack.c.b16 %v1191, %v1187
  %v1456 = vpack.c.b16 %v1192, %v1188
  %v1457 = vpack.c.b16 %v1193, %v1189
  %v1458 = vpack.c.b16 %v1194, %v1190
  %v1459 = vpack.c.b16 %v1199, %v1195
  %v1460 = vpack.c.b16 %v1200, %v1196
  %v1461 = vpack.c.b16 %v1201, %v1197
  %v1462 = vpack.c.b16 %v1202, %v1198
  %v1463 = vpack.c.b16 %v1207, %v1203
  %v1464 = vpack.c.b16 %v1208, %v1204
  %v1465 = vpack.c.b16 %v1209, %v1205
  %v1466 = vpack.c.b16 %v1210, %v1206
  %v1467 = vpack.c.b16 %v1215, %v1211
  %v1468 = vpack.c.b16 %v1216, %v1212
  %v1469 = vpack.c.b16 %v1217, %v1213
  %v1470 = vpack.c.b16 %v1218, %v1214
  %v1471 = vpack.c.b16 %v1223, %v1219
  %v1472 = vpack.c.b16 %v1224, %v1220
  %v1473 = vpack.c.b16 %v1225, %v1221
  %v1474 = vpack.c.b16 %v1226, %v1222
  %v1475 = vpack.c.b16 %v1231, %v1227
  %v1476 = vpack.c.b16 %v1232, %v1228
  %v1477 = vpack.c.b16 %v1233, %v1229
  %v1478 = vpack.c.b16 %v1234, %v1230
  %v1479 = vpack.c.b16 %v1239, %v1235
  %v1480 = vpack.c.b16 %v1240, %v1236
  %v1481 = vpack.c.b16 %v1241, %v1237
  %v1482 = vpack.c.b16 %v1242, %v1238
  %v1483 = vpack.c.b16 %v1247, %v1243
  %v1484 = vpack.c.b16 %v1248, %v1244
  %v1485 = vpack.c.b16 %v1249, %v1245
  %v1486 = vpack.c.b16 %v1250, %v1246
  %v1487 = vpack.c.b16 %v1255, %v1251
  %v1488 = vpack.c.b16 %v1256, %v1252
  %v1489 = vpack.c.b16 %v1257, %v1253
  %v1490 = vpack.c.b16 %v1258, %v1254
  %v1491 = vpack.c.b16 %v1263, %v1259
  %v1492 = vpack.c.b16 %v1264, %v1260
  %v1493 = vpack.c.b16 %v1265, %v1261
  %v1494 = vpack.c.b16 %v1266, %v1262
  %v1495 = vpack.c.b16 %v1271, %v1267
  %v1496 = vpack.c.b16 %v1272, %v1268
  %v1497 = vpack.c.b16 %v1273, %v1269
  %v1498 = vpack.c.b16 %v1274, %v1270
  %v1499 = vpack.c.b16 %v1279, %v1275
  %v1500 = vpack.c.b16 %v1280, %v1276
  %v1501 = vpack.c.b16 %v1281, %v1277
  %v1502 = vpack.c.b16 %v1282, %v1278
  %v1503 = vpack.c.b16 %v1287, %v1283
  %v1504 = vpack.c.b16 %v1288, %v1284
  %v1505 = vpack.c.b16 %v1289, %v1285
  %v1506 = vpack.c.b16 %v1290, %v1286
  %v1507 = vpack.c.b16 %v1295, %v1291
  %v1508 = vpack.c.b16 %v1296, %v1292
  %v1509 = vpack.c.b16 %v1297, %v1293
  %v1510 = vpack.c.b16 %v1298, %v1294
  %v1511 = vpack.c.b16 %v1303, %v1299
  %v1512 = vpack.c.b16 %v1304, %v1300
  %v1513 = vpack.c.b16 %v1305, %v1301
  %v1514 = vpack.c.b16 %v1306, %v1302
  %v1515 = vpack.c.b16 %v1311, %v1307
  %v1516 = vpack.c.b16 %v1312, %v1308
  %v1517 = vpack.c.b16 %v1313, %v1309
  %v1518 = vpack.c.b16 %v1314, %v1310
  %v1519 = vpack.c.b16 %v1319, %v1315
  %v1520 = vpack.c.b16 %v1320, %v1316
  %v1521 = vpack.c.b16 %v1321, %v1317
  %v1522 = vpack.c.b16 %v1322, %v1318
  %v1523 = vpack.c.b16 %v1327, %v1323
  %v1524 = vpack.c.b16 %v1328, %v1324
  %v1525 = vpack.c.b16 %v1329, %v1325
  %v1526 = vpack.c.b16 %v1330, %v1326
  %v1527 = vpack.c.b16 %v1335, %v1331
  %v1528 = vpack.c.b16 %v1336, %v1332
  %v1529 = vpack.c.b16 %v1337, %v1333
  %v1530 = vpack.c.b16 %v1338, %v1334
  %v1531 = vpack.c.b16 %v1343, %v1339
  %v1532 = vpack.c.b16 %v1344, %v1340
  %v1533 = vpack.c.b16 %v1345, %v1341
  %v1534 = vpack.c.b16 %v1346, %v1342
  %v1535 = vpack.c.b16 %v1351, %v1347
  %v1536 = vpack.c.b16 %v1352, %v1348
  %v1537 = vpack.c.b16 %v1353, %v1349
  %v1538 = vpack.c.b16 %v1354, %v1350
  %v1539 = vpack.c.b16 %v1359, %v1355
  %v1540 = vpack.c.b16 %v1360, %v1356
  %v1541 = vpack.c.b16 %v1361, %v1357
  %v1542 = vpack.c.b16 %v1362, %v1358
  %v1543 = vpack.c.b16 %v1367, %v1363
  %v1544 = vpack.c.b16 %v1368, %v1364
  %v1545 = vpack.c.b16 %v1369, %v1365
  %v1546 = vpack.c.b16 %v1370, %v1366
  %v1547 = vpack.c.b16 %v1375, %v1371
  %v1548 = vpack.c.b16 %v1376, %v1372
  %v1549 = vpack.c.b16 %v1377, %v1373
  %v1550 = vpack.c.b16 %v1378, %v1374
  %v1551 = vpack.c.b16 %v1383, %v1379
  %v1552 = vpack.c.b16 %v1384, %v1380
  %v1553 = vpack.c.b16 %v1385, %v1381
  %v1554 = vpack.c.b16 %v1386, %v1382
  %v1555 = vpack.c.b16 %v1391, %v1387
  %v1556 = vpack.c.b16 %v1392, %v1388
  %v1557 = vpack.c.b16 %v1393, %v1389
  %v1558 = vpack.c.b16 %v1394, %v1390
  %v1559 = vpack.c.b16 %v1399, %v1395
  %v1560 = vpack.c.b16 %v1400, %v1396
  %v1561 = vpack.c.b16 %v1401, %v1397
  %v1562 = vpack.c.b16 %v1402, %v1398
  %v1563 = vpack.c.b16 %v1407, %v1403
  %v1564 = vpack.c.b16 %v1408, %v1404
  %v1565 = vpack.c.b16 %v1409, %v1405
  %v1566 = vpack.c.b16 %v1410, %v1406
  %v1567 = vpack.c.b16 %v1415, %v1411
  %v1568 = vpack.c.b16 %v1416, %v1412
  %v1569 = vpack.c.b16 %v1417, %v1413
  %v1570 = vpack.c.b16 %v1418, %v1414
  %v1571 = vpack.c.b16 %v1423, %v1419
  %v1572 = vpack.c.b16 %v1424, %v1420
  %v1573 = vpack.c.b16 %v1425, %v1421
  %v1574 = vpack.c.b16 %v1426, %v1422
  %v1575 = vpack.c.b16 %v1431, %v1427
  %v1576 = vpack.c.b16 %v1432, %v1428
  %v1577 = vpack.c.b16 %v1433, %v1429
  %v1578 = vpack.c.b16 %v1434, %v1430
  %v1724 = vsel %vm537, %v857, 0
  %1726 = vmatprep.subr.bf16.mxu0 %v1436
  %1727 = vmatpush1.bf16.msra.mxu0 %v1435
  %1728 = vmatprep.subr.bf16.mxu0 %v1440
  %1729 = vmatpush1.bf16.msra.mxu0 %v1439
  %1730 = vmatprep.subr.bf16.mxu0 %v1444
  %1731 = vmatpush1.bf16.msra.mxu0 %v1443
  %1732 = vmatprep.subr.bf16.mxu0 %v1448
  %1733 = vmatpush1.bf16.msra.mxu0 %v1447
  %1734 = vmatprep.subr.bf16.mxu0 %v1452
  %1735 = vmatpush1.bf16.msra.mxu0 %v1451
  %1736 = vmatprep.subr.bf16.mxu0 %v1456
  %1737 = vmatpush1.bf16.msra.mxu0 %v1455
  %1738 = vmatprep.subr.bf16.mxu0 %v1460
  %1739 = vmatpush1.bf16.msra.mxu0 %v1459
  %1740 = vmatprep.subr.bf16.mxu0 %v1464
  %1741 = vmatpush1.bf16.msra.mxu0 %v1463
  %1742 = vmatprep.subr.bf16.mxu0 %v1468
  %1743 = vmatpush1.bf16.msra.mxu0 %v1467
  %1744 = vmatprep.subr.bf16.mxu0 %v1472
  %1745 = vmatpush1.bf16.msra.mxu0 %v1471
  %1746 = vmatprep.subr.bf16.mxu0 %v1476
  %1747 = vmatpush1.bf16.msra.mxu0 %v1475
  %1748 = vmatprep.subr.bf16.mxu0 %v1480
  %1749 = vmatpush1.bf16.msra.mxu0 %v1479
  %1750 = vmatprep.subr.bf16.mxu0 %v1484
  %1751 = vmatpush1.bf16.msra.mxu0 %v1483
  %1752 = vmatprep.subr.bf16.mxu0 %v1488
  %1753 = vmatpush1.bf16.msra.mxu0 %v1487
  %1754 = vmatprep.subr.bf16.mxu0 %v1492
  %1755 = vmatpush1.bf16.msra.mxu0 %v1491
  %1756 = vmatprep.subr.bf16.mxu0 %v1496
  %1757 = vmatpush1.bf16.msra.mxu0 %v1495
  %1758 = vmatprep.mubr.bf16.mxu0 %v854
  %1759 = vmatmul.mubr.bf16.gmra.mrb[0].mxu0 %v853
  %v1760 = vpop.f32.mrb[0].mxu0
  %v1761 = vadd.f32 0.0, %v1760
  %v1762 = vpop.f32.mrb[0].mxu0
  %v1763 = vadd.f32 0.0, %v1762
  %v1764 = vpop.f32.mrb[0].mxu0
  %v1765 = vadd.f32 0.0, %v1764
  %v1766 = vpop.f32.mrb[0].mxu0
  %v1767 = vadd.f32 0.0, %v1766
  %1768 = vdwg.mxu0
  %1769 = vmatprep.subr.bf16.mxu0 %v1500
  %1770 = vmatpush1.bf16.msra.mxu0 %v1499
  %1771 = vmatprep.subr.bf16.mxu0 %v1504
  %1772 = vmatpush1.bf16.msra.mxu0 %v1503
  %1773 = vmatprep.subr.bf16.mxu0 %v1508
  %1774 = vmatpush1.bf16.msra.mxu0 %v1507
  %1775 = vmatprep.subr.bf16.mxu0 %v1512
  %1776 = vmatpush1.bf16.msra.mxu0 %v1511
  %1777 = vmatprep.subr.bf16.mxu0 %v1516
  %1778 = vmatpush1.bf16.msra.mxu0 %v1515
  %1779 = vmatprep.subr.bf16.mxu0 %v1520
  %1780 = vmatpush1.bf16.msra.mxu0 %v1519
  %1781 = vmatprep.subr.bf16.mxu0 %v1524
  %1782 = vmatpush1.bf16.msra.mxu0 %v1523
  %1783 = vmatprep.subr.bf16.mxu0 %v1528
  %1784 = vmatpush1.bf16.msra.mxu0 %v1527
  %1785 = vmatprep.subr.bf16.mxu0 %v1532
  %1786 = vmatpush1.bf16.msra.mxu0 %v1531
  %1787 = vmatprep.subr.bf16.mxu0 %v1536
  %1788 = vmatpush1.bf16.msra.mxu0 %v1535
  %1789 = vmatprep.subr.bf16.mxu0 %v1540
  %1790 = vmatpush1.bf16.msra.mxu0 %v1539
  %1791 = vmatprep.subr.bf16.mxu0 %v1544
  %1792 = vmatpush1.bf16.msra.mxu0 %v1543
  %1793 = vmatprep.subr.bf16.mxu0 %v1548
  %1794 = vmatpush1.bf16.msra.mxu0 %v1547
  %1795 = vmatprep.subr.bf16.mxu0 %v1552
  %1796 = vmatpush1.bf16.msra.mxu0 %v1551
  %1797 = vmatprep.subr.bf16.mxu0 %v1556
  %1798 = vmatpush1.bf16.msra.mxu0 %v1555
  %1799 = vmatprep.subr.bf16.mxu0 %v1560
  %1800 = vmatpush1.bf16.msra.mxu0 %v1559
  %1801 = vmatprep.mubr.bf16.mxu0 %v856
  %1802 = vmatmul.mubr.bf16.gmra.mrb[0].mxu0 %v855
  %v1803 = vpop.f32.mrb[0].mxu0
  %v1804 = vadd.f32 %v1761, %v1803
  %v1805 = vpop.f32.mrb[0].mxu0
  %v1806 = vadd.f32 %v1763, %v1805
  %v1807 = vpop.f32.mrb[0].mxu0
  %v1808 = vadd.f32 %v1765, %v1807
  %v1809 = vpop.f32.mrb[0].mxu0
  %v1810 = vadd.f32 %v1767, %v1809
  %1811 = vdwg.mxu0
  %1812 = vmatprep.subr.bf16.mxu0 %v1564
  %1813 = vmatpush1.bf16.msra.mxu0 %v1563
  %1814 = vmatprep.subr.bf16.mxu0 %v1568
  %1815 = vmatpush1.bf16.msra.mxu0 %v1567
  %1816 = vmatprep.subr.bf16.mxu0 %v1572
  %1817 = vmatpush1.bf16.msra.mxu0 %v1571
  %1818 = vmatprep.subr.bf16.mxu0 %v1576
  %1819 = vmatpush1.bf16.msra.mxu0 %v1575
  %1820 = vmatprep.subr.bf16.mxu0 0
  %1821 = vmatpush1.bf16.msra.mxu0 0
  %1822 = vmatprep.subr.bf16.mxu0 0
  %1823 = vmatpush1.bf16.msra.mxu0 0
  %1824 = vmatprep.subr.bf16.mxu0 0
  %1825 = vmatpush1.bf16.msra.mxu0 0
  %1826 = vmatprep.subr.bf16.mxu0 0
  %1827 = vmatpush1.bf16.msra.mxu0 0
  %1828 = vmatprep.subr.bf16.mxu0 0
  %1829 = vmatpush1.bf16.msra.mxu0 0
  %1830 = vmatprep.subr.bf16.mxu0 0
  %1831 = vmatpush1.bf16.msra.mxu0 0
  %1832 = vmatprep.subr.bf16.mxu0 0
  %1833 = vmatpush1.bf16.msra.mxu0 0
  %1834 = vmatprep.subr.bf16.mxu0 0
  %1835 = vmatpush1.bf16.msra.mxu0 0
  %1836 = vmatprep.subr.bf16.mxu0 0
  %1837 = vmatpush1.bf16.msra.mxu0 0
  %1838 = vmatprep.subr.bf16.mxu0 0
  %1839 = vmatpush1.bf16.msra.mxu0 0
  %1840 = vmatprep.subr.bf16.mxu0 0
  %1841 = vmatpush1.bf16.msra.mxu0 0
  %1842 = vmatprep.subr.bf16.mxu0 0
  %1843 = vmatpush1.bf16.msra.mxu0 0
  %1844 = vmatprep.mubr.bf16.mxu0 0
  %1845 = vmatmul.mubr.bf16.gmra.mrb[0].mxu0 %v1724
  %v1846 = vpop.f32.mrb[0].mxu0
  %v1847 = vadd.f32 %v1804, %v1846
  %v1848 = vpop.f32.mrb[0].mxu0
  %v1849 = vadd.f32 %v1806, %v1848
  %v1850 = vpop.f32.mrb[0].mxu0
  %v1851 = vadd.f32 %v1808, %v1850
  %v1852 = vpop.f32.mrb[0].mxu0
  %v1853 = vadd.f32 %v1810, %v1852
  %1854 = vdwg.mxu0
  %1855 = vmatprep.subr.bf16.mxu0 %v1438
  %1856 = vmatpush1.bf16.msra.mxu0 %v1437
  %1857 = vmatprep.subr.bf16.mxu0 %v1442
  %1858 = vmatpush1.bf16.msra.mxu0 %v1441
  %1859 = vmatprep.subr.bf16.mxu0 %v1446
  %1860 = vmatpush1.bf16.msra.mxu0 %v1445
  %1861 = vmatprep.subr.bf16.mxu0 %v1450
  %1862 = vmatpush1.bf16.msra.mxu0 %v1449
  %1863 = vmatprep.subr.bf16.mxu0 %v1454
  %1864 = vmatpush1.bf16.msra.mxu0 %v1453
  %1865 = vmatprep.subr.bf16.mxu0 %v1458
  %1866 = vmatpush1.bf16.msra.mxu0 %v1457
  %1867 = vmatprep.subr.bf16.mxu0 %v1462
  %1868 = vmatpush1.bf16.msra.mxu0 %v1461
  %1869 = vmatprep.subr.bf16.mxu0 %v1466
  %1870 = vmatpush1.bf16.msra.mxu0 %v1465
  %1871 = vmatprep.subr.bf16.mxu0 %v1470
  %1872 = vmatpush1.bf16.msra.mxu0 %v1469
  %1873 = vmatprep.subr.bf16.mxu0 %v1474
  %1874 = vmatpush1.bf16.msra.mxu0 %v1473
  %1875 = vmatprep.subr.bf16.mxu0 %v1478
  %1876 = vmatpush1.bf16.msra.mxu0 %v1477
  %1877 = vmatprep.subr.bf16.mxu0 %v1482
  %1878 = vmatpush1.bf16.msra.mxu0 %v1481
  %1879 = vmatprep.subr.bf16.mxu0 %v1486
  %1880 = vmatpush1.bf16.msra.mxu0 %v1485
  %1881 = vmatprep.subr.bf16.mxu0 %v1490
  %1882 = vmatpush1.bf16.msra.mxu0 %v1489
  %1883 = vmatprep.subr.bf16.mxu0 %v1494
  %1884 = vmatpush1.bf16.msra.mxu0 %v1493
  %1885 = vmatprep.subr.bf16.mxu0 %v1498
  %1886 = vmatpush1.bf16.msra.mxu0 %v1497
  %1887 = vmatprep.mubr.bf16.mxu0 %v854
  %1888 = vmatmul.mubr.bf16.gmra.mrb[0].mxu0 %v853
  %v1889 = vpop.f32.mrb[0].mxu0
  %v1890 = vadd.f32 0.0, %v1889
  %v1891 = vpop.f32.mrb[0].mxu0
  %v1892 = vadd.f32 0.0, %v1891
  %v1893 = vpop.f32.mrb[0].mxu0
  %v1894 = vadd.f32 0.0, %v1893
  %v1895 = vpop.f32.mrb[0].mxu0
  %v1896 = vadd.f32 0.0, %v1895
  %1897 = vdwg.mxu0
  %1898 = vmatprep.subr.bf16.mxu0 %v1502
  %1899 = vmatpush1.bf16.msra.mxu0 %v1501
  %1900 = vmatprep.subr.bf16.mxu0 %v1506
  %1901 = vmatpush1.bf16.msra.mxu0 %v1505
  %1902 = vmatprep.subr.bf16.mxu0 %v1510
  %1903 = vmatpush1.bf16.msra.mxu0 %v1509
  %1904 = vmatprep.subr.bf16.mxu0 %v1514
  %1905 = vmatpush1.bf16.msra.mxu0 %v1513
  %1906 = vmatprep.subr.bf16.mxu0 %v1518
  %1907 = vmatpush1.bf16.msra.mxu0 %v1517
  %1908 = vmatprep.subr.bf16.mxu0 %v1522
  %1909 = vmatpush1.bf16.msra.mxu0 %v1521
  %1910 = vmatprep.subr.bf16.mxu0 %v1526
  %1911 = vmatpush1.bf16.msra.mxu0 %v1525
  %1912 = vmatprep.subr.bf16.mxu0 %v1530
  %1913 = vmatpush1.bf16.msra.mxu0 %v1529
  %1914 = vmatprep.subr.bf16.mxu0 %v1534
  %1915 = vmatpush1.bf16.msra.mxu0 %v1533
  %1916 = vmatprep.subr.bf16.mxu0 %v1538
  %1917 = vmatpush1.bf16.msra.mxu0 %v1537
  %1918 = vmatprep.subr.bf16.mxu0 %v1542
  %1919 = vmatpush1.bf16.msra.mxu0 %v1541
  %1920 = vmatprep.subr.bf16.mxu0 %v1546
  %1921 = vmatpush1.bf16.msra.mxu0 %v1545
  %1922 = vmatprep.subr.bf16.mxu0 %v1550
  %1923 = vmatpush1.bf16.msra.mxu0 %v1549
  %1924 = vmatprep.subr.bf16.mxu0 %v1554
  %1925 = vmatpush1.bf16.msra.mxu0 %v1553
  %1926 = vmatprep.subr.bf16.mxu0 %v1558
  %1927 = vmatpush1.bf16.msra.mxu0 %v1557
  %1928 = vmatprep.subr.bf16.mxu0 %v1562
  %1929 = vmatpush1.bf16.msra.mxu0 %v1561
  %1930 = vmatprep.mubr.bf16.mxu0 %v856
  %1931 = vmatmul.mubr.bf16.gmra.mrb[0].mxu0 %v855
  %v1932 = vpop.f32.mrb[0].mxu0
  %v1933 = vadd.f32 %v1890, %v1932
  %v1934 = vpop.f32.mrb[0].mxu0
  %v1935 = vadd.f32 %v1892, %v1934
  %v1936 = vpop.f32.mrb[0].mxu0
  %v1937 = vadd.f32 %v1894, %v1936
  %v1938 = vpop.f32.mrb[0].mxu0
  %v1939 = vadd.f32 %v1896, %v1938
  %1940 = vdwg.mxu0
  %1941 = vmatprep.subr.bf16.mxu0 %v1566
  %1942 = vmatpush1.bf16.msra.mxu0 %v1565
  %1943 = vmatprep.subr.bf16.mxu0 %v1570
  %1944 = vmatpush1.bf16.msra.mxu0 %v1569
  %1945 = vmatprep.subr.bf16.mxu0 %v1574
  %1946 = vmatpush1.bf16.msra.mxu0 %v1573
  %1947 = vmatprep.subr.bf16.mxu0 %v1578
  %1948 = vmatpush1.bf16.msra.mxu0 %v1577
  %1949 = vmatprep.subr.bf16.mxu0 0
  %1950 = vmatpush1.bf16.msra.mxu0 0
  %1951 = vmatprep.subr.bf16.mxu0 0
  %1952 = vmatpush1.bf16.msra.mxu0 0
  %1953 = vmatprep.subr.bf16.mxu0 0
  %1954 = vmatpush1.bf16.msra.mxu0 0
  %1955 = vmatprep.subr.bf16.mxu0 0
  %1956 = vmatpush1.bf16.msra.mxu0 0
  %1957 = vmatprep.subr.bf16.mxu0 0
  %1958 = vmatpush1.bf16.msra.mxu0 0
  %1959 = vmatprep.subr.bf16.mxu0 0
  %1960 = vmatpush1.bf16.msra.mxu0 0
  %1961 = vmatprep.subr.bf16.mxu0 0
  %1962 = vmatpush1.bf16.msra.mxu0 0
  %1963 = vmatprep.subr.bf16.mxu0 0
  %1964 = vmatpush1.bf16.msra.mxu0 0
  %1965 = vmatprep.subr.bf16.mxu0 0
  %1966 = vmatpush1.bf16.msra.mxu0 0
  %1967 = vmatprep.subr.bf16.mxu0 0
  %1968 = vmatpush1.bf16.msra.mxu0 0
  %1969 = vmatprep.subr.bf16.mxu0 0
  %1970 = vmatpush1.bf16.msra.mxu0 0
  %1971 = vmatprep.subr.bf16.mxu0 0
  %1972 = vmatpush1.bf16.msra.mxu0 0
  %1973 = vmatprep.mubr.bf16.mxu0 0
  %1974 = vmatmul.mubr.bf16.gmra.mrb[0].mxu0 %v1724
  %v1975 = vpop.f32.mrb[0].mxu0
  %v1976 = vadd.f32 %v1933, %v1975
  %v1977 = vpop.f32.mrb[0].mxu0
  %v1978 = vadd.f32 %v1935, %v1977
  %v1979 = vpop.f32.mrb[0].mxu0
  %v1980 = vadd.f32 %v1937, %v1979
  %v1981 = vpop.f32.mrb[0].mxu0
  %v1982 = vadd.f32 %v1939, %v1981
  %1983 = vdwg.mxu0
  %v2128 = vunpack.c.l.b16 %v699
  %v2129 = vunpack.c.h.b16 %v699
  %v2130 = vunpack.c.l.b16 %v700
  %v2131 = vunpack.c.h.b16 %v700
  %v2132 = vunpack.c.l.b16 %v701
  %v2133 = vunpack.c.h.b16 %v701
  %v2134 = vunpack.c.l.b16 %v702
  %v2135 = vunpack.c.h.b16 %v702
  %v2136 = vunpack.c.l.b16 %v703
  %v2137 = vunpack.c.h.b16 %v703
  %v2138 = vunpack.c.l.b16 %v704
  %v2139 = vunpack.c.h.b16 %v704
  %v2140 = vunpack.c.l.b16 %v705
  %v2141 = vunpack.c.h.b16 %v705
  %v2142 = vunpack.c.l.b16 %v706
  %v2143 = vunpack.c.h.b16 %v706
  %v2144 = vunpack.c.l.b16 %v707
  %v2145 = vunpack.c.h.b16 %v707
  %v2146 = vunpack.c.l.b16 %v708
  %v2147 = vunpack.c.h.b16 %v708
  %v2148 = vunpack.c.l.b16 %v709
  %v2149 = vunpack.c.h.b16 %v709
  %v2150 = vunpack.c.l.b16 %v710
  %v2151 = vunpack.c.h.b16 %v710
  %v2152 = vunpack.c.l.b16 %v711
  %v2153 = vunpack.c.h.b16 %v711
  %v2154 = vunpack.c.l.b16 %v712
  %v2155 = vunpack.c.h.b16 %v712
  %v2156 = vunpack.c.l.b16 %v713
  %v2157 = vunpack.c.h.b16 %v713
  %v2158 = vunpack.c.l.b16 %v714
  %v2159 = vunpack.c.h.b16 %v714
  %v2160 = vunpack.c.l.b16 %v715
  %v2161 = vunpack.c.h.b16 %v715
  %v2162 = vunpack.c.l.b16 %v716
  %v2163 = vunpack.c.h.b16 %v716
  %v2164 = vunpack.c.l.b16 %v717
  %v2165 = vunpack.c.h.b16 %v717
  %v2166 = vunpack.c.l.b16 %v718
  %v2167 = vunpack.c.h.b16 %v718
  %v2168 = vunpack.c.l.b16 %v719
  %v2169 = vunpack.c.h.b16 %v719
  %v2170 = vunpack.c.l.b16 %v720
  %v2171 = vunpack.c.h.b16 %v720
  %v2172 = vunpack.c.l.b16 %v721
  %v2173 = vunpack.c.h.b16 %v721
  %v2174 = vunpack.c.l.b16 %v722
  %v2175 = vunpack.c.h.b16 %v722
  %v2176 = vunpack.c.l.b16 %v723
  %v2177 = vunpack.c.h.b16 %v723
  %v2178 = vunpack.c.l.b16 %v724
  %v2179 = vunpack.c.h.b16 %v724
  %v2180 = vunpack.c.l.b16 %v725
  %v2181 = vunpack.c.h.b16 %v725
  %v2182 = vunpack.c.l.b16 %v726
  %v2183 = vunpack.c.h.b16 %v726
  %v2184 = vunpack.c.l.b16 %v727
  %v2185 = vunpack.c.h.b16 %v727
  %v2186 = vunpack.c.l.b16 %v728
  %v2187 = vunpack.c.h.b16 %v728
  %v2188 = vunpack.c.l.b16 %v729
  %v2189 = vunpack.c.h.b16 %v729
  %v2190 = vunpack.c.l.b16 %v730
  %v2191 = vunpack.c.h.b16 %v730
  %v2192 = vunpack.c.l.b16 %v731
  %v2193 = vunpack.c.h.b16 %v731
  %v2194 = vunpack.c.l.b16 %v732
  %v2195 = vunpack.c.h.b16 %v732
  %v2196 = vunpack.c.l.b16 %v733
  %v2197 = vunpack.c.h.b16 %v733
  %v2198 = vunpack.c.l.b16 %v734
  %v2199 = vunpack.c.h.b16 %v734
  %v2200 = vunpack.c.l.b16 %v735
  %v2201 = vunpack.c.h.b16 %v735
  %v2202 = vunpack.c.l.b16 %v736
  %v2203 = vunpack.c.h.b16 %v736
  %v2204 = vunpack.c.l.b16 %v737
  %v2205 = vunpack.c.h.b16 %v737
  %v2206 = vunpack.c.l.b16 %v738
  %v2207 = vunpack.c.h.b16 %v738
  %v2208 = vunpack.c.l.b16 %v739
  %v2209 = vunpack.c.h.b16 %v739
  %v2210 = vunpack.c.l.b16 %v740
  %v2211 = vunpack.c.h.b16 %v740
  %v2212 = vunpack.c.l.b16 %v741
  %v2213 = vunpack.c.h.b16 %v741
  %v2214 = vunpack.c.l.b16 %v742
  %v2215 = vunpack.c.h.b16 %v742
  %v2216 = vunpack.c.l.b16 %v743
  %v2217 = vunpack.c.h.b16 %v743
  %v2218 = vunpack.c.l.b16 %v744
  %v2219 = vunpack.c.h.b16 %v744
  %v2220 = vunpack.c.l.b16 %v745
  %v2221 = vunpack.c.h.b16 %v745
  %v2222 = vunpack.c.l.b16 %v746
  %v2223 = vunpack.c.h.b16 %v746
  %v2224 = vunpack.c.l.b16 %v747
  %v2225 = vunpack.c.h.b16 %v747
  %v2226 = vunpack.c.l.b16 %v748
  %v2227 = vunpack.c.h.b16 %v748
  %v2228 = vunpack.c.l.b16 %v749
  %v2229 = vunpack.c.h.b16 %v749
  %v2230 = vunpack.c.l.b16 %v750
  %v2231 = vunpack.c.h.b16 %v750
  %v2232 = vunpack.c.l.b16 %v751
  %v2233 = vunpack.c.h.b16 %v751
  %v2234 = vunpack.c.l.b16 %v752
  %v2235 = vunpack.c.h.b16 %v752
  %v2236 = vunpack.c.l.b16 %v753
  %v2237 = vunpack.c.h.b16 %v753
  %v2238 = vunpack.c.l.b16 %v754
  %v2239 = vunpack.c.h.b16 %v754
  %v2240 = vunpack.c.l.b16 %v755
  %v2241 = vunpack.c.h.b16 %v755
  %v2242 = vunpack.c.l.b16 %v756
  %v2243 = vunpack.c.h.b16 %v756
  %v2244 = vunpack.c.l.b16 %v757
  %v2245 = vunpack.c.h.b16 %v757
  %v2246 = vunpack.c.l.b16 %v758
  %v2247 = vunpack.c.h.b16 %v758
  %v2248 = vunpack.c.l.b16 %v759
  %v2249 = vunpack.c.h.b16 %v759
  %v2250 = vunpack.c.l.b16 %v760
  %v2251 = vunpack.c.h.b16 %v760
  %v2252 = vunpack.c.l.b16 %v761
  %v2253 = vunpack.c.h.b16 %v761
  %v2254 = vunpack.c.l.b16 %v762
  %v2255 = vunpack.c.h.b16 %v762
  %v2256 = vunpack.c.l.b16 %v763
  %v2257 = vunpack.c.h.b16 %v763
  %v2258 = vunpack.c.l.b16 %v764
  %v2259 = vunpack.c.h.b16 %v764
  %v2260 = vunpack.c.l.b16 %v765
  %v2261 = vunpack.c.h.b16 %v765
  %v2262 = vunpack.c.l.b16 %v766
  %v2263 = vunpack.c.h.b16 %v766
  %v2264 = vunpack.c.l.b16 %v767
  %v2265 = vunpack.c.h.b16 %v767
  %v2266 = vunpack.c.l.b16 %v768
  %v2267 = vunpack.c.h.b16 %v768
  %v2268 = vunpack.c.l.b16 %v769
  %v2269 = vunpack.c.h.b16 %v769
  %v2270 = vunpack.c.l.b16 %v770
  %v2271 = vunpack.c.h.b16 %v770
  %v2272 = vunpack.c.l.b16 %v771
  %v2273 = vunpack.c.h.b16 %v771
  %v2274 = vunpack.c.l.b16 %v772
  %v2275 = vunpack.c.h.b16 %v772
  %v2276 = vunpack.c.l.b16 %v773
  %v2277 = vunpack.c.h.b16 %v773
  %v2278 = vunpack.c.l.b16 %v774
  %v2279 = vunpack.c.h.b16 %v774
  %v2280 = vunpack.c.l.b16 %v775
  %v2281 = vunpack.c.h.b16 %v775
  %v2282 = vunpack.c.l.b16 %v776
  %v2283 = vunpack.c.h.b16 %v776
  %v2284 = vunpack.c.l.b16 %v777
  %v2285 = vunpack.c.h.b16 %v777
  %v2286 = vunpack.c.l.b16 %v778
  %v2287 = vunpack.c.h.b16 %v778
  %v2288 = vunpack.c.l.b16 %v779
  %v2289 = vunpack.c.h.b16 %v779
  %v2290 = vunpack.c.l.b16 %v780
  %v2291 = vunpack.c.h.b16 %v780
  %v2292 = vunpack.c.l.b16 %v781
  %v2293 = vunpack.c.h.b16 %v781
  %v2294 = vunpack.c.l.b16 %v782
  %v2295 = vunpack.c.h.b16 %v782
  %v2296 = vunpack.c.l.b16 %v783
  %v2297 = vunpack.c.h.b16 %v783
  %v2298 = vunpack.c.l.b16 %v784
  %v2299 = vunpack.c.h.b16 %v784
  %v2300 = vunpack.c.l.b16 %v785
  %v2301 = vunpack.c.h.b16 %v785
  %v2302 = vunpack.c.l.b16 %v786
  %v2303 = vunpack.c.h.b16 %v786
  %v2304 = vunpack.c.l.b16 %v787
  %v2305 = vunpack.c.h.b16 %v787
  %v2306 = vunpack.c.l.b16 %v788
  %v2307 = vunpack.c.h.b16 %v788
  %v2308 = vunpack.c.l.b16 %v789
  %v2309 = vunpack.c.h.b16 %v789
  %v2310 = vunpack.c.l.b16 %v790
  %v2311 = vunpack.c.h.b16 %v790
  %v2312 = vunpack.c.l.b16 %v791
  %v2313 = vunpack.c.h.b16 %v791
  %v2314 = vunpack.c.l.b16 %v792
  %v2315 = vunpack.c.h.b16 %v792
  %v2316 = vunpack.c.l.b16 %v793
  %v2317 = vunpack.c.h.b16 %v793
  %v2318 = vunpack.c.l.b16 %v794
  %v2319 = vunpack.c.h.b16 %v794
  %v2320 = vunpack.c.l.b16 %v795
  %v2321 = vunpack.c.h.b16 %v795
  %v2322 = vunpack.c.l.b16 %v796
  %v2323 = vunpack.c.h.b16 %v796
  %v2324 = vunpack.c.l.b16 %v797
  %v2325 = vunpack.c.h.b16 %v797
  %v2326 = vunpack.c.l.b16 %v798
  %v2327 = vunpack.c.h.b16 %v798
  %v2328 = vunpack.c.l.b16 %v799
  %v2329 = vunpack.c.h.b16 %v799
  %v2330 = vunpack.c.l.b16 %v800
  %v2331 = vunpack.c.h.b16 %v800
  %v2332 = vunpack.c.l.b16 %v801
  %v2333 = vunpack.c.h.b16 %v801
  %v2334 = vunpack.c.l.b16 %v802
  %v2335 = vunpack.c.h.b16 %v802
  %v2336 = vunpack.c.l.b16 %v803
  %v2337 = vunpack.c.h.b16 %v803
  %v2338 = vunpack.c.l.b16 %v804
  %v2339 = vunpack.c.h.b16 %v804
  %v2340 = vunpack.c.l.b16 %v805
  %v2341 = vunpack.c.h.b16 %v805
  %v2342 = vunpack.c.l.b16 %v806
  %v2343 = vunpack.c.h.b16 %v806
  %v2344 = vunpack.c.l.b16 %v807
  %v2345 = vunpack.c.h.b16 %v807
  %v2346 = vunpack.c.l.b16 %v808
  %v2347 = vunpack.c.h.b16 %v808
  %v2348 = vunpack.c.l.b16 %v809
  %v2349 = vunpack.c.h.b16 %v809
  %v2350 = vunpack.c.l.b16 %v810
  %v2351 = vunpack.c.h.b16 %v810
  %v2352 = vunpack.c.l.b16 %v811
  %v2353 = vunpack.c.h.b16 %v811
  %v2354 = vunpack.c.l.b16 %v812
  %v2355 = vunpack.c.h.b16 %v812
  %v2356 = vunpack.c.l.b16 %v813
  %v2357 = vunpack.c.h.b16 %v813
  %v2358 = vunpack.c.l.b16 %v814
  %v2359 = vunpack.c.h.b16 %v814
  %v2360 = vunpack.c.l.b16 %v815
  %v2361 = vunpack.c.h.b16 %v815
  %v2362 = vunpack.c.l.b16 %v816
  %v2363 = vunpack.c.h.b16 %v816
  %v2364 = vunpack.c.l.b16 %v817
  %v2365 = vunpack.c.h.b16 %v817
  %v2366 = vunpack.c.l.b16 %v818
  %v2367 = vunpack.c.h.b16 %v818
  %v2368 = vunpack.c.l.b16 %v819
  %v2369 = vunpack.c.h.b16 %v819
  %v2370 = vunpack.c.l.b16 %v820
  %v2371 = vunpack.c.h.b16 %v820
  %v2372 = vunpack.c.l.b16 %v821
  %v2373 = vunpack.c.h.b16 %v821
  %v2374 = vunpack.c.l.b16 %v822
  %v2375 = vunpack.c.h.b16 %v822
  %v2376 = vunpack.c.l.b16 %v823
  %v2377 = vunpack.c.h.b16 %v823
  %v2378 = vunpack.c.l.b16 %v824
  %v2379 = vunpack.c.h.b16 %v824
  %v2380 = vunpack.c.l.b16 %v825
  %v2381 = vunpack.c.h.b16 %v825
  %v2382 = vunpack.c.l.b16 %v826
  %v2383 = vunpack.c.h.b16 %v826
  %v2384 = vunpack.c.l.b16 %v827
  %v2385 = vunpack.c.h.b16 %v827
  %v2386 = vunpack.c.l.b16 %v828
  %v2387 = vunpack.c.h.b16 %v828
  %v2388 = vunpack.c.l.b16 %v829
  %v2389 = vunpack.c.h.b16 %v829
  %v2390 = vunpack.c.l.b16 %v830
  %v2391 = vunpack.c.h.b16 %v830
  %v2392 = vunpack.c.l.b16 %v831
  %v2393 = vunpack.c.h.b16 %v831
  %v2394 = vunpack.c.l.b16 %v832
  %v2395 = vunpack.c.h.b16 %v832
  %v2396 = vunpack.c.l.b16 %v833
  %v2397 = vunpack.c.h.b16 %v833
  %v2398 = vunpack.c.l.b16 %v834
  %v2399 = vunpack.c.h.b16 %v834
  %v2400 = vunpack.c.l.b16 %v835
  %v2401 = vunpack.c.h.b16 %v835
  %v2402 = vunpack.c.l.b16 %v836
  %v2403 = vunpack.c.h.b16 %v836
  %v2404 = vunpack.c.l.b16 %v837
  %v2405 = vunpack.c.h.b16 %v837
  %v2406 = vunpack.c.l.b16 %v838
  %v2407 = vunpack.c.h.b16 %v838
  %v2408 = vunpack.c.l.b16 %v839
  %v2409 = vunpack.c.h.b16 %v839
  %v2410 = vunpack.c.l.b16 %v840
  %v2411 = vunpack.c.h.b16 %v840
  %v2412 = vunpack.c.l.b16 %v841
  %v2413 = vunpack.c.h.b16 %v841
  %v2414 = vunpack.c.l.b16 %v842
  %v2415 = vunpack.c.h.b16 %v842
  %v2416 = vpack.c.b16 %v2132, %v2128
  %v2417 = vpack.c.b16 %v2133, %v2129
  %v2418 = vpack.c.b16 %v2134, %v2130
  %v2419 = vpack.c.b16 %v2135, %v2131
  %v2420 = vpack.c.b16 %v2140, %v2136
  %v2421 = vpack.c.b16 %v2141, %v2137
  %v2422 = vpack.c.b16 %v2142, %v2138
  %v2423 = vpack.c.b16 %v2143, %v2139
  %v2424 = vpack.c.b16 %v2148, %v2144
  %v2425 = vpack.c.b16 %v2149, %v2145
  %v2426 = vpack.c.b16 %v2150, %v2146
  %v2427 = vpack.c.b16 %v2151, %v2147
  %v2428 = vpack.c.b16 %v2156, %v2152
  %v2429 = vpack.c.b16 %v2157, %v2153
  %v2430 = vpack.c.b16 %v2158, %v2154
  %v2431 = vpack.c.b16 %v2159, %v2155
  %v2432 = vpack.c.b16 %v2164, %v2160
  %v2433 = vpack.c.b16 %v2165, %v2161
  %v2434 = vpack.c.b16 %v2166, %v2162
  %v2435 = vpack.c.b16 %v2167, %v2163
  %v2436 = vpack.c.b16 %v2172, %v2168
  %v2437 = vpack.c.b16 %v2173, %v2169
  %v2438 = vpack.c.b16 %v2174, %v2170
  %v2439 = vpack.c.b16 %v2175, %v2171
  %v2440 = vpack.c.b16 %v2180, %v2176
  %v2441 = vpack.c.b16 %v2181, %v2177
  %v2442 = vpack.c.b16 %v2182, %v2178
  %v2443 = vpack.c.b16 %v2183, %v2179
  %v2444 = vpack.c.b16 %v2188, %v2184
  %v2445 = vpack.c.b16 %v2189, %v2185
  %v2446 = vpack.c.b16 %v2190, %v2186
  %v2447 = vpack.c.b16 %v2191, %v2187
  %v2448 = vpack.c.b16 %v2196, %v2192
  %v2449 = vpack.c.b16 %v2197, %v2193
  %v2450 = vpack.c.b16 %v2198, %v2194
  %v2451 = vpack.c.b16 %v2199, %v2195
  %v2452 = vpack.c.b16 %v2204, %v2200
  %v2453 = vpack.c.b16 %v2205, %v2201
  %v2454 = vpack.c.b16 %v2206, %v2202
  %v2455 = vpack.c.b16 %v2207, %v2203
  %v2456 = vpack.c.b16 %v2212, %v2208
  %v2457 = vpack.c.b16 %v2213, %v2209
  %v2458 = vpack.c.b16 %v2214, %v2210
  %v2459 = vpack.c.b16 %v2215, %v2211
  %v2460 = vpack.c.b16 %v2220, %v2216
  %v2461 = vpack.c.b16 %v2221, %v2217
  %v2462 = vpack.c.b16 %v2222, %v2218
  %v2463 = vpack.c.b16 %v2223, %v2219
  %v2464 = vpack.c.b16 %v2228, %v2224
  %v2465 = vpack.c.b16 %v2229, %v2225
  %v2466 = vpack.c.b16 %v2230, %v2226
  %v2467 = vpack.c.b16 %v2231, %v2227
  %v2468 = vpack.c.b16 %v2236, %v2232
  %v2469 = vpack.c.b16 %v2237, %v2233
  %v2470 = vpack.c.b16 %v2238, %v2234
  %v2471 = vpack.c.b16 %v2239, %v2235
  %v2472 = vpack.c.b16 %v2244, %v2240
  %v2473 = vpack.c.b16 %v2245, %v2241
  %v2474 = vpack.c.b16 %v2246, %v2242
  %v2475 = vpack.c.b16 %v2247, %v2243
  %v2476 = vpack.c.b16 %v2252, %v2248
  %v2477 = vpack.c.b16 %v2253, %v2249
  %v2478 = vpack.c.b16 %v2254, %v2250
  %v2479 = vpack.c.b16 %v2255, %v2251
  %v2480 = vpack.c.b16 %v2260, %v2256
  %v2481 = vpack.c.b16 %v2261, %v2257
  %v2482 = vpack.c.b16 %v2262, %v2258
  %v2483 = vpack.c.b16 %v2263, %v2259
  %v2484 = vpack.c.b16 %v2268, %v2264
  %v2485 = vpack.c.b16 %v2269, %v2265
  %v2486 = vpack.c.b16 %v2270, %v2266
  %v2487 = vpack.c.b16 %v2271, %v2267
  %v2488 = vpack.c.b16 %v2276, %v2272
  %v2489 = vpack.c.b16 %v2277, %v2273
  %v2490 = vpack.c.b16 %v2278, %v2274
  %v2491 = vpack.c.b16 %v2279, %v2275
  %v2492 = vpack.c.b16 %v2284, %v2280
  %v2493 = vpack.c.b16 %v2285, %v2281
  %v2494 = vpack.c.b16 %v2286, %v2282
  %v2495 = vpack.c.b16 %v2287, %v2283
  %v2496 = vpack.c.b16 %v2292, %v2288
  %v2497 = vpack.c.b16 %v2293, %v2289
  %v2498 = vpack.c.b16 %v2294, %v2290
  %v2499 = vpack.c.b16 %v2295, %v2291
  %v2500 = vpack.c.b16 %v2300, %v2296
  %v2501 = vpack.c.b16 %v2301, %v2297
  %v2502 = vpack.c.b16 %v2302, %v2298
  %v2503 = vpack.c.b16 %v2303, %v2299
  %v2504 = vpack.c.b16 %v2308, %v2304
  %v2505 = vpack.c.b16 %v2309, %v2305
  %v2506 = vpack.c.b16 %v2310, %v2306
  %v2507 = vpack.c.b16 %v2311, %v2307
  %v2508 = vpack.c.b16 %v2316, %v2312
  %v2509 = vpack.c.b16 %v2317, %v2313
  %v2510 = vpack.c.b16 %v2318, %v2314
  %v2511 = vpack.c.b16 %v2319, %v2315
  %v2512 = vpack.c.b16 %v2324, %v2320
  %v2513 = vpack.c.b16 %v2325, %v2321
  %v2514 = vpack.c.b16 %v2326, %v2322
  %v2515 = vpack.c.b16 %v2327, %v2323
  %v2516 = vpack.c.b16 %v2332, %v2328
  %v2517 = vpack.c.b16 %v2333, %v2329
  %v2518 = vpack.c.b16 %v2334, %v2330
  %v2519 = vpack.c.b16 %v2335, %v2331
  %v2520 = vpack.c.b16 %v2340, %v2336
  %v2521 = vpack.c.b16 %v2341, %v2337
  %v2522 = vpack.c.b16 %v2342, %v2338
  %v2523 = vpack.c.b16 %v2343, %v2339
  %v2524 = vpack.c.b16 %v2348, %v2344
  %v2525 = vpack.c.b16 %v2349, %v2345
  %v2526 = vpack.c.b16 %v2350, %v2346
  %v2527 = vpack.c.b16 %v2351, %v2347
  %v2528 = vpack.c.b16 %v2356, %v2352
  %v2529 = vpack.c.b16 %v2357, %v2353
  %v2530 = vpack.c.b16 %v2358, %v2354
  %v2531 = vpack.c.b16 %v2359, %v2355
  %v2532 = vpack.c.b16 %v2364, %v2360
  %v2533 = vpack.c.b16 %v2365, %v2361
  %v2534 = vpack.c.b16 %v2366, %v2362
  %v2535 = vpack.c.b16 %v2367, %v2363
  %v2536 = vpack.c.b16 %v2372, %v2368
  %v2537 = vpack.c.b16 %v2373, %v2369
  %v2538 = vpack.c.b16 %v2374, %v2370
  %v2539 = vpack.c.b16 %v2375, %v2371
  %v2540 = vpack.c.b16 %v2380, %v2376
  %v2541 = vpack.c.b16 %v2381, %v2377
  %v2542 = vpack.c.b16 %v2382, %v2378
  %v2543 = vpack.c.b16 %v2383, %v2379
  %v2544 = vpack.c.b16 %v2388, %v2384
  %v2545 = vpack.c.b16 %v2389, %v2385
  %v2546 = vpack.c.b16 %v2390, %v2386
  %v2547 = vpack.c.b16 %v2391, %v2387
  %v2548 = vpack.c.b16 %v2396, %v2392
  %v2549 = vpack.c.b16 %v2397, %v2393
  %v2550 = vpack.c.b16 %v2398, %v2394
  %v2551 = vpack.c.b16 %v2399, %v2395
  %v2552 = vpack.c.b16 %v2404, %v2400
  %v2553 = vpack.c.b16 %v2405, %v2401
  %v2554 = vpack.c.b16 %v2406, %v2402
  %v2555 = vpack.c.b16 %v2407, %v2403
  %v2556 = vpack.c.b16 %v2412, %v2408
  %v2557 = vpack.c.b16 %v2413, %v2409
  %v2558 = vpack.c.b16 %v2414, %v2410
  %v2559 = vpack.c.b16 %v2415, %v2411
  %v2705 = vsel %vm537, %v698, 0
  %2707 = vmatprep.subr.bf16.mxu0 %v2417
  %2708 = vmatpush1.bf16.msra.mxu0 %v2416
  %2709 = vmatprep.subr.bf16.mxu0 %v2421
  %2710 = vmatpush1.bf16.msra.mxu0 %v2420
  %2711 = vmatprep.subr.bf16.mxu0 %v2425
  %2712 = vmatpush1.bf16.msra.mxu0 %v2424
  %2713 = vmatprep.subr.bf16.mxu0 %v2429
  %2714 = vmatpush1.bf16.msra.mxu0 %v2428
  %2715 = vmatprep.subr.bf16.mxu0 %v2433
  %2716 = vmatpush1.bf16.msra.mxu0 %v2432
  %2717 = vmatprep.subr.bf16.mxu0 %v2437
  %2718 = vmatpush1.bf16.msra.mxu0 %v2436
  %2719 = vmatprep.subr.bf16.mxu0 %v2441
  %2720 = vmatpush1.bf16.msra.mxu0 %v2440
  %2721 = vmatprep.subr.bf16.mxu0 %v2445
  %2722 = vmatpush1.bf16.msra.mxu0 %v2444
  %2723 = vmatprep.subr.bf16.mxu0 %v2449
  %2724 = vmatpush1.bf16.msra.mxu0 %v2448
  %2725 = vmatprep.subr.bf16.mxu0 %v2453
  %2726 = vmatpush1.bf16.msra.mxu0 %v2452
  %2727 = vmatprep.subr.bf16.mxu0 %v2457
  %2728 = vmatpush1.bf16.msra.mxu0 %v2456
  %2729 = vmatprep.subr.bf16.mxu0 %v2461
  %2730 = vmatpush1.bf16.msra.mxu0 %v2460
  %2731 = vmatprep.subr.bf16.mxu0 %v2465
  %2732 = vmatpush1.bf16.msra.mxu0 %v2464
  %2733 = vmatprep.subr.bf16.mxu0 %v2469
  %2734 = vmatpush1.bf16.msra.mxu0 %v2468
  %2735 = vmatprep.subr.bf16.mxu0 %v2473
  %2736 = vmatpush1.bf16.msra.mxu0 %v2472
  %2737 = vmatprep.subr.bf16.mxu0 %v2477
  %2738 = vmatpush1.bf16.msra.mxu0 %v2476
  %2739 = vmatprep.mubr.bf16.mxu0 %v695
  %2740 = vmatmul.mubr.bf16.gmra.mrb[0].mxu0 %v694
  %v2741 = vpop.f32.mrb[0].mxu0
  %v2742 = vadd.f32 %v1847, %v2741
  %v2743 = vpop.f32.mrb[0].mxu0
  %v2744 = vadd.f32 %v1849, %v2743
  %v2745 = vpop.f32.mrb[0].mxu0
  %v2746 = vadd.f32 %v1851, %v2745
  %v2747 = vpop.f32.mrb[0].mxu0
  %v2748 = vadd.f32 %v1853, %v2747
  %2749 = vdwg.mxu0
  %2750 = vmatprep.subr.bf16.mxu0 %v2481
  %2751 = vmatpush1.bf16.msra.mxu0 %v2480
  %2752 = vmatprep.subr.bf16.mxu0 %v2485
  %2753 = vmatpush1.bf16.msra.mxu0 %v2484
  %2754 = vmatprep.subr.bf16.mxu0 %v2489
  %2755 = vmatpush1.bf16.msra.mxu0 %v2488
  %2756 = vmatprep.subr.bf16.mxu0 %v2493
  %2757 = vmatpush1.bf16.msra.mxu0 %v2492
  %2758 = vmatprep.subr.bf16.mxu0 %v2497
  %2759 = vmatpush1.bf16.msra.mxu0 %v2496
  %2760 = vmatprep.subr.bf16.mxu0 %v2501
  %2761 = vmatpush1.bf16.msra.mxu0 %v2500
  %2762 = vmatprep.subr.bf16.mxu0 %v2505
  %2763 = vmatpush1.bf16.msra.mxu0 %v2504
  %2764 = vmatprep.subr.bf16.mxu0 %v2509
  %2765 = vmatpush1.bf16.msra.mxu0 %v2508
  %2766 = vmatprep.subr.bf16.mxu0 %v2513
  %2767 = vmatpush1.bf16.msra.mxu0 %v2512
  %2768 = vmatprep.subr.bf16.mxu0 %v2517
  %2769 = vmatpush1.bf16.msra.mxu0 %v2516
  %2770 = vmatprep.subr.bf16.mxu0 %v2521
  %2771 = vmatpush1.bf16.msra.mxu0 %v2520
  %2772 = vmatprep.subr.bf16.mxu0 %v2525
  %2773 = vmatpush1.bf16.msra.mxu0 %v2524
  %2774 = vmatprep.subr.bf16.mxu0 %v2529
  %2775 = vmatpush1.bf16.msra.mxu0 %v2528
  %2776 = vmatprep.subr.bf16.mxu0 %v2533
  %2777 = vmatpush1.bf16.msra.mxu0 %v2532
  %2778 = vmatprep.subr.bf16.mxu0 %v2537
  %2779 = vmatpush1.bf16.msra.mxu0 %v2536
  %2780 = vmatprep.subr.bf16.mxu0 %v2541
  %2781 = vmatpush1.bf16.msra.mxu0 %v2540
  %2782 = vmatprep.mubr.bf16.mxu0 %v697
  %2783 = vmatmul.mubr.bf16.gmra.mrb[0].mxu0 %v696
  %v2784 = vpop.f32.mrb[0].mxu0
  %v2785 = vadd.f32 %v2742, %v2784
  %v2786 = vpop.f32.mrb[0].mxu0
  %v2787 = vadd.f32 %v2744, %v2786
  %v2788 = vpop.f32.mrb[0].mxu0
  %v2789 = vadd.f32 %v2746, %v2788
  %v2790 = vpop.f32.mrb[0].mxu0
  %v2791 = vadd.f32 %v2748, %v2790
  %2792 = vdwg.mxu0
  %2793 = vmatprep.subr.bf16.mxu0 %v2545
  %2794 = vmatpush1.bf16.msra.mxu0 %v2544
  %2795 = vmatprep.subr.bf16.mxu0 %v2549
  %2796 = vmatpush1.bf16.msra.mxu0 %v2548
  %2797 = vmatprep.subr.bf16.mxu0 %v2553
  %2798 = vmatpush1.bf16.msra.mxu0 %v2552
  %2799 = vmatprep.subr.bf16.mxu0 %v2557
  %2800 = vmatpush1.bf16.msra.mxu0 %v2556
  %2801 = vmatprep.subr.bf16.mxu0 0
  %2802 = vmatpush1.bf16.msra.mxu0 0
  %2803 = vmatprep.subr.bf16.mxu0 0
  %2804 = vmatpush1.bf16.msra.mxu0 0
  %2805 = vmatprep.subr.bf16.mxu0 0
  %2806 = vmatpush1.bf16.msra.mxu0 0
  %2807 = vmatprep.subr.bf16.mxu0 0
  %2808 = vmatpush1.bf16.msra.mxu0 0
  %2809 = vmatprep.subr.bf16.mxu0 0
  %2810 = vmatpush1.bf16.msra.mxu0 0
  %2811 = vmatprep.subr.bf16.mxu0 0
  %2812 = vmatpush1.bf16.msra.mxu0 0
  %2813 = vmatprep.subr.bf16.mxu0 0
  %2814 = vmatpush1.bf16.msra.mxu0 0
  %2815 = vmatprep.subr.bf16.mxu0 0
  %2816 = vmatpush1.bf16.msra.mxu0 0
  %2817 = vmatprep.subr.bf16.mxu0 0
  %2818 = vmatpush1.bf16.msra.mxu0 0
  %2819 = vmatprep.subr.bf16.mxu0 0
  %2820 = vmatpush1.bf16.msra.mxu0 0
  %2821 = vmatprep.subr.bf16.mxu0 0
  %2822 = vmatpush1.bf16.msra.mxu0 0
  %2823 = vmatprep.subr.bf16.mxu0 0
  %2824 = vmatpush1.bf16.msra.mxu0 0
  %2825 = vmatprep.mubr.bf16.mxu0 0
  %2826 = vmatmul.mubr.bf16.gmra.mrb[0].mxu0 %v2705
  %v2827 = vpop.f32.mrb[0].mxu0
  %v2828 = vadd.f32 %v2785, %v2827
  %v2829 = vpop.f32.mrb[0].mxu0
  %v2830 = vadd.f32 %v2787, %v2829
  %v2831 = vpop.f32.mrb[0].mxu0
  %v2832 = vadd.f32 %v2789, %v2831
  %v2833 = vpop.f32.mrb[0].mxu0
  %v2834 = vadd.f32 %v2791, %v2833
  %2835 = vdwg.mxu0
  %2836 = vmatprep.subr.bf16.mxu0 %v2419
  %2837 = vmatpush1.bf16.msra.mxu0 %v2418
  %2838 = vmatprep.subr.bf16.mxu0 %v2423
  %2839 = vmatpush1.bf16.msra.mxu0 %v2422
  %2840 = vmatprep.subr.bf16.mxu0 %v2427
  %2841 = vmatpush1.bf16.msra.mxu0 %v2426
  %2842 = vmatprep.subr.bf16.mxu0 %v2431
  %2843 = vmatpush1.bf16.msra.mxu0 %v2430
  %2844 = vmatprep.subr.bf16.mxu0 %v2435
  %2845 = vmatpush1.bf16.msra.mxu0 %v2434
  %2846 = vmatprep.subr.bf16.mxu0 %v2439
  %2847 = vmatpush1.bf16.msra.mxu0 %v2438
  %2848 = vmatprep.subr.bf16.mxu0 %v2443
  %2849 = vmatpush1.bf16.msra.mxu0 %v2442
  %2850 = vmatprep.subr.bf16.mxu0 %v2447
  %2851 = vmatpush1.bf16.msra.mxu0 %v2446
  %2852 = vmatprep.subr.bf16.mxu0 %v2451
  %2853 = vmatpush1.bf16.msra.mxu0 %v2450
  %2854 = vmatprep.subr.bf16.mxu0 %v2455
  %2855 = vmatpush1.bf16.msra.mxu0 %v2454
  %2856 = vmatprep.subr.bf16.mxu0 %v2459
  %2857 = vmatpush1.bf16.msra.mxu0 %v2458
  %2858 = vmatprep.subr.bf16.mxu0 %v2463
  %2859 = vmatpush1.bf16.msra.mxu0 %v2462
  %2860 = vmatprep.subr.bf16.mxu0 %v2467
  %2861 = vmatpush1.bf16.msra.mxu0 %v2466
  %2862 = vmatprep.subr.bf16.mxu0 %v2471
  %2863 = vmatpush1.bf16.msra.mxu0 %v2470
  %2864 = vmatprep.subr.bf16.mxu0 %v2475
  %2865 = vmatpush1.bf16.msra.mxu0 %v2474
  %2866 = vmatprep.subr.bf16.mxu0 %v2479
  %2867 = vmatpush1.bf16.msra.mxu0 %v2478
  %2868 = vmatprep.mubr.bf16.mxu0 %v695
  %2869 = vmatmul.mubr.bf16.gmra.mrb[0].mxu0 %v694
  %v2870 = vpop.f32.mrb[0].mxu0
  %v2871 = vadd.f32 %v1976, %v2870
  %v2872 = vpop.f32.mrb[0].mxu0
  %v2873 = vadd.f32 %v1978, %v2872
  %v2874 = vpop.f32.mrb[0].mxu0
  %v2875 = vadd.f32 %v1980, %v2874
  %v2876 = vpop.f32.mrb[0].mxu0
  %v2877 = vadd.f32 %v1982, %v2876
  %2878 = vdwg.mxu0
  %2879 = vmatprep.subr.bf16.mxu0 %v2483
  %2880 = vmatpush1.bf16.msra.mxu0 %v2482
  %2881 = vmatprep.subr.bf16.mxu0 %v2487
  %2882 = vmatpush1.bf16.msra.mxu0 %v2486
  %2883 = vmatprep.subr.bf16.mxu0 %v2491
  %2884 = vmatpush1.bf16.msra.mxu0 %v2490
  %2885 = vmatprep.subr.bf16.mxu0 %v2495
  %2886 = vmatpush1.bf16.msra.mxu0 %v2494
  %2887 = vmatprep.subr.bf16.mxu0 %v2499
  %2888 = vmatpush1.bf16.msra.mxu0 %v2498
  %2889 = vmatprep.subr.bf16.mxu0 %v2503
  %2890 = vmatpush1.bf16.msra.mxu0 %v2502
  %2891 = vmatprep.subr.bf16.mxu0 %v2507
  %2892 = vmatpush1.bf16.msra.mxu0 %v2506
  %2893 = vmatprep.subr.bf16.mxu0 %v2511
  %2894 = vmatpush1.bf16.msra.mxu0 %v2510
  %2895 = vmatprep.subr.bf16.mxu0 %v2515
  %2896 = vmatpush1.bf16.msra.mxu0 %v2514
  %2897 = vmatprep.subr.bf16.mxu0 %v2519
  %2898 = vmatpush1.bf16.msra.mxu0 %v2518
  %2899 = vmatprep.subr.bf16.mxu0 %v2523
  %2900 = vmatpush1.bf16.msra.mxu0 %v2522
  %2901 = vmatprep.subr.bf16.mxu0 %v2527
  %2902 = vmatpush1.bf16.msra.mxu0 %v2526
  %2903 = vmatprep.subr.bf16.mxu0 %v2531
  %2904 = vmatpush1.bf16.msra.mxu0 %v2530
  %2905 = vmatprep.subr.bf16.mxu0 %v2535
  %2906 = vmatpush1.bf16.msra.mxu0 %v2534
  %2907 = vmatprep.subr.bf16.mxu0 %v2539
  %2908 = vmatpush1.bf16.msra.mxu0 %v2538
  %2909 = vmatprep.subr.bf16.mxu0 %v2543
  %2910 = vmatpush1.bf16.msra.mxu0 %v2542
  %2911 = vmatprep.mubr.bf16.mxu0 %v697
  %2912 = vmatmul.mubr.bf16.gmra.mrb[0].mxu0 %v696
  %v2913 = vpop.f32.mrb[0].mxu0
  %v2914 = vadd.f32 %v2871, %v2913
  %v2915 = vpop.f32.mrb[0].mxu0
  %v2916 = vadd.f32 %v2873, %v2915
  %v2917 = vpop.f32.mrb[0].mxu0
  %v2918 = vadd.f32 %v2875, %v2917
  %v2919 = vpop.f32.mrb[0].mxu0
  %v2920 = vadd.f32 %v2877, %v2919
  %2921 = vdwg.mxu0
  %2922 = vmatprep.subr.bf16.mxu0 %v2547
  %2923 = vmatpush1.bf16.msra.mxu0 %v2546
  %2924 = vmatprep.subr.bf16.mxu0 %v2551
  %2925 = vmatpush1.bf16.msra.mxu0 %v2550
  %2926 = vmatprep.subr.bf16.mxu0 %v2555
  %2927 = vmatpush1.bf16.msra.mxu0 %v2554
  %2928 = vmatprep.subr.bf16.mxu0 %v2559
  %2929 = vmatpush1.bf16.msra.mxu0 %v2558
  %2930 = vmatprep.subr.bf16.mxu0 0
  %2931 = vmatpush1.bf16.msra.mxu0 0
  %2932 = vmatprep.subr.bf16.mxu0 0
  %2933 = vmatpush1.bf16.msra.mxu0 0
  %2934 = vmatprep.subr.bf16.mxu0 0
  %2935 = vmatpush1.bf16.msra.mxu0 0
  %2936 = vmatprep.subr.bf16.mxu0 0
  %2937 = vmatpush1.bf16.msra.mxu0 0
  %2938 = vmatprep.subr.bf16.mxu0 0
  %2939 = vmatpush1.bf16.msra.mxu0 0
  %2940 = vmatprep.subr.bf16.mxu0 0
  %2941 = vmatpush1.bf16.msra.mxu0 0
  %2942 = vmatprep.subr.bf16.mxu0 0
  %2943 = vmatpush1.bf16.msra.mxu0 0
  %2944 = vmatprep.subr.bf16.mxu0 0
  %2945 = vmatpush1.bf16.msra.mxu0 0
  %2946 = vmatprep.subr.bf16.mxu0 0
  %2947 = vmatpush1.bf16.msra.mxu0 0
  %2948 = vmatprep.subr.bf16.mxu0 0
  %2949 = vmatpush1.bf16.msra.mxu0 0
  %2950 = vmatprep.subr.bf16.mxu0 0
  %2951 = vmatpush1.bf16.msra.mxu0 0
  %2952 = vmatprep.subr.bf16.mxu0 0
  %2953 = vmatpush1.bf16.msra.mxu0 0
  %2954 = vmatprep.mubr.bf16.mxu0 0
  %2955 = vmatmul.mubr.bf16.gmra.mrb[0].mxu0 %v2705
  %v2956 = vpop.f32.mrb[0].mxu0
  %v2957 = vadd.f32 %v2914, %v2956
  %v2958 = vpop.f32.mrb[0].mxu0
  %v2959 = vadd.f32 %v2916, %v2958
  %v2960 = vpop.f32.mrb[0].mxu0
  %v2961 = vadd.f32 %v2918, %v2960
  %v2962 = vpop.f32.mrb[0].mxu0
  %v2963 = vadd.f32 %v2920, %v2962
  %2964 = vdwg.mxu0
  %v2965 = vld [vmem:[#allocation2] sm:$0xfc]
  %v2966 = vld [vmem:[#allocation2 + $0x8] sm:$0xfc]
  %v2967 = vld [vmem:[#allocation2 + $0x10] sm:$0xfc]
  %v2968 = vld [vmem:[#allocation2 + $0x18] sm:$0xfc]
  %v2969 = vld [vmem:[#allocation2 + $0x20] sm:$0xfc]
  %v2970 = vld [vmem:[#allocation2 + $0x28] sm:$0xff]
  %v2971 = vld [vmem:[#allocation2 + $0x30] sm:$0xff]
  %v2972 = vld [vmem:[#allocation2 + $0x38] sm:$0xff]
  %v2973 = vld [vmem:[#allocation2 + $0x40] sm:$0xff]
  %v2974 = vld [vmem:[#allocation2 + $0x48] sm:$0xff]
  %v2975 = vpack.c.bf16 %v2970, %v2965
  %v2976 = vpack.c.bf16 %v2971, %v2966
  %v2977 = vpack.c.bf16 %v2972, %v2967
  %v2978 = vpack.c.bf16 %v2973, %v2968
  %v2979 = vpack.c.bf16 %v2974, %v2969
  %s2980 = scalar_lea.vmem %s3, 2304
  %v2981 = vld [vmem:[%s2980] sm:$0xff]
  %v2982 = vld [vmem:[%s2980 + $0x8] sm:$0xff]
  %v2983 = vld [vmem:[%s2980 + $0x10] sm:$0xff]
  %v2984 = vld [vmem:[%s2980 + $0x18] sm:$0xff]
  %v2985 = vld [vmem:[%s2980 + $0x20] sm:$0xff]
  %v2986 = vld [vmem:[%s2980 + $0x28] sm:$0xff]
  %v2987 = vld [vmem:[%s2980 + $0x30] sm:$0xff]
  %v2988 = vld [vmem:[%s2980 + $0x38] sm:$0xff]
  %v2989 = vld [vmem:[%s2980 + $0x40] sm:$0xff]
  %v2990 = vld [vmem:[%s2980 + $0x48] sm:$0xff]
  %v2991 = vld [vmem:[%s2980 + $0x50] sm:$0xff]
  %v2992 = vld [vmem:[%s2980 + $0x58] sm:$0xff]
  %v2993 = vld [vmem:[%s2980 + $0x60] sm:$0xff]
  %v2994 = vld [vmem:[%s2980 + $0x68] sm:$0xff]
  %v2995 = vld [vmem:[%s2980 + $0x70] sm:$0xff]
  %v2996 = vld [vmem:[%s2980 + $0x78] sm:$0xff]
  %v2997 = vld [vmem:[%s2980 + $0x80] sm:$0xff]
  %v2998 = vld [vmem:[%s2980 + $0x88] sm:$0xff]
  %v2999 = vld [vmem:[%s2980 + $0x90] sm:$0xff]
  %v3000 = vld [vmem:[%s2980 + $0x98] sm:$0xff]
  %v3001 = vld [vmem:[%s2980 + $0xa0] sm:$0xff]
  %v3002 = vld [vmem:[%s2980 + $0xa8] sm:$0xff]
  %v3003 = vld [vmem:[%s2980 + $0xb0] sm:$0xff]
  %v3004 = vld [vmem:[%s2980 + $0xb8] sm:$0xff]
  %v3005 = vld [vmem:[%s2980 + $0xc0] sm:$0xff]
  %v3006 = vld [vmem:[%s2980 + $0xc8] sm:$0xff]
  %v3007 = vld [vmem:[%s2980 + $0xd0] sm:$0xff]
  %v3008 = vld [vmem:[%s2980 + $0xd8] sm:$0xff]
  %v3009 = vld [vmem:[%s2980 + $0xe0] sm:$0xff]
  %v3010 = vld [vmem:[%s2980 + $0xe8] sm:$0xff]
  %v3011 = vld [vmem:[%s2980 + $0xf0] sm:$0xff]
  %v3012 = vld [vmem:[%s2980 + $0xf8] sm:$0xff]
  %v3013 = vld [vmem:[%s2980 + $0x100] sm:$0xff]
  %v3014 = vld [vmem:[%s2980 + $0x108] sm:$0xff]
  %v3015 = vld [vmem:[%s2980 + $0x110] sm:$0xff]
  %v3016 = vld [vmem:[%s2980 + $0x118] sm:$0xff]
  %v3017 = vld [vmem:[%s2980 + $0x120] sm:$0xff]
  %v3018 = vld [vmem:[%s2980 + $0x128] sm:$0xff]
  %v3019 = vld [vmem:[%s2980 + $0x130] sm:$0xff]
  %v3020 = vld [vmem:[%s2980 + $0x138] sm:$0xff]
  %v3021 = vld [vmem:[%s2980 + $0x140] sm:$0xff]
  %v3022 = vld [vmem:[%s2980 + $0x148] sm:$0xff]
  %v3023 = vld [vmem:[%s2980 + $0x150] sm:$0xff]
  %v3024 = vld [vmem:[%s2980 + $0x158] sm:$0xff]
  %v3025 = vld [vmem:[%s2980 + $0x160] sm:$0xff]
  %v3026 = vld [vmem:[%s2980 + $0x168] sm:$0xff]
  %v3027 = vld [vmem:[%s2980 + $0x170] sm:$0xff]
  %v3028 = vld [vmem:[%s2980 + $0x178] sm:$0xff]
  %v3029 = vld [vmem:[%s2980 + $0x180] sm:$0xff]
  %v3030 = vld [vmem:[%s2980 + $0x188] sm:$0xff]
  %v3031 = vld [vmem:[%s2980 + $0x190] sm:$0xff]
  %v3032 = vld [vmem:[%s2980 + $0x198] sm:$0xff]
  %v3033 = vld [vmem:[%s2980 + $0x1a0] sm:$0xff]
  %v3034 = vld [vmem:[%s2980 + $0x1a8] sm:$0xff]
  %v3035 = vld [vmem:[%s2980 + $0x1b0] sm:$0xff]
  %v3036 = vld [vmem:[%s2980 + $0x1b8] sm:$0xff]
  %v3037 = vld [vmem:[%s2980 + $0x1c0] sm:$0xff]
  %v3038 = vld [vmem:[%s2980 + $0x1c8] sm:$0xff]
  %v3039 = vld [vmem:[%s2980 + $0x1d0] sm:$0xff]
  %v3040 = vld [vmem:[%s2980 + $0x1d8] sm:$0xff]
  %v3041 = vld [vmem:[%s2980 + $0x1e0] sm:$0xff]
  %v3042 = vld [vmem:[%s2980 + $0x1e8] sm:$0xff]
  %v3043 = vld [vmem:[%s2980 + $0x1f0] sm:$0xff]
  %v3044 = vld [vmem:[%s2980 + $0x1f8] sm:$0xff]
  %v3045 = vld [vmem:[%s2980 + $0x200] sm:$0xff]
  %v3046 = vld [vmem:[%s2980 + $0x208] sm:$0xff]
  %v3047 = vld [vmem:[%s2980 + $0x210] sm:$0xff]
  %v3048 = vld [vmem:[%s2980 + $0x218] sm:$0xff]
  %v3049 = vld [vmem:[%s2980 + $0x220] sm:$0xff]
  %v3050 = vld [vmem:[%s2980 + $0x228] sm:$0xff]
  %v3051 = vld [vmem:[%s2980 + $0x230] sm:$0xff]
  %v3052 = vld [vmem:[%s2980 + $0x238] sm:$0xff]
  %v3053 = vld [vmem:[%s2980 + $0x240] sm:$0xff]
  %v3054 = vld [vmem:[%s2980 + $0x248] sm:$0xff]
  %v3055 = vld [vmem:[%s2980 + $0x250] sm:$0xff]
  %v3056 = vld [vmem:[%s2980 + $0x258] sm:$0xff]
  %v3057 = vld [vmem:[%s2980 + $0x260] sm:$0xff]
  %v3058 = vld [vmem:[%s2980 + $0x268] sm:$0xff]
  %v3059 = vld [vmem:[%s2980 + $0x270] sm:$0xff]
  %v3060 = vld [vmem:[%s2980 + $0x278] sm:$0xff]
  %v3061 = vld [vmem:[%s2980 + $0x280] sm:$0xff]
  %v3062 = vld [vmem:[%s2980 + $0x288] sm:$0xff]
  %v3063 = vld [vmem:[%s2980 + $0x290] sm:$0xff]
  %v3064 = vld [vmem:[%s2980 + $0x298] sm:$0xff]
  %v3065 = vld [vmem:[%s2980 + $0x2a0] sm:$0xff]
  %v3066 = vld [vmem:[%s2980 + $0x2a8] sm:$0xff]
  %v3067 = vld [vmem:[%s2980 + $0x2b0] sm:$0xff]
  %v3068 = vld [vmem:[%s2980 + $0x2b8] sm:$0xff]
  %v3069 = vld [vmem:[%s2980 + $0x2c0] sm:$0xff]
  %v3070 = vld [vmem:[%s2980 + $0x2c8] sm:$0xff]
  %v3071 = vld [vmem:[%s2980 + $0x2d0] sm:$0xff]
  %v3072 = vld [vmem:[%s2980 + $0x2d8] sm:$0xff]
  %v3073 = vld [vmem:[%s2980 + $0x2e0] sm:$0xff]
  %v3074 = vld [vmem:[%s2980 + $0x2e8] sm:$0xff]
  %v3075 = vld [vmem:[%s2980 + $0x2f0] sm:$0xff]
  %v3076 = vld [vmem:[%s2980 + $0x2f8] sm:$0xff]
  %v3077 = vld [vmem:[%s2980 + $0x300] sm:$0xff]
  %v3078 = vld [vmem:[%s2980 + $0x308] sm:$0xff]
  %v3079 = vld [vmem:[%s2980 + $0x310] sm:$0xff]
  %v3080 = vld [vmem:[%s2980 + $0x318] sm:$0xff]
  %v3081 = vld [vmem:[%s2980 + $0x320] sm:$0xff]
  %v3082 = vld [vmem:[%s2980 + $0x328] sm:$0xff]
  %v3083 = vld [vmem:[%s2980 + $0x330] sm:$0xff]
  %v3084 = vld [vmem:[%s2980 + $0x338] sm:$0xff]
  %v3085 = vld [vmem:[%s2980 + $0x340] sm:$0xff]
  %v3086 = vld [vmem:[%s2980 + $0x348] sm:$0xff]
  %v3087 = vld [vmem:[%s2980 + $0x350] sm:$0xff]
  %v3088 = vld [vmem:[%s2980 + $0x358] sm:$0xff]
  %v3089 = vld [vmem:[%s2980 + $0x360] sm:$0xff]
  %v3090 = vld [vmem:[%s2980 + $0x368] sm:$0xff]
  %v3091 = vld [vmem:[%s2980 + $0x370] sm:$0xff]
  %v3092 = vld [vmem:[%s2980 + $0x378] sm:$0xff]
  %v3093 = vld [vmem:[%s2980 + $0x380] sm:$0xff]
  %v3094 = vld [vmem:[%s2980 + $0x388] sm:$0xff]
  %v3095 = vld [vmem:[%s2980 + $0x390] sm:$0xff]
  %v3096 = vld [vmem:[%s2980 + $0x398] sm:$0xff]
  %v3097 = vld [vmem:[%s2980 + $0x3a0] sm:$0xff]
  %v3098 = vld [vmem:[%s2980 + $0x3a8] sm:$0xff]
  %v3099 = vld [vmem:[%s2980 + $0x3b0] sm:$0xff]
  %v3100 = vld [vmem:[%s2980 + $0x3b8] sm:$0xff]
  %v3101 = vld [vmem:[%s2980 + $0x3c0] sm:$0xff]
  %v3102 = vld [vmem:[%s2980 + $0x3c8] sm:$0xff]
  %v3103 = vld [vmem:[%s2980 + $0x3d0] sm:$0xff]
  %v3104 = vld [vmem:[%s2980 + $0x3d8] sm:$0xff]
  %v3105 = vld [vmem:[%s2980 + $0x3e0] sm:$0xff]
  %v3106 = vld [vmem:[%s2980 + $0x3e8] sm:$0xff]
  %v3107 = vld [vmem:[%s2980 + $0x3f0] sm:$0xff]
  %v3108 = vld [vmem:[%s2980 + $0x3f8] sm:$0xff]
  %v3109 = vld [vmem:[%s2980 + $0x400] sm:$0xff]
  %v3110 = vld [vmem:[%s2980 + $0x408] sm:$0xff]
  %v3111 = vld [vmem:[%s2980 + $0x410] sm:$0xff]
  %v3112 = vld [vmem:[%s2980 + $0x418] sm:$0xff]
  %v3113 = vld [vmem:[%s2980 + $0x420] sm:$0xff]
  %v3114 = vld [vmem:[%s2980 + $0x428] sm:$0xff]
  %v3115 = vld [vmem:[%s2980 + $0x430] sm:$0xff]
  %v3116 = vld [vmem:[%s2980 + $0x438] sm:$0xff]
  %v3117 = vld [vmem:[%s2980 + $0x440] sm:$0xff]
  %v3118 = vld [vmem:[%s2980 + $0x448] sm:$0xff]
  %v3119 = vld [vmem:[%s2980 + $0x450] sm:$0xff]
  %v3120 = vld [vmem:[%s2980 + $0x458] sm:$0xff]
  %v3121 = vld [vmem:[%s2980 + $0x460] sm:$0xff]
  %v3122 = vld [vmem:[%s2980 + $0x468] sm:$0xff]
  %v3123 = vld [vmem:[%s2980 + $0x470] sm:$0xff]
  %v3124 = vld [vmem:[%s2980 + $0x478] sm:$0xff]
  %v3130 = vrot.slane %v2975, 1
  %v3131 = vrot.slane %v2976, 1
  %v3132 = vrot.slane %v2977, 1
  %v3133 = vrot.slane %v2978, 1
  %v3134 = vrot.slane %v2979, 1
  %v3283 = vunpack.c.l.b16 %v2981
  %v3284 = vunpack.c.h.b16 %v2981
  %v3285 = vunpack.c.l.b16 %v2982
  %v3286 = vunpack.c.h.b16 %v2982
  %v3287 = vunpack.c.l.b16 %v2983
  %v3288 = vunpack.c.h.b16 %v2983
  %v3289 = vunpack.c.l.b16 %v2984
  %v3290 = vunpack.c.h.b16 %v2984
  %v3291 = vunpack.c.l.b16 %v2985
  %v3292 = vunpack.c.h.b16 %v2985
  %v3293 = vunpack.c.l.b16 %v2986
  %v3294 = vunpack.c.h.b16 %v2986
  %v3295 = vunpack.c.l.b16 %v2987
  %v3296 = vunpack.c.h.b16 %v2987
  %v3297 = vunpack.c.l.b16 %v2988
  %v3298 = vunpack.c.h.b16 %v2988
  %v3299 = vunpack.c.l.b16 %v2989
  %v3300 = vunpack.c.h.b16 %v2989
  %v3301 = vunpack.c.l.b16 %v2990
  %v3302 = vunpack.c.h.b16 %v2990
  %v3303 = vunpack.c.l.b16 %v2991
  %v3304 = vunpack.c.h.b16 %v2991
  %v3305 = vunpack.c.l.b16 %v2992
  %v3306 = vunpack.c.h.b16 %v2992
  %v3307 = vunpack.c.l.b16 %v2993
  %v3308 = vunpack.c.h.b16 %v2993
  %v3309 = vunpack.c.l.b16 %v2994
  %v3310 = vunpack.c.h.b16 %v2994
  %v3311 = vunpack.c.l.b16 %v2995
  %v3312 = vunpack.c.h.b16 %v2995
  %v3313 = vunpack.c.l.b16 %v2996
  %v3314 = vunpack.c.h.b16 %v2996
  %v3315 = vunpack.c.l.b16 %v2997
  %v3316 = vunpack.c.h.b16 %v2997
  %v3317 = vunpack.c.l.b16 %v2998
  %v3318 = vunpack.c.h.b16 %v2998
  %v3319 = vunpack.c.l.b16 %v2999
  %v3320 = vunpack.c.h.b16 %v2999
  %v3321 = vunpack.c.l.b16 %v3000
  %v3322 = vunpack.c.h.b16 %v3000
  %v3323 = vunpack.c.l.b16 %v3001
  %v3324 = vunpack.c.h.b16 %v3001
  %v3325 = vunpack.c.l.b16 %v3002
  %v3326 = vunpack.c.h.b16 %v3002
  %v3327 = vunpack.c.l.b16 %v3003
  %v3328 = vunpack.c.h.b16 %v3003
  %v3329 = vunpack.c.l.b16 %v3004
  %v3330 = vunpack.c.h.b16 %v3004
  %v3331 = vunpack.c.l.b16 %v3005
  %v3332 = vunpack.c.h.b16 %v3005
  %v3333 = vunpack.c.l.b16 %v3006
  %v3334 = vunpack.c.h.b16 %v3006
  %v3335 = vunpack.c.l.b16 %v3007
  %v3336 = vunpack.c.h.b16 %v3007
  %v3337 = vunpack.c.l.b16 %v3008
  %v3338 = vunpack.c.h.b16 %v3008
  %v3339 = vunpack.c.l.b16 %v3009
  %v3340 = vunpack.c.h.b16 %v3009
  %v3341 = vunpack.c.l.b16 %v3010
  %v3342 = vunpack.c.h.b16 %v3010
  %v3343 = vunpack.c.l.b16 %v3011
  %v3344 = vunpack.c.h.b16 %v3011
  %v3345 = vunpack.c.l.b16 %v3012
  %v3346 = vunpack.c.h.b16 %v3012
  %v3347 = vunpack.c.l.b16 %v3013
  %v3348 = vunpack.c.h.b16 %v3013
  %v3349 = vunpack.c.l.b16 %v3014
  %v3350 = vunpack.c.h.b16 %v3014
  %v3351 = vunpack.c.l.b16 %v3015
  %v3352 = vunpack.c.h.b16 %v3015
  %v3353 = vunpack.c.l.b16 %v3016
  %v3354 = vunpack.c.h.b16 %v3016
  %v3355 = vunpack.c.l.b16 %v3017
  %v3356 = vunpack.c.h.b16 %v3017
  %v3357 = vunpack.c.l.b16 %v3018
  %v3358 = vunpack.c.h.b16 %v3018
  %v3359 = vunpack.c.l.b16 %v3019
  %v3360 = vunpack.c.h.b16 %v3019
  %v3361 = vunpack.c.l.b16 %v3020
  %v3362 = vunpack.c.h.b16 %v3020
  %v3363 = vunpack.c.l.b16 %v3021
  %v3364 = vunpack.c.h.b16 %v3021
  %v3365 = vunpack.c.l.b16 %v3022
  %v3366 = vunpack.c.h.b16 %v3022
  %v3367 = vunpack.c.l.b16 %v3023
  %v3368 = vunpack.c.h.b16 %v3023
  %v3369 = vunpack.c.l.b16 %v3024
  %v3370 = vunpack.c.h.b16 %v3024
  %v3371 = vunpack.c.l.b16 %v3025
  %v3372 = vunpack.c.h.b16 %v3025
  %v3373 = vunpack.c.l.b16 %v3026
  %v3374 = vunpack.c.h.b16 %v3026
  %v3375 = vunpack.c.l.b16 %v3027
  %v3376 = vunpack.c.h.b16 %v3027
  %v3377 = vunpack.c.l.b16 %v3028
  %v3378 = vunpack.c.h.b16 %v3028
  %v3379 = vunpack.c.l.b16 %v3029
  %v3380 = vunpack.c.h.b16 %v3029
  %v3381 = vunpack.c.l.b16 %v3030
  %v3382 = vunpack.c.h.b16 %v3030
  %v3383 = vunpack.c.l.b16 %v3031
  %v3384 = vunpack.c.h.b16 %v3031
  %v3385 = vunpack.c.l.b16 %v3032
  %v3386 = vunpack.c.h.b16 %v3032
  %v3387 = vunpack.c.l.b16 %v3033
  %v3388 = vunpack.c.h.b16 %v3033
  %v3389 = vunpack.c.l.b16 %v3034
  %v3390 = vunpack.c.h.b16 %v3034
  %v3391 = vunpack.c.l.b16 %v3035
  %v3392 = vunpack.c.h.b16 %v3035
  %v3393 = vunpack.c.l.b16 %v3036
  %v3394 = vunpack.c.h.b16 %v3036
  %v3395 = vunpack.c.l.b16 %v3037
  %v3396 = vunpack.c.h.b16 %v3037
  %v3397 = vunpack.c.l.b16 %v3038
  %v3398 = vunpack.c.h.b16 %v3038
  %v3399 = vunpack.c.l.b16 %v3039
  %v3400 = vunpack.c.h.b16 %v3039
  %v3401 = vunpack.c.l.b16 %v3040
  %v3402 = vunpack.c.h.b16 %v3040
  %v3403 = vunpack.c.l.b16 %v3041
  %v3404 = vunpack.c.h.b16 %v3041
  %v3405 = vunpack.c.l.b16 %v3042
  %v3406 = vunpack.c.h.b16 %v3042
  %v3407 = vunpack.c.l.b16 %v3043
  %v3408 = vunpack.c.h.b16 %v3043
  %v3409 = vunpack.c.l.b16 %v3044
  %v3410 = vunpack.c.h.b16 %v3044
  %v3411 = vunpack.c.l.b16 %v3045
  %v3412 = vunpack.c.h.b16 %v3045
  %v3413 = vunpack.c.l.b16 %v3046
  %v3414 = vunpack.c.h.b16 %v3046
  %v3415 = vunpack.c.l.b16 %v3047
  %v3416 = vunpack.c.h.b16 %v3047
  %v3417 = vunpack.c.l.b16 %v3048
  %v3418 = vunpack.c.h.b16 %v3048
  %v3419 = vunpack.c.l.b16 %v3049
  %v3420 = vunpack.c.h.b16 %v3049
  %v3421 = vunpack.c.l.b16 %v3050
  %v3422 = vunpack.c.h.b16 %v3050
  %v3423 = vunpack.c.l.b16 %v3051
  %v3424 = vunpack.c.h.b16 %v3051
  %v3425 = vunpack.c.l.b16 %v3052
  %v3426 = vunpack.c.h.b16 %v3052
  %v3427 = vunpack.c.l.b16 %v3053
  %v3428 = vunpack.c.h.b16 %v3053
  %v3429 = vunpack.c.l.b16 %v3054
  %v3430 = vunpack.c.h.b16 %v3054
  %v3431 = vunpack.c.l.b16 %v3055
  %v3432 = vunpack.c.h.b16 %v3055
  %v3433 = vunpack.c.l.b16 %v3056
  %v3434 = vunpack.c.h.b16 %v3056
  %v3435 = vunpack.c.l.b16 %v3057
  %v3436 = vunpack.c.h.b16 %v3057
  %v3437 = vunpack.c.l.b16 %v3058
  %v3438 = vunpack.c.h.b16 %v3058
  %v3439 = vunpack.c.l.b16 %v3059
  %v3440 = vunpack.c.h.b16 %v3059
  %v3441 = vunpack.c.l.b16 %v3060
  %v3442 = vunpack.c.h.b16 %v3060
  %v3443 = vunpack.c.l.b16 %v3061
  %v3444 = vunpack.c.h.b16 %v3061
  %v3445 = vunpack.c.l.b16 %v3062
  %v3446 = vunpack.c.h.b16 %v3062
  %v3447 = vunpack.c.l.b16 %v3063
  %v3448 = vunpack.c.h.b16 %v3063
  %v3449 = vunpack.c.l.b16 %v3064
  %v3450 = vunpack.c.h.b16 %v3064
  %v3451 = vunpack.c.l.b16 %v3065
  %v3452 = vunpack.c.h.b16 %v3065
  %v3453 = vunpack.c.l.b16 %v3066
  %v3454 = vunpack.c.h.b16 %v3066
  %v3455 = vunpack.c.l.b16 %v3067
  %v3456 = vunpack.c.h.b16 %v3067
  %v3457 = vunpack.c.l.b16 %v3068
  %v3458 = vunpack.c.h.b16 %v3068
  %v3459 = vunpack.c.l.b16 %v3069
  %v3460 = vunpack.c.h.b16 %v3069
  %v3461 = vunpack.c.l.b16 %v3070
  %v3462 = vunpack.c.h.b16 %v3070
  %v3463 = vunpack.c.l.b16 %v3071
  %v3464 = vunpack.c.h.b16 %v3071
  %v3465 = vunpack.c.l.b16 %v3072
  %v3466 = vunpack.c.h.b16 %v3072
  %v3467 = vunpack.c.l.b16 %v3073
  %v3468 = vunpack.c.h.b16 %v3073
  %v3469 = vunpack.c.l.b16 %v3074
  %v3470 = vunpack.c.h.b16 %v3074
  %v3471 = vunpack.c.l.b16 %v3075
  %v3472 = vunpack.c.h.b16 %v3075
  %v3473 = vunpack.c.l.b16 %v3076
  %v3474 = vunpack.c.h.b16 %v3076
  %v3475 = vunpack.c.l.b16 %v3077
  %v3476 = vunpack.c.h.b16 %v3077
  %v3477 = vunpack.c.l.b16 %v3078
  %v3478 = vunpack.c.h.b16 %v3078
  %v3479 = vunpack.c.l.b16 %v3079
  %v3480 = vunpack.c.h.b16 %v3079
  %v3481 = vunpack.c.l.b16 %v3080
  %v3482 = vunpack.c.h.b16 %v3080
  %v3483 = vunpack.c.l.b16 %v3081
  %v3484 = vunpack.c.h.b16 %v3081
  %v3485 = vunpack.c.l.b16 %v3082
  %v3486 = vunpack.c.h.b16 %v3082
  %v3487 = vunpack.c.l.b16 %v3083
  %v3488 = vunpack.c.h.b16 %v3083
  %v3489 = vunpack.c.l.b16 %v3084
  %v3490 = vunpack.c.h.b16 %v3084
  %v3491 = vunpack.c.l.b16 %v3085
  %v3492 = vunpack.c.h.b16 %v3085
  %v3493 = vunpack.c.l.b16 %v3086
  %v3494 = vunpack.c.h.b16 %v3086
  %v3495 = vunpack.c.l.b16 %v3087
  %v3496 = vunpack.c.h.b16 %v3087
  %v3497 = vunpack.c.l.b16 %v3088
  %v3498 = vunpack.c.h.b16 %v3088
  %v3499 = vunpack.c.l.b16 %v3089
  %v3500 = vunpack.c.h.b16 %v3089
  %v3501 = vunpack.c.l.b16 %v3090
  %v3502 = vunpack.c.h.b16 %v3090
  %v3503 = vunpack.c.l.b16 %v3091
  %v3504 = vunpack.c.h.b16 %v3091
  %v3505 = vunpack.c.l.b16 %v3092
  %v3506 = vunpack.c.h.b16 %v3092
  %v3507 = vunpack.c.l.b16 %v3093
  %v3508 = vunpack.c.h.b16 %v3093
  %v3509 = vunpack.c.l.b16 %v3094
  %v3510 = vunpack.c.h.b16 %v3094
  %v3511 = vunpack.c.l.b16 %v3095
  %v3512 = vunpack.c.h.b16 %v3095
  %v3513 = vunpack.c.l.b16 %v3096
  %v3514 = vunpack.c.h.b16 %v3096
  %v3515 = vunpack.c.l.b16 %v3097
  %v3516 = vunpack.c.h.b16 %v3097
  %v3517 = vunpack.c.l.b16 %v3098
  %v3518 = vunpack.c.h.b16 %v3098
  %v3519 = vunpack.c.l.b16 %v3099
  %v3520 = vunpack.c.h.b16 %v3099
  %v3521 = vunpack.c.l.b16 %v3100
  %v3522 = vunpack.c.h.b16 %v3100
  %v3523 = vunpack.c.l.b16 %v3101
  %v3524 = vunpack.c.h.b16 %v3101
  %v3525 = vunpack.c.l.b16 %v3102
  %v3526 = vunpack.c.h.b16 %v3102
  %v3527 = vunpack.c.l.b16 %v3103
  %v3528 = vunpack.c.h.b16 %v3103
  %v3529 = vunpack.c.l.b16 %v3104
  %v3530 = vunpack.c.h.b16 %v3104
  %v3531 = vunpack.c.l.b16 %v3105
  %v3532 = vunpack.c.h.b16 %v3105
  %v3533 = vunpack.c.l.b16 %v3106
  %v3534 = vunpack.c.h.b16 %v3106
  %v3535 = vunpack.c.l.b16 %v3107
  %v3536 = vunpack.c.h.b16 %v3107
  %v3537 = vunpack.c.l.b16 %v3108
  %v3538 = vunpack.c.h.b16 %v3108
  %v3539 = vunpack.c.l.b16 %v3109
  %v3540 = vunpack.c.h.b16 %v3109
  %v3541 = vunpack.c.l.b16 %v3110
  %v3542 = vunpack.c.h.b16 %v3110
  %v3543 = vunpack.c.l.b16 %v3111
  %v3544 = vunpack.c.h.b16 %v3111
  %v3545 = vunpack.c.l.b16 %v3112
  %v3546 = vunpack.c.h.b16 %v3112
  %v3547 = vunpack.c.l.b16 %v3113
  %v3548 = vunpack.c.h.b16 %v3113
  %v3549 = vunpack.c.l.b16 %v3114
  %v3550 = vunpack.c.h.b16 %v3114
  %v3551 = vunpack.c.l.b16 %v3115
  %v3552 = vunpack.c.h.b16 %v3115
  %v3553 = vunpack.c.l.b16 %v3116
  %v3554 = vunpack.c.h.b16 %v3116
  %v3555 = vunpack.c.l.b16 %v3117
  %v3556 = vunpack.c.h.b16 %v3117
  %v3557 = vunpack.c.l.b16 %v3118
  %v3558 = vunpack.c.h.b16 %v3118
  %v3559 = vunpack.c.l.b16 %v3119
  %v3560 = vunpack.c.h.b16 %v3119
  %v3561 = vunpack.c.l.b16 %v3120
  %v3562 = vunpack.c.h.b16 %v3120
  %v3563 = vunpack.c.l.b16 %v3121
  %v3564 = vunpack.c.h.b16 %v3121
  %v3565 = vunpack.c.l.b16 %v3122
  %v3566 = vunpack.c.h.b16 %v3122
  %v3567 = vunpack.c.l.b16 %v3123
  %v3568 = vunpack.c.h.b16 %v3123
  %v3569 = vunpack.c.l.b16 %v3124
  %v3570 = vunpack.c.h.b16 %v3124
  %v3571 = vpack.c.b16 %v3287, %v3283
  %v3572 = vpack.c.b16 %v3288, %v3284
  %v3573 = vpack.c.b16 %v3289, %v3285
  %v3574 = vpack.c.b16 %v3290, %v3286
  %v3575 = vpack.c.b16 %v3295, %v3291
  %v3576 = vpack.c.b16 %v3296, %v3292
  %v3577 = vpack.c.b16 %v3297, %v3293
  %v3578 = vpack.c.b16 %v3298, %v3294
  %v3579 = vpack.c.b16 %v3303, %v3299
  %v3580 = vpack.c.b16 %v3304, %v3300
  %v3581 = vpack.c.b16 %v3305, %v3301
  %v3582 = vpack.c.b16 %v3306, %v3302
  %v3583 = vpack.c.b16 %v3311, %v3307
  %v3584 = vpack.c.b16 %v3312, %v3308
  %v3585 = vpack.c.b16 %v3313, %v3309
  %v3586 = vpack.c.b16 %v3314, %v3310
  %v3587 = vpack.c.b16 %v3319, %v3315
  %v3588 = vpack.c.b16 %v3320, %v3316
  %v3589 = vpack.c.b16 %v3321, %v3317
  %v3590 = vpack.c.b16 %v3322, %v3318
  %v3591 = vpack.c.b16 %v3327, %v3323
  %v3592 = vpack.c.b16 %v3328, %v3324
  %v3593 = vpack.c.b16 %v3329, %v3325
  %v3594 = vpack.c.b16 %v3330, %v3326
  %v3595 = vpack.c.b16 %v3335, %v3331
  %v3596 = vpack.c.b16 %v3336, %v3332
  %v3597 = vpack.c.b16 %v3337, %v3333
  %v3598 = vpack.c.b16 %v3338, %v3334
  %v3599 = vpack.c.b16 %v3343, %v3339
  %v3600 = vpack.c.b16 %v3344, %v3340
  %v3601 = vpack.c.b16 %v3345, %v3341
  %v3602 = vpack.c.b16 %v3346, %v3342
  %v3603 = vpack.c.b16 %v3351, %v3347
  %v3604 = vpack.c.b16 %v3352, %v3348
  %v3605 = vpack.c.b16 %v3353, %v3349
  %v3606 = vpack.c.b16 %v3354, %v3350
  %v3607 = vpack.c.b16 %v3359, %v3355
  %v3608 = vpack.c.b16 %v3360, %v3356
  %v3609 = vpack.c.b16 %v3361, %v3357
  %v3610 = vpack.c.b16 %v3362, %v3358
  %v3611 = vpack.c.b16 %v3367, %v3363
  %v3612 = vpack.c.b16 %v3368, %v3364
  %v3613 = vpack.c.b16 %v3369, %v3365
  %v3614 = vpack.c.b16 %v3370, %v3366
  %v3615 = vpack.c.b16 %v3375, %v3371
  %v3616 = vpack.c.b16 %v3376, %v3372
  %v3617 = vpack.c.b16 %v3377, %v3373
  %v3618 = vpack.c.b16 %v3378, %v3374
  %v3619 = vpack.c.b16 %v3383, %v3379
  %v3620 = vpack.c.b16 %v3384, %v3380
  %v3621 = vpack.c.b16 %v3385, %v3381
  %v3622 = vpack.c.b16 %v3386, %v3382
  %v3623 = vpack.c.b16 %v3391, %v3387
  %v3624 = vpack.c.b16 %v3392, %v3388
  %v3625 = vpack.c.b16 %v3393, %v3389
  %v3626 = vpack.c.b16 %v3394, %v3390
  %v3627 = vpack.c.b16 %v3399, %v3395
  %v3628 = vpack.c.b16 %v3400, %v3396
  %v3629 = vpack.c.b16 %v3401, %v3397
  %v3630 = vpack.c.b16 %v3402, %v3398
  %v3631 = vpack.c.b16 %v3407, %v3403
  %v3632 = vpack.c.b16 %v3408, %v3404
  %v3633 = vpack.c.b16 %v3409, %v3405
  %v3634 = vpack.c.b16 %v3410, %v3406
  %v3635 = vpack.c.b16 %v3415, %v3411
  %v3636 = vpack.c.b16 %v3416, %v3412
  %v3637 = vpack.c.b16 %v3417, %v3413
  %v3638 = vpack.c.b16 %v3418, %v3414
  %v3639 = vpack.c.b16 %v3423, %v3419
  %v3640 = vpack.c.b16 %v3424, %v3420
  %v3641 = vpack.c.b16 %v3425, %v3421
  %v3642 = vpack.c.b16 %v3426, %v3422
  %v3643 = vpack.c.b16 %v3431, %v3427
  %v3644 = vpack.c.b16 %v3432, %v3428
  %v3645 = vpack.c.b16 %v3433, %v3429
  %v3646 = vpack.c.b16 %v3434, %v3430
  %v3647 = vpack.c.b16 %v3439, %v3435
  %v3648 = vpack.c.b16 %v3440, %v3436
  %v3649 = vpack.c.b16 %v3441, %v3437
  %v3650 = vpack.c.b16 %v3442, %v3438
  %v3651 = vpack.c.b16 %v3447, %v3443
  %v3652 = vpack.c.b16 %v3448, %v3444
  %v3653 = vpack.c.b16 %v3449, %v3445
  %v3654 = vpack.c.b16 %v3450, %v3446
  %v3655 = vpack.c.b16 %v3455, %v3451
  %v3656 = vpack.c.b16 %v3456, %v3452
  %v3657 = vpack.c.b16 %v3457, %v3453
  %v3658 = vpack.c.b16 %v3458, %v3454
  %v3659 = vpack.c.b16 %v3463, %v3459
  %v3660 = vpack.c.b16 %v3464, %v3460
  %v3661 = vpack.c.b16 %v3465, %v3461
  %v3662 = vpack.c.b16 %v3466, %v3462
  %v3663 = vpack.c.b16 %v3471, %v3467
  %v3664 = vpack.c.b16 %v3472, %v3468
  %v3665 = vpack.c.b16 %v3473, %v3469
  %v3666 = vpack.c.b16 %v3474, %v3470
  %v3667 = vpack.c.b16 %v3479, %v3475
  %v3668 = vpack.c.b16 %v3480, %v3476
  %v3669 = vpack.c.b16 %v3481, %v3477
  %v3670 = vpack.c.b16 %v3482, %v3478
  %v3671 = vpack.c.b16 %v3487, %v3483
  %v3672 = vpack.c.b16 %v3488, %v3484
  %v3673 = vpack.c.b16 %v3489, %v3485
  %v3674 = vpack.c.b16 %v3490, %v3486
  %v3675 = vpack.c.b16 %v3495, %v3491
  %v3676 = vpack.c.b16 %v3496, %v3492
  %v3677 = vpack.c.b16 %v3497, %v3493
  %v3678 = vpack.c.b16 %v3498, %v3494
  %v3679 = vpack.c.b16 %v3503, %v3499
  %v3680 = vpack.c.b16 %v3504, %v3500
  %v3681 = vpack.c.b16 %v3505, %v3501
  %v3682 = vpack.c.b16 %v3506, %v3502
  %v3683 = vpack.c.b16 %v3511, %v3507
  %v3684 = vpack.c.b16 %v3512, %v3508
  %v3685 = vpack.c.b16 %v3513, %v3509
  %v3686 = vpack.c.b16 %v3514, %v3510
  %v3687 = vpack.c.b16 %v3519, %v3515
  %v3688 = vpack.c.b16 %v3520, %v3516
  %v3689 = vpack.c.b16 %v3521, %v3517
  %v3690 = vpack.c.b16 %v3522, %v3518
  %v3691 = vpack.c.b16 %v3527, %v3523
  %v3692 = vpack.c.b16 %v3528, %v3524
  %v3693 = vpack.c.b16 %v3529, %v3525
  %v3694 = vpack.c.b16 %v3530, %v3526
  %v3695 = vpack.c.b16 %v3535, %v3531
  %v3696 = vpack.c.b16 %v3536, %v3532
  %v3697 = vpack.c.b16 %v3537, %v3533
  %v3698 = vpack.c.b16 %v3538, %v3534
  %v3699 = vpack.c.b16 %v3543, %v3539
  %v3700 = vpack.c.b16 %v3544, %v3540
  %v3701 = vpack.c.b16 %v3545, %v3541
  %v3702 = vpack.c.b16 %v3546, %v3542
  %v3703 = vpack.c.b16 %v3551, %v3547
  %v3704 = vpack.c.b16 %v3552, %v3548
  %v3705 = vpack.c.b16 %v3553, %v3549
  %v3706 = vpack.c.b16 %v3554, %v3550
  %v3707 = vpack.c.b16 %v3559, %v3555
  %v3708 = vpack.c.b16 %v3560, %v3556
  %v3709 = vpack.c.b16 %v3561, %v3557
  %v3710 = vpack.c.b16 %v3562, %v3558
  %v3711 = vpack.c.b16 %v3567, %v3563
  %v3712 = vpack.c.b16 %v3568, %v3564
  %v3713 = vpack.c.b16 %v3569, %v3565
  %v3714 = vpack.c.b16 %v3570, %v3566
  %v3860 = vsel %vm537, %v3134, 0
  %3862 = vmatprep.subr.bf16.mxu0 %v3572
  %3863 = vmatpush1.bf16.msra.mxu0 %v3571
  %3864 = vmatprep.subr.bf16.mxu0 %v3576
  %3865 = vmatpush1.bf16.msra.mxu0 %v3575
  %3866 = vmatprep.subr.bf16.mxu0 %v3580
  %3867 = vmatpush1.bf16.msra.mxu0 %v3579
  %3868 = vmatprep.subr.bf16.mxu0 %v3584
  %3869 = vmatpush1.bf16.msra.mxu0 %v3583
  %3870 = vmatprep.subr.bf16.mxu0 %v3588
  %3871 = vmatpush1.bf16.msra.mxu0 %v3587
  %3872 = vmatprep.subr.bf16.mxu0 %v3592
  %3873 = vmatpush1.bf16.msra.mxu0 %v3591
  %3874 = vmatprep.subr.bf16.mxu0 %v3596
  %3875 = vmatpush1.bf16.msra.mxu0 %v3595
  %3876 = vmatprep.subr.bf16.mxu0 %v3600
  %3877 = vmatpush1.bf16.msra.mxu0 %v3599
  %3878 = vmatprep.subr.bf16.mxu0 %v3604
  %3879 = vmatpush1.bf16.msra.mxu0 %v3603
  %3880 = vmatprep.subr.bf16.mxu0 %v3608
  %3881 = vmatpush1.bf16.msra.mxu0 %v3607
  %3882 = vmatprep.subr.bf16.mxu0 %v3612
  %3883 = vmatpush1.bf16.msra.mxu0 %v3611
  %3884 = vmatprep.subr.bf16.mxu0 %v3616
  %3885 = vmatpush1.bf16.msra.mxu0 %v3615
  %3886 = vmatprep.subr.bf16.mxu0 %v3620
  %3887 = vmatpush1.bf16.msra.mxu0 %v3619
  %3888 = vmatprep.subr.bf16.mxu0 %v3624
  %3889 = vmatpush1.bf16.msra.mxu0 %v3623
  %3890 = vmatprep.subr.bf16.mxu0 %v3628
  %3891 = vmatpush1.bf16.msra.mxu0 %v3627
  %3892 = vmatprep.subr.bf16.mxu0 %v3632
  %3893 = vmatpush1.bf16.msra.mxu0 %v3631
  %3894 = vmatprep.mubr.bf16.mxu0 %v3131
  %3895 = vmatmul.mubr.bf16.gmra.mrb[0].mxu0 %v3130
  %v3896 = vpop.f32.mrb[0].mxu0
  %v3897 = vadd.f32 0.0, %v3896
  %v3898 = vpop.f32.mrb[0].mxu0
  %v3899 = vadd.f32 0.0, %v3898
  %v3900 = vpop.f32.mrb[0].mxu0
  %v3901 = vadd.f32 0.0, %v3900
  %v3902 = vpop.f32.mrb[0].mxu0
  %v3903 = vadd.f32 0.0, %v3902
  %3904 = vdwg.mxu0
  %3905 = vmatprep.subr.bf16.mxu0 %v3636
  %3906 = vmatpush1.bf16.msra.mxu0 %v3635
  %3907 = vmatprep.subr.bf16.mxu0 %v3640
  %3908 = vmatpush1.bf16.msra.mxu0 %v3639
  %3909 = vmatprep.subr.bf16.mxu0 %v3644
  %3910 = vmatpush1.bf16.msra.mxu0 %v3643
  %3911 = vmatprep.subr.bf16.mxu0 %v3648
  %3912 = vmatpush1.bf16.msra.mxu0 %v3647
  %3913 = vmatprep.subr.bf16.mxu0 %v3652
  %3914 = vmatpush1.bf16.msra.mxu0 %v3651
  %3915 = vmatprep.subr.bf16.mxu0 %v3656
  %3916 = vmatpush1.bf16.msra.mxu0 %v3655
  %3917 = vmatprep.subr.bf16.mxu0 %v3660
  %3918 = vmatpush1.bf16.msra.mxu0 %v3659
  %3919 = vmatprep.subr.bf16.mxu0 %v3664
  %3920 = vmatpush1.bf16.msra.mxu0 %v3663
  %3921 = vmatprep.subr.bf16.mxu0 %v3668
  %3922 = vmatpush1.bf16.msra.mxu0 %v3667
  %3923 = vmatprep.subr.bf16.mxu0 %v3672
  %3924 = vmatpush1.bf16.msra.mxu0 %v3671
  %3925 = vmatprep.subr.bf16.mxu0 %v3676
  %3926 = vmatpush1.bf16.msra.mxu0 %v3675
  %3927 = vmatprep.subr.bf16.mxu0 %v3680
  %3928 = vmatpush1.bf16.msra.mxu0 %v3679
  %3929 = vmatprep.subr.bf16.mxu0 %v3684
  %3930 = vmatpush1.bf16.msra.mxu0 %v3683
  %3931 = vmatprep.subr.bf16.mxu0 %v3688
  %3932 = vmatpush1.bf16.msra.mxu0 %v3687
  %3933 = vmatprep.subr.bf16.mxu0 %v3692
  %3934 = vmatpush1.bf16.msra.mxu0 %v3691
  %3935 = vmatprep.subr.bf16.mxu0 %v3696
  %3936 = vmatpush1.bf16.msra.mxu0 %v3695
  %3937 = vmatprep.mubr.bf16.mxu0 %v3133
  %3938 = vmatmul.mubr.bf16.gmra.mrb[0].mxu0 %v3132
  %v3939 = vpop.f32.mrb[0].mxu0
  %v3940 = vadd.f32 %v3897, %v3939
  %v3941 = vpop.f32.mrb[0].mxu0
  %v3942 = vadd.f32 %v3899, %v3941
  %v3943 = vpop.f32.mrb[0].mxu0
  %v3944 = vadd.f32 %v3901, %v3943
  %v3945 = vpop.f32.mrb[0].mxu0
  %v3946 = vadd.f32 %v3903, %v3945
  %3947 = vdwg.mxu0
  %3948 = vmatprep.subr.bf16.mxu0 %v3700
  %3949 = vmatpush1.bf16.msra.mxu0 %v3699
  %3950 = vmatprep.subr.bf16.mxu0 %v3704
  %3951 = vmatpush1.bf16.msra.mxu0 %v3703
  %3952 = vmatprep.subr.bf16.mxu0 %v3708
  %3953 = vmatpush1.bf16.msra.mxu0 %v3707
  %3954 = vmatprep.subr.bf16.mxu0 %v3712
  %3955 = vmatpush1.bf16.msra.mxu0 %v3711
  %3956 = vmatprep.subr.bf16.mxu0 0
  %3957 = vmatpush1.bf16.msra.mxu0 0
  %3958 = vmatprep.subr.bf16.mxu0 0
  %3959 = vmatpush1.bf16.msra.mxu0 0
  %3960 = vmatprep.subr.bf16.mxu0 0
  %3961 = vmatpush1.bf16.msra.mxu0 0
  %3962 = vmatprep.subr.bf16.mxu0 0
  %3963 = vmatpush1.bf16.msra.mxu0 0
  %3964 = vmatprep.subr.bf16.mxu0 0
  %3965 = vmatpush1.bf16.msra.mxu0 0
  %3966 = vmatprep.subr.bf16.mxu0 0
  %3967 = vmatpush1.bf16.msra.mxu0 0
  %3968 = vmatprep.subr.bf16.mxu0 0
  %3969 = vmatpush1.bf16.msra.mxu0 0
  %3970 = vmatprep.subr.bf16.mxu0 0
  %3971 = vmatpush1.bf16.msra.mxu0 0
  %3972 = vmatprep.subr.bf16.mxu0 0
  %3973 = vmatpush1.bf16.msra.mxu0 0
  %3974 = vmatprep.subr.bf16.mxu0 0
  %3975 = vmatpush1.bf16.msra.mxu0 0
  %3976 = vmatprep.subr.bf16.mxu0 0
  %3977 = vmatpush1.bf16.msra.mxu0 0
  %3978 = vmatprep.subr.bf16.mxu0 0
  %3979 = vmatpush1.bf16.msra.mxu0 0
  %3980 = vmatprep.mubr.bf16.mxu0 0
  %3981 = vmatmul.mubr.bf16.gmra.mrb[0].mxu0 %v3860
  %v3982 = vpop.f32.mrb[0].mxu0
  %v3983 = vadd.f32 %v3940, %v3982
  %v3984 = vpop.f32.mrb[0].mxu0
  %v3985 = vadd.f32 %v3942, %v3984
  %v3986 = vpop.f32.mrb[0].mxu0
  %v3987 = vadd.f32 %v3944, %v3986
  %v3988 = vpop.f32.mrb[0].mxu0
  %v3989 = vadd.f32 %v3946, %v3988
  %3990 = vdwg.mxu0
  %3991 = vmatprep.subr.bf16.mxu0 %v3574
  %3992 = vmatpush1.bf16.msra.mxu0 %v3573
  %3993 = vmatprep.subr.bf16.mxu0 %v3578
  %3994 = vmatpush1.bf16.msra.mxu0 %v3577
  %3995 = vmatprep.subr.bf16.mxu0 %v3582
  %3996 = vmatpush1.bf16.msra.mxu0 %v3581
  %3997 = vmatprep.subr.bf16.mxu0 %v3586
  %3998 = vmatpush1.bf16.msra.mxu0 %v3585
  %3999 = vmatprep.subr.bf16.mxu0 %v3590
  %4000 = vmatpush1.bf16.msra.mxu0 %v3589
  %4001 = vmatprep.subr.bf16.mxu0 %v3594
  %4002 = vmatpush1.bf16.msra.mxu0 %v3593
  %4003 = vmatprep.subr.bf16.mxu0 %v3598
  %4004 = vmatpush1.bf16.msra.mxu0 %v3597
  %4005 = vmatprep.subr.bf16.mxu0 %v3602
  %4006 = vmatpush1.bf16.msra.mxu0 %v3601
  %4007 = vmatprep.subr.bf16.mxu0 %v3606
  %4008 = vmatpush1.bf16.msra.mxu0 %v3605
  %4009 = vmatprep.subr.bf16.mxu0 %v3610
  %4010 = vmatpush1.bf16.msra.mxu0 %v3609
  %4011 = vmatprep.subr.bf16.mxu0 %v3614
  %4012 = vmatpush1.bf16.msra.mxu0 %v3613
  %4013 = vmatprep.subr.bf16.mxu0 %v3618
  %4014 = vmatpush1.bf16.msra.mxu0 %v3617
  %4015 = vmatprep.subr.bf16.mxu0 %v3622
  %4016 = vmatpush1.bf16.msra.mxu0 %v3621
  %4017 = vmatprep.subr.bf16.mxu0 %v3626
  %4018 = vmatpush1.bf16.msra.mxu0 %v3625
  %4019 = vmatprep.subr.bf16.mxu0 %v3630
  %4020 = vmatpush1.bf16.msra.mxu0 %v3629
  %4021 = vmatprep.subr.bf16.mxu0 %v3634
  %4022 = vmatpush1.bf16.msra.mxu0 %v3633
  %4023 = vmatprep.mubr.bf16.mxu0 %v3131
  %4024 = vmatmul.mubr.bf16.gmra.mrb[0].mxu0 %v3130
  %v4025 = vpop.f32.mrb[0].mxu0
  %v4026 = vadd.f32 0.0, %v4025
  %v4027 = vpop.f32.mrb[0].mxu0
  %v4028 = vadd.f32 0.0, %v4027
  %v4029 = vpop.f32.mrb[0].mxu0
  %v4030 = vadd.f32 0.0, %v4029
  %v4031 = vpop.f32.mrb[0].mxu0
  %v4032 = vadd.f32 0.0, %v4031
  %4033 = vdwg.mxu0
  %4034 = vmatprep.subr.bf16.mxu0 %v3638
  %4035 = vmatpush1.bf16.msra.mxu0 %v3637
  %4036 = vmatprep.subr.bf16.mxu0 %v3642
  %4037 = vmatpush1.bf16.msra.mxu0 %v3641
  %4038 = vmatprep.subr.bf16.mxu0 %v3646
  %4039 = vmatpush1.bf16.msra.mxu0 %v3645
  %4040 = vmatprep.subr.bf16.mxu0 %v3650
  %4041 = vmatpush1.bf16.msra.mxu0 %v3649
  %4042 = vmatprep.subr.bf16.mxu0 %v3654
  %4043 = vmatpush1.bf16.msra.mxu0 %v3653
  %4044 = vmatprep.subr.bf16.mxu0 %v3658
  %4045 = vmatpush1.bf16.msra.mxu0 %v3657
  %4046 = vmatprep.subr.bf16.mxu0 %v3662
  %4047 = vmatpush1.bf16.msra.mxu0 %v3661
  %4048 = vmatprep.subr.bf16.mxu0 %v3666
  %4049 = vmatpush1.bf16.msra.mxu0 %v3665
  %4050 = vmatprep.subr.bf16.mxu0 %v3670
  %4051 = vmatpush1.bf16.msra.mxu0 %v3669
  %4052 = vmatprep.subr.bf16.mxu0 %v3674
  %4053 = vmatpush1.bf16.msra.mxu0 %v3673
  %4054 = vmatprep.subr.bf16.mxu0 %v3678
  %4055 = vmatpush1.bf16.msra.mxu0 %v3677
  %4056 = vmatprep.subr.bf16.mxu0 %v3682
  %4057 = vmatpush1.bf16.msra.mxu0 %v3681
  %4058 = vmatprep.subr.bf16.mxu0 %v3686
  %4059 = vmatpush1.bf16.msra.mxu0 %v3685
  %4060 = vmatprep.subr.bf16.mxu0 %v3690
  %4061 = vmatpush1.bf16.msra.mxu0 %v3689
  %4062 = vmatprep.subr.bf16.mxu0 %v3694
  %4063 = vmatpush1.bf16.msra.mxu0 %v3693
  %4064 = vmatprep.subr.bf16.mxu0 %v3698
  %4065 = vmatpush1.bf16.msra.mxu0 %v3697
  %4066 = vmatprep.mubr.bf16.mxu0 %v3133
  %4067 = vmatmul.mubr.bf16.gmra.mrb[0].mxu0 %v3132
  %v4068 = vpop.f32.mrb[0].mxu0
  %v4069 = vadd.f32 %v4026, %v4068
  %v4070 = vpop.f32.mrb[0].mxu0
  %v4071 = vadd.f32 %v4028, %v4070
  %v4072 = vpop.f32.mrb[0].mxu0
  %v4073 = vadd.f32 %v4030, %v4072
  %v4074 = vpop.f32.mrb[0].mxu0
  %v4075 = vadd.f32 %v4032, %v4074
  %4076 = vdwg.mxu0
  %4077 = vmatprep.subr.bf16.mxu0 %v3702
  %4078 = vmatpush1.bf16.msra.mxu0 %v3701
  %4079 = vmatprep.subr.bf16.mxu0 %v3706
  %4080 = vmatpush1.bf16.msra.mxu0 %v3705
  %4081 = vmatprep.subr.bf16.mxu0 %v3710
  %4082 = vmatpush1.bf16.msra.mxu0 %v3709
  %4083 = vmatprep.subr.bf16.mxu0 %v3714
  %4084 = vmatpush1.bf16.msra.mxu0 %v3713
  %4085 = vmatprep.subr.bf16.mxu0 0
  %4086 = vmatpush1.bf16.msra.mxu0 0
  %4087 = vmatprep.subr.bf16.mxu0 0
  %4088 = vmatpush1.bf16.msra.mxu0 0
  %4089 = vmatprep.subr.bf16.mxu0 0
  %4090 = vmatpush1.bf16.msra.mxu0 0
  %4091 = vmatprep.subr.bf16.mxu0 0
  %4092 = vmatpush1.bf16.msra.mxu0 0
  %4093 = vmatprep.subr.bf16.mxu0 0
  %4094 = vmatpush1.bf16.msra.mxu0 0
  %4095 = vmatprep.subr.bf16.mxu0 0
  %4096 = vmatpush1.bf16.msra.mxu0 0
  %4097 = vmatprep.subr.bf16.mxu0 0
  %4098 = vmatpush1.bf16.msra.mxu0 0
  %4099 = vmatprep.subr.bf16.mxu0 0
  %4100 = vmatpush1.bf16.msra.mxu0 0
  %4101 = vmatprep.subr.bf16.mxu0 0
  %4102 = vmatpush1.bf16.msra.mxu0 0
  %4103 = vmatprep.subr.bf16.mxu0 0
  %4104 = vmatpush1.bf16.msra.mxu0 0
  %4105 = vmatprep.subr.bf16.mxu0 0
  %4106 = vmatpush1.bf16.msra.mxu0 0
  %4107 = vmatprep.subr.bf16.mxu0 0
  %4108 = vmatpush1.bf16.msra.mxu0 0
  %4109 = vmatprep.mubr.bf16.mxu0 0
  %4110 = vmatmul.mubr.bf16.gmra.mrb[0].mxu0 %v3860
  %v4111 = vpop.f32.mrb[0].mxu0
  %v4112 = vadd.f32 %v4069, %v4111
  %v4113 = vpop.f32.mrb[0].mxu0
  %v4114 = vadd.f32 %v4071, %v4113
  %v4115 = vpop.f32.mrb[0].mxu0
  %v4116 = vadd.f32 %v4073, %v4115
  %v4117 = vpop.f32.mrb[0].mxu0
  %v4118 = vadd.f32 %v4075, %v4117
  %4119 = vdwg.mxu0
  %v4120 = vadd.f32 %v2828, %v3983
  %v4121 = vadd.f32 %v2830, %v3985
  %v4122 = vadd.f32 %v2957, %v4112
  %v4123 = vadd.f32 %v2959, %v4114
  %v4124 = vadd.f32 %v2832, %v3987
  %v4125 = vadd.f32 %v2834, %v3989
  %v4126 = vadd.f32 %v2961, %v4116
  %v4127 = vadd.f32 %v2963, %v4118
  %v4128 = vld [vmem:[#allocation3] sm:$0xfc]
  %v4129 = vld [vmem:[#allocation3 + $0x8] sm:$0xfc]
  %v4130 = vld [vmem:[#allocation3 + $0x10] sm:$0xfc]
  %v4131 = vld [vmem:[#allocation3 + $0x18] sm:$0xfc]
  %v4132 = vld [vmem:[#allocation3 + $0x20] sm:$0xfc]
  %v4133 = vld [vmem:[#allocation3 + $0x28] sm:$0xff]
  %v4134 = vld [vmem:[#allocation3 + $0x30] sm:$0xff]
  %v4135 = vld [vmem:[#allocation3 + $0x38] sm:$0xff]
  %v4136 = vld [vmem:[#allocation3 + $0x40] sm:$0xff]
  %v4137 = vld [vmem:[#allocation3 + $0x48] sm:$0xff]
  %v4138 = vpack.c.bf16 %v4133, %v4128
  %v4139 = vpack.c.bf16 %v4134, %v4129
  %v4140 = vpack.c.bf16 %v4135, %v4130
  %v4141 = vpack.c.bf16 %v4136, %v4131
  %v4142 = vpack.c.bf16 %v4137, %v4132
  %s4143 = scalar_lea.vmem %s3, 3456
  %v4144 = vld [vmem:[%s4143] sm:$0xff]
  %v4145 = vld [vmem:[%s4143 + $0x8] sm:$0xff]
  %v4146 = vld [vmem:[%s4143 + $0x10] sm:$0xff]
  %v4147 = vld [vmem:[%s4143 + $0x18] sm:$0xff]
  %v4148 = vld [vmem:[%s4143 + $0x20] sm:$0xff]
  %v4149 = vld [vmem:[%s4143 + $0x28] sm:$0xff]
  %v4150 = vld [vmem:[%s4143 + $0x30] sm:$0xff]
  %v4151 = vld [vmem:[%s4143 + $0x38] sm:$0xff]
  %v4152 = vld [vmem:[%s4143 + $0x40] sm:$0xff]
  %v4153 = vld [vmem:[%s4143 + $0x48] sm:$0xff]
  %v4154 = vld [vmem:[%s4143 + $0x50] sm:$0xff]
  %v4155 = vld [vmem:[%s4143 + $0x58] sm:$0xff]
  %v4156 = vld [vmem:[%s4143 + $0x60] sm:$0xff]
  %v4157 = vld [vmem:[%s4143 + $0x68] sm:$0xff]
  %v4158 = vld [vmem:[%s4143 + $0x70] sm:$0xff]
  %v4159 = vld [vmem:[%s4143 + $0x78] sm:$0xff]
  %v4160 = vld [vmem:[%s4143 + $0x80] sm:$0xff]
  %v4161 = vld [vmem:[%s4143 + $0x88] sm:$0xff]
  %v4162 = vld [vmem:[%s4143 + $0x90] sm:$0xff]
  %v4163 = vld [vmem:[%s4143 + $0x98] sm:$0xff]
  %v4164 = vld [vmem:[%s4143 + $0xa0] sm:$0xff]
  %v4165 = vld [vmem:[%s4143 + $0xa8] sm:$0xff]
  %v4166 = vld [vmem:[%s4143 + $0xb0] sm:$0xff]
  %v4167 = vld [vmem:[%s4143 + $0xb8] sm:$0xff]
  %v4168 = vld [vmem:[%s4143 + $0xc0] sm:$0xff]
  %v4169 = vld [vmem:[%s4143 + $0xc8] sm:$0xff]
  %v4170 = vld [vmem:[%s4143 + $0xd0] sm:$0xff]
  %v4171 = vld [vmem:[%s4143 + $0xd8] sm:$0xff]
  %v4172 = vld [vmem:[%s4143 + $0xe0] sm:$0xff]
  %v4173 = vld [vmem:[%s4143 + $0xe8] sm:$0xff]
  %v4174 = vld [vmem:[%s4143 + $0xf0] sm:$0xff]
  %v4175 = vld [vmem:[%s4143 + $0xf8] sm:$0xff]
  %v4176 = vld [vmem:[%s4143 + $0x100] sm:$0xff]
  %v4177 = vld [vmem:[%s4143 + $0x108] sm:$0xff]
  %v4178 = vld [vmem:[%s4143 + $0x110] sm:$0xff]
  %v4179 = vld [vmem:[%s4143 + $0x118] sm:$0xff]
  %v4180 = vld [vmem:[%s4143 + $0x120] sm:$0xff]
  %v4181 = vld [vmem:[%s4143 + $0x128] sm:$0xff]
  %v4182 = vld [vmem:[%s4143 + $0x130] sm:$0xff]
  %v4183 = vld [vmem:[%s4143 + $0x138] sm:$0xff]
  %v4184 = vld [vmem:[%s4143 + $0x140] sm:$0xff]
  %v4185 = vld [vmem:[%s4143 + $0x148] sm:$0xff]
  %v4186 = vld [vmem:[%s4143 + $0x150] sm:$0xff]
  %v4187 = vld [vmem:[%s4143 + $0x158] sm:$0xff]
  %v4188 = vld [vmem:[%s4143 + $0x160] sm:$0xff]
  %v4189 = vld [vmem:[%s4143 + $0x168] sm:$0xff]
  %v4190 = vld [vmem:[%s4143 + $0x170] sm:$0xff]
  %v4191 = vld [vmem:[%s4143 + $0x178] sm:$0xff]
  %v4192 = vld [vmem:[%s4143 + $0x180] sm:$0xff]
  %v4193 = vld [vmem:[%s4143 + $0x188] sm:$0xff]
  %v4194 = vld [vmem:[%s4143 + $0x190] sm:$0xff]
  %v4195 = vld [vmem:[%s4143 + $0x198] sm:$0xff]
  %v4196 = vld [vmem:[%s4143 + $0x1a0] sm:$0xff]
  %v4197 = vld [vmem:[%s4143 + $0x1a8] sm:$0xff]
  %v4198 = vld [vmem:[%s4143 + $0x1b0] sm:$0xff]
  %v4199 = vld [vmem:[%s4143 + $0x1b8] sm:$0xff]
  %v4200 = vld [vmem:[%s4143 + $0x1c0] sm:$0xff]
  %v4201 = vld [vmem:[%s4143 + $0x1c8] sm:$0xff]
  %v4202 = vld [vmem:[%s4143 + $0x1d0] sm:$0xff]
  %v4203 = vld [vmem:[%s4143 + $0x1d8] sm:$0xff]
  %v4204 = vld [vmem:[%s4143 + $0x1e0] sm:$0xff]
  %v4205 = vld [vmem:[%s4143 + $0x1e8] sm:$0xff]
  %v4206 = vld [vmem:[%s4143 + $0x1f0] sm:$0xff]
  %v4207 = vld [vmem:[%s4143 + $0x1f8] sm:$0xff]
  %v4208 = vld [vmem:[%s4143 + $0x200] sm:$0xff]
  %v4209 = vld [vmem:[%s4143 + $0x208] sm:$0xff]
  %v4210 = vld [vmem:[%s4143 + $0x210] sm:$0xff]
  %v4211 = vld [vmem:[%s4143 + $0x218] sm:$0xff]
  %v4212 = vld [vmem:[%s4143 + $0x220] sm:$0xff]
  %v4213 = vld [vmem:[%s4143 + $0x228] sm:$0xff]
  %v4214 = vld [vmem:[%s4143 + $0x230] sm:$0xff]
  %v4215 = vld [vmem:[%s4143 + $0x238] sm:$0xff]
  %v4216 = vld [vmem:[%s4143 + $0x240] sm:$0xff]
  %v4217 = vld [vmem:[%s4143 + $0x248] sm:$0xff]
  %v4218 = vld [vmem:[%s4143 + $0x250] sm:$0xff]
  %v4219 = vld [vmem:[%s4143 + $0x258] sm:$0xff]
  %v4220 = vld [vmem:[%s4143 + $0x260] sm:$0xff]
  %v4221 = vld [vmem:[%s4143 + $0x268] sm:$0xff]
  %v4222 = vld [vmem:[%s4143 + $0x270] sm:$0xff]
  %v4223 = vld [vmem:[%s4143 + $0x278] sm:$0xff]
  %v4224 = vld [vmem:[%s4143 + $0x280] sm:$0xff]
  %v4225 = vld [vmem:[%s4143 + $0x288] sm:$0xff]
  %v4226 = vld [vmem:[%s4143 + $0x290] sm:$0xff]
  %v4227 = vld [vmem:[%s4143 + $0x298] sm:$0xff]
  %v4228 = vld [vmem:[%s4143 + $0x2a0] sm:$0xff]
  %v4229 = vld [vmem:[%s4143 + $0x2a8] sm:$0xff]
  %v4230 = vld [vmem:[%s4143 + $0x2b0] sm:$0xff]
  %v4231 = vld [vmem:[%s4143 + $0x2b8] sm:$0xff]
  %v4232 = vld [vmem:[%s4143 + $0x2c0] sm:$0xff]
  %v4233 = vld [vmem:[%s4143 + $0x2c8] sm:$0xff]
  %v4234 = vld [vmem:[%s4143 + $0x2d0] sm:$0xff]
  %v4235 = vld [vmem:[%s4143 + $0x2d8] sm:$0xff]
  %v4236 = vld [vmem:[%s4143 + $0x2e0] sm:$0xff]
  %v4237 = vld [vmem:[%s4143 + $0x2e8] sm:$0xff]
  %v4238 = vld [vmem:[%s4143 + $0x2f0] sm:$0xff]
  %v4239 = vld [vmem:[%s4143 + $0x2f8] sm:$0xff]
  %v4240 = vld [vmem:[%s4143 + $0x300] sm:$0xff]
  %v4241 = vld [vmem:[%s4143 + $0x308] sm:$0xff]
  %v4242 = vld [vmem:[%s4143 + $0x310] sm:$0xff]
  %v4243 = vld [vmem:[%s4143 + $0x318] sm:$0xff]
  %v4244 = vld [vmem:[%s4143 + $0x320] sm:$0xff]
  %v4245 = vld [vmem:[%s4143 + $0x328] sm:$0xff]
  %v4246 = vld [vmem:[%s4143 + $0x330] sm:$0xff]
  %v4247 = vld [vmem:[%s4143 + $0x338] sm:$0xff]
  %v4248 = vld [vmem:[%s4143 + $0x340] sm:$0xff]
  %v4249 = vld [vmem:[%s4143 + $0x348] sm:$0xff]
  %v4250 = vld [vmem:[%s4143 + $0x350] sm:$0xff]
  %v4251 = vld [vmem:[%s4143 + $0x358] sm:$0xff]
  %v4252 = vld [vmem:[%s4143 + $0x360] sm:$0xff]
  %v4253 = vld [vmem:[%s4143 + $0x368] sm:$0xff]
  %v4254 = vld [vmem:[%s4143 + $0x370] sm:$0xff]
  %v4255 = vld [vmem:[%s4143 + $0x378] sm:$0xff]
  %v4256 = vld [vmem:[%s4143 + $0x380] sm:$0xff]
  %v4257 = vld [vmem:[%s4143 + $0x388] sm:$0xff]
  %v4258 = vld [vmem:[%s4143 + $0x390] sm:$0xff]
  %v4259 = vld [vmem:[%s4143 + $0x398] sm:$0xff]
  %v4260 = vld [vmem:[%s4143 + $0x3a0] sm:$0xff]
  %v4261 = vld [vmem:[%s4143 + $0x3a8] sm:$0xff]
  %v4262 = vld [vmem:[%s4143 + $0x3b0] sm:$0xff]
  %v4263 = vld [vmem:[%s4143 + $0x3b8] sm:$0xff]
  %v4264 = vld [vmem:[%s4143 + $0x3c0] sm:$0xff]
  %v4265 = vld [vmem:[%s4143 + $0x3c8] sm:$0xff]
  %v4266 = vld [vmem:[%s4143 + $0x3d0] sm:$0xff]
  %v4267 = vld [vmem:[%s4143 + $0x3d8] sm:$0xff]
  %v4268 = vld [vmem:[%s4143 + $0x3e0] sm:$0xff]
  %v4269 = vld [vmem:[%s4143 + $0x3e8] sm:$0xff]
  %v4270 = vld [vmem:[%s4143 + $0x3f0] sm:$0xff]
  %v4271 = vld [vmem:[%s4143 + $0x3f8] sm:$0xff]
  %v4272 = vld [vmem:[%s4143 + $0x400] sm:$0xff]
  %v4273 = vld [vmem:[%s4143 + $0x408] sm:$0xff]
  %v4274 = vld [vmem:[%s4143 + $0x410] sm:$0xff]
  %v4275 = vld [vmem:[%s4143 + $0x418] sm:$0xff]
  %v4276 = vld [vmem:[%s4143 + $0x420] sm:$0xff]
  %v4277 = vld [vmem:[%s4143 + $0x428] sm:$0xff]
  %v4278 = vld [vmem:[%s4143 + $0x430] sm:$0xff]
  %v4279 = vld [vmem:[%s4143 + $0x438] sm:$0xff]
  %v4280 = vld [vmem:[%s4143 + $0x440] sm:$0xff]
  %v4281 = vld [vmem:[%s4143 + $0x448] sm:$0xff]
  %v4282 = vld [vmem:[%s4143 + $0x450] sm:$0xff]
  %v4283 = vld [vmem:[%s4143 + $0x458] sm:$0xff]
  %v4284 = vld [vmem:[%s4143 + $0x460] sm:$0xff]
  %v4285 = vld [vmem:[%s4143 + $0x468] sm:$0xff]
  %v4286 = vld [vmem:[%s4143 + $0x470] sm:$0xff]
  %v4287 = vld [vmem:[%s4143 + $0x478] sm:$0xff]
  %v4293 = vrot.slane %v4138, 1
  %v4294 = vrot.slane %v4139, 1
  %v4295 = vrot.slane %v4140, 1
  %v4296 = vrot.slane %v4141, 1
  %v4297 = vrot.slane %v4142, 1
  %v4446 = vunpack.c.l.b16 %v4144
  %v4447 = vunpack.c.h.b16 %v4144
  %v4448 = vunpack.c.l.b16 %v4145
  %v4449 = vunpack.c.h.b16 %v4145
  %v4450 = vunpack.c.l.b16 %v4146
  %v4451 = vunpack.c.h.b16 %v4146
  %v4452 = vunpack.c.l.b16 %v4147
  %v4453 = vunpack.c.h.b16 %v4147
  %v4454 = vunpack.c.l.b16 %v4148
  %v4455 = vunpack.c.h.b16 %v4148
  %v4456 = vunpack.c.l.b16 %v4149
  %v4457 = vunpack.c.h.b16 %v4149
  %v4458 = vunpack.c.l.b16 %v4150
  %v4459 = vunpack.c.h.b16 %v4150
  %v4460 = vunpack.c.l.b16 %v4151
  %v4461 = vunpack.c.h.b16 %v4151
  %v4462 = vunpack.c.l.b16 %v4152
  %v4463 = vunpack.c.h.b16 %v4152
  %v4464 = vunpack.c.l.b16 %v4153
  %v4465 = vunpack.c.h.b16 %v4153
  %v4466 = vunpack.c.l.b16 %v4154
  %v4467 = vunpack.c.h.b16 %v4154
  %v4468 = vunpack.c.l.b16 %v4155
  %v4469 = vunpack.c.h.b16 %v4155
  %v4470 = vunpack.c.l.b16 %v4156
  %v4471 = vunpack.c.h.b16 %v4156
  %v4472 = vunpack.c.l.b16 %v4157
  %v4473 = vunpack.c.h.b16 %v4157
  %v4474 = vunpack.c.l.b16 %v4158
  %v4475 = vunpack.c.h.b16 %v4158
  %v4476 = vunpack.c.l.b16 %v4159
  %v4477 = vunpack.c.h.b16 %v4159
  %v4478 = vunpack.c.l.b16 %v4160
  %v4479 = vunpack.c.h.b16 %v4160
  %v4480 = vunpack.c.l.b16 %v4161
  %v4481 = vunpack.c.h.b16 %v4161
  %v4482 = vunpack.c.l.b16 %v4162
  %v4483 = vunpack.c.h.b16 %v4162
  %v4484 = vunpack.c.l.b16 %v4163
  %v4485 = vunpack.c.h.b16 %v4163
  %v4486 = vunpack.c.l.b16 %v4164
  %v4487 = vunpack.c.h.b16 %v4164
  %v4488 = vunpack.c.l.b16 %v4165
  %v4489 = vunpack.c.h.b16 %v4165
  %v4490 = vunpack.c.l.b16 %v4166
  %v4491 = vunpack.c.h.b16 %v4166
  %v4492 = vunpack.c.l.b16 %v4167
  %v4493 = vunpack.c.h.b16 %v4167
  %v4494 = vunpack.c.l.b16 %v4168
  %v4495 = vunpack.c.h.b16 %v4168
  %v4496 = vunpack.c.l.b16 %v4169
  %v4497 = vunpack.c.h.b16 %v4169
  %v4498 = vunpack.c.l.b16 %v4170
  %v4499 = vunpack.c.h.b16 %v4170
  %v4500 = vunpack.c.l.b16 %v4171
  %v4501 = vunpack.c.h.b16 %v4171
  %v4502 = vunpack.c.l.b16 %v4172
  %v4503 = vunpack.c.h.b16 %v4172
  %v4504 = vunpack.c.l.b16 %v4173
  %v4505 = vunpack.c.h.b16 %v4173
  %v4506 = vunpack.c.l.b16 %v4174
  %v4507 = vunpack.c.h.b16 %v4174
  %v4508 = vunpack.c.l.b16 %v4175
  %v4509 = vunpack.c.h.b16 %v4175
  %v4510 = vunpack.c.l.b16 %v4176
  %v4511 = vunpack.c.h.b16 %v4176
  %v4512 = vunpack.c.l.b16 %v4177
  %v4513 = vunpack.c.h.b16 %v4177
  %v4514 = vunpack.c.l.b16 %v4178
  %v4515 = vunpack.c.h.b16 %v4178
  %v4516 = vunpack.c.l.b16 %v4179
  %v4517 = vunpack.c.h.b16 %v4179
  %v4518 = vunpack.c.l.b16 %v4180
  %v4519 = vunpack.c.h.b16 %v4180
  %v4520 = vunpack.c.l.b16 %v4181
  %v4521 = vunpack.c.h.b16 %v4181
  %v4522 = vunpack.c.l.b16 %v4182
  %v4523 = vunpack.c.h.b16 %v4182
  %v4524 = vunpack.c.l.b16 %v4183
  %v4525 = vunpack.c.h.b16 %v4183
  %v4526 = vunpack.c.l.b16 %v4184
  %v4527 = vunpack.c.h.b16 %v4184
  %v4528 = vunpack.c.l.b16 %v4185
  %v4529 = vunpack.c.h.b16 %v4185
  %v4530 = vunpack.c.l.b16 %v4186
  %v4531 = vunpack.c.h.b16 %v4186
  %v4532 = vunpack.c.l.b16 %v4187
  %v4533 = vunpack.c.h.b16 %v4187
  %v4534 = vunpack.c.l.b16 %v4188
  %v4535 = vunpack.c.h.b16 %v4188
  %v4536 = vunpack.c.l.b16 %v4189
  %v4537 = vunpack.c.h.b16 %v4189
  %v4538 = vunpack.c.l.b16 %v4190
  %v4539 = vunpack.c.h.b16 %v4190
  %v4540 = vunpack.c.l.b16 %v4191
  %v4541 = vunpack.c.h.b16 %v4191
  %v4542 = vunpack.c.l.b16 %v4192
  %v4543 = vunpack.c.h.b16 %v4192
  %v4544 = vunpack.c.l.b16 %v4193
  %v4545 = vunpack.c.h.b16 %v4193
  %v4546 = vunpack.c.l.b16 %v4194
  %v4547 = vunpack.c.h.b16 %v4194
  %v4548 = vunpack.c.l.b16 %v4195
  %v4549 = vunpack.c.h.b16 %v4195
  %v4550 = vunpack.c.l.b16 %v4196
  %v4551 = vunpack.c.h.b16 %v4196
  %v4552 = vunpack.c.l.b16 %v4197
  %v4553 = vunpack.c.h.b16 %v4197
  %v4554 = vunpack.c.l.b16 %v4198
  %v4555 = vunpack.c.h.b16 %v4198
  %v4556 = vunpack.c.l.b16 %v4199
  %v4557 = vunpack.c.h.b16 %v4199
  %v4558 = vunpack.c.l.b16 %v4200
  %v4559 = vunpack.c.h.b16 %v4200
  %v4560 = vunpack.c.l.b16 %v4201
  %v4561 = vunpack.c.h.b16 %v4201
  %v4562 = vunpack.c.l.b16 %v4202
  %v4563 = vunpack.c.h.b16 %v4202
  %v4564 = vunpack.c.l.b16 %v4203
  %v4565 = vunpack.c.h.b16 %v4203
  %v4566 = vunpack.c.l.b16 %v4204
  %v4567 = vunpack.c.h.b16 %v4204
  %v4568 = vunpack.c.l.b16 %v4205
  %v4569 = vunpack.c.h.b16 %v4205
  %v4570 = vunpack.c.l.b16 %v4206
  %v4571 = vunpack.c.h.b16 %v4206
  %v4572 = vunpack.c.l.b16 %v4207
  %v4573 = vunpack.c.h.b16 %v4207
  %v4574 = vunpack.c.l.b16 %v4208
  %v4575 = vunpack.c.h.b16 %v4208
  %v4576 = vunpack.c.l.b16 %v4209
  %v4577 = vunpack.c.h.b16 %v4209
  %v4578 = vunpack.c.l.b16 %v4210
  %v4579 = vunpack.c.h.b16 %v4210
  %v4580 = vunpack.c.l.b16 %v4211
  %v4581 = vunpack.c.h.b16 %v4211
  %v4582 = vunpack.c.l.b16 %v4212
  %v4583 = vunpack.c.h.b16 %v4212
  %v4584 = vunpack.c.l.b16 %v4213
  %v4585 = vunpack.c.h.b16 %v4213
  %v4586 = vunpack.c.l.b16 %v4214
  %v4587 = vunpack.c.h.b16 %v4214
  %v4588 = vunpack.c.l.b16 %v4215
  %v4589 = vunpack.c.h.b16 %v4215
  %v4590 = vunpack.c.l.b16 %v4216
  %v4591 = vunpack.c.h.b16 %v4216
  %v4592 = vunpack.c.l.b16 %v4217
  %v4593 = vunpack.c.h.b16 %v4217
  %v4594 = vunpack.c.l.b16 %v4218
  %v4595 = vunpack.c.h.b16 %v4218
  %v4596 = vunpack.c.l.b16 %v4219
  %v4597 = vunpack.c.h.b16 %v4219
  %v4598 = vunpack.c.l.b16 %v4220
  %v4599 = vunpack.c.h.b16 %v4220
  %v4600 = vunpack.c.l.b16 %v4221
  %v4601 = vunpack.c.h.b16 %v4221
  %v4602 = vunpack.c.l.b16 %v4222
  %v4603 = vunpack.c.h.b16 %v4222
  %v4604 = vunpack.c.l.b16 %v4223
  %v4605 = vunpack.c.h.b16 %v4223
  %v4606 = vunpack.c.l.b16 %v4224
  %v4607 = vunpack.c.h.b16 %v4224
  %v4608 = vunpack.c.l.b16 %v4225
  %v4609 = vunpack.c.h.b16 %v4225
  %v4610 = vunpack.c.l.b16 %v4226
  %v4611 = vunpack.c.h.b16 %v4226
  %v4612 = vunpack.c.l.b16 %v4227
  %v4613 = vunpack.c.h.b16 %v4227
  %v4614 = vunpack.c.l.b16 %v4228
  %v4615 = vunpack.c.h.b16 %v4228
  %v4616 = vunpack.c.l.b16 %v4229
  %v4617 = vunpack.c.h.b16 %v4229
  %v4618 = vunpack.c.l.b16 %v4230
  %v4619 = vunpack.c.h.b16 %v4230
  %v4620 = vunpack.c.l.b16 %v4231
  %v4621 = vunpack.c.h.b16 %v4231
  %v4622 = vunpack.c.l.b16 %v4232
  %v4623 = vunpack.c.h.b16 %v4232
  %v4624 = vunpack.c.l.b16 %v4233
  %v4625 = vunpack.c.h.b16 %v4233
  %v4626 = vunpack.c.l.b16 %v4234
  %v4627 = vunpack.c.h.b16 %v4234
  %v4628 = vunpack.c.l.b16 %v4235
  %v4629 = vunpack.c.h.b16 %v4235
  %v4630 = vunpack.c.l.b16 %v4236
  %v4631 = vunpack.c.h.b16 %v4236
  %v4632 = vunpack.c.l.b16 %v4237
  %v4633 = vunpack.c.h.b16 %v4237
  %v4634 = vunpack.c.l.b16 %v4238
  %v4635 = vunpack.c.h.b16 %v4238
  %v4636 = vunpack.c.l.b16 %v4239
  %v4637 = vunpack.c.h.b16 %v4239
  %v4638 = vunpack.c.l.b16 %v4240
  %v4639 = vunpack.c.h.b16 %v4240
  %v4640 = vunpack.c.l.b16 %v4241
  %v4641 = vunpack.c.h.b16 %v4241
  %v4642 = vunpack.c.l.b16 %v4242
  %v4643 = vunpack.c.h.b16 %v4242
  %v4644 = vunpack.c.l.b16 %v4243
  %v4645 = vunpack.c.h.b16 %v4243
  %v4646 = vunpack.c.l.b16 %v4244
  %v4647 = vunpack.c.h.b16 %v4244
  %v4648 = vunpack.c.l.b16 %v4245
  %v4649 = vunpack.c.h.b16 %v4245
  %v4650 = vunpack.c.l.b16 %v4246
  %v4651 = vunpack.c.h.b16 %v4246
  %v4652 = vunpack.c.l.b16 %v4247
  %v4653 = vunpack.c.h.b16 %v4247
  %v4654 = vunpack.c.l.b16 %v4248
  %v4655 = vunpack.c.h.b16 %v4248
  %v4656 = vunpack.c.l.b16 %v4249
  %v4657 = vunpack.c.h.b16 %v4249
  %v4658 = vunpack.c.l.b16 %v4250
  %v4659 = vunpack.c.h.b16 %v4250
  %v4660 = vunpack.c.l.b16 %v4251
  %v4661 = vunpack.c.h.b16 %v4251
  %v4662 = vunpack.c.l.b16 %v4252
  %v4663 = vunpack.c.h.b16 %v4252
  %v4664 = vunpack.c.l.b16 %v4253
  %v4665 = vunpack.c.h.b16 %v4253
  %v4666 = vunpack.c.l.b16 %v4254
  %v4667 = vunpack.c.h.b16 %v4254
  %v4668 = vunpack.c.l.b16 %v4255
  %v4669 = vunpack.c.h.b16 %v4255
  %v4670 = vunpack.c.l.b16 %v4256
  %v4671 = vunpack.c.h.b16 %v4256
  %v4672 = vunpack.c.l.b16 %v4257
  %v4673 = vunpack.c.h.b16 %v4257
  %v4674 = vunpack.c.l.b16 %v4258
  %v4675 = vunpack.c.h.b16 %v4258
  %v4676 = vunpack.c.l.b16 %v4259
  %v4677 = vunpack.c.h.b16 %v4259
  %v4678 = vunpack.c.l.b16 %v4260
  %v4679 = vunpack.c.h.b16 %v4260
  %v4680 = vunpack.c.l.b16 %v4261
  %v4681 = vunpack.c.h.b16 %v4261
  %v4682 = vunpack.c.l.b16 %v4262
  %v4683 = vunpack.c.h.b16 %v4262
  %v4684 = vunpack.c.l.b16 %v4263
  %v4685 = vunpack.c.h.b16 %v4263
  %v4686 = vunpack.c.l.b16 %v4264
  %v4687 = vunpack.c.h.b16 %v4264
  %v4688 = vunpack.c.l.b16 %v4265
  %v4689 = vunpack.c.h.b16 %v4265
  %v4690 = vunpack.c.l.b16 %v4266
  %v4691 = vunpack.c.h.b16 %v4266
  %v4692 = vunpack.c.l.b16 %v4267
  %v4693 = vunpack.c.h.b16 %v4267
  %v4694 = vunpack.c.l.b16 %v4268
  %v4695 = vunpack.c.h.b16 %v4268
  %v4696 = vunpack.c.l.b16 %v4269
  %v4697 = vunpack.c.h.b16 %v4269
  %v4698 = vunpack.c.l.b16 %v4270
  %v4699 = vunpack.c.h.b16 %v4270
  %v4700 = vunpack.c.l.b16 %v4271
  %v4701 = vunpack.c.h.b16 %v4271
  %v4702 = vunpack.c.l.b16 %v4272
  %v4703 = vunpack.c.h.b16 %v4272
  %v4704 = vunpack.c.l.b16 %v4273
  %v4705 = vunpack.c.h.b16 %v4273
  %v4706 = vunpack.c.l.b16 %v4274
  %v4707 = vunpack.c.h.b16 %v4274
  %v4708 = vunpack.c.l.b16 %v4275
  %v4709 = vunpack.c.h.b16 %v4275
  %v4710 = vunpack.c.l.b16 %v4276
  %v4711 = vunpack.c.h.b16 %v4276
  %v4712 = vunpack.c.l.b16 %v4277
  %v4713 = vunpack.c.h.b16 %v4277
  %v4714 = vunpack.c.l.b16 %v4278
  %v4715 = vunpack.c.h.b16 %v4278
  %v4716 = vunpack.c.l.b16 %v4279
  %v4717 = vunpack.c.h.b16 %v4279
  %v4718 = vunpack.c.l.b16 %v4280
  %v4719 = vunpack.c.h.b16 %v4280
  %v4720 = vunpack.c.l.b16 %v4281
  %v4721 = vunpack.c.h.b16 %v4281
  %v4722 = vunpack.c.l.b16 %v4282
  %v4723 = vunpack.c.h.b16 %v4282
  %v4724 = vunpack.c.l.b16 %v4283
  %v4725 = vunpack.c.h.b16 %v4283
  %v4726 = vunpack.c.l.b16 %v4284
  %v4727 = vunpack.c.h.b16 %v4284
  %v4728 = vunpack.c.l.b16 %v4285
  %v4729 = vunpack.c.h.b16 %v4285
  %v4730 = vunpack.c.l.b16 %v4286
  %v4731 = vunpack.c.h.b16 %v4286
  %v4732 = vunpack.c.l.b16 %v4287
  %v4733 = vunpack.c.h.b16 %v4287
  %v4734 = vpack.c.b16 %v4450, %v4446
  %v4735 = vpack.c.b16 %v4451, %v4447
  %v4736 = vpack.c.b16 %v4452, %v4448
  %v4737 = vpack.c.b16 %v4453, %v4449
  %v4738 = vpack.c.b16 %v4458, %v4454
  %v4739 = vpack.c.b16 %v4459, %v4455
  %v4740 = vpack.c.b16 %v4460, %v4456
  %v4741 = vpack.c.b16 %v4461, %v4457
  %v4742 = vpack.c.b16 %v4466, %v4462
  %v4743 = vpack.c.b16 %v4467, %v4463
  %v4744 = vpack.c.b16 %v4468, %v4464
  %v4745 = vpack.c.b16 %v4469, %v4465
  %v4746 = vpack.c.b16 %v4474, %v4470
  %v4747 = vpack.c.b16 %v4475, %v4471
  %v4748 = vpack.c.b16 %v4476, %v4472
  %v4749 = vpack.c.b16 %v4477, %v4473
  %v4750 = vpack.c.b16 %v4482, %v4478
  %v4751 = vpack.c.b16 %v4483, %v4479
  %v4752 = vpack.c.b16 %v4484, %v4480
  %v4753 = vpack.c.b16 %v4485, %v4481
  %v4754 = vpack.c.b16 %v4490, %v4486
  %v4755 = vpack.c.b16 %v4491, %v4487
  %v4756 = vpack.c.b16 %v4492, %v4488
  %v4757 = vpack.c.b16 %v4493, %v4489
  %v4758 = vpack.c.b16 %v4498, %v4494
  %v4759 = vpack.c.b16 %v4499, %v4495
  %v4760 = vpack.c.b16 %v4500, %v4496
  %v4761 = vpack.c.b16 %v4501, %v4497
  %v4762 = vpack.c.b16 %v4506, %v4502
  %v4763 = vpack.c.b16 %v4507, %v4503
  %v4764 = vpack.c.b16 %v4508, %v4504
  %v4765 = vpack.c.b16 %v4509, %v4505
  %v4766 = vpack.c.b16 %v4514, %v4510
  %v4767 = vpack.c.b16 %v4515, %v4511
  %v4768 = vpack.c.b16 %v4516, %v4512
  %v4769 = vpack.c.b16 %v4517, %v4513
  %v4770 = vpack.c.b16 %v4522, %v4518
  %v4771 = vpack.c.b16 %v4523, %v4519
  %v4772 = vpack.c.b16 %v4524, %v4520
  %v4773 = vpack.c.b16 %v4525, %v4521
  %v4774 = vpack.c.b16 %v4530, %v4526
  %v4775 = vpack.c.b16 %v4531, %v4527
  %v4776 = vpack.c.b16 %v4532, %v4528
  %v4777 = vpack.c.b16 %v4533, %v4529
  %v4778 = vpack.c.b16 %v4538, %v4534
  %v4779 = vpack.c.b16 %v4539, %v4535
  %v4780 = vpack.c.b16 %v4540, %v4536
  %v4781 = vpack.c.b16 %v4541, %v4537
  %v4782 = vpack.c.b16 %v4546, %v4542
  %v4783 = vpack.c.b16 %v4547, %v4543
  %v4784 = vpack.c.b16 %v4548, %v4544
  %v4785 = vpack.c.b16 %v4549, %v4545
  %v4786 = vpack.c.b16 %v4554, %v4550
  %v4787 = vpack.c.b16 %v4555, %v4551
  %v4788 = vpack.c.b16 %v4556, %v4552
  %v4789 = vpack.c.b16 %v4557, %v4553
  %v4790 = vpack.c.b16 %v4562, %v4558
  %v4791 = vpack.c.b16 %v4563, %v4559
  %v4792 = vpack.c.b16 %v4564, %v4560
  %v4793 = vpack.c.b16 %v4565, %v4561
  %v4794 = vpack.c.b16 %v4570, %v4566
  %v4795 = vpack.c.b16 %v4571, %v4567
  %v4796 = vpack.c.b16 %v4572, %v4568
  %v4797 = vpack.c.b16 %v4573, %v4569
  %v4798 = vpack.c.b16 %v4578, %v4574
  %v4799 = vpack.c.b16 %v4579, %v4575
  %v4800 = vpack.c.b16 %v4580, %v4576
  %v4801 = vpack.c.b16 %v4581, %v4577
  %v4802 = vpack.c.b16 %v4586, %v4582
  %v4803 = vpack.c.b16 %v4587, %v4583
  %v4804 = vpack.c.b16 %v4588, %v4584
  %v4805 = vpack.c.b16 %v4589, %v4585
  %v4806 = vpack.c.b16 %v4594, %v4590
  %v4807 = vpack.c.b16 %v4595, %v4591
  %v4808 = vpack.c.b16 %v4596, %v4592
  %v4809 = vpack.c.b16 %v4597, %v4593
  %v4810 = vpack.c.b16 %v4602, %v4598
  %v4811 = vpack.c.b16 %v4603, %v4599
  %v4812 = vpack.c.b16 %v4604, %v4600
  %v4813 = vpack.c.b16 %v4605, %v4601
  %v4814 = vpack.c.b16 %v4610, %v4606
  %v4815 = vpack.c.b16 %v4611, %v4607
  %v4816 = vpack.c.b16 %v4612, %v4608
  %v4817 = vpack.c.b16 %v4613, %v4609
  %v4818 = vpack.c.b16 %v4618, %v4614
  %v4819 = vpack.c.b16 %v4619, %v4615
  %v4820 = vpack.c.b16 %v4620, %v4616
  %v4821 = vpack.c.b16 %v4621, %v4617
  %v4822 = vpack.c.b16 %v4626, %v4622
  %v4823 = vpack.c.b16 %v4627, %v4623
  %v4824 = vpack.c.b16 %v4628, %v4624
  %v4825 = vpack.c.b16 %v4629, %v4625
  %v4826 = vpack.c.b16 %v4634, %v4630
  %v4827 = vpack.c.b16 %v4635, %v4631
  %v4828 = vpack.c.b16 %v4636, %v4632
  %v4829 = vpack.c.b16 %v4637, %v4633
  %v4830 = vpack.c.b16 %v4642, %v4638
  %v4831 = vpack.c.b16 %v4643, %v4639
  %v4832 = vpack.c.b16 %v4644, %v4640
  %v4833 = vpack.c.b16 %v4645, %v4641
  %v4834 = vpack.c.b16 %v4650, %v4646
  %v4835 = vpack.c.b16 %v4651, %v4647
  %v4836 = vpack.c.b16 %v4652, %v4648
  %v4837 = vpack.c.b16 %v4653, %v4649
  %v4838 = vpack.c.b16 %v4658, %v4654
  %v4839 = vpack.c.b16 %v4659, %v4655
  %v4840 = vpack.c.b16 %v4660, %v4656
  %v4841 = vpack.c.b16 %v4661, %v4657
  %v4842 = vpack.c.b16 %v4666, %v4662
  %v4843 = vpack.c.b16 %v4667, %v4663
  %v4844 = vpack.c.b16 %v4668, %v4664
  %v4845 = vpack.c.b16 %v4669, %v4665
  %v4846 = vpack.c.b16 %v4674, %v4670
  %v4847 = vpack.c.b16 %v4675, %v4671
  %v4848 = vpack.c.b16 %v4676, %v4672
  %v4849 = vpack.c.b16 %v4677, %v4673
  %v4850 = vpack.c.b16 %v4682, %v4678
  %v4851 = vpack.c.b16 %v4683, %v4679
  %v4852 = vpack.c.b16 %v4684, %v4680
  %v4853 = vpack.c.b16 %v4685, %v4681
  %v4854 = vpack.c.b16 %v4690, %v4686
  %v4855 = vpack.c.b16 %v4691, %v4687
  %v4856 = vpack.c.b16 %v4692, %v4688
  %v4857 = vpack.c.b16 %v4693, %v4689
  %v4858 = vpack.c.b16 %v4698, %v4694
  %v4859 = vpack.c.b16 %v4699, %v4695
  %v4860 = vpack.c.b16 %v4700, %v4696
  %v4861 = vpack.c.b16 %v4701, %v4697
  %v4862 = vpack.c.b16 %v4706, %v4702
  %v4863 = vpack.c.b16 %v4707, %v4703
  %v4864 = vpack.c.b16 %v4708, %v4704
  %v4865 = vpack.c.b16 %v4709, %v4705
  %v4866 = vpack.c.b16 %v4714, %v4710
  %v4867 = vpack.c.b16 %v4715, %v4711
  %v4868 = vpack.c.b16 %v4716, %v4712
  %v4869 = vpack.c.b16 %v4717, %v4713
  %v4870 = vpack.c.b16 %v4722, %v4718
  %v4871 = vpack.c.b16 %v4723, %v4719
  %v4872 = vpack.c.b16 %v4724, %v4720
  %v4873 = vpack.c.b16 %v4725, %v4721
  %v4874 = vpack.c.b16 %v4730, %v4726
  %v4875 = vpack.c.b16 %v4731, %v4727
  %v4876 = vpack.c.b16 %v4732, %v4728
  %v4877 = vpack.c.b16 %v4733, %v4729
  %v5023 = vsel %vm537, %v4297, 0
  %5025 = vmatprep.subr.bf16.mxu0 %v4735
  %5026 = vmatpush1.bf16.msra.mxu0 %v4734
  %5027 = vmatprep.subr.bf16.mxu0 %v4739
  %5028 = vmatpush1.bf16.msra.mxu0 %v4738
  %5029 = vmatprep.subr.bf16.mxu0 %v4743
  %5030 = vmatpush1.bf16.msra.mxu0 %v4742
  %5031 = vmatprep.subr.bf16.mxu0 %v4747
  %5032 = vmatpush1.bf16.msra.mxu0 %v4746
  %5033 = vmatprep.subr.bf16.mxu0 %v4751
  %5034 = vmatpush1.bf16.msra.mxu0 %v4750
  %5035 = vmatprep.subr.bf16.mxu0 %v4755
  %5036 = vmatpush1.bf16.msra.mxu0 %v4754
  %5037 = vmatprep.subr.bf16.mxu0 %v4759
  %5038 = vmatpush1.bf16.msra.mxu0 %v4758
  %5039 = vmatprep.subr.bf16.mxu0 %v4763
  %5040 = vmatpush1.bf16.msra.mxu0 %v4762
  %5041 = vmatprep.subr.bf16.mxu0 %v4767
  %5042 = vmatpush1.bf16.msra.mxu0 %v4766
  %5043 = vmatprep.subr.bf16.mxu0 %v4771
  %5044 = vmatpush1.bf16.msra.mxu0 %v4770
  %5045 = vmatprep.subr.bf16.mxu0 %v4775
  %5046 = vmatpush1.bf16.msra.mxu0 %v4774
  %5047 = vmatprep.subr.bf16.mxu0 %v4779
  %5048 = vmatpush1.bf16.msra.mxu0 %v4778
  %5049 = vmatprep.subr.bf16.mxu0 %v4783
  %5050 = vmatpush1.bf16.msra.mxu0 %v4782
  %5051 = vmatprep.subr.bf16.mxu0 %v4787
  %5052 = vmatpush1.bf16.msra.mxu0 %v4786
  %5053 = vmatprep.subr.bf16.mxu0 %v4791
  %5054 = vmatpush1.bf16.msra.mxu0 %v4790
  %5055 = vmatprep.subr.bf16.mxu0 %v4795
  %5056 = vmatpush1.bf16.msra.mxu0 %v4794
  %5057 = vmatprep.mubr.bf16.mxu0 %v4294
  %5058 = vmatmul.mubr.bf16.gmra.mrb[0].mxu0 %v4293
  %v5059 = vpop.f32.mrb[0].mxu0
  %v5060 = vadd.f32 0.0, %v5059
  %v5061 = vpop.f32.mrb[0].mxu0
  %v5062 = vadd.f32 0.0, %v5061
  %v5063 = vpop.f32.mrb[0].mxu0
  %v5064 = vadd.f32 0.0, %v5063
  %v5065 = vpop.f32.mrb[0].mxu0
  %v5066 = vadd.f32 0.0, %v5065
  %5067 = vdwg.mxu0
  %5068 = vmatprep.subr.bf16.mxu0 %v4799
  %5069 = vmatpush1.bf16.msra.mxu0 %v4798
  %5070 = vmatprep.subr.bf16.mxu0 %v4803
  %5071 = vmatpush1.bf16.msra.mxu0 %v4802
  %5072 = vmatprep.subr.bf16.mxu0 %v4807
  %5073 = vmatpush1.bf16.msra.mxu0 %v4806
  %5074 = vmatprep.subr.bf16.mxu0 %v4811
  %5075 = vmatpush1.bf16.msra.mxu0 %v4810
  %5076 = vmatprep.subr.bf16.mxu0 %v4815
  %5077 = vmatpush1.bf16.msra.mxu0 %v4814
  %5078 = vmatprep.subr.bf16.mxu0 %v4819
  %5079 = vmatpush1.bf16.msra.mxu0 %v4818
  %5080 = vmatprep.subr.bf16.mxu0 %v4823
  %5081 = vmatpush1.bf16.msra.mxu0 %v4822
  %5082 = vmatprep.subr.bf16.mxu0 %v4827
  %5083 = vmatpush1.bf16.msra.mxu0 %v4826
  %5084 = vmatprep.subr.bf16.mxu0 %v4831
  %5085 = vmatpush1.bf16.msra.mxu0 %v4830
  %5086 = vmatprep.subr.bf16.mxu0 %v4835
  %5087 = vmatpush1.bf16.msra.mxu0 %v4834
  %5088 = vmatprep.subr.bf16.mxu0 %v4839
  %5089 = vmatpush1.bf16.msra.mxu0 %v4838
  %5090 = vmatprep.subr.bf16.mxu0 %v4843
  %5091 = vmatpush1.bf16.msra.mxu0 %v4842
  %5092 = vmatprep.subr.bf16.mxu0 %v4847
  %5093 = vmatpush1.bf16.msra.mxu0 %v4846
  %5094 = vmatprep.subr.bf16.mxu0 %v4851
  %5095 = vmatpush1.bf16.msra.mxu0 %v4850
  %5096 = vmatprep.subr.bf16.mxu0 %v4855
  %5097 = vmatpush1.bf16.msra.mxu0 %v4854
  %5098 = vmatprep.subr.bf16.mxu0 %v4859
  %5099 = vmatpush1.bf16.msra.mxu0 %v4858
  %5100 = vmatprep.mubr.bf16.mxu0 %v4296
  %5101 = vmatmul.mubr.bf16.gmra.mrb[0].mxu0 %v4295
  %v5102 = vpop.f32.mrb[0].mxu0
  %v5103 = vadd.f32 %v5060, %v5102
  %v5104 = vpop.f32.mrb[0].mxu0
  %v5105 = vadd.f32 %v5062, %v5104
  %v5106 = vpop.f32.mrb[0].mxu0
  %v5107 = vadd.f32 %v5064, %v5106
  %v5108 = vpop.f32.mrb[0].mxu0
  %v5109 = vadd.f32 %v5066, %v5108
  %5110 = vdwg.mxu0
  %5111 = vmatprep.subr.bf16.mxu0 %v4863
  %5112 = vmatpush1.bf16.msra.mxu0 %v4862
  %5113 = vmatprep.subr.bf16.mxu0 %v4867
  %5114 = vmatpush1.bf16.msra.mxu0 %v4866
  %5115 = vmatprep.subr.bf16.mxu0 %v4871
  %5116 = vmatpush1.bf16.msra.mxu0 %v4870
  %5117 = vmatprep.subr.bf16.mxu0 %v4875
  %5118 = vmatpush1.bf16.msra.mxu0 %v4874
  %5119 = vmatprep.subr.bf16.mxu0 0
  %5120 = vmatpush1.bf16.msra.mxu0 0
  %5121 = vmatprep.subr.bf16.mxu0 0
  %5122 = vmatpush1.bf16.msra.mxu0 0
  %5123 = vmatprep.subr.bf16.mxu0 0
  %5124 = vmatpush1.bf16.msra.mxu0 0
  %5125 = vmatprep.subr.bf16.mxu0 0
  %5126 = vmatpush1.bf16.msra.mxu0 0
  %5127 = vmatprep.subr.bf16.mxu0 0
  %5128 = vmatpush1.bf16.msra.mxu0 0
  %5129 = vmatprep.subr.bf16.mxu0 0
  %5130 = vmatpush1.bf16.msra.mxu0 0
  %5131 = vmatprep.subr.bf16.mxu0 0
  %5132 = vmatpush1.bf16.msra.mxu0 0
  %5133 = vmatprep.subr.bf16.mxu0 0
  %5134 = vmatpush1.bf16.msra.mxu0 0
  %5135 = vmatprep.subr.bf16.mxu0 0
  %5136 = vmatpush1.bf16.msra.mxu0 0
  %5137 = vmatprep.subr.bf16.mxu0 0
  %5138 = vmatpush1.bf16.msra.mxu0 0
  %5139 = vmatprep.subr.bf16.mxu0 0
  %5140 = vmatpush1.bf16.msra.mxu0 0
  %5141 = vmatprep.subr.bf16.mxu0 0
  %5142 = vmatpush1.bf16.msra.mxu0 0
  %5143 = vmatprep.mubr.bf16.mxu0 0
  %5144 = vmatmul.mubr.bf16.gmra.mrb[0].mxu0 %v5023
  %v5145 = vpop.f32.mrb[0].mxu0
  %v5146 = vadd.f32 %v5103, %v5145
  %v5147 = vpop.f32.mrb[0].mxu0
  %v5148 = vadd.f32 %v5105, %v5147
  %v5149 = vpop.f32.mrb[0].mxu0
  %v5150 = vadd.f32 %v5107, %v5149
  %v5151 = vpop.f32.mrb[0].mxu0
  %v5152 = vadd.f32 %v5109, %v5151
  %5153 = vdwg.mxu0
  %5154 = vmatprep.subr.bf16.mxu0 %v4737
  %5155 = vmatpush1.bf16.msra.mxu0 %v4736
  %5156 = vmatprep.subr.bf16.mxu0 %v4741
  %5157 = vmatpush1.bf16.msra.mxu0 %v4740
  %5158 = vmatprep.subr.bf16.mxu0 %v4745
  %5159 = vmatpush1.bf16.msra.mxu0 %v4744
  %5160 = vmatprep.subr.bf16.mxu0 %v4749
  %5161 = vmatpush1.bf16.msra.mxu0 %v4748
  %5162 = vmatprep.subr.bf16.mxu0 %v4753
  %5163 = vmatpush1.bf16.msra.mxu0 %v4752
  %5164 = vmatprep.subr.bf16.mxu0 %v4757
  %5165 = vmatpush1.bf16.msra.mxu0 %v4756
  %5166 = vmatprep.subr.bf16.mxu0 %v4761
  %5167 = vmatpush1.bf16.msra.mxu0 %v4760
  %5168 = vmatprep.subr.bf16.mxu0 %v4765
  %5169 = vmatpush1.bf16.msra.mxu0 %v4764
  %5170 = vmatprep.subr.bf16.mxu0 %v4769
  %5171 = vmatpush1.bf16.msra.mxu0 %v4768
  %5172 = vmatprep.subr.bf16.mxu0 %v4773
  %5173 = vmatpush1.bf16.msra.mxu0 %v4772
  %5174 = vmatprep.subr.bf16.mxu0 %v4777
  %5175 = vmatpush1.bf16.msra.mxu0 %v4776
  %5176 = vmatprep.subr.bf16.mxu0 %v4781
  %5177 = vmatpush1.bf16.msra.mxu0 %v4780
  %5178 = vmatprep.subr.bf16.mxu0 %v4785
  %5179 = vmatpush1.bf16.msra.mxu0 %v4784
  %5180 = vmatprep.subr.bf16.mxu0 %v4789
  %5181 = vmatpush1.bf16.msra.mxu0 %v4788
  %5182 = vmatprep.subr.bf16.mxu0 %v4793
  %5183 = vmatpush1.bf16.msra.mxu0 %v4792
  %5184 = vmatprep.subr.bf16.mxu0 %v4797
  %5185 = vmatpush1.bf16.msra.mxu0 %v4796
  %5186 = vmatprep.mubr.bf16.mxu0 %v4294
  %5187 = vmatmul.mubr.bf16.gmra.mrb[0].mxu0 %v4293
  %v5188 = vpop.f32.mrb[0].mxu0
  %v5189 = vadd.f32 0.0, %v5188
  %v5190 = vpop.f32.mrb[0].mxu0
  %v5191 = vadd.f32 0.0, %v5190
  %v5192 = vpop.f32.mrb[0].mxu0
  %v5193 = vadd.f32 0.0, %v5192
  %v5194 = vpop.f32.mrb[0].mxu0
  %v5195 = vadd.f32 0.0, %v5194
  %5196 = vdwg.mxu0
  %5197 = vmatprep.subr.bf16.mxu0 %v4801
  %5198 = vmatpush1.bf16.msra.mxu0 %v4800
  %5199 = vmatprep.subr.bf16.mxu0 %v4805
  %5200 = vmatpush1.bf16.msra.mxu0 %v4804
  %5201 = vmatprep.subr.bf16.mxu0 %v4809
  %5202 = vmatpush1.bf16.msra.mxu0 %v4808
  %5203 = vmatprep.subr.bf16.mxu0 %v4813
  %5204 = vmatpush1.bf16.msra.mxu0 %v4812
  %5205 = vmatprep.subr.bf16.mxu0 %v4817
  %5206 = vmatpush1.bf16.msra.mxu0 %v4816
  %5207 = vmatprep.subr.bf16.mxu0 %v4821
  %5208 = vmatpush1.bf16.msra.mxu0 %v4820
  %5209 = vmatprep.subr.bf16.mxu0 %v4825
  %5210 = vmatpush1.bf16.msra.mxu0 %v4824
  %5211 = vmatprep.subr.bf16.mxu0 %v4829
  %5212 = vmatpush1.bf16.msra.mxu0 %v4828
  %5213 = vmatprep.subr.bf16.mxu0 %v4833
  %5214 = vmatpush1.bf16.msra.mxu0 %v4832
  %5215 = vmatprep.subr.bf16.mxu0 %v4837
  %5216 = vmatpush1.bf16.msra.mxu0 %v4836
  %5217 = vmatprep.subr.bf16.mxu0 %v4841
  %5218 = vmatpush1.bf16.msra.mxu0 %v4840
  %5219 = vmatprep.subr.bf16.mxu0 %v4845
  %5220 = vmatpush1.bf16.msra.mxu0 %v4844
  %5221 = vmatprep.subr.bf16.mxu0 %v4849
  %5222 = vmatpush1.bf16.msra.mxu0 %v4848
  %5223 = vmatprep.subr.bf16.mxu0 %v4853
  %5224 = vmatpush1.bf16.msra.mxu0 %v4852
  %5225 = vmatprep.subr.bf16.mxu0 %v4857
  %5226 = vmatpush1.bf16.msra.mxu0 %v4856
  %5227 = vmatprep.subr.bf16.mxu0 %v4861
  %5228 = vmatpush1.bf16.msra.mxu0 %v4860
  %5229 = vmatprep.mubr.bf16.mxu0 %v4296
  %5230 = vmatmul.mubr.bf16.gmra.mrb[0].mxu0 %v4295
  %v5231 = vpop.f32.mrb[0].mxu0
  %v5232 = vadd.f32 %v5189, %v5231
  %v5233 = vpop.f32.mrb[0].mxu0
  %v5234 = vadd.f32 %v5191, %v5233
  %v5235 = vpop.f32.mrb[0].mxu0
  %v5236 = vadd.f32 %v5193, %v5235
  %v5237 = vpop.f32.mrb[0].mxu0
  %v5238 = vadd.f32 %v5195, %v5237
  %5239 = vdwg.mxu0
  %5240 = vmatprep.subr.bf16.mxu0 %v4865
  %5241 = vmatpush1.bf16.msra.mxu0 %v4864
  %5242 = vmatprep.subr.bf16.mxu0 %v4869
  %5243 = vmatpush1.bf16.msra.mxu0 %v4868
  %5244 = vmatprep.subr.bf16.mxu0 %v4873
  %5245 = vmatpush1.bf16.msra.mxu0 %v4872
  %5246 = vmatprep.subr.bf16.mxu0 %v4877
  %5247 = vmatpush1.bf16.msra.mxu0 %v4876
  %5248 = vmatprep.subr.bf16.mxu0 0
  %5249 = vmatpush1.bf16.msra.mxu0 0
  %5250 = vmatprep.subr.bf16.mxu0 0
  %5251 = vmatpush1.bf16.msra.mxu0 0
  %5252 = vmatprep.subr.bf16.mxu0 0
  %5253 = vmatpush1.bf16.msra.mxu0 0
  %5254 = vmatprep.subr.bf16.mxu0 0
  %5255 = vmatpush1.bf16.msra.mxu0 0
  %5256 = vmatprep.subr.bf16.mxu0 0
  %5257 = vmatpush1.bf16.msra.mxu0 0
  %5258 = vmatprep.subr.bf16.mxu0 0
  %5259 = vmatpush1.bf16.msra.mxu0 0
  %5260 = vmatprep.subr.bf16.mxu0 0
  %5261 = vmatpush1.bf16.msra.mxu0 0
  %5262 = vmatprep.subr.bf16.mxu0 0
  %5263 = vmatpush1.bf16.msra.mxu0 0
  %5264 = vmatprep.subr.bf16.mxu0 0
  %5265 = vmatpush1.bf16.msra.mxu0 0
  %5266 = vmatprep.subr.bf16.mxu0 0
  %5267 = vmatpush1.bf16.msra.mxu0 0
  %5268 = vmatprep.subr.bf16.mxu0 0
  %5269 = vmatpush1.bf16.msra.mxu0 0
  %5270 = vmatprep.subr.bf16.mxu0 0
  %5271 = vmatpush1.bf16.msra.mxu0 0
  %5272 = vmatprep.mubr.bf16.mxu0 0
  %5273 = vmatmul.mubr.bf16.gmra.mrb[0].mxu0 %v5023
  %v5274 = vpop.f32.mrb[0].mxu0
  %v5275 = vadd.f32 %v5232, %v5274
  %v5276 = vpop.f32.mrb[0].mxu0
  %v5277 = vadd.f32 %v5234, %v5276
  %v5278 = vpop.f32.mrb[0].mxu0
  %v5279 = vadd.f32 %v5236, %v5278
  %v5280 = vpop.f32.mrb[0].mxu0
  %v5281 = vadd.f32 %v5238, %v5280
  %5282 = vdwg.mxu0
  %v5283 = vadd.f32 %v4120, %v5146
  %v5284 = vadd.f32 %v4121, %v5148
  %v5285 = vadd.f32 %v4122, %v5275
  %v5286 = vadd.f32 %v4123, %v5277
  %v5287 = vadd.f32 %v4124, %v5150
  %v5288 = vadd.f32 %v4125, %v5152
  %v5289 = vadd.f32 %v4126, %v5279
  %v5290 = vadd.f32 %v4127, %v5281
  %v5291 = vld [vmem:[#allocation2] sm:$0xf0]
  %v5292 = vld [vmem:[#allocation2 + $0x8] sm:$0xf0]
  %v5293 = vld [vmem:[#allocation2 + $0x10] sm:$0xf0]
  %v5294 = vld [vmem:[#allocation2 + $0x18] sm:$0xf0]
  %v5295 = vld [vmem:[#allocation2 + $0x20] sm:$0xf0]
  %v5296 = vld [vmem:[#allocation2 + $0x28] sm:$0xff]
  %v5297 = vld [vmem:[#allocation2 + $0x30] sm:$0xff]
  %v5298 = vld [vmem:[#allocation2 + $0x38] sm:$0xff]
  %v5299 = vld [vmem:[#allocation2 + $0x40] sm:$0xff]
  %v5300 = vld [vmem:[#allocation2 + $0x48] sm:$0xff]
  %v5301 = vld [vmem:[#allocation2 + $0x50] sm:$0x3]
  %v5302 = vld [vmem:[#allocation2 + $0x58] sm:$0x3]
  %v5303 = vld [vmem:[#allocation2 + $0x60] sm:$0x3]
  %v5304 = vld [vmem:[#allocation2 + $0x68] sm:$0x3]
  %v5305 = vld [vmem:[#allocation2 + $0x70] sm:$0x3]
  %v5306 = vpack.c.bf16 %v5296, %v5291
  %v5307 = vpack.c.bf16 %v5297, %v5292
  %v5308 = vpack.c.bf16 %v5298, %v5293
  %v5309 = vpack.c.bf16 %v5299, %v5294
  %v5310 = vpack.c.bf16 %v5300, %v5295
  %v5311 = vpack.c.bf16 %v5301, %v5301
  %v5312 = vpack.c.bf16 %v5302, %v5302
  %v5313 = vpack.c.bf16 %v5303, %v5303
  %v5314 = vpack.c.bf16 %v5304, %v5304
  %v5315 = vpack.c.bf16 %v5305, %v5305
  %s5316 = scalar_lea.vmem %s3, 4608
  %v5317 = vld [vmem:[%s5316] sm:$0xff]
  %v5318 = vld [vmem:[%s5316 + $0x8] sm:$0xff]
  %v5319 = vld [vmem:[%s5316 + $0x10] sm:$0xff]
  %v5320 = vld [vmem:[%s5316 + $0x18] sm:$0xff]
  %v5321 = vld [vmem:[%s5316 + $0x20] sm:$0xff]
  %v5322 = vld [vmem:[%s5316 + $0x28] sm:$0xff]
  %v5323 = vld [vmem:[%s5316 + $0x30] sm:$0xff]
  %v5324 = vld [vmem:[%s5316 + $0x38] sm:$0xff]
  %v5325 = vld [vmem:[%s5316 + $0x40] sm:$0xff]
  %v5326 = vld [vmem:[%s5316 + $0x48] sm:$0xff]
  %v5327 = vld [vmem:[%s5316 + $0x50] sm:$0xff]
  %v5328 = vld [vmem:[%s5316 + $0x58] sm:$0xff]
  %v5329 = vld [vmem:[%s5316 + $0x60] sm:$0xff]
  %v5330 = vld [vmem:[%s5316 + $0x68] sm:$0xff]
  %v5331 = vld [vmem:[%s5316 + $0x70] sm:$0xff]
  %v5332 = vld [vmem:[%s5316 + $0x78] sm:$0xff]
  %v5333 = vld [vmem:[%s5316 + $0x80] sm:$0xff]
  %v5334 = vld [vmem:[%s5316 + $0x88] sm:$0xff]
  %v5335 = vld [vmem:[%s5316 + $0x90] sm:$0xff]
  %v5336 = vld [vmem:[%s5316 + $0x98] sm:$0xff]
  %v5337 = vld [vmem:[%s5316 + $0xa0] sm:$0xff]
  %v5338 = vld [vmem:[%s5316 + $0xa8] sm:$0xff]
  %v5339 = vld [vmem:[%s5316 + $0xb0] sm:$0xff]
  %v5340 = vld [vmem:[%s5316 + $0xb8] sm:$0xff]
  %v5341 = vld [vmem:[%s5316 + $0xc0] sm:$0xff]
  %v5342 = vld [vmem:[%s5316 + $0xc8] sm:$0xff]
  %v5343 = vld [vmem:[%s5316 + $0xd0] sm:$0xff]
  %v5344 = vld [vmem:[%s5316 + $0xd8] sm:$0xff]
  %v5345 = vld [vmem:[%s5316 + $0xe0] sm:$0xff]
  %v5346 = vld [vmem:[%s5316 + $0xe8] sm:$0xff]
  %v5347 = vld [vmem:[%s5316 + $0xf0] sm:$0xff]
  %v5348 = vld [vmem:[%s5316 + $0xf8] sm:$0xff]
  %v5349 = vld [vmem:[%s5316 + $0x100] sm:$0xff]
  %v5350 = vld [vmem:[%s5316 + $0x108] sm:$0xff]
  %v5351 = vld [vmem:[%s5316 + $0x110] sm:$0xff]
  %v5352 = vld [vmem:[%s5316 + $0x118] sm:$0xff]
  %v5353 = vld [vmem:[%s5316 + $0x120] sm:$0xff]
  %v5354 = vld [vmem:[%s5316 + $0x128] sm:$0xff]
  %v5355 = vld [vmem:[%s5316 + $0x130] sm:$0xff]
  %v5356 = vld [vmem:[%s5316 + $0x138] sm:$0xff]
  %v5357 = vld [vmem:[%s5316 + $0x140] sm:$0xff]
  %v5358 = vld [vmem:[%s5316 + $0x148] sm:$0xff]
  %v5359 = vld [vmem:[%s5316 + $0x150] sm:$0xff]
  %v5360 = vld [vmem:[%s5316 + $0x158] sm:$0xff]
  %v5361 = vld [vmem:[%s5316 + $0x160] sm:$0xff]
  %v5362 = vld [vmem:[%s5316 + $0x168] sm:$0xff]
  %v5363 = vld [vmem:[%s5316 + $0x170] sm:$0xff]
  %v5364 = vld [vmem:[%s5316 + $0x178] sm:$0xff]
  %v5365 = vld [vmem:[%s5316 + $0x180] sm:$0xff]
  %v5366 = vld [vmem:[%s5316 + $0x188] sm:$0xff]
  %v5367 = vld [vmem:[%s5316 + $0x190] sm:$0xff]
  %v5368 = vld [vmem:[%s5316 + $0x198] sm:$0xff]
  %v5369 = vld [vmem:[%s5316 + $0x1a0] sm:$0xff]
  %v5370 = vld [vmem:[%s5316 + $0x1a8] sm:$0xff]
  %v5371 = vld [vmem:[%s5316 + $0x1b0] sm:$0xff]
  %v5372 = vld [vmem:[%s5316 + $0x1b8] sm:$0xff]
  %v5373 = vld [vmem:[%s5316 + $0x1c0] sm:$0xff]
  %v5374 = vld [vmem:[%s5316 + $0x1c8] sm:$0xff]
  %v5375 = vld [vmem:[%s5316 + $0x1d0] sm:$0xff]
  %v5376 = vld [vmem:[%s5316 + $0x1d8] sm:$0xff]
  %v5377 = vld [vmem:[%s5316 + $0x1e0] sm:$0xff]
  %v5378 = vld [vmem:[%s5316 + $0x1e8] sm:$0xff]
  %v5379 = vld [vmem:[%s5316 + $0x1f0] sm:$0xff]
  %v5380 = vld [vmem:[%s5316 + $0x1f8] sm:$0xff]
  %v5381 = vld [vmem:[%s5316 + $0x200] sm:$0xff]
  %v5382 = vld [vmem:[%s5316 + $0x208] sm:$0xff]
  %v5383 = vld [vmem:[%s5316 + $0x210] sm:$0xff]
  %v5384 = vld [vmem:[%s5316 + $0x218] sm:$0xff]
  %v5385 = vld [vmem:[%s5316 + $0x220] sm:$0xff]
  %v5386 = vld [vmem:[%s5316 + $0x228] sm:$0xff]
  %v5387 = vld [vmem:[%s5316 + $0x230] sm:$0xff]
  %v5388 = vld [vmem:[%s5316 + $0x238] sm:$0xff]
  %v5389 = vld [vmem:[%s5316 + $0x240] sm:$0xff]
  %v5390 = vld [vmem:[%s5316 + $0x248] sm:$0xff]
  %v5391 = vld [vmem:[%s5316 + $0x250] sm:$0xff]
  %v5392 = vld [vmem:[%s5316 + $0x258] sm:$0xff]
  %v5393 = vld [vmem:[%s5316 + $0x260] sm:$0xff]
  %v5394 = vld [vmem:[%s5316 + $0x268] sm:$0xff]
  %v5395 = vld [vmem:[%s5316 + $0x270] sm:$0xff]
  %v5396 = vld [vmem:[%s5316 + $0x278] sm:$0xff]
  %v5397 = vld [vmem:[%s5316 + $0x280] sm:$0xff]
  %v5398 = vld [vmem:[%s5316 + $0x288] sm:$0xff]
  %v5399 = vld [vmem:[%s5316 + $0x290] sm:$0xff]
  %v5400 = vld [vmem:[%s5316 + $0x298] sm:$0xff]
  %v5401 = vld [vmem:[%s5316 + $0x2a0] sm:$0xff]
  %v5402 = vld [vmem:[%s5316 + $0x2a8] sm:$0xff]
  %v5403 = vld [vmem:[%s5316 + $0x2b0] sm:$0xff]
  %v5404 = vld [vmem:[%s5316 + $0x2b8] sm:$0xff]
  %v5405 = vld [vmem:[%s5316 + $0x2c0] sm:$0xff]
  %v5406 = vld [vmem:[%s5316 + $0x2c8] sm:$0xff]
  %v5407 = vld [vmem:[%s5316 + $0x2d0] sm:$0xff]
  %v5408 = vld [vmem:[%s5316 + $0x2d8] sm:$0xff]
  %v5409 = vld [vmem:[%s5316 + $0x2e0] sm:$0xff]
  %v5410 = vld [vmem:[%s5316 + $0x2e8] sm:$0xff]
  %v5411 = vld [vmem:[%s5316 + $0x2f0] sm:$0xff]
  %v5412 = vld [vmem:[%s5316 + $0x2f8] sm:$0xff]
  %v5413 = vld [vmem:[%s5316 + $0x300] sm:$0xff]
  %v5414 = vld [vmem:[%s5316 + $0x308] sm:$0xff]
  %v5415 = vld [vmem:[%s5316 + $0x310] sm:$0xff]
  %v5416 = vld [vmem:[%s5316 + $0x318] sm:$0xff]
  %v5417 = vld [vmem:[%s5316 + $0x320] sm:$0xff]
  %v5418 = vld [vmem:[%s5316 + $0x328] sm:$0xff]
  %v5419 = vld [vmem:[%s5316 + $0x330] sm:$0xff]
  %v5420 = vld [vmem:[%s5316 + $0x338] sm:$0xff]
  %v5421 = vld [vmem:[%s5316 + $0x340] sm:$0xff]
  %v5422 = vld [vmem:[%s5316 + $0x348] sm:$0xff]
  %v5423 = vld [vmem:[%s5316 + $0x350] sm:$0xff]
  %v5424 = vld [vmem:[%s5316 + $0x358] sm:$0xff]
  %v5425 = vld [vmem:[%s5316 + $0x360] sm:$0xff]
  %v5426 = vld [vmem:[%s5316 + $0x368] sm:$0xff]
  %v5427 = vld [vmem:[%s5316 + $0x370] sm:$0xff]
  %v5428 = vld [vmem:[%s5316 + $0x378] sm:$0xff]
  %v5429 = vld [vmem:[%s5316 + $0x380] sm:$0xff]
  %v5430 = vld [vmem:[%s5316 + $0x388] sm:$0xff]
  %v5431 = vld [vmem:[%s5316 + $0x390] sm:$0xff]
  %v5432 = vld [vmem:[%s5316 + $0x398] sm:$0xff]
  %v5433 = vld [vmem:[%s5316 + $0x3a0] sm:$0xff]
  %v5434 = vld [vmem:[%s5316 + $0x3a8] sm:$0xff]
  %v5435 = vld [vmem:[%s5316 + $0x3b0] sm:$0xff]
  %v5436 = vld [vmem:[%s5316 + $0x3b8] sm:$0xff]
  %v5437 = vld [vmem:[%s5316 + $0x3c0] sm:$0xff]
  %v5438 = vld [vmem:[%s5316 + $0x3c8] sm:$0xff]
  %v5439 = vld [vmem:[%s5316 + $0x3d0] sm:$0xff]
  %v5440 = vld [vmem:[%s5316 + $0x3d8] sm:$0xff]
  %v5441 = vld [vmem:[%s5316 + $0x3e0] sm:$0xff]
  %v5442 = vld [vmem:[%s5316 + $0x3e8] sm:$0xff]
  %v5443 = vld [vmem:[%s5316 + $0x3f0] sm:$0xff]
  %v5444 = vld [vmem:[%s5316 + $0x3f8] sm:$0xff]
  %v5445 = vld [vmem:[%s5316 + $0x400] sm:$0xff]
  %v5446 = vld [vmem:[%s5316 + $0x408] sm:$0xff]
  %v5447 = vld [vmem:[%s5316 + $0x410] sm:$0xff]
  %v5448 = vld [vmem:[%s5316 + $0x418] sm:$0xff]
  %v5449 = vld [vmem:[%s5316 + $0x420] sm:$0xff]
  %v5450 = vld [vmem:[%s5316 + $0x428] sm:$0xff]
  %v5451 = vld [vmem:[%s5316 + $0x430] sm:$0xff]
  %v5452 = vld [vmem:[%s5316 + $0x438] sm:$0xff]
  %v5453 = vld [vmem:[%s5316 + $0x440] sm:$0xff]
  %v5454 = vld [vmem:[%s5316 + $0x448] sm:$0xff]
  %v5455 = vld [vmem:[%s5316 + $0x450] sm:$0xff]
  %v5456 = vld [vmem:[%s5316 + $0x458] sm:$0xff]
  %v5457 = vld [vmem:[%s5316 + $0x460] sm:$0xff]
  %v5458 = vld [vmem:[%s5316 + $0x468] sm:$0xff]
  %v5459 = vld [vmem:[%s5316 + $0x470] sm:$0xff]
  %v5460 = vld [vmem:[%s5316 + $0x478] sm:$0xff]
  %vm5471 = vcmask 1045504
  %v5472 = vrot.slane %v5306, 2
  %v5473 = vrot.slane %v5311, 2
  %v5474 = vsel %vm5471, %v5472, %v5473
  %v5475 = vrot.slane %v5307, 2
  %v5476 = vrot.slane %v5312, 2
  %v5477 = vsel %vm5471, %v5475, %v5476
  %v5478 = vrot.slane %v5308, 2
  %v5479 = vrot.slane %v5313, 2
  %v5480 = vsel %vm5471, %v5478, %v5479
  %v5481 = vrot.slane %v5309, 2
  %v5482 = vrot.slane %v5314, 2
  %v5483 = vsel %vm5471, %v5481, %v5482
  %v5484 = vrot.slane %v5310, 2
  %v5485 = vrot.slane %v5315, 2
  %v5486 = vsel %vm5471, %v5484, %v5485
  %v5635 = vunpack.c.l.b16 %v5317
  %v5636 = vunpack.c.h.b16 %v5317
  %v5637 = vunpack.c.l.b16 %v5318
  %v5638 = vunpack.c.h.b16 %v5318
  %v5639 = vunpack.c.l.b16 %v5319
  %v5640 = vunpack.c.h.b16 %v5319
  %v5641 = vunpack.c.l.b16 %v5320
  %v5642 = vunpack.c.h.b16 %v5320
  %v5643 = vunpack.c.l.b16 %v5321
  %v5644 = vunpack.c.h.b16 %v5321
  %v5645 = vunpack.c.l.b16 %v5322
  %v5646 = vunpack.c.h.b16 %v5322
  %v5647 = vunpack.c.l.b16 %v5323
  %v5648 = vunpack.c.h.b16 %v5323
  %v5649 = vunpack.c.l.b16 %v5324
  %v5650 = vunpack.c.h.b16 %v5324
  %v5651 = vunpack.c.l.b16 %v5325
  %v5652 = vunpack.c.h.b16 %v5325
  %v5653 = vunpack.c.l.b16 %v5326
  %v5654 = vunpack.c.h.b16 %v5326
  %v5655 = vunpack.c.l.b16 %v5327
  %v5656 = vunpack.c.h.b16 %v5327
  %v5657 = vunpack.c.l.b16 %v5328
  %v5658 = vunpack.c.h.b16 %v5328
  %v5659 = vunpack.c.l.b16 %v5329
  %v5660 = vunpack.c.h.b16 %v5329
  %v5661 = vunpack.c.l.b16 %v5330
  %v5662 = vunpack.c.h.b16 %v5330
  %v5663 = vunpack.c.l.b16 %v5331
  %v5664 = vunpack.c.h.b16 %v5331
  %v5665 = vunpack.c.l.b16 %v5332
  %v5666 = vunpack.c.h.b16 %v5332
  %v5667 = vunpack.c.l.b16 %v5333
  %v5668 = vunpack.c.h.b16 %v5333
  %v5669 = vunpack.c.l.b16 %v5334
  %v5670 = vunpack.c.h.b16 %v5334
  %v5671 = vunpack.c.l.b16 %v5335
  %v5672 = vunpack.c.h.b16 %v5335
  %v5673 = vunpack.c.l.b16 %v5336
  %v5674 = vunpack.c.h.b16 %v5336
  %v5675 = vunpack.c.l.b16 %v5337
  %v5676 = vunpack.c.h.b16 %v5337
  %v5677 = vunpack.c.l.b16 %v5338
  %v5678 = vunpack.c.h.b16 %v5338
  %v5679 = vunpack.c.l.b16 %v5339
  %v5680 = vunpack.c.h.b16 %v5339
  %v5681 = vunpack.c.l.b16 %v5340
  %v5682 = vunpack.c.h.b16 %v5340
  %v5683 = vunpack.c.l.b16 %v5341
  %v5684 = vunpack.c.h.b16 %v5341
  %v5685 = vunpack.c.l.b16 %v5342
  %v5686 = vunpack.c.h.b16 %v5342
  %v5687 = vunpack.c.l.b16 %v5343
  %v5688 = vunpack.c.h.b16 %v5343
  %v5689 = vunpack.c.l.b16 %v5344
  %v5690 = vunpack.c.h.b16 %v5344
  %v5691 = vunpack.c.l.b16 %v5345
  %v5692 = vunpack.c.h.b16 %v5345
  %v5693 = vunpack.c.l.b16 %v5346
  %v5694 = vunpack.c.h.b16 %v5346
  %v5695 = vunpack.c.l.b16 %v5347
  %v5696 = vunpack.c.h.b16 %v5347
  %v5697 = vunpack.c.l.b16 %v5348
  %v5698 = vunpack.c.h.b16 %v5348
  %v5699 = vunpack.c.l.b16 %v5349
  %v5700 = vunpack.c.h.b16 %v5349
  %v5701 = vunpack.c.l.b16 %v5350
  %v5702 = vunpack.c.h.b16 %v5350
  %v5703 = vunpack.c.l.b16 %v5351
  %v5704 = vunpack.c.h.b16 %v5351
  %v5705 = vunpack.c.l.b16 %v5352
  %v5706 = vunpack.c.h.b16 %v5352
  %v5707 = vunpack.c.l.b16 %v5353
  %v5708 = vunpack.c.h.b16 %v5353
  %v5709 = vunpack.c.l.b16 %v5354
  %v5710 = vunpack.c.h.b16 %v5354
  %v5711 = vunpack.c.l.b16 %v5355
  %v5712 = vunpack.c.h.b16 %v5355
  %v5713 = vunpack.c.l.b16 %v5356
  %v5714 = vunpack.c.h.b16 %v5356
  %v5715 = vunpack.c.l.b16 %v5357
  %v5716 = vunpack.c.h.b16 %v5357
  %v5717 = vunpack.c.l.b16 %v5358
  %v5718 = vunpack.c.h.b16 %v5358
  %v5719 = vunpack.c.l.b16 %v5359
  %v5720 = vunpack.c.h.b16 %v5359
  %v5721 = vunpack.c.l.b16 %v5360
  %v5722 = vunpack.c.h.b16 %v5360
  %v5723 = vunpack.c.l.b16 %v5361
  %v5724 = vunpack.c.h.b16 %v5361
  %v5725 = vunpack.c.l.b16 %v5362
  %v5726 = vunpack.c.h.b16 %v5362
  %v5727 = vunpack.c.l.b16 %v5363
  %v5728 = vunpack.c.h.b16 %v5363
  %v5729 = vunpack.c.l.b16 %v5364
  %v5730 = vunpack.c.h.b16 %v5364
  %v5731 = vunpack.c.l.b16 %v5365
  %v5732 = vunpack.c.h.b16 %v5365
  %v5733 = vunpack.c.l.b16 %v5366
  %v5734 = vunpack.c.h.b16 %v5366
  %v5735 = vunpack.c.l.b16 %v5367
  %v5736 = vunpack.c.h.b16 %v5367
  %v5737 = vunpack.c.l.b16 %v5368
  %v5738 = vunpack.c.h.b16 %v5368
  %v5739 = vunpack.c.l.b16 %v5369
  %v5740 = vunpack.c.h.b16 %v5369
  %v5741 = vunpack.c.l.b16 %v5370
  %v5742 = vunpack.c.h.b16 %v5370
  %v5743 = vunpack.c.l.b16 %v5371
  %v5744 = vunpack.c.h.b16 %v5371
  %v5745 = vunpack.c.l.b16 %v5372
  %v5746 = vunpack.c.h.b16 %v5372
  %v5747 = vunpack.c.l.b16 %v5373
  %v5748 = vunpack.c.h.b16 %v5373
  %v5749 = vunpack.c.l.b16 %v5374
  %v5750 = vunpack.c.h.b16 %v5374
  %v5751 = vunpack.c.l.b16 %v5375
  %v5752 = vunpack.c.h.b16 %v5375
  %v5753 = vunpack.c.l.b16 %v5376
  %v5754 = vunpack.c.h.b16 %v5376
  %v5755 = vunpack.c.l.b16 %v5377
  %v5756 = vunpack.c.h.b16 %v5377
  %v5757 = vunpack.c.l.b16 %v5378
  %v5758 = vunpack.c.h.b16 %v5378
  %v5759 = vunpack.c.l.b16 %v5379
  %v5760 = vunpack.c.h.b16 %v5379
  %v5761 = vunpack.c.l.b16 %v5380
  %v5762 = vunpack.c.h.b16 %v5380
  %v5763 = vunpack.c.l.b16 %v5381
  %v5764 = vunpack.c.h.b16 %v5381
  %v5765 = vunpack.c.l.b16 %v5382
  %v5766 = vunpack.c.h.b16 %v5382
  %v5767 = vunpack.c.l.b16 %v5383
  %v5768 = vunpack.c.h.b16 %v5383
  %v5769 = vunpack.c.l.b16 %v5384
  %v5770 = vunpack.c.h.b16 %v5384
  %v5771 = vunpack.c.l.b16 %v5385
  %v5772 = vunpack.c.h.b16 %v5385
  %v5773 = vunpack.c.l.b16 %v5386
  %v5774 = vunpack.c.h.b16 %v5386
  %v5775 = vunpack.c.l.b16 %v5387
  %v5776 = vunpack.c.h.b16 %v5387
  %v5777 = vunpack.c.l.b16 %v5388
  %v5778 = vunpack.c.h.b16 %v5388
  %v5779 = vunpack.c.l.b16 %v5389
  %v5780 = vunpack.c.h.b16 %v5389
  %v5781 = vunpack.c.l.b16 %v5390
  %v5782 = vunpack.c.h.b16 %v5390
  %v5783 = vunpack.c.l.b16 %v5391
  %v5784 = vunpack.c.h.b16 %v5391
  %v5785 = vunpack.c.l.b16 %v5392
  %v5786 = vunpack.c.h.b16 %v5392
  %v5787 = vunpack.c.l.b16 %v5393
  %v5788 = vunpack.c.h.b16 %v5393
  %v5789 = vunpack.c.l.b16 %v5394
  %v5790 = vunpack.c.h.b16 %v5394
  %v5791 = vunpack.c.l.b16 %v5395
  %v5792 = vunpack.c.h.b16 %v5395
  %v5793 = vunpack.c.l.b16 %v5396
  %v5794 = vunpack.c.h.b16 %v5396
  %v5795 = vunpack.c.l.b16 %v5397
  %v5796 = vunpack.c.h.b16 %v5397
  %v5797 = vunpack.c.l.b16 %v5398
  %v5798 = vunpack.c.h.b16 %v5398
  %v5799 = vunpack.c.l.b16 %v5399
  %v5800 = vunpack.c.h.b16 %v5399
  %v5801 = vunpack.c.l.b16 %v5400
  %v5802 = vunpack.c.h.b16 %v5400
  %v5803 = vunpack.c.l.b16 %v5401
  %v5804 = vunpack.c.h.b16 %v5401
  %v5805 = vunpack.c.l.b16 %v5402
  %v5806 = vunpack.c.h.b16 %v5402
  %v5807 = vunpack.c.l.b16 %v5403
  %v5808 = vunpack.c.h.b16 %v5403
  %v5809 = vunpack.c.l.b16 %v5404
  %v5810 = vunpack.c.h.b16 %v5404
  %v5811 = vunpack.c.l.b16 %v5405
  %v5812 = vunpack.c.h.b16 %v5405
  %v5813 = vunpack.c.l.b16 %v5406
  %v5814 = vunpack.c.h.b16 %v5406
  %v5815 = vunpack.c.l.b16 %v5407
  %v5816 = vunpack.c.h.b16 %v5407
  %v5817 = vunpack.c.l.b16 %v5408
  %v5818 = vunpack.c.h.b16 %v5408
  %v5819 = vunpack.c.l.b16 %v5409
  %v5820 = vunpack.c.h.b16 %v5409
  %v5821 = vunpack.c.l.b16 %v5410
  %v5822 = vunpack.c.h.b16 %v5410
  %v5823 = vunpack.c.l.b16 %v5411
  %v5824 = vunpack.c.h.b16 %v5411
  %v5825 = vunpack.c.l.b16 %v5412
  %v5826 = vunpack.c.h.b16 %v5412
  %v5827 = vunpack.c.l.b16 %v5413
  %v5828 = vunpack.c.h.b16 %v5413
  %v5829 = vunpack.c.l.b16 %v5414
  %v5830 = vunpack.c.h.b16 %v5414
  %v5831 = vunpack.c.l.b16 %v5415
  %v5832 = vunpack.c.h.b16 %v5415
  %v5833 = vunpack.c.l.b16 %v5416
  %v5834 = vunpack.c.h.b16 %v5416
  %v5835 = vunpack.c.l.b16 %v5417
  %v5836 = vunpack.c.h.b16 %v5417
  %v5837 = vunpack.c.l.b16 %v5418
  %v5838 = vunpack.c.h.b16 %v5418
  %v5839 = vunpack.c.l.b16 %v5419
  %v5840 = vunpack.c.h.b16 %v5419
  %v5841 = vunpack.c.l.b16 %v5420
  %v5842 = vunpack.c.h.b16 %v5420
  %v5843 = vunpack.c.l.b16 %v5421
  %v5844 = vunpack.c.h.b16 %v5421
  %v5845 = vunpack.c.l.b16 %v5422
  %v5846 = vunpack.c.h.b16 %v5422
  %v5847 = vunpack.c.l.b16 %v5423
  %v5848 = vunpack.c.h.b16 %v5423
  %v5849 = vunpack.c.l.b16 %v5424
  %v5850 = vunpack.c.h.b16 %v5424
  %v5851 = vunpack.c.l.b16 %v5425
  %v5852 = vunpack.c.h.b16 %v5425
  %v5853 = vunpack.c.l.b16 %v5426
  %v5854 = vunpack.c.h.b16 %v5426
  %v5855 = vunpack.c.l.b16 %v5427
  %v5856 = vunpack.c.h.b16 %v5427
  %v5857 = vunpack.c.l.b16 %v5428
  %v5858 = vunpack.c.h.b16 %v5428
  %v5859 = vunpack.c.l.b16 %v5429
  %v5860 = vunpack.c.h.b16 %v5429
  %v5861 = vunpack.c.l.b16 %v5430
  %v5862 = vunpack.c.h.b16 %v5430
  %v5863 = vunpack.c.l.b16 %v5431
  %v5864 = vunpack.c.h.b16 %v5431
  %v5865 = vunpack.c.l.b16 %v5432
  %v5866 = vunpack.c.h.b16 %v5432
  %v5867 = vunpack.c.l.b16 %v5433
  %v5868 = vunpack.c.h.b16 %v5433
  %v5869 = vunpack.c.l.b16 %v5434
  %v5870 = vunpack.c.h.b16 %v5434
  %v5871 = vunpack.c.l.b16 %v5435
  %v5872 = vunpack.c.h.b16 %v5435
  %v5873 = vunpack.c.l.b16 %v5436
  %v5874 = vunpack.c.h.b16 %v5436
  %v5875 = vunpack.c.l.b16 %v5437
  %v5876 = vunpack.c.h.b16 %v5437
  %v5877 = vunpack.c.l.b16 %v5438
  %v5878 = vunpack.c.h.b16 %v5438
  %v5879 = vunpack.c.l.b16 %v5439
  %v5880 = vunpack.c.h.b16 %v5439
  %v5881 = vunpack.c.l.b16 %v5440
  %v5882 = vunpack.c.h.b16 %v5440
  %v5883 = vunpack.c.l.b16 %v5441
  %v5884 = vunpack.c.h.b16 %v5441
  %v5885 = vunpack.c.l.b16 %v5442
  %v5886 = vunpack.c.h.b16 %v5442
  %v5887 = vunpack.c.l.b16 %v5443
  %v5888 = vunpack.c.h.b16 %v5443
  %v5889 = vunpack.c.l.b16 %v5444
  %v5890 = vunpack.c.h.b16 %v5444
  %v5891 = vunpack.c.l.b16 %v5445
  %v5892 = vunpack.c.h.b16 %v5445
  %v5893 = vunpack.c.l.b16 %v5446
  %v5894 = vunpack.c.h.b16 %v5446
  %v5895 = vunpack.c.l.b16 %v5447
  %v5896 = vunpack.c.h.b16 %v5447
  %v5897 = vunpack.c.l.b16 %v5448
  %v5898 = vunpack.c.h.b16 %v5448
  %v5899 = vunpack.c.l.b16 %v5449
  %v5900 = vunpack.c.h.b16 %v5449
  %v5901 = vunpack.c.l.b16 %v5450
  %v5902 = vunpack.c.h.b16 %v5450
  %v5903 = vunpack.c.l.b16 %v5451
  %v5904 = vunpack.c.h.b16 %v5451
  %v5905 = vunpack.c.l.b16 %v5452
  %v5906 = vunpack.c.h.b16 %v5452
  %v5907 = vunpack.c.l.b16 %v5453
  %v5908 = vunpack.c.h.b16 %v5453
  %v5909 = vunpack.c.l.b16 %v5454
  %v5910 = vunpack.c.h.b16 %v5454
  %v5911 = vunpack.c.l.b16 %v5455
  %v5912 = vunpack.c.h.b16 %v5455
  %v5913 = vunpack.c.l.b16 %v5456
  %v5914 = vunpack.c.h.b16 %v5456
  %v5915 = vunpack.c.l.b16 %v5457
  %v5916 = vunpack.c.h.b16 %v5457
  %v5917 = vunpack.c.l.b16 %v5458
  %v5918 = vunpack.c.h.b16 %v5458
  %v5919 = vunpack.c.l.b16 %v5459
  %v5920 = vunpack.c.h.b16 %v5459
  %v5921 = vunpack.c.l.b16 %v5460
  %v5922 = vunpack.c.h.b16 %v5460
  %v5923 = vpack.c.b16 %v5639, %v5635
  %v5924 = vpack.c.b16 %v5640, %v5636
  %v5925 = vpack.c.b16 %v5641, %v5637
  %v5926 = vpack.c.b16 %v5642, %v5638
  %v5927 = vpack.c.b16 %v5647, %v5643
  %v5928 = vpack.c.b16 %v5648, %v5644
  %v5929 = vpack.c.b16 %v5649, %v5645
  %v5930 = vpack.c.b16 %v5650, %v5646
  %v5931 = vpack.c.b16 %v5655, %v5651
  %v5932 = vpack.c.b16 %v5656, %v5652
  %v5933 = vpack.c.b16 %v5657, %v5653
  %v5934 = vpack.c.b16 %v5658, %v5654
  %v5935 = vpack.c.b16 %v5663, %v5659
  %v5936 = vpack.c.b16 %v5664, %v5660
  %v5937 = vpack.c.b16 %v5665, %v5661
  %v5938 = vpack.c.b16 %v5666, %v5662
  %v5939 = vpack.c.b16 %v5671, %v5667
  %v5940 = vpack.c.b16 %v5672, %v5668
  %v5941 = vpack.c.b16 %v5673, %v5669
  %v5942 = vpack.c.b16 %v5674, %v5670
  %v5943 = vpack.c.b16 %v5679, %v5675
  %v5944 = vpack.c.b16 %v5680, %v5676
  %v5945 = vpack.c.b16 %v5681, %v5677
  %v5946 = vpack.c.b16 %v5682, %v5678
  %v5947 = vpack.c.b16 %v5687, %v5683
  %v5948 = vpack.c.b16 %v5688, %v5684
  %v5949 = vpack.c.b16 %v5689, %v5685
  %v5950 = vpack.c.b16 %v5690, %v5686
  %v5951 = vpack.c.b16 %v5695, %v5691
  %v5952 = vpack.c.b16 %v5696, %v5692
  %v5953 = vpack.c.b16 %v5697, %v5693
  %v5954 = vpack.c.b16 %v5698, %v5694
  %v5955 = vpack.c.b16 %v5703, %v5699
  %v5956 = vpack.c.b16 %v5704, %v5700
  %v5957 = vpack.c.b16 %v5705, %v5701
  %v5958 = vpack.c.b16 %v5706, %v5702
  %v5959 = vpack.c.b16 %v5711, %v5707
  %v5960 = vpack.c.b16 %v5712, %v5708
  %v5961 = vpack.c.b16 %v5713, %v5709
  %v5962 = vpack.c.b16 %v5714, %v5710
  %v5963 = vpack.c.b16 %v5719, %v5715
  %v5964 = vpack.c.b16 %v5720, %v5716
  %v5965 = vpack.c.b16 %v5721, %v5717
  %v5966 = vpack.c.b16 %v5722, %v5718
  %v5967 = vpack.c.b16 %v5727, %v5723
  %v5968 = vpack.c.b16 %v5728, %v5724
  %v5969 = vpack.c.b16 %v5729, %v5725
  %v5970 = vpack.c.b16 %v5730, %v5726
  %v5971 = vpack.c.b16 %v5735, %v5731
  %v5972 = vpack.c.b16 %v5736, %v5732
  %v5973 = vpack.c.b16 %v5737, %v5733
  %v5974 = vpack.c.b16 %v5738, %v5734
  %v5975 = vpack.c.b16 %v5743, %v5739
  %v5976 = vpack.c.b16 %v5744, %v5740
  %v5977 = vpack.c.b16 %v5745, %v5741
  %v5978 = vpack.c.b16 %v5746, %v5742
  %v5979 = vpack.c.b16 %v5751, %v5747
  %v5980 = vpack.c.b16 %v5752, %v5748
  %v5981 = vpack.c.b16 %v5753, %v5749
  %v5982 = vpack.c.b16 %v5754, %v5750
  %v5983 = vpack.c.b16 %v5759, %v5755
  %v5984 = vpack.c.b16 %v5760, %v5756
  %v5985 = vpack.c.b16 %v5761, %v5757
  %v5986 = vpack.c.b16 %v5762, %v5758
  %v5987 = vpack.c.b16 %v5767, %v5763
  %v5988 = vpack.c.b16 %v5768, %v5764
  %v5989 = vpack.c.b16 %v5769, %v5765
  %v5990 = vpack.c.b16 %v5770, %v5766
  %v5991 = vpack.c.b16 %v5775, %v5771
  %v5992 = vpack.c.b16 %v5776, %v5772
  %v5993 = vpack.c.b16 %v5777, %v5773
  %v5994 = vpack.c.b16 %v5778, %v5774
  %v5995 = vpack.c.b16 %v5783, %v5779
  %v5996 = vpack.c.b16 %v5784, %v5780
  %v5997 = vpack.c.b16 %v5785, %v5781
  %v5998 = vpack.c.b16 %v5786, %v5782
  %v5999 = vpack.c.b16 %v5791, %v5787
  %v6000 = vpack.c.b16 %v5792, %v5788
  %v6001 = vpack.c.b16 %v5793, %v5789
  %v6002 = vpack.c.b16 %v5794, %v5790
  %v6003 = vpack.c.b16 %v5799, %v5795
  %v6004 = vpack.c.b16 %v5800, %v5796
  %v6005 = vpack.c.b16 %v5801, %v5797
  %v6006 = vpack.c.b16 %v5802, %v5798
  %v6007 = vpack.c.b16 %v5807, %v5803
  %v6008 = vpack.c.b16 %v5808, %v5804
  %v6009 = vpack.c.b16 %v5809, %v5805
  %v6010 = vpack.c.b16 %v5810, %v5806
  %v6011 = vpack.c.b16 %v5815, %v5811
  %v6012 = vpack.c.b16 %v5816, %v5812
  %v6013 = vpack.c.b16 %v5817, %v5813
  %v6014 = vpack.c.b16 %v5818, %v5814
  %v6015 = vpack.c.b16 %v5823, %v5819
  %v6016 = vpack.c.b16 %v5824, %v5820
  %v6017 = vpack.c.b16 %v5825, %v5821
  %v6018 = vpack.c.b16 %v5826, %v5822
  %v6019 = vpack.c.b16 %v5831, %v5827
  %v6020 = vpack.c.b16 %v5832, %v5828
  %v6021 = vpack.c.b16 %v5833, %v5829
  %v6022 = vpack.c.b16 %v5834, %v5830
  %v6023 = vpack.c.b16 %v5839, %v5835
  %v6024 = vpack.c.b16 %v5840, %v5836
  %v6025 = vpack.c.b16 %v5841, %v5837
  %v6026 = vpack.c.b16 %v5842, %v5838
  %v6027 = vpack.c.b16 %v5847, %v5843
  %v6028 = vpack.c.b16 %v5848, %v5844
  %v6029 = vpack.c.b16 %v5849, %v5845
  %v6030 = vpack.c.b16 %v5850, %v5846
  %v6031 = vpack.c.b16 %v5855, %v5851
  %v6032 = vpack.c.b16 %v5856, %v5852
  %v6033 = vpack.c.b16 %v5857, %v5853
  %v6034 = vpack.c.b16 %v5858, %v5854
  %v6035 = vpack.c.b16 %v5863, %v5859
  %v6036 = vpack.c.b16 %v5864, %v5860
  %v6037 = vpack.c.b16 %v5865, %v5861
  %v6038 = vpack.c.b16 %v5866, %v5862
  %v6039 = vpack.c.b16 %v5871, %v5867
  %v6040 = vpack.c.b16 %v5872, %v5868
  %v6041 = vpack.c.b16 %v5873, %v5869
  %v6042 = vpack.c.b16 %v5874, %v5870
  %v6043 = vpack.c.b16 %v5879, %v5875
  %v6044 = vpack.c.b16 %v5880, %v5876
  %v6045 = vpack.c.b16 %v5881, %v5877
  %v6046 = vpack.c.b16 %v5882, %v5878
  %v6047 = vpack.c.b16 %v5887, %v5883
  %v6048 = vpack.c.b16 %v5888, %v5884
  %v6049 = vpack.c.b16 %v5889, %v5885
  %v6050 = vpack.c.b16 %v5890, %v5886
  %v6051 = vpack.c.b16 %v5895, %v5891
  %v6052 = vpack.c.b16 %v5896, %v5892
  %v6053 = vpack.c.b16 %v5897, %v5893
  %v6054 = vpack.c.b16 %v5898, %v5894
  %v6055 = vpack.c.b16 %v5903, %v5899
  %v6056 = vpack.c.b16 %v5904, %v5900
  %v6057 = vpack.c.b16 %v5905, %v5901
  %v6058 = vpack.c.b16 %v5906, %v5902
  %v6059 = vpack.c.b16 %v5911, %v5907
  %v6060 = vpack.c.b16 %v5912, %v5908
  %v6061 = vpack.c.b16 %v5913, %v5909
  %v6062 = vpack.c.b16 %v5914, %v5910
  %v6063 = vpack.c.b16 %v5919, %v5915
  %v6064 = vpack.c.b16 %v5920, %v5916
  %v6065 = vpack.c.b16 %v5921, %v5917
  %v6066 = vpack.c.b16 %v5922, %v5918
  %v6212 = vsel %vm537, %v5486, 0
  %6214 = vmatprep.subr.bf16.mxu0 %v5924
  %6215 = vmatpush1.bf16.msra.mxu0 %v5923
  %6216 = vmatprep.subr.bf16.mxu0 %v5928
  %6217 = vmatpush1.bf16.msra.mxu0 %v5927
  %6218 = vmatprep.subr.bf16.mxu0 %v5932
  %6219 = vmatpush1.bf16.msra.mxu0 %v5931
  %6220 = vmatprep.subr.bf16.mxu0 %v5936
  %6221 = vmatpush1.bf16.msra.mxu0 %v5935
  %6222 = vmatprep.subr.bf16.mxu0 %v5940
  %6223 = vmatpush1.bf16.msra.mxu0 %v5939
  %6224 = vmatprep.subr.bf16.mxu0 %v5944
  %6225 = vmatpush1.bf16.msra.mxu0 %v5943
  %6226 = vmatprep.subr.bf16.mxu0 %v5948
  %6227 = vmatpush1.bf16.msra.mxu0 %v5947
  %6228 = vmatprep.subr.bf16.mxu0 %v5952
  %6229 = vmatpush1.bf16.msra.mxu0 %v5951
  %6230 = vmatprep.subr.bf16.mxu0 %v5956
  %6231 = vmatpush1.bf16.msra.mxu0 %v5955
  %6232 = vmatprep.subr.bf16.mxu0 %v5960
  %6233 = vmatpush1.bf16.msra.mxu0 %v5959
  %6234 = vmatprep.subr.bf16.mxu0 %v5964
  %6235 = vmatpush1.bf16.msra.mxu0 %v5963
  %6236 = vmatprep.subr.bf16.mxu0 %v5968
  %6237 = vmatpush1.bf16.msra.mxu0 %v5967
  %6238 = vmatprep.subr.bf16.mxu0 %v5972
  %6239 = vmatpush1.bf16.msra.mxu0 %v5971
  %6240 = vmatprep.subr.bf16.mxu0 %v5976
  %6241 = vmatpush1.bf16.msra.mxu0 %v5975
  %6242 = vmatprep.subr.bf16.mxu0 %v5980
  %6243 = vmatpush1.bf16.msra.mxu0 %v5979
  %6244 = vmatprep.subr.bf16.mxu0 %v5984
  %6245 = vmatpush1.bf16.msra.mxu0 %v5983
  %6246 = vmatprep.mubr.bf16.mxu0 %v5477
  %6247 = vmatmul.mubr.bf16.gmra.mrb[0].mxu0 %v5474
  %v6248 = vpop.f32.mrb[0].mxu0
  %v6249 = vadd.f32 0.0, %v6248
  %v6250 = vpop.f32.mrb[0].mxu0
  %v6251 = vadd.f32 0.0, %v6250
  %v6252 = vpop.f32.mrb[0].mxu0
  %v6253 = vadd.f32 0.0, %v6252
  %v6254 = vpop.f32.mrb[0].mxu0
  %v6255 = vadd.f32 0.0, %v6254
  %6256 = vdwg.mxu0
  %6257 = vmatprep.subr.bf16.mxu0 %v5988
  %6258 = vmatpush1.bf16.msra.mxu0 %v5987
  %6259 = vmatprep.subr.bf16.mxu0 %v5992
  %6260 = vmatpush1.bf16.msra.mxu0 %v5991
  %6261 = vmatprep.subr.bf16.mxu0 %v5996
  %6262 = vmatpush1.bf16.msra.mxu0 %v5995
  %6263 = vmatprep.subr.bf16.mxu0 %v6000
  %6264 = vmatpush1.bf16.msra.mxu0 %v5999
  %6265 = vmatprep.subr.bf16.mxu0 %v6004
  %6266 = vmatpush1.bf16.msra.mxu0 %v6003
  %6267 = vmatprep.subr.bf16.mxu0 %v6008
  %6268 = vmatpush1.bf16.msra.mxu0 %v6007
  %6269 = vmatprep.subr.bf16.mxu0 %v6012
  %6270 = vmatpush1.bf16.msra.mxu0 %v6011
  %6271 = vmatprep.subr.bf16.mxu0 %v6016
  %6272 = vmatpush1.bf16.msra.mxu0 %v6015
  %6273 = vmatprep.subr.bf16.mxu0 %v6020
  %6274 = vmatpush1.bf16.msra.mxu0 %v6019
  %6275 = vmatprep.subr.bf16.mxu0 %v6024
  %6276 = vmatpush1.bf16.msra.mxu0 %v6023
  %6277 = vmatprep.subr.bf16.mxu0 %v6028
  %6278 = vmatpush1.bf16.msra.mxu0 %v6027
  %6279 = vmatprep.subr.bf16.mxu0 %v6032
  %6280 = vmatpush1.bf16.msra.mxu0 %v6031
  %6281 = vmatprep.subr.bf16.mxu0 %v6036
  %6282 = vmatpush1.bf16.msra.mxu0 %v6035
  %6283 = vmatprep.subr.bf16.mxu0 %v6040
  %6284 = vmatpush1.bf16.msra.mxu0 %v6039
  %6285 = vmatprep.subr.bf16.mxu0 %v6044
  %6286 = vmatpush1.bf16.msra.mxu0 %v6043
  %6287 = vmatprep.subr.bf16.mxu0 %v6048
  %6288 = vmatpush1.bf16.msra.mxu0 %v6047
  %6289 = vmatprep.mubr.bf16.mxu0 %v5483
  %6290 = vmatmul.mubr.bf16.gmra.mrb[0].mxu0 %v5480
  %v6291 = vpop.f32.mrb[0].mxu0
  %v6292 = vadd.f32 %v6249, %v6291
  %v6293 = vpop.f32.mrb[0].mxu0
  %v6294 = vadd.f32 %v6251, %v6293
  %v6295 = vpop.f32.mrb[0].mxu0
  %v6296 = vadd.f32 %v6253, %v6295
  %v6297 = vpop.f32.mrb[0].mxu0
  %v6298 = vadd.f32 %v6255, %v6297
  %6299 = vdwg.mxu0
  %6300 = vmatprep.subr.bf16.mxu0 %v6052
  %6301 = vmatpush1.bf16.msra.mxu0 %v6051
  %6302 = vmatprep.subr.bf16.mxu0 %v6056
  %6303 = vmatpush1.bf16.msra.mxu0 %v6055
  %6304 = vmatprep.subr.bf16.mxu0 %v6060
  %6305 = vmatpush1.bf16.msra.mxu0 %v6059
  %6306 = vmatprep.subr.bf16.mxu0 %v6064
  %6307 = vmatpush1.bf16.msra.mxu0 %v6063
  %6308 = vmatprep.subr.bf16.mxu0 0
  %6309 = vmatpush1.bf16.msra.mxu0 0
  %6310 = vmatprep.subr.bf16.mxu0 0
  %6311 = vmatpush1.bf16.msra.mxu0 0
  %6312 = vmatprep.subr.bf16.mxu0 0
  %6313 = vmatpush1.bf16.msra.mxu0 0
  %6314 = vmatprep.subr.bf16.mxu0 0
  %6315 = vmatpush1.bf16.msra.mxu0 0
  %6316 = vmatprep.subr.bf16.mxu0 0
  %6317 = vmatpush1.bf16.msra.mxu0 0
  %6318 = vmatprep.subr.bf16.mxu0 0
  %6319 = vmatpush1.bf16.msra.mxu0 0
  %6320 = vmatprep.subr.bf16.mxu0 0
  %6321 = vmatpush1.bf16.msra.mxu0 0
  %6322 = vmatprep.subr.bf16.mxu0 0
  %6323 = vmatpush1.bf16.msra.mxu0 0
  %6324 = vmatprep.subr.bf16.mxu0 0
  %6325 = vmatpush1.bf16.msra.mxu0 0
  %6326 = vmatprep.subr.bf16.mxu0 0
  %6327 = vmatpush1.bf16.msra.mxu0 0
  %6328 = vmatprep.subr.bf16.mxu0 0
  %6329 = vmatpush1.bf16.msra.mxu0 0
  %6330 = vmatprep.subr.bf16.mxu0 0
  %6331 = vmatpush1.bf16.msra.mxu0 0
  %6332 = vmatprep.mubr.bf16.mxu0 0
  %6333 = vmatmul.mubr.bf16.gmra.mrb[0].mxu0 %v6212
  %v6334 = vpop.f32.mrb[0].mxu0
  %v6335 = vadd.f32 %v6292, %v6334
  %v6336 = vpop.f32.mrb[0].mxu0
  %v6337 = vadd.f32 %v6294, %v6336
  %v6338 = vpop.f32.mrb[0].mxu0
  %v6339 = vadd.f32 %v6296, %v6338
  %v6340 = vpop.f32.mrb[0].mxu0
  %v6341 = vadd.f32 %v6298, %v6340
  %6342 = vdwg.mxu0
  %6343 = vmatprep.subr.bf16.mxu0 %v5926
  %6344 = vmatpush1.bf16.msra.mxu0 %v5925
  %6345 = vmatprep.subr.bf16.mxu0 %v5930
  %6346 = vmatpush1.bf16.msra.mxu0 %v5929
  %6347 = vmatprep.subr.bf16.mxu0 %v5934
  %6348 = vmatpush1.bf16.msra.mxu0 %v5933
  %6349 = vmatprep.subr.bf16.mxu0 %v5938
  %6350 = vmatpush1.bf16.msra.mxu0 %v5937
  %6351 = vmatprep.subr.bf16.mxu0 %v5942
  %6352 = vmatpush1.bf16.msra.mxu0 %v5941
  %6353 = vmatprep.subr.bf16.mxu0 %v5946
  %6354 = vmatpush1.bf16.msra.mxu0 %v5945
  %6355 = vmatprep.subr.bf16.mxu0 %v5950
  %6356 = vmatpush1.bf16.msra.mxu0 %v5949
  %6357 = vmatprep.subr.bf16.mxu0 %v5954
  %6358 = vmatpush1.bf16.msra.mxu0 %v5953
  %6359 = vmatprep.subr.bf16.mxu0 %v5958
  %6360 = vmatpush1.bf16.msra.mxu0 %v5957
  %6361 = vmatprep.subr.bf16.mxu0 %v5962
  %6362 = vmatpush1.bf16.msra.mxu0 %v5961
  %6363 = vmatprep.subr.bf16.mxu0 %v5966
  %6364 = vmatpush1.bf16.msra.mxu0 %v5965
  %6365 = vmatprep.subr.bf16.mxu0 %v5970
  %6366 = vmatpush1.bf16.msra.mxu0 %v5969
  %6367 = vmatprep.subr.bf16.mxu0 %v5974
  %6368 = vmatpush1.bf16.msra.mxu0 %v5973
  %6369 = vmatprep.subr.bf16.mxu0 %v5978
  %6370 = vmatpush1.bf16.msra.mxu0 %v5977
  %6371 = vmatprep.subr.bf16.mxu0 %v5982
  %6372 = vmatpush1.bf16.msra.mxu0 %v5981
  %6373 = vmatprep.subr.bf16.mxu0 %v5986
  %6374 = vmatpush1.bf16.msra.mxu0 %v5985
  %6375 = vmatprep.mubr.bf16.mxu0 %v5477
  %6376 = vmatmul.mubr.bf16.gmra.mrb[0].mxu0 %v5474
  %v6377 = vpop.f32.mrb[0].mxu0
  %v6378 = vadd.f32 0.0, %v6377
  %v6379 = vpop.f32.mrb[0].mxu0
  %v6380 = vadd.f32 0.0, %v6379
  %v6381 = vpop.f32.mrb[0].mxu0
  %v6382 = vadd.f32 0.0, %v6381
  %v6383 = vpop.f32.mrb[0].mxu0
  %v6384 = vadd.f32 0.0, %v6383
  %6385 = vdwg.mxu0
  %6386 = vmatprep.subr.bf16.mxu0 %v5990
  %6387 = vmatpush1.bf16.msra.mxu0 %v5989
  %6388 = vmatprep.subr.bf16.mxu0 %v5994
  %6389 = vmatpush1.bf16.msra.mxu0 %v5993
  %6390 = vmatprep.subr.bf16.mxu0 %v5998
  %6391 = vmatpush1.bf16.msra.mxu0 %v5997
  %6392 = vmatprep.subr.bf16.mxu0 %v6002
  %6393 = vmatpush1.bf16.msra.mxu0 %v6001
  %6394 = vmatprep.subr.bf16.mxu0 %v6006
  %6395 = vmatpush1.bf16.msra.mxu0 %v6005
  %6396 = vmatprep.subr.bf16.mxu0 %v6010
  %6397 = vmatpush1.bf16.msra.mxu0 %v6009
  %6398 = vmatprep.subr.bf16.mxu0 %v6014
  %6399 = vmatpush1.bf16.msra.mxu0 %v6013
  %6400 = vmatprep.subr.bf16.mxu0 %v6018
  %6401 = vmatpush1.bf16.msra.mxu0 %v6017
  %6402 = vmatprep.subr.bf16.mxu0 %v6022
  %6403 = vmatpush1.bf16.msra.mxu0 %v6021
  %6404 = vmatprep.subr.bf16.mxu0 %v6026
  %6405 = vmatpush1.bf16.msra.mxu0 %v6025
  %6406 = vmatprep.subr.bf16.mxu0 %v6030
  %6407 = vmatpush1.bf16.msra.mxu0 %v6029
  %6408 = vmatprep.subr.bf16.mxu0 %v6034
  %6409 = vmatpush1.bf16.msra.mxu0 %v6033
  %6410 = vmatprep.subr.bf16.mxu0 %v6038
  %6411 = vmatpush1.bf16.msra.mxu0 %v6037
  %6412 = vmatprep.subr.bf16.mxu0 %v6042
  %6413 = vmatpush1.bf16.msra.mxu0 %v6041
  %6414 = vmatprep.subr.bf16.mxu0 %v6046
  %6415 = vmatpush1.bf16.msra.mxu0 %v6045
  %6416 = vmatprep.subr.bf16.mxu0 %v6050
  %6417 = vmatpush1.bf16.msra.mxu0 %v6049
  %6418 = vmatprep.mubr.bf16.mxu0 %v5483
  %6419 = vmatmul.mubr.bf16.gmra.mrb[0].mxu0 %v5480
  %v6420 = vpop.f32.mrb[0].mxu0
  %v6421 = vadd.f32 %v6378, %v6420
  %v6422 = vpop.f32.mrb[0].mxu0
  %v6423 = vadd.f32 %v6380, %v6422
  %v6424 = vpop.f32.mrb[0].mxu0
  %v6425 = vadd.f32 %v6382, %v6424
  %v6426 = vpop.f32.mrb[0].mxu0
  %v6427 = vadd.f32 %v6384, %v6426
  %6428 = vdwg.mxu0
  %6429 = vmatprep.subr.bf16.mxu0 %v6054
  %6430 = vmatpush1.bf16.msra.mxu0 %v6053
  %6431 = vmatprep.subr.bf16.mxu0 %v6058
  %6432 = vmatpush1.bf16.msra.mxu0 %v6057
  %6433 = vmatprep.subr.bf16.mxu0 %v6062
  %6434 = vmatpush1.bf16.msra.mxu0 %v6061
  %6435 = vmatprep.subr.bf16.mxu0 %v6066
  %6436 = vmatpush1.bf16.msra.mxu0 %v6065
  %6437 = vmatprep.subr.bf16.mxu0 0
  %6438 = vmatpush1.bf16.msra.mxu0 0
  %6439 = vmatprep.subr.bf16.mxu0 0
  %6440 = vmatpush1.bf16.msra.mxu0 0
  %6441 = vmatprep.subr.bf16.mxu0 0
  %6442 = vmatpush1.bf16.msra.mxu0 0
  %6443 = vmatprep.subr.bf16.mxu0 0
  %6444 = vmatpush1.bf16.msra.mxu0 0
  %6445 = vmatprep.subr.bf16.mxu0 0
  %6446 = vmatpush1.bf16.msra.mxu0 0
  %6447 = vmatprep.subr.bf16.mxu0 0
  %6448 = vmatpush1.bf16.msra.mxu0 0
  %6449 = vmatprep.subr.bf16.mxu0 0
  %6450 = vmatpush1.bf16.msra.mxu0 0
  %6451 = vmatprep.subr.bf16.mxu0 0
  %6452 = vmatpush1.bf16.msra.mxu0 0
  %6453 = vmatprep.subr.bf16.mxu0 0
  %6454 = vmatpush1.bf16.msra.mxu0 0
  %6455 = vmatprep.subr.bf16.mxu0 0
  %6456 = vmatpush1.bf16.msra.mxu0 0
  %6457 = vmatprep.subr.bf16.mxu0 0
  %6458 = vmatpush1.bf16.msra.mxu0 0
  %6459 = vmatprep.subr.bf16.mxu0 0
  %6460 = vmatpush1.bf16.msra.mxu0 0
  %6461 = vmatprep.mubr.bf16.mxu0 0
  %6462 = vmatmul.mubr.bf16.gmra.mrb[0].mxu0 %v6212
  %v6463 = vpop.f32.mrb[0].mxu0
  %v6464 = vadd.f32 %v6421, %v6463
  %v6465 = vpop.f32.mrb[0].mxu0
  %v6466 = vadd.f32 %v6423, %v6465
  %v6467 = vpop.f32.mrb[0].mxu0
  %v6468 = vadd.f32 %v6425, %v6467
  %v6469 = vpop.f32.mrb[0].mxu0
  %v6470 = vadd.f32 %v6427, %v6469
  %6471 = vdwg.mxu0
  %v6472 = vadd.f32 %v5283, %v6335
  %v6473 = vadd.f32 %v5284, %v6337
  %v6474 = vadd.f32 %v5285, %v6464
  %v6475 = vadd.f32 %v5286, %v6466
  %v6476 = vadd.f32 %v5287, %v6339
  %v6477 = vadd.f32 %v5288, %v6341
  %v6478 = vadd.f32 %v5289, %v6468
  %v6479 = vadd.f32 %v5290, %v6470
  %vm6480 = vcmask 1045504
  %v6481 = vsel %vm6480, %v6476, 0.0
  %v6482 = vadd.f32 %v6472, %v6481
  %v6483 = vrot.slane %v6482, 4
  %v6484 = vadd.f32 %v6482, %v6483
  %v6485 = vrot.slane %v6484, 2
  %v6486 = vadd.f32 %v6484, %v6485
  %v6487 = vrot.slane %v6486, 1
  %v6488 = vadd.f32 %v6486, %v6487
  %v6489 = vsel %vm6480, %v6477, 0.0
  %v6490 = vadd.f32 %v6473, %v6489
  %v6491 = vrot.slane %v6490, 4
  %v6492 = vadd.f32 %v6490, %v6491
  %v6493 = vrot.slane %v6492, 2
  %v6494 = vadd.f32 %v6492, %v6493
  %v6495 = vrot.slane %v6494, 1
  %v6496 = vadd.f32 %v6494, %v6495
  %v6497 = vsel %vm6480, %v6478, 0.0
  %v6498 = vadd.f32 %v6474, %v6497
  %v6499 = vrot.slane %v6498, 4
  %v6500 = vadd.f32 %v6498, %v6499
  %v6501 = vrot.slane %v6500, 2
  %v6502 = vadd.f32 %v6500, %v6501
  %v6503 = vrot.slane %v6502, 1
  %v6504 = vadd.f32 %v6502, %v6503
  %v6505 = vsel %vm537, %v6475, 0.0
  %vm6506 = vcmask 521216
  %v6507 = vsel %vm6506, %v6479, 0.0
  %v6508 = vadd.f32 %v6505, %v6507
  %v6509 = vrot.slane %v6508, 4
  %v6510 = vadd.f32 %v6508, %v6509
  %v6511 = vrot.slane %v6510, 2
  %v6512 = vadd.f32 %v6510, %v6511
  %v6513 = vrot.slane %v6512, 1
  %v6514 = vadd.f32 %v6512, %v6513
  %v6515 = vmul.f32 %v6472, %v6472
  %v6516 = vmul.f32 %v6473, %v6473
  %v6517 = vmul.f32 %v6474, %v6474
  %v6518 = vmul.f32 %v6475, %v6475
  %v6519 = vmul.f32 %v6476, %v6476
  %v6520 = vmul.f32 %v6477, %v6477
  %v6521 = vmul.f32 %v6478, %v6478
  %v6522 = vmul.f32 %v6479, %v6479
  %v6523 = vsel %vm6480, %v6519, 0.0
  %v6524 = vadd.f32 %v6515, %v6523
  %v6525 = vrot.slane %v6524, 4
  %v6526 = vadd.f32 %v6524, %v6525
  %v6527 = vrot.slane %v6526, 2
  %v6528 = vadd.f32 %v6526, %v6527
  %v6529 = vrot.slane %v6528, 1
  %v6530 = vadd.f32 %v6528, %v6529
  %v6531 = vsel %vm6480, %v6520, 0.0
  %v6532 = vadd.f32 %v6516, %v6531
  %v6533 = vrot.slane %v6532, 4
  %v6534 = vadd.f32 %v6532, %v6533
  %v6535 = vrot.slane %v6534, 2
  %v6536 = vadd.f32 %v6534, %v6535
  %v6537 = vrot.slane %v6536, 1
  %v6538 = vadd.f32 %v6536, %v6537
  %v6539 = vsel %vm6480, %v6521, 0.0
  %v6540 = vadd.f32 %v6517, %v6539
  %v6541 = vrot.slane %v6540, 4
  %v6542 = vadd.f32 %v6540, %v6541
  %v6543 = vrot.slane %v6542, 2
  %v6544 = vadd.f32 %v6542, %v6543
  %v6545 = vrot.slane %v6544, 1
  %v6546 = vadd.f32 %v6544, %v6545
  %v6547 = vsel %vm537, %v6518, 0.0
  %v6548 = vsel %vm6506, %v6522, 0.0
  %v6549 = vadd.f32 %v6547, %v6548
  %v6550 = vrot.slane %v6549, 4
  %v6551 = vadd.f32 %v6549, %v6550
  %v6552 = vrot.slane %v6551, 2
  %v6553 = vadd.f32 %v6551, %v6552
  %v6554 = vrot.slane %v6553, 1
  %v6555 = vadd.f32 %v6553, %v6554
  %6557 = vrot.lane.b32.xlu0 %v6488, 64
  %v6558 = vpop.permute.xlu0 %6557
  %v6560 = vadd.f32 %v6488, %v6558
  %6562 = vrot.lane.b32.xlu0 %v6530, 64
  %v6563 = vpop.permute.xlu0 %6562
  %v6565 = vadd.f32 %v6530, %v6563
  %v6566 = vadd.f32 %v6560, %v6496
  %v6567 = vadd.f32 %v6565, %v6538
  %6569 = vrot.lane.b32.xlu0 %v6496, 64
  %v6570 = vpop.permute.xlu0 %6569
  %v6572 = vadd.f32 %v6566, %v6570
  %6574 = vrot.lane.b32.xlu0 %v6538, 64
  %v6575 = vpop.permute.xlu0 %6574
  %v6577 = vadd.f32 %v6567, %v6575
  %v6578 = vadd.f32 %v6572, %v6504
  %v6579 = vadd.f32 %v6577, %v6546
  %6581 = vrot.lane.b32.xlu0 %v6504, 64
  %v6582 = vpop.permute.xlu0 %6581
  %v6584 = vadd.f32 %v6578, %v6582
  %6586 = vrot.lane.b32.xlu0 %v6546, 64
  %v6587 = vpop.permute.xlu0 %6586
  %v6589 = vadd.f32 %v6579, %v6587
  %v6590 = vadd.f32 %v6584, %v6514
  %v6591 = vadd.f32 %v6589, %v6555
  %v6592 = vrcp.pop 98.0
  %v6593 = vmul.f32 %v6590, %v6592
  %v6594 = vmul.f32 %v6591, %v6592
  %v6595 = vmul.f32 %v6593, %v6593
  %v6596 = vsub.f32 %v6594, %v6595
  %v6597 = vadd.f32 %v6596, 1e-05
  %v6598 = vrsqrt.pop %v6597
  %6600 = vrot.lane.b32.xlu0 %v6593, 64
  %v6601 = vpop.permute.xlu0 %6600
  %v6603 = vsel %vm537, %v6593, %v6601
  %6605 = vrot.lane.b32.xlu0 %v6598, 64
  %v6606 = vpop.permute.xlu0 %6605
  %v6608 = vsel %vm537, %v6598, %v6606
  %v6609 = vld [vmem:[%s6] sm:$0xf]
  %v6610 = vlaneseq
  %v6611 = vshrl.u32 %v6610, 7
  %v6612 = vsub.s32 0, %v6611
  %v6613 = vrot.slane %v6603, %v6612
  %v6614 = vlaneseq
  %v6615 = vshrl.u32 %v6614, 7
  %v6616 = vsub.s32 0, %v6615
  %v6617 = vrot.slane %v6593, %v6616
  %v6618 = vsub.f32 %v6472, %v6613
  %v6619 = vsub.f32 %v6473, %v6613
  %v6620 = vsub.f32 %v6474, %v6613
  %v6621 = vsub.f32 %v6475, %v6617
  %v6622 = vsub.f32 %v6476, %v6613
  %v6623 = vsub.f32 %v6477, %v6613
  %v6624 = vsub.f32 %v6478, %v6613
  %v6625 = vsub.f32 %v6479, %v6617
  %v6627 = vlaneseq
  %v6628 = vshrl.u32 %v6627, 7
  %v6629 = vsub.s32 0, %v6628
  %v6630 = vrot.slane %v6609, %v6629
  %v6631 = vlaneseq
  %v6632 = vshrl.u32 %v6631, 7
  %v6633 = vsub.s32 1, %v6632
  %v6634 = vrot.slane %v6609, %v6633
  %v6635 = vlaneseq
  %v6636 = vshrl.u32 %v6635, 7
  %v6637 = vsub.s32 2, %v6636
  %v6638 = vrot.slane %v6609, %v6637
  %v6639 = vlaneseq
  %v6640 = vshrl.u32 %v6639, 7
  %v6641 = vsub.s32 3, %v6640
  %v6642 = vrot.slane %v6609, %v6641
  %v6647 = vmul.f32 %v6630, %v6618
  %v6648 = vmul.f32 %v6634, %v6619
  %v6649 = vmul.f32 %v6638, %v6620
  %v6650 = vmul.f32 %v6642, %v6621
  %v6651 = vmul.f32 %v6630, %v6622
  %v6652 = vmul.f32 %v6634, %v6623
  %v6653 = vmul.f32 %v6638, %v6624
  %v6654 = vmul.f32 %v6642, %v6625
  %v6655 = vlaneseq
  %v6656 = vshrl.u32 %v6655, 7
  %v6657 = vsub.s32 0, %v6656
  %v6658 = vrot.slane %v6608, %v6657
  %v6659 = vlaneseq
  %v6660 = vshrl.u32 %v6659, 7
  %v6661 = vsub.s32 0, %v6660
  %v6662 = vrot.slane %v6598, %v6661
  %v6663 = vmul.f32 %v6647, %v6658
  %v6664 = vmul.f32 %v6648, %v6658
  %v6665 = vmul.f32 %v6649, %v6658
  %v6666 = vmul.f32 %v6650, %v6662
  %v6667 = vmul.f32 %v6651, %v6658
  %v6668 = vmul.f32 %v6652, %v6658
  %v6669 = vmul.f32 %v6653, %v6658
  %v6670 = vmul.f32 %v6654, %v6662
  %v6671 = vld [vmem:[%s7] sm:$0xf]
  %v6673 = vlaneseq
  %v6674 = vshrl.u32 %v6673, 7
  %v6675 = vsub.s32 0, %v6674
  %v6676 = vrot.slane %v6671, %v6675
  %v6677 = vlaneseq
  %v6678 = vshrl.u32 %v6677, 7
  %v6679 = vsub.s32 1, %v6678
  %v6680 = vrot.slane %v6671, %v6679
  %v6681 = vlaneseq
  %v6682 = vshrl.u32 %v6681, 7
  %v6683 = vsub.s32 2, %v6682
  %v6684 = vrot.slane %v6671, %v6683
  %v6685 = vlaneseq
  %v6686 = vshrl.u32 %v6685, 7
  %v6687 = vsub.s32 3, %v6686
  %v6688 = vrot.slane %v6671, %v6687
  %v6693 = vadd.f32 %v6663, %v6676
  %v6694 = vadd.f32 %v6664, %v6680
  %v6695 = vadd.f32 %v6665, %v6684
  %v6696 = vadd.f32 %v6666, %v6688
  %v6697 = vadd.f32 %v6667, %v6676
  %v6698 = vadd.f32 %v6668, %v6680
  %v6699 = vadd.f32 %v6669, %v6684
  %v6700 = vadd.f32 %v6670, %v6688
  %vm6701 = vcmp.gt.f32.partialorder %v6693, 0.0
  %vm6702 = vcmp.gt.f32.partialorder %v6694, 0.0
  %vm6703 = vcmp.gt.f32.partialorder %v6695, 0.0
  %vm6704 = vcmp.gt.f32.partialorder %v6696, 0.0
  %vm6705 = vcmp.gt.f32.partialorder %v6697, 0.0
  %vm6706 = vcmp.gt.f32.partialorder %v6698, 0.0
  %vm6707 = vcmp.gt.f32.partialorder %v6699, 0.0
  %vm6708 = vcmp.gt.f32.partialorder %v6700, 0.0
  %v6709 = vmul.f32 %v6693, 0.2
  %v6710 = vmul.f32 %v6694, 0.2
  %v6711 = vmul.f32 %v6695, 0.2
  %v6712 = vmul.f32 %v6696, 0.2
  %v6713 = vmul.f32 %v6697, 0.2
  %v6714 = vmul.f32 %v6698, 0.2
  %v6715 = vmul.f32 %v6699, 0.2
  %v6716 = vmul.f32 %v6700, 0.2
  %v6717 = vsel %vm6701, %v6693, %v6709
  %v6718 = vsel %vm6702, %v6694, %v6710
  %v6719 = vsel %vm6703, %v6695, %v6711
  %v6720 = vsel %vm6704, %v6696, %v6712
  %v6721 = vsel %vm6705, %v6697, %v6713
  %v6722 = vsel %vm6706, %v6698, %v6714
  %v6723 = vsel %vm6707, %v6699, %v6715
  %v6724 = vsel %vm6708, %v6700, %v6716
  %6725 = vst [vmem:[#allocation4] sm:$0xff] %v6717
  %6726 = vst [vmem:[#allocation4 + $0x8] sm:$0xff] %v6718
  %6727 = vst [vmem:[#allocation4 + $0x10] sm:$0xff] %v6719
  %6728 = vst.msk [vmem:[#allocation4 + $0x18] sm:$0xff] %vm537, %v6720
  %6729 = vst [vmem:[#allocation4 + $0x20] sm:$0x3f] %v6721
  %6730 = vst [vmem:[#allocation4 + $0x28] sm:$0x3f] %v6722
  %6731 = vst [vmem:[#allocation4 + $0x30] sm:$0x3f] %v6723
  %6732 = vst.msk [vmem:[#allocation4 + $0x38] sm:$0x3f] %vm6506, %v6724
  %v6733 = vld [vmem:[#allocation4] sm:$0x3]
  %v6734 = vld [vmem:[#allocation4 + $0x8] sm:$0x3]
  %v6735 = vld [vmem:[#allocation4 + $0x10] sm:$0x3]
  %v6736 = vld [vmem:[#allocation4 + $0x18] sm:$0x3]
  %v6737 = vpack.c.bf16 %v6733, %v6733
  %v6738 = vpack.c.bf16 %v6734, %v6734
  %v6739 = vpack.c.bf16 %v6735, %v6735
  %v6740 = vpack.c.bf16 %v6736, %v6736
  %v6741 = vld [vmem:[%s4] sm:$0xff]
  %v6742 = vld [vmem:[%s4 + $0x8] sm:$0xff]
  %v6743 = vld [vmem:[%s4 + $0x10] sm:$0xff]
  %v6744 = vld [vmem:[%s4 + $0x18] sm:$0xff]
  %v6745 = vld [vmem:[%s4 + $0x20] sm:$0xff]
  %v6746 = vld [vmem:[%s4 + $0x28] sm:$0xff]
  %v6747 = vld [vmem:[%s4 + $0x30] sm:$0xff]
  %v6748 = vld [vmem:[%s4 + $0x38] sm:$0xff]
  %v6749 = vld [vmem:[%s4 + $0x40] sm:$0xff]
  %v6750 = vld [vmem:[%s4 + $0x48] sm:$0xff]
  %v6751 = vld [vmem:[%s4 + $0x50] sm:$0xff]
  %v6752 = vld [vmem:[%s4 + $0x58] sm:$0xff]
  %v6753 = vld [vmem:[%s4 + $0x60] sm:$0xff]
  %v6754 = vld [vmem:[%s4 + $0x68] sm:$0xff]
  %v6755 = vld [vmem:[%s4 + $0x70] sm:$0xff]
  %v6756 = vld [vmem:[%s4 + $0x78] sm:$0xff]
  %v6757 = vld [vmem:[%s4 + $0x80] sm:$0xff]
  %v6758 = vld [vmem:[%s4 + $0x88] sm:$0xff]
  %v6759 = vld [vmem:[%s4 + $0x90] sm:$0xff]
  %v6760 = vld [vmem:[%s4 + $0x98] sm:$0xff]
  %v6761 = vld [vmem:[%s4 + $0xa0] sm:$0xff]
  %v6762 = vld [vmem:[%s4 + $0xa8] sm:$0xff]
  %v6763 = vld [vmem:[%s4 + $0xb0] sm:$0xff]
  %v6764 = vld [vmem:[%s4 + $0xb8] sm:$0xff]
  %v6765 = vld [vmem:[%s4 + $0xc0] sm:$0xff]
  %v6766 = vld [vmem:[%s4 + $0xc8] sm:$0xff]
  %v6767 = vld [vmem:[%s4 + $0xd0] sm:$0xff]
  %v6768 = vld [vmem:[%s4 + $0xd8] sm:$0xff]
  %v6769 = vld [vmem:[%s4 + $0xe0] sm:$0xff]
  %v6770 = vld [vmem:[%s4 + $0xe8] sm:$0xff]
  %v6771 = vld [vmem:[%s4 + $0xf0] sm:$0xff]
  %v6772 = vld [vmem:[%s4 + $0xf8] sm:$0xff]
  %v6773 = vld [vmem:[%s4 + $0x100] sm:$0xff]
  %v6774 = vld [vmem:[%s4 + $0x108] sm:$0xff]
  %v6775 = vld [vmem:[%s4 + $0x110] sm:$0xff]
  %v6776 = vld [vmem:[%s4 + $0x118] sm:$0xff]
  %v6777 = vld [vmem:[%s4 + $0x120] sm:$0xff]
  %v6778 = vld [vmem:[%s4 + $0x128] sm:$0xff]
  %v6779 = vld [vmem:[%s4 + $0x130] sm:$0xff]
  %v6780 = vld [vmem:[%s4 + $0x138] sm:$0xff]
  %v6781 = vld [vmem:[%s4 + $0x140] sm:$0xff]
  %v6782 = vld [vmem:[%s4 + $0x148] sm:$0xff]
  %v6783 = vld [vmem:[%s4 + $0x150] sm:$0xff]
  %v6784 = vld [vmem:[%s4 + $0x158] sm:$0xff]
  %v6785 = vld [vmem:[%s4 + $0x160] sm:$0xff]
  %v6786 = vld [vmem:[%s4 + $0x168] sm:$0xff]
  %v6787 = vld [vmem:[%s4 + $0x170] sm:$0xff]
  %v6788 = vld [vmem:[%s4 + $0x178] sm:$0xff]
  %v6789 = vld [vmem:[%s4 + $0x180] sm:$0xff]
  %v6790 = vld [vmem:[%s4 + $0x188] sm:$0xff]
  %v6791 = vld [vmem:[%s4 + $0x190] sm:$0xff]
  %v6792 = vld [vmem:[%s4 + $0x198] sm:$0xff]
  %v6793 = vld [vmem:[%s4 + $0x1a0] sm:$0xff]
  %v6794 = vld [vmem:[%s4 + $0x1a8] sm:$0xff]
  %v6795 = vld [vmem:[%s4 + $0x1b0] sm:$0xff]
  %v6796 = vld [vmem:[%s4 + $0x1b8] sm:$0xff]
  %v6797 = vld [vmem:[%s4 + $0x1c0] sm:$0xff]
  %v6798 = vld [vmem:[%s4 + $0x1c8] sm:$0xff]
  %v6799 = vld [vmem:[%s4 + $0x1d0] sm:$0xff]
  %v6800 = vld [vmem:[%s4 + $0x1d8] sm:$0xff]
  %v6801 = vld [vmem:[%s4 + $0x1e0] sm:$0xff]
  %v6802 = vld [vmem:[%s4 + $0x1e8] sm:$0xff]
  %v6803 = vld [vmem:[%s4 + $0x1f0] sm:$0xff]
  %v6804 = vld [vmem:[%s4 + $0x1f8] sm:$0xff]
  %v6805 = vld [vmem:[%s4 + $0x200] sm:$0xff]
  %v6806 = vld [vmem:[%s4 + $0x208] sm:$0xff]
  %v6807 = vld [vmem:[%s4 + $0x210] sm:$0xff]
  %v6808 = vld [vmem:[%s4 + $0x218] sm:$0xff]
  %v6809 = vld [vmem:[%s4 + $0x220] sm:$0xff]
  %v6810 = vld [vmem:[%s4 + $0x228] sm:$0xff]
  %v6811 = vld [vmem:[%s4 + $0x230] sm:$0xff]
  %v6812 = vld [vmem:[%s4 + $0x238] sm:$0xff]
  %v6813 = vld [vmem:[%s4 + $0x240] sm:$0xff]
  %v6814 = vld [vmem:[%s4 + $0x248] sm:$0xff]
  %v6815 = vld [vmem:[%s4 + $0x250] sm:$0xff]
  %v6816 = vld [vmem:[%s4 + $0x258] sm:$0xff]
  %v6817 = vld [vmem:[%s4 + $0x260] sm:$0xff]
  %v6818 = vld [vmem:[%s4 + $0x268] sm:$0xff]
  %v6819 = vld [vmem:[%s4 + $0x270] sm:$0xff]
  %v6820 = vld [vmem:[%s4 + $0x278] sm:$0xff]
  %v6821 = vld [vmem:[%s4 + $0x280] sm:$0xff]
  %v6822 = vld [vmem:[%s4 + $0x288] sm:$0xff]
  %v6823 = vld [vmem:[%s4 + $0x290] sm:$0xff]
  %v6824 = vld [vmem:[%s4 + $0x298] sm:$0xff]
  %v6825 = vld [vmem:[%s4 + $0x2a0] sm:$0xff]
  %v6826 = vld [vmem:[%s4 + $0x2a8] sm:$0xff]
  %v6827 = vld [vmem:[%s4 + $0x2b0] sm:$0xff]
  %v6828 = vld [vmem:[%s4 + $0x2b8] sm:$0xff]
  %v6829 = vld [vmem:[%s4 + $0x2c0] sm:$0xff]
  %v6830 = vld [vmem:[%s4 + $0x2c8] sm:$0xff]
  %v6831 = vld [vmem:[%s4 + $0x2d0] sm:$0xff]
  %v6832 = vld [vmem:[%s4 + $0x2d8] sm:$0xff]
  %v6833 = vld [vmem:[%s4 + $0x2e0] sm:$0xff]
  %v6834 = vld [vmem:[%s4 + $0x2e8] sm:$0xff]
  %v6835 = vld [vmem:[%s4 + $0x2f0] sm:$0xff]
  %v6836 = vld [vmem:[%s4 + $0x2f8] sm:$0xff]
  %v6837 = vld [vmem:[%s4 + $0x300] sm:$0xff]
  %v6838 = vld [vmem:[%s4 + $0x308] sm:$0xff]
  %v6839 = vld [vmem:[%s4 + $0x310] sm:$0xff]
  %v6840 = vld [vmem:[%s4 + $0x318] sm:$0xff]
  %v6841 = vld [vmem:[%s4 + $0x320] sm:$0xff]
  %v6842 = vld [vmem:[%s4 + $0x328] sm:$0xff]
  %v6843 = vld [vmem:[%s4 + $0x330] sm:$0xff]
  %v6844 = vld [vmem:[%s4 + $0x338] sm:$0xff]
  %v6845 = vld [vmem:[%s4 + $0x340] sm:$0xff]
  %v6846 = vld [vmem:[%s4 + $0x348] sm:$0xff]
  %v6847 = vld [vmem:[%s4 + $0x350] sm:$0xff]
  %v6848 = vld [vmem:[%s4 + $0x358] sm:$0xff]
  %v6849 = vld [vmem:[%s4 + $0x360] sm:$0xff]
  %v6850 = vld [vmem:[%s4 + $0x368] sm:$0xff]
  %v6851 = vld [vmem:[%s4 + $0x370] sm:$0xff]
  %v6852 = vld [vmem:[%s4 + $0x378] sm:$0xff]
  %v6853 = vld [vmem:[#allocation4] sm:$0xc]
  %v6854 = vld [vmem:[#allocation4 + $0x8] sm:$0xc]
  %v6855 = vld [vmem:[#allocation4 + $0x10] sm:$0xc]
  %v6856 = vld [vmem:[#allocation4 + $0x18] sm:$0xc]
  %v6857 = vpack.c.bf16 %v6853, %v6853
  %v6858 = vpack.c.bf16 %v6854, %v6854
  %v6859 = vpack.c.bf16 %v6855, %v6855
  %v6860 = vpack.c.bf16 %v6856, %v6856
  %v6861 = vld [vmem:[%s4 + $0x380] sm:$0xff]
  %v6862 = vld [vmem:[%s4 + $0x388] sm:$0xff]
  %v6863 = vld [vmem:[%s4 + $0x390] sm:$0xff]
  %v6864 = vld [vmem:[%s4 + $0x398] sm:$0xff]
  %v6865 = vld [vmem:[%s4 + $0x3a0] sm:$0xff]
  %v6866 = vld [vmem:[%s4 + $0x3a8] sm:$0xff]
  %v6867 = vld [vmem:[%s4 + $0x3b0] sm:$0xff]
  %v6868 = vld [vmem:[%s4 + $0x3b8] sm:$0xff]
  %v6869 = vld [vmem:[%s4 + $0x3c0] sm:$0xff]
  %v6870 = vld [vmem:[%s4 + $0x3c8] sm:$0xff]
  %v6871 = vld [vmem:[%s4 + $0x3d0] sm:$0xff]
  %v6872 = vld [vmem:[%s4 + $0x3d8] sm:$0xff]
  %v6873 = vld [vmem:[%s4 + $0x3e0] sm:$0xff]
  %v6874 = vld [vmem:[%s4 + $0x3e8] sm:$0xff]
  %v6875 = vld [vmem:[%s4 + $0x3f0] sm:$0xff]
  %v6876 = vld [vmem:[%s4 + $0x3f8] sm:$0xff]
  %v6877 = vld [vmem:[%s4 + $0x400] sm:$0xff]
  %v6878 = vld [vmem:[%s4 + $0x408] sm:$0xff]
  %v6879 = vld [vmem:[%s4 + $0x410] sm:$0xff]
  %v6880 = vld [vmem:[%s4 + $0x418] sm:$0xff]
  %v6881 = vld [vmem:[%s4 + $0x420] sm:$0xff]
  %v6882 = vld [vmem:[%s4 + $0x428] sm:$0xff]
  %v6883 = vld [vmem:[%s4 + $0x430] sm:$0xff]
  %v6884 = vld [vmem:[%s4 + $0x438] sm:$0xff]
  %v6885 = vld [vmem:[%s4 + $0x440] sm:$0xff]
  %v6886 = vld [vmem:[%s4 + $0x448] sm:$0xff]
  %v6887 = vld [vmem:[%s4 + $0x450] sm:$0xff]
  %v6888 = vld [vmem:[%s4 + $0x458] sm:$0xff]
  %v6889 = vld [vmem:[%s4 + $0x460] sm:$0xff]
  %v6890 = vld [vmem:[%s4 + $0x468] sm:$0xff]
  %v6891 = vld [vmem:[%s4 + $0x470] sm:$0xff]
  %v6892 = vld [vmem:[%s4 + $0x478] sm:$0xff]
  %v6893 = vld [vmem:[%s4 + $0x480] sm:$0xff]
  %v6894 = vld [vmem:[%s4 + $0x488] sm:$0xff]
  %v6895 = vld [vmem:[%s4 + $0x490] sm:$0xff]
  %v6896 = vld [vmem:[%s4 + $0x498] sm:$0xff]
  %v6897 = vld [vmem:[%s4 + $0x4a0] sm:$0xff]
  %v6898 = vld [vmem:[%s4 + $0x4a8] sm:$0xff]
  %v6899 = vld [vmem:[%s4 + $0x4b0] sm:$0xff]
  %v6900 = vld [vmem:[%s4 + $0x4b8] sm:$0xff]
  %v6901 = vld [vmem:[%s4 + $0x4c0] sm:$0xff]
  %v6902 = vld [vmem:[%s4 + $0x4c8] sm:$0xff]
  %v6903 = vld [vmem:[%s4 + $0x4d0] sm:$0xff]
  %v6904 = vld [vmem:[%s4 + $0x4d8] sm:$0xff]
  %v6905 = vld [vmem:[%s4 + $0x4e0] sm:$0xff]
  %v6906 = vld [vmem:[%s4 + $0x4e8] sm:$0xff]
  %v6907 = vld [vmem:[%s4 + $0x4f0] sm:$0xff]
  %v6908 = vld [vmem:[%s4 + $0x4f8] sm:$0xff]
  %v6909 = vld [vmem:[%s4 + $0x500] sm:$0xff]
  %v6910 = vld [vmem:[%s4 + $0x508] sm:$0xff]
  %v6911 = vld [vmem:[%s4 + $0x510] sm:$0xff]
  %v6912 = vld [vmem:[%s4 + $0x518] sm:$0xff]
  %v6913 = vld [vmem:[%s4 + $0x520] sm:$0xff]
  %v6914 = vld [vmem:[%s4 + $0x528] sm:$0xff]
  %v6915 = vld [vmem:[%s4 + $0x530] sm:$0xff]
  %v6916 = vld [vmem:[%s4 + $0x538] sm:$0xff]
  %v6917 = vld [vmem:[%s4 + $0x540] sm:$0xff]
  %v6918 = vld [vmem:[%s4 + $0x548] sm:$0xff]
  %v6919 = vld [vmem:[%s4 + $0x550] sm:$0xff]
  %v6920 = vld [vmem:[%s4 + $0x558] sm:$0xff]
  %v6921 = vld [vmem:[%s4 + $0x560] sm:$0xff]
  %v6922 = vld [vmem:[%s4 + $0x568] sm:$0xff]
  %v6923 = vld [vmem:[%s4 + $0x570] sm:$0xff]
  %v6924 = vld [vmem:[%s4 + $0x578] sm:$0xff]
  %v6925 = vld [vmem:[%s4 + $0x580] sm:$0xff]
  %v6926 = vld [vmem:[%s4 + $0x588] sm:$0xff]
  %v6927 = vld [vmem:[%s4 + $0x590] sm:$0xff]
  %v6928 = vld [vmem:[%s4 + $0x598] sm:$0xff]
  %v6929 = vld [vmem:[%s4 + $0x5a0] sm:$0xff]
  %v6930 = vld [vmem:[%s4 + $0x5a8] sm:$0xff]
  %v6931 = vld [vmem:[%s4 + $0x5b0] sm:$0xff]
  %v6932 = vld [vmem:[%s4 + $0x5b8] sm:$0xff]
  %v6933 = vld [vmem:[%s4 + $0x5c0] sm:$0xff]
  %v6934 = vld [vmem:[%s4 + $0x5c8] sm:$0xff]
  %v6935 = vld [vmem:[%s4 + $0x5d0] sm:$0xff]
  %v6936 = vld [vmem:[%s4 + $0x5d8] sm:$0xff]
  %v6937 = vld [vmem:[%s4 + $0x5e0] sm:$0xff]
  %v6938 = vld [vmem:[%s4 + $0x5e8] sm:$0xff]
  %v6939 = vld [vmem:[%s4 + $0x5f0] sm:$0xff]
  %v6940 = vld [vmem:[%s4 + $0x5f8] sm:$0xff]
  %v6941 = vld [vmem:[%s4 + $0x600] sm:$0xff]
  %v6942 = vld [vmem:[%s4 + $0x608] sm:$0xff]
  %v6943 = vld [vmem:[%s4 + $0x610] sm:$0xff]
  %v6944 = vld [vmem:[%s4 + $0x618] sm:$0xff]
  %v6945 = vld [vmem:[%s4 + $0x620] sm:$0xff]
  %v6946 = vld [vmem:[%s4 + $0x628] sm:$0xff]
  %v6947 = vld [vmem:[%s4 + $0x630] sm:$0xff]
  %v6948 = vld [vmem:[%s4 + $0x638] sm:$0xff]
  %v6949 = vld [vmem:[%s4 + $0x640] sm:$0xff]
  %v6950 = vld [vmem:[%s4 + $0x648] sm:$0xff]
  %v6951 = vld [vmem:[%s4 + $0x650] sm:$0xff]
  %v6952 = vld [vmem:[%s4 + $0x658] sm:$0xff]
  %v6953 = vld [vmem:[%s4 + $0x660] sm:$0xff]
  %v6954 = vld [vmem:[%s4 + $0x668] sm:$0xff]
  %v6955 = vld [vmem:[%s4 + $0x670] sm:$0xff]
  %v6956 = vld [vmem:[%s4 + $0x678] sm:$0xff]
  %v6957 = vld [vmem:[%s4 + $0x680] sm:$0xff]
  %v6958 = vld [vmem:[%s4 + $0x688] sm:$0xff]
  %v6959 = vld [vmem:[%s4 + $0x690] sm:$0xff]
  %v6960 = vld [vmem:[%s4 + $0x698] sm:$0xff]
  %v6961 = vld [vmem:[%s4 + $0x6a0] sm:$0xff]
  %v6962 = vld [vmem:[%s4 + $0x6a8] sm:$0xff]
  %v6963 = vld [vmem:[%s4 + $0x6b0] sm:$0xff]
  %v6964 = vld [vmem:[%s4 + $0x6b8] sm:$0xff]
  %v6965 = vld [vmem:[%s4 + $0x6c0] sm:$0xff]
  %v6966 = vld [vmem:[%s4 + $0x6c8] sm:$0xff]
  %v6967 = vld [vmem:[%s4 + $0x6d0] sm:$0xff]
  %v6968 = vld [vmem:[%s4 + $0x6d8] sm:$0xff]
  %v6969 = vld [vmem:[%s4 + $0x6e0] sm:$0xff]
  %v6970 = vld [vmem:[%s4 + $0x6e8] sm:$0xff]
  %v6971 = vld [vmem:[%s4 + $0x6f0] sm:$0xff]
  %v6972 = vld [vmem:[%s4 + $0x6f8] sm:$0xff]
  %v6977 = vrot.slane %v6857, 1
  %v6978 = vrot.slane %v6858, 1
  %v6979 = vrot.slane %v6859, 1
  %v6980 = vrot.slane %v6860, 1
  %v7096 = vunpack.c.l.b16 %v6861
  %v7097 = vunpack.c.h.b16 %v6861
  %v7098 = vunpack.c.l.b16 %v6862
  %v7099 = vunpack.c.h.b16 %v6862
  %v7100 = vunpack.c.l.b16 %v6863
  %v7101 = vunpack.c.h.b16 %v6863
  %v7102 = vunpack.c.l.b16 %v6864
  %v7103 = vunpack.c.h.b16 %v6864
  %v7104 = vunpack.c.l.b16 %v6865
  %v7105 = vunpack.c.h.b16 %v6865
  %v7106 = vunpack.c.l.b16 %v6866
  %v7107 = vunpack.c.h.b16 %v6866
  %v7108 = vunpack.c.l.b16 %v6867
  %v7109 = vunpack.c.h.b16 %v6867
  %v7110 = vunpack.c.l.b16 %v6868
  %v7111 = vunpack.c.h.b16 %v6868
  %v7112 = vunpack.c.l.b16 %v6869
  %v7113 = vunpack.c.h.b16 %v6869
  %v7114 = vunpack.c.l.b16 %v6870
  %v7115 = vunpack.c.h.b16 %v6870
  %v7116 = vunpack.c.l.b16 %v6871
  %v7117 = vunpack.c.h.b16 %v6871
  %v7118 = vunpack.c.l.b16 %v6872
  %v7119 = vunpack.c.h.b16 %v6872
  %v7120 = vunpack.c.l.b16 %v6873
  %v7121 = vunpack.c.h.b16 %v6873
  %v7122 = vunpack.c.l.b16 %v6874
  %v7123 = vunpack.c.h.b16 %v6874
  %v7124 = vunpack.c.l.b16 %v6875
  %v7125 = vunpack.c.h.b16 %v6875
  %v7126 = vunpack.c.l.b16 %v6876
  %v7127 = vunpack.c.h.b16 %v6876
  %v7128 = vunpack.c.l.b16 %v6877
  %v7129 = vunpack.c.h.b16 %v6877
  %v7130 = vunpack.c.l.b16 %v6878
  %v7131 = vunpack.c.h.b16 %v6878
  %v7132 = vunpack.c.l.b16 %v6879
  %v7133 = vunpack.c.h.b16 %v6879
  %v7134 = vunpack.c.l.b16 %v6880
  %v7135 = vunpack.c.h.b16 %v6880
  %v7136 = vunpack.c.l.b16 %v6881
  %v7137 = vunpack.c.h.b16 %v6881
  %v7138 = vunpack.c.l.b16 %v6882
  %v7139 = vunpack.c.h.b16 %v6882
  %v7140 = vunpack.c.l.b16 %v6883
  %v7141 = vunpack.c.h.b16 %v6883
  %v7142 = vunpack.c.l.b16 %v6884
  %v7143 = vunpack.c.h.b16 %v6884
  %v7144 = vunpack.c.l.b16 %v6885
  %v7145 = vunpack.c.h.b16 %v6885
  %v7146 = vunpack.c.l.b16 %v6886
  %v7147 = vunpack.c.h.b16 %v6886
  %v7148 = vunpack.c.l.b16 %v6887
  %v7149 = vunpack.c.h.b16 %v6887
  %v7150 = vunpack.c.l.b16 %v6888
  %v7151 = vunpack.c.h.b16 %v6888
  %v7152 = vunpack.c.l.b16 %v6889
  %v7153 = vunpack.c.h.b16 %v6889
  %v7154 = vunpack.c.l.b16 %v6890
  %v7155 = vunpack.c.h.b16 %v6890
  %v7156 = vunpack.c.l.b16 %v6891
  %v7157 = vunpack.c.h.b16 %v6891
  %v7158 = vunpack.c.l.b16 %v6892
  %v7159 = vunpack.c.h.b16 %v6892
  %v7160 = vunpack.c.l.b16 %v6893
  %v7161 = vunpack.c.h.b16 %v6893
  %v7162 = vunpack.c.l.b16 %v6894
  %v7163 = vunpack.c.h.b16 %v6894
  %v7164 = vunpack.c.l.b16 %v6895
  %v7165 = vunpack.c.h.b16 %v6895
  %v7166 = vunpack.c.l.b16 %v6896
  %v7167 = vunpack.c.h.b16 %v6896
  %v7168 = vunpack.c.l.b16 %v6897
  %v7169 = vunpack.c.h.b16 %v6897
  %v7170 = vunpack.c.l.b16 %v6898
  %v7171 = vunpack.c.h.b16 %v6898
  %v7172 = vunpack.c.l.b16 %v6899
  %v7173 = vunpack.c.h.b16 %v6899
  %v7174 = vunpack.c.l.b16 %v6900
  %v7175 = vunpack.c.h.b16 %v6900
  %v7176 = vunpack.c.l.b16 %v6901
  %v7177 = vunpack.c.h.b16 %v6901
  %v7178 = vunpack.c.l.b16 %v6902
  %v7179 = vunpack.c.h.b16 %v6902
  %v7180 = vunpack.c.l.b16 %v6903
  %v7181 = vunpack.c.h.b16 %v6903
  %v7182 = vunpack.c.l.b16 %v6904
  %v7183 = vunpack.c.h.b16 %v6904
  %v7184 = vunpack.c.l.b16 %v6905
  %v7185 = vunpack.c.h.b16 %v6905
  %v7186 = vunpack.c.l.b16 %v6906
  %v7187 = vunpack.c.h.b16 %v6906
  %v7188 = vunpack.c.l.b16 %v6907
  %v7189 = vunpack.c.h.b16 %v6907
  %v7190 = vunpack.c.l.b16 %v6908
  %v7191 = vunpack.c.h.b16 %v6908
  %v7192 = vunpack.c.l.b16 %v6909
  %v7193 = vunpack.c.h.b16 %v6909
  %v7194 = vunpack.c.l.b16 %v6910
  %v7195 = vunpack.c.h.b16 %v6910
  %v7196 = vunpack.c.l.b16 %v6911
  %v7197 = vunpack.c.h.b16 %v6911
  %v7198 = vunpack.c.l.b16 %v6912
  %v7199 = vunpack.c.h.b16 %v6912
  %v7200 = vunpack.c.l.b16 %v6913
  %v7201 = vunpack.c.h.b16 %v6913
  %v7202 = vunpack.c.l.b16 %v6914
  %v7203 = vunpack.c.h.b16 %v6914
  %v7204 = vunpack.c.l.b16 %v6915
  %v7205 = vunpack.c.h.b16 %v6915
  %v7206 = vunpack.c.l.b16 %v6916
  %v7207 = vunpack.c.h.b16 %v6916
  %v7208 = vunpack.c.l.b16 %v6917
  %v7209 = vunpack.c.h.b16 %v6917
  %v7210 = vunpack.c.l.b16 %v6918
  %v7211 = vunpack.c.h.b16 %v6918
  %v7212 = vunpack.c.l.b16 %v6919
  %v7213 = vunpack.c.h.b16 %v6919
  %v7214 = vunpack.c.l.b16 %v6920
  %v7215 = vunpack.c.h.b16 %v6920
  %v7216 = vunpack.c.l.b16 %v6921
  %v7217 = vunpack.c.h.b16 %v6921
  %v7218 = vunpack.c.l.b16 %v6922
  %v7219 = vunpack.c.h.b16 %v6922
  %v7220 = vunpack.c.l.b16 %v6923
  %v7221 = vunpack.c.h.b16 %v6923
  %v7222 = vunpack.c.l.b16 %v6924
  %v7223 = vunpack.c.h.b16 %v6924
  %v7224 = vunpack.c.l.b16 %v6925
  %v7225 = vunpack.c.h.b16 %v6925
  %v7226 = vunpack.c.l.b16 %v6926
  %v7227 = vunpack.c.h.b16 %v6926
  %v7228 = vunpack.c.l.b16 %v6927
  %v7229 = vunpack.c.h.b16 %v6927
  %v7230 = vunpack.c.l.b16 %v6928
  %v7231 = vunpack.c.h.b16 %v6928
  %v7232 = vunpack.c.l.b16 %v6929
  %v7233 = vunpack.c.h.b16 %v6929
  %v7234 = vunpack.c.l.b16 %v6930
  %v7235 = vunpack.c.h.b16 %v6930
  %v7236 = vunpack.c.l.b16 %v6931
  %v7237 = vunpack.c.h.b16 %v6931
  %v7238 = vunpack.c.l.b16 %v6932
  %v7239 = vunpack.c.h.b16 %v6932
  %v7240 = vunpack.c.l.b16 %v6933
  %v7241 = vunpack.c.h.b16 %v6933
  %v7242 = vunpack.c.l.b16 %v6934
  %v7243 = vunpack.c.h.b16 %v6934
  %v7244 = vunpack.c.l.b16 %v6935
  %v7245 = vunpack.c.h.b16 %v6935
  %v7246 = vunpack.c.l.b16 %v6936
  %v7247 = vunpack.c.h.b16 %v6936
  %v7248 = vunpack.c.l.b16 %v6937
  %v7249 = vunpack.c.h.b16 %v6937
  %v7250 = vunpack.c.l.b16 %v6938
  %v7251 = vunpack.c.h.b16 %v6938
  %v7252 = vunpack.c.l.b16 %v6939
  %v7253 = vunpack.c.h.b16 %v6939
  %v7254 = vunpack.c.l.b16 %v6940
  %v7255 = vunpack.c.h.b16 %v6940
  %v7256 = vunpack.c.l.b16 %v6941
  %v7257 = vunpack.c.h.b16 %v6941
  %v7258 = vunpack.c.l.b16 %v6942
  %v7259 = vunpack.c.h.b16 %v6942
  %v7260 = vunpack.c.l.b16 %v6943
  %v7261 = vunpack.c.h.b16 %v6943
  %v7262 = vunpack.c.l.b16 %v6944
  %v7263 = vunpack.c.h.b16 %v6944
  %v7264 = vunpack.c.l.b16 %v6945
  %v7265 = vunpack.c.h.b16 %v6945
  %v7266 = vunpack.c.l.b16 %v6946
  %v7267 = vunpack.c.h.b16 %v6946
  %v7268 = vunpack.c.l.b16 %v6947
  %v7269 = vunpack.c.h.b16 %v6947
  %v7270 = vunpack.c.l.b16 %v6948
  %v7271 = vunpack.c.h.b16 %v6948
  %v7272 = vunpack.c.l.b16 %v6949
  %v7273 = vunpack.c.h.b16 %v6949
  %v7274 = vunpack.c.l.b16 %v6950
  %v7275 = vunpack.c.h.b16 %v6950
  %v7276 = vunpack.c.l.b16 %v6951
  %v7277 = vunpack.c.h.b16 %v6951
  %v7278 = vunpack.c.l.b16 %v6952
  %v7279 = vunpack.c.h.b16 %v6952
  %v7280 = vunpack.c.l.b16 %v6953
  %v7281 = vunpack.c.h.b16 %v6953
  %v7282 = vunpack.c.l.b16 %v6954
  %v7283 = vunpack.c.h.b16 %v6954
  %v7284 = vunpack.c.l.b16 %v6955
  %v7285 = vunpack.c.h.b16 %v6955
  %v7286 = vunpack.c.l.b16 %v6956
  %v7287 = vunpack.c.h.b16 %v6956
  %v7288 = vunpack.c.l.b16 %v6957
  %v7289 = vunpack.c.h.b16 %v6957
  %v7290 = vunpack.c.l.b16 %v6958
  %v7291 = vunpack.c.h.b16 %v6958
  %v7292 = vunpack.c.l.b16 %v6959
  %v7293 = vunpack.c.h.b16 %v6959
  %v7294 = vunpack.c.l.b16 %v6960
  %v7295 = vunpack.c.h.b16 %v6960
  %v7296 = vunpack.c.l.b16 %v6961
  %v7297 = vunpack.c.h.b16 %v6961
  %v7298 = vunpack.c.l.b16 %v6962
  %v7299 = vunpack.c.h.b16 %v6962
  %v7300 = vunpack.c.l.b16 %v6963
  %v7301 = vunpack.c.h.b16 %v6963
  %v7302 = vunpack.c.l.b16 %v6964
  %v7303 = vunpack.c.h.b16 %v6964
  %v7304 = vunpack.c.l.b16 %v6965
  %v7305 = vunpack.c.h.b16 %v6965
  %v7306 = vunpack.c.l.b16 %v6966
  %v7307 = vunpack.c.h.b16 %v6966
  %v7308 = vunpack.c.l.b16 %v6967
  %v7309 = vunpack.c.h.b16 %v6967
  %v7310 = vunpack.c.l.b16 %v6968
  %v7311 = vunpack.c.h.b16 %v6968
  %v7312 = vunpack.c.l.b16 %v6969
  %v7313 = vunpack.c.h.b16 %v6969
  %v7314 = vunpack.c.l.b16 %v6970
  %v7315 = vunpack.c.h.b16 %v6970
  %v7316 = vunpack.c.l.b16 %v6971
  %v7317 = vunpack.c.h.b16 %v6971
  %v7318 = vunpack.c.l.b16 %v6972
  %v7319 = vunpack.c.h.b16 %v6972
  %v7320 = vpack.c.b16 %v7100, %v7096
  %v7321 = vpack.c.b16 %v7101, %v7097
  %v7322 = vpack.c.b16 %v7102, %v7098
  %v7323 = vpack.c.b16 %v7103, %v7099
  %v7324 = vpack.c.b16 %v7108, %v7104
  %v7325 = vpack.c.b16 %v7109, %v7105
  %v7326 = vpack.c.b16 %v7110, %v7106
  %v7327 = vpack.c.b16 %v7111, %v7107
  %v7328 = vpack.c.b16 %v7116, %v7112
  %v7329 = vpack.c.b16 %v7117, %v7113
  %v7330 = vpack.c.b16 %v7118, %v7114
  %v7331 = vpack.c.b16 %v7119, %v7115
  %v7332 = vpack.c.b16 %v7124, %v7120
  %v7333 = vpack.c.b16 %v7125, %v7121
  %v7334 = vpack.c.b16 %v7126, %v7122
  %v7335 = vpack.c.b16 %v7127, %v7123
  %v7336 = vpack.c.b16 %v7132, %v7128
  %v7337 = vpack.c.b16 %v7133, %v7129
  %v7338 = vpack.c.b16 %v7134, %v7130
  %v7339 = vpack.c.b16 %v7135, %v7131
  %v7340 = vpack.c.b16 %v7140, %v7136
  %v7341 = vpack.c.b16 %v7141, %v7137
  %v7342 = vpack.c.b16 %v7142, %v7138
  %v7343 = vpack.c.b16 %v7143, %v7139
  %v7344 = vpack.c.b16 %v7148, %v7144
  %v7345 = vpack.c.b16 %v7149, %v7145
  %v7346 = vpack.c.b16 %v7150, %v7146
  %v7347 = vpack.c.b16 %v7151, %v7147
  %v7348 = vpack.c.b16 %v7156, %v7152
  %v7349 = vpack.c.b16 %v7157, %v7153
  %v7350 = vpack.c.b16 %v7158, %v7154
  %v7351 = vpack.c.b16 %v7159, %v7155
  %v7352 = vpack.c.b16 %v7164, %v7160
  %v7353 = vpack.c.b16 %v7165, %v7161
  %v7354 = vpack.c.b16 %v7166, %v7162
  %v7355 = vpack.c.b16 %v7167, %v7163
  %v7356 = vpack.c.b16 %v7172, %v7168
  %v7357 = vpack.c.b16 %v7173, %v7169
  %v7358 = vpack.c.b16 %v7174, %v7170
  %v7359 = vpack.c.b16 %v7175, %v7171
  %v7360 = vpack.c.b16 %v7180, %v7176
  %v7361 = vpack.c.b16 %v7181, %v7177
  %v7362 = vpack.c.b16 %v7182, %v7178
  %v7363 = vpack.c.b16 %v7183, %v7179
  %v7364 = vpack.c.b16 %v7188, %v7184
  %v7365 = vpack.c.b16 %v7189, %v7185
  %v7366 = vpack.c.b16 %v7190, %v7186
  %v7367 = vpack.c.b16 %v7191, %v7187
  %v7368 = vpack.c.b16 %v7196, %v7192
  %v7369 = vpack.c.b16 %v7197, %v7193
  %v7370 = vpack.c.b16 %v7198, %v7194
  %v7371 = vpack.c.b16 %v7199, %v7195
  %v7372 = vpack.c.b16 %v7204, %v7200
  %v7373 = vpack.c.b16 %v7205, %v7201
  %v7374 = vpack.c.b16 %v7206, %v7202
  %v7375 = vpack.c.b16 %v7207, %v7203
  %v7376 = vpack.c.b16 %v7212, %v7208
  %v7377 = vpack.c.b16 %v7213, %v7209
  %v7378 = vpack.c.b16 %v7214, %v7210
  %v7379 = vpack.c.b16 %v7215, %v7211
  %v7380 = vpack.c.b16 %v7220, %v7216
  %v7381 = vpack.c.b16 %v7221, %v7217
  %v7382 = vpack.c.b16 %v7222, %v7218
  %v7383 = vpack.c.b16 %v7223, %v7219
  %v7384 = vpack.c.b16 %v7228, %v7224
  %v7385 = vpack.c.b16 %v7229, %v7225
  %v7386 = vpack.c.b16 %v7230, %v7226
  %v7387 = vpack.c.b16 %v7231, %v7227
  %v7388 = vpack.c.b16 %v7236, %v7232
  %v7389 = vpack.c.b16 %v7237, %v7233
  %v7390 = vpack.c.b16 %v7238, %v7234
  %v7391 = vpack.c.b16 %v7239, %v7235
  %v7392 = vpack.c.b16 %v7244, %v7240
  %v7393 = vpack.c.b16 %v7245, %v7241
  %v7394 = vpack.c.b16 %v7246, %v7242
  %v7395 = vpack.c.b16 %v7247, %v7243
  %v7396 = vpack.c.b16 %v7252, %v7248
  %v7397 = vpack.c.b16 %v7253, %v7249
  %v7398 = vpack.c.b16 %v7254, %v7250
  %v7399 = vpack.c.b16 %v7255, %v7251
  %v7400 = vpack.c.b16 %v7260, %v7256
  %v7401 = vpack.c.b16 %v7261, %v7257
  %v7402 = vpack.c.b16 %v7262, %v7258
  %v7403 = vpack.c.b16 %v7263, %v7259
  %v7404 = vpack.c.b16 %v7268, %v7264
  %v7405 = vpack.c.b16 %v7269, %v7265
  %v7406 = vpack.c.b16 %v7270, %v7266
  %v7407 = vpack.c.b16 %v7271, %v7267
  %v7408 = vpack.c.b16 %v7276, %v7272
  %v7409 = vpack.c.b16 %v7277, %v7273
  %v7410 = vpack.c.b16 %v7278, %v7274
  %v7411 = vpack.c.b16 %v7279, %v7275
  %v7412 = vpack.c.b16 %v7284, %v7280
  %v7413 = vpack.c.b16 %v7285, %v7281
  %v7414 = vpack.c.b16 %v7286, %v7282
  %v7415 = vpack.c.b16 %v7287, %v7283
  %v7416 = vpack.c.b16 %v7292, %v7288
  %v7417 = vpack.c.b16 %v7293, %v7289
  %v7418 = vpack.c.b16 %v7294, %v7290
  %v7419 = vpack.c.b16 %v7295, %v7291
  %v7420 = vpack.c.b16 %v7300, %v7296
  %v7421 = vpack.c.b16 %v7301, %v7297
  %v7422 = vpack.c.b16 %v7302, %v7298
  %v7423 = vpack.c.b16 %v7303, %v7299
  %v7424 = vpack.c.b16 %v7308, %v7304
  %v7425 = vpack.c.b16 %v7309, %v7305
  %v7426 = vpack.c.b16 %v7310, %v7306
  %v7427 = vpack.c.b16 %v7311, %v7307
  %v7428 = vpack.c.b16 %v7316, %v7312
  %v7429 = vpack.c.b16 %v7317, %v7313
  %v7430 = vpack.c.b16 %v7318, %v7314
  %v7431 = vpack.c.b16 %v7319, %v7315
  %v7545 = vsel %vm537, %v6980, 0
  %7547 = vmatprep.subr.bf16.mxu0 %v7321
  %7548 = vmatpush1.bf16.msra.mxu0 %v7320
  %7549 = vmatprep.subr.bf16.mxu0 %v7325
  %7550 = vmatpush1.bf16.msra.mxu0 %v7324
  %7551 = vmatprep.subr.bf16.mxu0 %v7329
  %7552 = vmatpush1.bf16.msra.mxu0 %v7328
  %7553 = vmatprep.subr.bf16.mxu0 %v7333
  %7554 = vmatpush1.bf16.msra.mxu0 %v7332
  %7555 = vmatprep.subr.bf16.mxu0 %v7337
  %7556 = vmatpush1.bf16.msra.mxu0 %v7336
  %7557 = vmatprep.subr.bf16.mxu0 %v7341
  %7558 = vmatpush1.bf16.msra.mxu0 %v7340
  %7559 = vmatprep.subr.bf16.mxu0 %v7345
  %7560 = vmatpush1.bf16.msra.mxu0 %v7344
  %7561 = vmatprep.subr.bf16.mxu0 %v7349
  %7562 = vmatpush1.bf16.msra.mxu0 %v7348
  %7563 = vmatprep.subr.bf16.mxu0 %v7353
  %7564 = vmatpush1.bf16.msra.mxu0 %v7352
  %7565 = vmatprep.subr.bf16.mxu0 %v7357
  %7566 = vmatpush1.bf16.msra.mxu0 %v7356
  %7567 = vmatprep.subr.bf16.mxu0 %v7361
  %7568 = vmatpush1.bf16.msra.mxu0 %v7360
  %7569 = vmatprep.subr.bf16.mxu0 %v7365
  %7570 = vmatpush1.bf16.msra.mxu0 %v7364
  %7571 = vmatprep.subr.bf16.mxu0 %v7369
  %7572 = vmatpush1.bf16.msra.mxu0 %v7368
  %7573 = vmatprep.subr.bf16.mxu0 %v7373
  %7574 = vmatpush1.bf16.msra.mxu0 %v7372
  %7575 = vmatprep.subr.bf16.mxu0 %v7377
  %7576 = vmatpush1.bf16.msra.mxu0 %v7376
  %7577 = vmatprep.subr.bf16.mxu0 %v7381
  %7578 = vmatpush1.bf16.msra.mxu0 %v7380
  %7579 = vmatprep.mubr.bf16.mxu0 %v6978
  %7580 = vmatmul.mubr.bf16.gmra.mrb[0].mxu0 %v6977
  %v7581 = vpop.f32.mrb[0].mxu0
  %v7582 = vadd.f32 0.0, %v7581
  %v7583 = vpop.f32.mrb[0].mxu0
  %v7584 = vadd.f32 0.0, %v7583
  %v7585 = vpop.f32.mrb[0].mxu0
  %v7586 = vpop.f32.mrb[0].mxu0
  %7587 = vdwg.mxu0
  %7588 = vmatprep.subr.bf16.mxu0 %v7385
  %7589 = vmatpush1.bf16.msra.mxu0 %v7384
  %7590 = vmatprep.subr.bf16.mxu0 %v7389
  %7591 = vmatpush1.bf16.msra.mxu0 %v7388
  %7592 = vmatprep.subr.bf16.mxu0 %v7393
  %7593 = vmatpush1.bf16.msra.mxu0 %v7392
  %7594 = vmatprep.subr.bf16.mxu0 %v7397
  %7595 = vmatpush1.bf16.msra.mxu0 %v7396
  %7596 = vmatprep.subr.bf16.mxu0 %v7401
  %7597 = vmatpush1.bf16.msra.mxu0 %v7400
  %7598 = vmatprep.subr.bf16.mxu0 %v7405
  %7599 = vmatpush1.bf16.msra.mxu0 %v7404
  %7600 = vmatprep.subr.bf16.mxu0 %v7409
  %7601 = vmatpush1.bf16.msra.mxu0 %v7408
  %7602 = vmatprep.subr.bf16.mxu0 %v7413
  %7603 = vmatpush1.bf16.msra.mxu0 %v7412
  %7604 = vmatprep.subr.bf16.mxu0 %v7417
  %7605 = vmatpush1.bf16.msra.mxu0 %v7416
  %7606 = vmatprep.subr.bf16.mxu0 %v7421
  %7607 = vmatpush1.bf16.msra.mxu0 %v7420
  %7608 = vmatprep.subr.bf16.mxu0 %v7425
  %7609 = vmatpush1.bf16.msra.mxu0 %v7424
  %7610 = vmatprep.subr.bf16.mxu0 %v7429
  %7611 = vmatpush1.bf16.msra.mxu0 %v7428
  %7612 = vmatprep.subr.bf16.mxu0 0
  %7613 = vmatpush1.bf16.msra.mxu0 0
  %7614 = vmatprep.subr.bf16.mxu0 0
  %7615 = vmatpush1.bf16.msra.mxu0 0
  %7616 = vmatprep.subr.bf16.mxu0 0
  %7617 = vmatpush1.bf16.msra.mxu0 0
  %7618 = vmatprep.subr.bf16.mxu0 0
  %7619 = vmatpush1.bf16.msra.mxu0 0
  %7620 = vmatprep.mubr.bf16.mxu0 %v7545
  %7621 = vmatmul.mubr.bf16.gmra.mrb[0].mxu0 %v6979
  %v7622 = vpop.f32.mrb[0].mxu0
  %v7623 = vadd.f32 %v7582, %v7622
  %v7624 = vpop.f32.mrb[0].mxu0
  %v7625 = vadd.f32 %v7584, %v7624
  %v7626 = vpop.f32.mrb[0].mxu0
  %v7627 = vpop.f32.mrb[0].mxu0
  %7628 = vdwg.mxu0
  %7629 = vmatprep.subr.bf16.mxu0 %v7323
  %7630 = vmatpush1.bf16.msra.mxu0 %v7322
  %7631 = vmatprep.subr.bf16.mxu0 %v7327
  %7632 = vmatpush1.bf16.msra.mxu0 %v7326
  %7633 = vmatprep.subr.bf16.mxu0 %v7331
  %7634 = vmatpush1.bf16.msra.mxu0 %v7330
  %7635 = vmatprep.subr.bf16.mxu0 %v7335
  %7636 = vmatpush1.bf16.msra.mxu0 %v7334
  %7637 = vmatprep.subr.bf16.mxu0 %v7339
  %7638 = vmatpush1.bf16.msra.mxu0 %v7338
  %7639 = vmatprep.subr.bf16.mxu0 %v7343
  %7640 = vmatpush1.bf16.msra.mxu0 %v7342
  %7641 = vmatprep.subr.bf16.mxu0 %v7347
  %7642 = vmatpush1.bf16.msra.mxu0 %v7346
  %7643 = vmatprep.subr.bf16.mxu0 %v7351
  %7644 = vmatpush1.bf16.msra.mxu0 %v7350
  %7645 = vmatprep.subr.bf16.mxu0 %v7355
  %7646 = vmatpush1.bf16.msra.mxu0 %v7354
  %7647 = vmatprep.subr.bf16.mxu0 %v7359
  %7648 = vmatpush1.bf16.msra.mxu0 %v7358
  %7649 = vmatprep.subr.bf16.mxu0 %v7363
  %7650 = vmatpush1.bf16.msra.mxu0 %v7362
  %7651 = vmatprep.subr.bf16.mxu0 %v7367
  %7652 = vmatpush1.bf16.msra.mxu0 %v7366
  %7653 = vmatprep.subr.bf16.mxu0 %v7371
  %7654 = vmatpush1.bf16.msra.mxu0 %v7370
  %7655 = vmatprep.subr.bf16.mxu0 %v7375
  %7656 = vmatpush1.bf16.msra.mxu0 %v7374
  %7657 = vmatprep.subr.bf16.mxu0 %v7379
  %7658 = vmatpush1.bf16.msra.mxu0 %v7378
  %7659 = vmatprep.subr.bf16.mxu0 %v7383
  %7660 = vmatpush1.bf16.msra.mxu0 %v7382
  %7661 = vmatprep.mubr.bf16.mxu0 %v6978
  %7662 = vmatmul.mubr.bf16.gmra.mrb[0].mxu0 %v6977
  %v7663 = vpop.f32.mrb[0].mxu0
  %v7664 = vadd.f32 0.0, %v7663
  %v7665 = vpop.f32.mrb[0].mxu0
  %v7666 = vadd.f32 0.0, %v7665
  %v7667 = vpop.f32.mrb[0].mxu0
  %v7668 = vpop.f32.mrb[0].mxu0
  %7669 = vdwg.mxu0
  %7670 = vmatprep.subr.bf16.mxu0 %v7387
  %7671 = vmatpush1.bf16.msra.mxu0 %v7386
  %7672 = vmatprep.subr.bf16.mxu0 %v7391
  %7673 = vmatpush1.bf16.msra.mxu0 %v7390
  %7674 = vmatprep.subr.bf16.mxu0 %v7395
  %7675 = vmatpush1.bf16.msra.mxu0 %v7394
  %7676 = vmatprep.subr.bf16.mxu0 %v7399
  %7677 = vmatpush1.bf16.msra.mxu0 %v7398
  %7678 = vmatprep.subr.bf16.mxu0 %v7403
  %7679 = vmatpush1.bf16.msra.mxu0 %v7402
  %7680 = vmatprep.subr.bf16.mxu0 %v7407
  %7681 = vmatpush1.bf16.msra.mxu0 %v7406
  %7682 = vmatprep.subr.bf16.mxu0 %v7411
  %7683 = vmatpush1.bf16.msra.mxu0 %v7410
  %7684 = vmatprep.subr.bf16.mxu0 %v7415
  %7685 = vmatpush1.bf16.msra.mxu0 %v7414
  %7686 = vmatprep.subr.bf16.mxu0 %v7419
  %7687 = vmatpush1.bf16.msra.mxu0 %v7418
  %7688 = vmatprep.subr.bf16.mxu0 %v7423
  %7689 = vmatpush1.bf16.msra.mxu0 %v7422
  %7690 = vmatprep.subr.bf16.mxu0 %v7427
  %7691 = vmatpush1.bf16.msra.mxu0 %v7426
  %7692 = vmatprep.subr.bf16.mxu0 %v7431
  %7693 = vmatpush1.bf16.msra.mxu0 %v7430
  %7694 = vmatprep.subr.bf16.mxu0 0
  %7695 = vmatpush1.bf16.msra.mxu0 0
  %7696 = vmatprep.subr.bf16.mxu0 0
  %7697 = vmatpush1.bf16.msra.mxu0 0
  %7698 = vmatprep.subr.bf16.mxu0 0
  %7699 = vmatpush1.bf16.msra.mxu0 0
  %7700 = vmatprep.subr.bf16.mxu0 0
  %7701 = vmatpush1.bf16.msra.mxu0 0
  %7702 = vmatprep.mubr.bf16.mxu0 %v7545
  %7703 = vmatmul.mubr.bf16.gmra.mrb[0].mxu0 %v6979
  %v7704 = vpop.f32.mrb[0].mxu0
  %v7705 = vadd.f32 %v7664, %v7704
  %v7706 = vpop.f32.mrb[0].mxu0
  %v7707 = vadd.f32 %v7666, %v7706
  %v7708 = vpop.f32.mrb[0].mxu0
  %v7709 = vpop.f32.mrb[0].mxu0
  %7710 = vdwg.mxu0
  %v7823 = vunpack.c.l.b16 %v6741
  %v7824 = vunpack.c.h.b16 %v6741
  %v7825 = vunpack.c.l.b16 %v6742
  %v7826 = vunpack.c.h.b16 %v6742
  %v7827 = vunpack.c.l.b16 %v6743
  %v7828 = vunpack.c.h.b16 %v6743
  %v7829 = vunpack.c.l.b16 %v6744
  %v7830 = vunpack.c.h.b16 %v6744
  %v7831 = vunpack.c.l.b16 %v6745
  %v7832 = vunpack.c.h.b16 %v6745
  %v7833 = vunpack.c.l.b16 %v6746
  %v7834 = vunpack.c.h.b16 %v6746
  %v7835 = vunpack.c.l.b16 %v6747
  %v7836 = vunpack.c.h.b16 %v6747
  %v7837 = vunpack.c.l.b16 %v6748
  %v7838 = vunpack.c.h.b16 %v6748
  %v7839 = vunpack.c.l.b16 %v6749
  %v7840 = vunpack.c.h.b16 %v6749
  %v7841 = vunpack.c.l.b16 %v6750
  %v7842 = vunpack.c.h.b16 %v6750
  %v7843 = vunpack.c.l.b16 %v6751
  %v7844 = vunpack.c.h.b16 %v6751
  %v7845 = vunpack.c.l.b16 %v6752
  %v7846 = vunpack.c.h.b16 %v6752
  %v7847 = vunpack.c.l.b16 %v6753
  %v7848 = vunpack.c.h.b16 %v6753
  %v7849 = vunpack.c.l.b16 %v6754
  %v7850 = vunpack.c.h.b16 %v6754
  %v7851 = vunpack.c.l.b16 %v6755
  %v7852 = vunpack.c.h.b16 %v6755
  %v7853 = vunpack.c.l.b16 %v6756
  %v7854 = vunpack.c.h.b16 %v6756
  %v7855 = vunpack.c.l.b16 %v6757
  %v7856 = vunpack.c.h.b16 %v6757
  %v7857 = vunpack.c.l.b16 %v6758
  %v7858 = vunpack.c.h.b16 %v6758
  %v7859 = vunpack.c.l.b16 %v6759
  %v7860 = vunpack.c.h.b16 %v6759
  %v7861 = vunpack.c.l.b16 %v6760
  %v7862 = vunpack.c.h.b16 %v6760
  %v7863 = vunpack.c.l.b16 %v6761
  %v7864 = vunpack.c.h.b16 %v6761
  %v7865 = vunpack.c.l.b16 %v6762
  %v7866 = vunpack.c.h.b16 %v6762
  %v7867 = vunpack.c.l.b16 %v6763
  %v7868 = vunpack.c.h.b16 %v6763
  %v7869 = vunpack.c.l.b16 %v6764
  %v7870 = vunpack.c.h.b16 %v6764
  %v7871 = vunpack.c.l.b16 %v6765
  %v7872 = vunpack.c.h.b16 %v6765
  %v7873 = vunpack.c.l.b16 %v6766
  %v7874 = vunpack.c.h.b16 %v6766
  %v7875 = vunpack.c.l.b16 %v6767
  %v7876 = vunpack.c.h.b16 %v6767
  %v7877 = vunpack.c.l.b16 %v6768
  %v7878 = vunpack.c.h.b16 %v6768
  %v7879 = vunpack.c.l.b16 %v6769
  %v7880 = vunpack.c.h.b16 %v6769
  %v7881 = vunpack.c.l.b16 %v6770
  %v7882 = vunpack.c.h.b16 %v6770
  %v7883 = vunpack.c.l.b16 %v6771
  %v7884 = vunpack.c.h.b16 %v6771
  %v7885 = vunpack.c.l.b16 %v6772
  %v7886 = vunpack.c.h.b16 %v6772
  %v7887 = vunpack.c.l.b16 %v6773
  %v7888 = vunpack.c.h.b16 %v6773
  %v7889 = vunpack.c.l.b16 %v6774
  %v7890 = vunpack.c.h.b16 %v6774
  %v7891 = vunpack.c.l.b16 %v6775
  %v7892 = vunpack.c.h.b16 %v6775
  %v7893 = vunpack.c.l.b16 %v6776
  %v7894 = vunpack.c.h.b16 %v6776
  %v7895 = vunpack.c.l.b16 %v6777
  %v7896 = vunpack.c.h.b16 %v6777
  %v7897 = vunpack.c.l.b16 %v6778
  %v7898 = vunpack.c.h.b16 %v6778
  %v7899 = vunpack.c.l.b16 %v6779
  %v7900 = vunpack.c.h.b16 %v6779
  %v7901 = vunpack.c.l.b16 %v6780
  %v7902 = vunpack.c.h.b16 %v6780
  %v7903 = vunpack.c.l.b16 %v6781
  %v7904 = vunpack.c.h.b16 %v6781
  %v7905 = vunpack.c.l.b16 %v6782
  %v7906 = vunpack.c.h.b16 %v6782
  %v7907 = vunpack.c.l.b16 %v6783
  %v7908 = vunpack.c.h.b16 %v6783
  %v7909 = vunpack.c.l.b16 %v6784
  %v7910 = vunpack.c.h.b16 %v6784
  %v7911 = vunpack.c.l.b16 %v6785
  %v7912 = vunpack.c.h.b16 %v6785
  %v7913 = vunpack.c.l.b16 %v6786
  %v7914 = vunpack.c.h.b16 %v6786
  %v7915 = vunpack.c.l.b16 %v6787
  %v7916 = vunpack.c.h.b16 %v6787
  %v7917 = vunpack.c.l.b16 %v6788
  %v7918 = vunpack.c.h.b16 %v6788
  %v7919 = vunpack.c.l.b16 %v6789
  %v7920 = vunpack.c.h.b16 %v6789
  %v7921 = vunpack.c.l.b16 %v6790
  %v7922 = vunpack.c.h.b16 %v6790
  %v7923 = vunpack.c.l.b16 %v6791
  %v7924 = vunpack.c.h.b16 %v6791
  %v7925 = vunpack.c.l.b16 %v6792
  %v7926 = vunpack.c.h.b16 %v6792
  %v7927 = vunpack.c.l.b16 %v6793
  %v7928 = vunpack.c.h.b16 %v6793
  %v7929 = vunpack.c.l.b16 %v6794
  %v7930 = vunpack.c.h.b16 %v6794
  %v7931 = vunpack.c.l.b16 %v6795
  %v7932 = vunpack.c.h.b16 %v6795
  %v7933 = vunpack.c.l.b16 %v6796
  %v7934 = vunpack.c.h.b16 %v6796
  %v7935 = vunpack.c.l.b16 %v6797
  %v7936 = vunpack.c.h.b16 %v6797
  %v7937 = vunpack.c.l.b16 %v6798
  %v7938 = vunpack.c.h.b16 %v6798
  %v7939 = vunpack.c.l.b16 %v6799
  %v7940 = vunpack.c.h.b16 %v6799
  %v7941 = vunpack.c.l.b16 %v6800
  %v7942 = vunpack.c.h.b16 %v6800
  %v7943 = vunpack.c.l.b16 %v6801
  %v7944 = vunpack.c.h.b16 %v6801
  %v7945 = vunpack.c.l.b16 %v6802
  %v7946 = vunpack.c.h.b16 %v6802
  %v7947 = vunpack.c.l.b16 %v6803
  %v7948 = vunpack.c.h.b16 %v6803
  %v7949 = vunpack.c.l.b16 %v6804
  %v7950 = vunpack.c.h.b16 %v6804
  %v7951 = vunpack.c.l.b16 %v6805
  %v7952 = vunpack.c.h.b16 %v6805
  %v7953 = vunpack.c.l.b16 %v6806
  %v7954 = vunpack.c.h.b16 %v6806
  %v7955 = vunpack.c.l.b16 %v6807
  %v7956 = vunpack.c.h.b16 %v6807
  %v7957 = vunpack.c.l.b16 %v6808
  %v7958 = vunpack.c.h.b16 %v6808
  %v7959 = vunpack.c.l.b16 %v6809
  %v7960 = vunpack.c.h.b16 %v6809
  %v7961 = vunpack.c.l.b16 %v6810
  %v7962 = vunpack.c.h.b16 %v6810
  %v7963 = vunpack.c.l.b16 %v6811
  %v7964 = vunpack.c.h.b16 %v6811
  %v7965 = vunpack.c.l.b16 %v6812
  %v7966 = vunpack.c.h.b16 %v6812
  %v7967 = vunpack.c.l.b16 %v6813
  %v7968 = vunpack.c.h.b16 %v6813
  %v7969 = vunpack.c.l.b16 %v6814
  %v7970 = vunpack.c.h.b16 %v6814
  %v7971 = vunpack.c.l.b16 %v6815
  %v7972 = vunpack.c.h.b16 %v6815
  %v7973 = vunpack.c.l.b16 %v6816
  %v7974 = vunpack.c.h.b16 %v6816
  %v7975 = vunpack.c.l.b16 %v6817
  %v7976 = vunpack.c.h.b16 %v6817
  %v7977 = vunpack.c.l.b16 %v6818
  %v7978 = vunpack.c.h.b16 %v6818
  %v7979 = vunpack.c.l.b16 %v6819
  %v7980 = vunpack.c.h.b16 %v6819
  %v7981 = vunpack.c.l.b16 %v6820
  %v7982 = vunpack.c.h.b16 %v6820
  %v7983 = vunpack.c.l.b16 %v6821
  %v7984 = vunpack.c.h.b16 %v6821
  %v7985 = vunpack.c.l.b16 %v6822
  %v7986 = vunpack.c.h.b16 %v6822
  %v7987 = vunpack.c.l.b16 %v6823
  %v7988 = vunpack.c.h.b16 %v6823
  %v7989 = vunpack.c.l.b16 %v6824
  %v7990 = vunpack.c.h.b16 %v6824
  %v7991 = vunpack.c.l.b16 %v6825
  %v7992 = vunpack.c.h.b16 %v6825
  %v7993 = vunpack.c.l.b16 %v6826
  %v7994 = vunpack.c.h.b16 %v6826
  %v7995 = vunpack.c.l.b16 %v6827
  %v7996 = vunpack.c.h.b16 %v6827
  %v7997 = vunpack.c.l.b16 %v6828
  %v7998 = vunpack.c.h.b16 %v6828
  %v7999 = vunpack.c.l.b16 %v6829
  %v8000 = vunpack.c.h.b16 %v6829
  %v8001 = vunpack.c.l.b16 %v6830
  %v8002 = vunpack.c.h.b16 %v6830
  %v8003 = vunpack.c.l.b16 %v6831
  %v8004 = vunpack.c.h.b16 %v6831
  %v8005 = vunpack.c.l.b16 %v6832
  %v8006 = vunpack.c.h.b16 %v6832
  %v8007 = vunpack.c.l.b16 %v6833
  %v8008 = vunpack.c.h.b16 %v6833
  %v8009 = vunpack.c.l.b16 %v6834
  %v8010 = vunpack.c.h.b16 %v6834
  %v8011 = vunpack.c.l.b16 %v6835
  %v8012 = vunpack.c.h.b16 %v6835
  %v8013 = vunpack.c.l.b16 %v6836
  %v8014 = vunpack.c.h.b16 %v6836
  %v8015 = vunpack.c.l.b16 %v6837
  %v8016 = vunpack.c.h.b16 %v6837
  %v8017 = vunpack.c.l.b16 %v6838
  %v8018 = vunpack.c.h.b16 %v6838
  %v8019 = vunpack.c.l.b16 %v6839
  %v8020 = vunpack.c.h.b16 %v6839
  %v8021 = vunpack.c.l.b16 %v6840
  %v8022 = vunpack.c.h.b16 %v6840
  %v8023 = vunpack.c.l.b16 %v6841
  %v8024 = vunpack.c.h.b16 %v6841
  %v8025 = vunpack.c.l.b16 %v6842
  %v8026 = vunpack.c.h.b16 %v6842
  %v8027 = vunpack.c.l.b16 %v6843
  %v8028 = vunpack.c.h.b16 %v6843
  %v8029 = vunpack.c.l.b16 %v6844
  %v8030 = vunpack.c.h.b16 %v6844
  %v8031 = vunpack.c.l.b16 %v6845
  %v8032 = vunpack.c.h.b16 %v6845
  %v8033 = vunpack.c.l.b16 %v6846
  %v8034 = vunpack.c.h.b16 %v6846
  %v8035 = vunpack.c.l.b16 %v6847
  %v8036 = vunpack.c.h.b16 %v6847
  %v8037 = vunpack.c.l.b16 %v6848
  %v8038 = vunpack.c.h.b16 %v6848
  %v8039 = vunpack.c.l.b16 %v6849
  %v8040 = vunpack.c.h.b16 %v6849
  %v8041 = vunpack.c.l.b16 %v6850
  %v8042 = vunpack.c.h.b16 %v6850
  %v8043 = vunpack.c.l.b16 %v6851
  %v8044 = vunpack.c.h.b16 %v6851
  %v8045 = vunpack.c.l.b16 %v6852
  %v8046 = vunpack.c.h.b16 %v6852
  %v8047 = vpack.c.b16 %v7827, %v7823
  %v8048 = vpack.c.b16 %v7828, %v7824
  %v8049 = vpack.c.b16 %v7829, %v7825
  %v8050 = vpack.c.b16 %v7830, %v7826
  %v8051 = vpack.c.b16 %v7835, %v7831
  %v8052 = vpack.c.b16 %v7836, %v7832
  %v8053 = vpack.c.b16 %v7837, %v7833
  %v8054 = vpack.c.b16 %v7838, %v7834
  %v8055 = vpack.c.b16 %v7843, %v7839
  %v8056 = vpack.c.b16 %v7844, %v7840
  %v8057 = vpack.c.b16 %v7845, %v7841
  %v8058 = vpack.c.b16 %v7846, %v7842
  %v8059 = vpack.c.b16 %v7851, %v7847
  %v8060 = vpack.c.b16 %v7852, %v7848
  %v8061 = vpack.c.b16 %v7853, %v7849
  %v8062 = vpack.c.b16 %v7854, %v7850
  %v8063 = vpack.c.b16 %v7859, %v7855
  %v8064 = vpack.c.b16 %v7860, %v7856
  %v8065 = vpack.c.b16 %v7861, %v7857
  %v8066 = vpack.c.b16 %v7862, %v7858
  %v8067 = vpack.c.b16 %v7867, %v7863
  %v8068 = vpack.c.b16 %v7868, %v7864
  %v8069 = vpack.c.b16 %v7869, %v7865
  %v8070 = vpack.c.b16 %v7870, %v7866
  %v8071 = vpack.c.b16 %v7875, %v7871
  %v8072 = vpack.c.b16 %v7876, %v7872
  %v8073 = vpack.c.b16 %v7877, %v7873
  %v8074 = vpack.c.b16 %v7878, %v7874
  %v8075 = vpack.c.b16 %v7883, %v7879
  %v8076 = vpack.c.b16 %v7884, %v7880
  %v8077 = vpack.c.b16 %v7885, %v7881
  %v8078 = vpack.c.b16 %v7886, %v7882
  %v8079 = vpack.c.b16 %v7891, %v7887
  %v8080 = vpack.c.b16 %v7892, %v7888
  %v8081 = vpack.c.b16 %v7893, %v7889
  %v8082 = vpack.c.b16 %v7894, %v7890
  %v8083 = vpack.c.b16 %v7899, %v7895
  %v8084 = vpack.c.b16 %v7900, %v7896
  %v8085 = vpack.c.b16 %v7901, %v7897
  %v8086 = vpack.c.b16 %v7902, %v7898
  %v8087 = vpack.c.b16 %v7907, %v7903
  %v8088 = vpack.c.b16 %v7908, %v7904
  %v8089 = vpack.c.b16 %v7909, %v7905
  %v8090 = vpack.c.b16 %v7910, %v7906
  %v8091 = vpack.c.b16 %v7915, %v7911
  %v8092 = vpack.c.b16 %v7916, %v7912
  %v8093 = vpack.c.b16 %v7917, %v7913
  %v8094 = vpack.c.b16 %v7918, %v7914
  %v8095 = vpack.c.b16 %v7923, %v7919
  %v8096 = vpack.c.b16 %v7924, %v7920
  %v8097 = vpack.c.b16 %v7925, %v7921
  %v8098 = vpack.c.b16 %v7926, %v7922
  %v8099 = vpack.c.b16 %v7931, %v7927
  %v8100 = vpack.c.b16 %v7932, %v7928
  %v8101 = vpack.c.b16 %v7933, %v7929
  %v8102 = vpack.c.b16 %v7934, %v7930
  %v8103 = vpack.c.b16 %v7939, %v7935
  %v8104 = vpack.c.b16 %v7940, %v7936
  %v8105 = vpack.c.b16 %v7941, %v7937
  %v8106 = vpack.c.b16 %v7942, %v7938
  %v8107 = vpack.c.b16 %v7947, %v7943
  %v8108 = vpack.c.b16 %v7948, %v7944
  %v8109 = vpack.c.b16 %v7949, %v7945
  %v8110 = vpack.c.b16 %v7950, %v7946
  %v8111 = vpack.c.b16 %v7955, %v7951
  %v8112 = vpack.c.b16 %v7956, %v7952
  %v8113 = vpack.c.b16 %v7957, %v7953
  %v8114 = vpack.c.b16 %v7958, %v7954
  %v8115 = vpack.c.b16 %v7963, %v7959
  %v8116 = vpack.c.b16 %v7964, %v7960
  %v8117 = vpack.c.b16 %v7965, %v7961
  %v8118 = vpack.c.b16 %v7966, %v7962
  %v8119 = vpack.c.b16 %v7971, %v7967
  %v8120 = vpack.c.b16 %v7972, %v7968
  %v8121 = vpack.c.b16 %v7973, %v7969
  %v8122 = vpack.c.b16 %v7974, %v7970
  %v8123 = vpack.c.b16 %v7979, %v7975
  %v8124 = vpack.c.b16 %v7980, %v7976
  %v8125 = vpack.c.b16 %v7981, %v7977
  %v8126 = vpack.c.b16 %v7982, %v7978
  %v8127 = vpack.c.b16 %v7987, %v7983
  %v8128 = vpack.c.b16 %v7988, %v7984
  %v8129 = vpack.c.b16 %v7989, %v7985
  %v8130 = vpack.c.b16 %v7990, %v7986
  %v8131 = vpack.c.b16 %v7995, %v7991
  %v8132 = vpack.c.b16 %v7996, %v7992
  %v8133 = vpack.c.b16 %v7997, %v7993
  %v8134 = vpack.c.b16 %v7998, %v7994
  %v8135 = vpack.c.b16 %v8003, %v7999
  %v8136 = vpack.c.b16 %v8004, %v8000
  %v8137 = vpack.c.b16 %v8005, %v8001
  %v8138 = vpack.c.b16 %v8006, %v8002
  %v8139 = vpack.c.b16 %v8011, %v8007
  %v8140 = vpack.c.b16 %v8012, %v8008
  %v8141 = vpack.c.b16 %v8013, %v8009
  %v8142 = vpack.c.b16 %v8014, %v8010
  %v8143 = vpack.c.b16 %v8019, %v8015
  %v8144 = vpack.c.b16 %v8020, %v8016
  %v8145 = vpack.c.b16 %v8021, %v8017
  %v8146 = vpack.c.b16 %v8022, %v8018
  %v8147 = vpack.c.b16 %v8027, %v8023
  %v8148 = vpack.c.b16 %v8028, %v8024
  %v8149 = vpack.c.b16 %v8029, %v8025
  %v8150 = vpack.c.b16 %v8030, %v8026
  %v8151 = vpack.c.b16 %v8035, %v8031
  %v8152 = vpack.c.b16 %v8036, %v8032
  %v8153 = vpack.c.b16 %v8037, %v8033
  %v8154 = vpack.c.b16 %v8038, %v8034
  %v8155 = vpack.c.b16 %v8043, %v8039
  %v8156 = vpack.c.b16 %v8044, %v8040
  %v8157 = vpack.c.b16 %v8045, %v8041
  %v8158 = vpack.c.b16 %v8046, %v8042
  %v8272 = vsel %vm537, %v6740, 0
  %8274 = vmatprep.subr.bf16.mxu0 %v8048
  %8275 = vmatpush1.bf16.msra.mxu0 %v8047
  %8276 = vmatprep.subr.bf16.mxu0 %v8052
  %8277 = vmatpush1.bf16.msra.mxu0 %v8051
  %8278 = vmatprep.subr.bf16.mxu0 %v8056
  %8279 = vmatpush1.bf16.msra.mxu0 %v8055
  %8280 = vmatprep.subr.bf16.mxu0 %v8060
  %8281 = vmatpush1.bf16.msra.mxu0 %v8059
  %8282 = vmatprep.subr.bf16.mxu0 %v8064
  %8283 = vmatpush1.bf16.msra.mxu0 %v8063
  %8284 = vmatprep.subr.bf16.mxu0 %v8068
  %8285 = vmatpush1.bf16.msra.mxu0 %v8067
  %8286 = vmatprep.subr.bf16.mxu0 %v8072
  %8287 = vmatpush1.bf16.msra.mxu0 %v8071
  %8288 = vmatprep.subr.bf16.mxu0 %v8076
  %8289 = vmatpush1.bf16.msra.mxu0 %v8075
  %8290 = vmatprep.subr.bf16.mxu0 %v8080
  %8291 = vmatpush1.bf16.msra.mxu0 %v8079
  %8292 = vmatprep.subr.bf16.mxu0 %v8084
  %8293 = vmatpush1.bf16.msra.mxu0 %v8083
  %8294 = vmatprep.subr.bf16.mxu0 %v8088
  %8295 = vmatpush1.bf16.msra.mxu0 %v8087
  %8296 = vmatprep.subr.bf16.mxu0 %v8092
  %8297 = vmatpush1.bf16.msra.mxu0 %v8091
  %8298 = vmatprep.subr.bf16.mxu0 %v8096
  %8299 = vmatpush1.bf16.msra.mxu0 %v8095
  %8300 = vmatprep.subr.bf16.mxu0 %v8100
  %8301 = vmatpush1.bf16.msra.mxu0 %v8099
  %8302 = vmatprep.subr.bf16.mxu0 %v8104
  %8303 = vmatpush1.bf16.msra.mxu0 %v8103
  %8304 = vmatprep.subr.bf16.mxu0 %v8108
  %8305 = vmatpush1.bf16.msra.mxu0 %v8107
  %8306 = vmatprep.mubr.bf16.mxu0 %v6738
  %8307 = vmatmul.mubr.bf16.gmra.mrb[0].mxu0 %v6737
  %v8308 = vpop.f32.mrb[0].mxu0
  %v8309 = vadd.f32 %v7623, %v8308
  %v8310 = vpop.f32.mrb[0].mxu0
  %v8311 = vadd.f32 %v7625, %v8310
  %v8312 = vpop.f32.mrb[0].mxu0
  %v8313 = vpop.f32.mrb[0].mxu0
  %8314 = vdwg.mxu0
  %8315 = vmatprep.subr.bf16.mxu0 %v8112
  %8316 = vmatpush1.bf16.msra.mxu0 %v8111
  %8317 = vmatprep.subr.bf16.mxu0 %v8116
  %8318 = vmatpush1.bf16.msra.mxu0 %v8115
  %8319 = vmatprep.subr.bf16.mxu0 %v8120
  %8320 = vmatpush1.bf16.msra.mxu0 %v8119
  %8321 = vmatprep.subr.bf16.mxu0 %v8124
  %8322 = vmatpush1.bf16.msra.mxu0 %v8123
  %8323 = vmatprep.subr.bf16.mxu0 %v8128
  %8324 = vmatpush1.bf16.msra.mxu0 %v8127
  %8325 = vmatprep.subr.bf16.mxu0 %v8132
  %8326 = vmatpush1.bf16.msra.mxu0 %v8131
  %8327 = vmatprep.subr.bf16.mxu0 %v8136
  %8328 = vmatpush1.bf16.msra.mxu0 %v8135
  %8329 = vmatprep.subr.bf16.mxu0 %v8140
  %8330 = vmatpush1.bf16.msra.mxu0 %v8139
  %8331 = vmatprep.subr.bf16.mxu0 %v8144
  %8332 = vmatpush1.bf16.msra.mxu0 %v8143
  %8333 = vmatprep.subr.bf16.mxu0 %v8148
  %8334 = vmatpush1.bf16.msra.mxu0 %v8147
  %8335 = vmatprep.subr.bf16.mxu0 %v8152
  %8336 = vmatpush1.bf16.msra.mxu0 %v8151
  %8337 = vmatprep.subr.bf16.mxu0 %v8156
  %8338 = vmatpush1.bf16.msra.mxu0 %v8155
  %8339 = vmatprep.subr.bf16.mxu0 0
  %8340 = vmatpush1.bf16.msra.mxu0 0
  %8341 = vmatprep.subr.bf16.mxu0 0
  %8342 = vmatpush1.bf16.msra.mxu0 0
  %8343 = vmatprep.subr.bf16.mxu0 0
  %8344 = vmatpush1.bf16.msra.mxu0 0
  %8345 = vmatprep.subr.bf16.mxu0 0
  %8346 = vmatpush1.bf16.msra.mxu0 0
  %8347 = vmatprep.mubr.bf16.mxu0 %v8272
  %8348 = vmatmul.mubr.bf16.gmra.mrb[0].mxu0 %v6739
  %v8349 = vpop.f32.mrb[0].mxu0
  %v8350 = vadd.f32 %v8309, %v8349
  %v8351 = vpop.f32.mrb[0].mxu0
  %v8352 = vadd.f32 %v8311, %v8351
  %v8353 = vpop.f32.mrb[0].mxu0
  %v8354 = vpop.f32.mrb[0].mxu0
  %8355 = vdwg.mxu0
  %8356 = vmatprep.subr.bf16.mxu0 %v8050
  %8357 = vmatpush1.bf16.msra.mxu0 %v8049
  %8358 = vmatprep.subr.bf16.mxu0 %v8054
  %8359 = vmatpush1.bf16.msra.mxu0 %v8053
  %8360 = vmatprep.subr.bf16.mxu0 %v8058
  %8361 = vmatpush1.bf16.msra.mxu0 %v8057
  %8362 = vmatprep.subr.bf16.mxu0 %v8062
  %8363 = vmatpush1.bf16.msra.mxu0 %v8061
  %8364 = vmatprep.subr.bf16.mxu0 %v8066
  %8365 = vmatpush1.bf16.msra.mxu0 %v8065
  %8366 = vmatprep.subr.bf16.mxu0 %v8070
  %8367 = vmatpush1.bf16.msra.mxu0 %v8069
  %8368 = vmatprep.subr.bf16.mxu0 %v8074
  %8369 = vmatpush1.bf16.msra.mxu0 %v8073
  %8370 = vmatprep.subr.bf16.mxu0 %v8078
  %8371 = vmatpush1.bf16.msra.mxu0 %v8077
  %8372 = vmatprep.subr.bf16.mxu0 %v8082
  %8373 = vmatpush1.bf16.msra.mxu0 %v8081
  %8374 = vmatprep.subr.bf16.mxu0 %v8086
  %8375 = vmatpush1.bf16.msra.mxu0 %v8085
  %8376 = vmatprep.subr.bf16.mxu0 %v8090
  %8377 = vmatpush1.bf16.msra.mxu0 %v8089
  %8378 = vmatprep.subr.bf16.mxu0 %v8094
  %8379 = vmatpush1.bf16.msra.mxu0 %v8093
  %8380 = vmatprep.subr.bf16.mxu0 %v8098
  %8381 = vmatpush1.bf16.msra.mxu0 %v8097
  %8382 = vmatprep.subr.bf16.mxu0 %v8102
  %8383 = vmatpush1.bf16.msra.mxu0 %v8101
  %8384 = vmatprep.subr.bf16.mxu0 %v8106
  %8385 = vmatpush1.bf16.msra.mxu0 %v8105
  %8386 = vmatprep.subr.bf16.mxu0 %v8110
  %8387 = vmatpush1.bf16.msra.mxu0 %v8109
  %8388 = vmatprep.mubr.bf16.mxu0 %v6738
  %8389 = vmatmul.mubr.bf16.gmra.mrb[0].mxu0 %v6737
  %v8390 = vpop.f32.mrb[0].mxu0
  %v8391 = vadd.f32 %v7705, %v8390
  %v8392 = vpop.f32.mrb[0].mxu0
  %v8393 = vadd.f32 %v7707, %v8392
  %v8394 = vpop.f32.mrb[0].mxu0
  %v8395 = vpop.f32.mrb[0].mxu0
  %8396 = vdwg.mxu0
  %8397 = vmatprep.subr.bf16.mxu0 %v8114
  %8398 = vmatpush1.bf16.msra.mxu0 %v8113
  %8399 = vmatprep.subr.bf16.mxu0 %v8118
  %8400 = vmatpush1.bf16.msra.mxu0 %v8117
  %8401 = vmatprep.subr.bf16.mxu0 %v8122
  %8402 = vmatpush1.bf16.msra.mxu0 %v8121
  %8403 = vmatprep.subr.bf16.mxu0 %v8126
  %8404 = vmatpush1.bf16.msra.mxu0 %v8125
  %8405 = vmatprep.subr.bf16.mxu0 %v8130
  %8406 = vmatpush1.bf16.msra.mxu0 %v8129
  %8407 = vmatprep.subr.bf16.mxu0 %v8134
  %8408 = vmatpush1.bf16.msra.mxu0 %v8133
  %8409 = vmatprep.subr.bf16.mxu0 %v8138
  %8410 = vmatpush1.bf16.msra.mxu0 %v8137
  %8411 = vmatprep.subr.bf16.mxu0 %v8142
  %8412 = vmatpush1.bf16.msra.mxu0 %v8141
  %8413 = vmatprep.subr.bf16.mxu0 %v8146
  %8414 = vmatpush1.bf16.msra.mxu0 %v8145
  %8415 = vmatprep.subr.bf16.mxu0 %v8150
  %8416 = vmatpush1.bf16.msra.mxu0 %v8149
  %8417 = vmatprep.subr.bf16.mxu0 %v8154
  %8418 = vmatpush1.bf16.msra.mxu0 %v8153
  %8419 = vmatprep.subr.bf16.mxu0 %v8158
  %8420 = vmatpush1.bf16.msra.mxu0 %v8157
  %8421 = vmatprep.subr.bf16.mxu0 0
  %8422 = vmatpush1.bf16.msra.mxu0 0
  %8423 = vmatprep.subr.bf16.mxu0 0
  %8424 = vmatpush1.bf16.msra.mxu0 0
  %8425 = vmatprep.subr.bf16.mxu0 0
  %8426 = vmatpush1.bf16.msra.mxu0 0
  %8427 = vmatprep.subr.bf16.mxu0 0
  %8428 = vmatpush1.bf16.msra.mxu0 0
  %8429 = vmatprep.mubr.bf16.mxu0 %v8272
  %8430 = vmatmul.mubr.bf16.gmra.mrb[0].mxu0 %v6739
  %v8431 = vpop.f32.mrb[0].mxu0
  %v8432 = vadd.f32 %v8391, %v8431
  %v8433 = vpop.f32.mrb[0].mxu0
  %v8434 = vadd.f32 %v8393, %v8433
  %v8435 = vpop.f32.mrb[0].mxu0
  %v8436 = vpop.f32.mrb[0].mxu0
  %8437 = vdwg.mxu0
  %v8438 = vld [vmem:[#allocation4] sm:$0x30]
  %v8439 = vld [vmem:[#allocation4 + $0x8] sm:$0x30]
  %v8440 = vld [vmem:[#allocation4 + $0x10] sm:$0x30]
  %v8441 = vld [vmem:[#allocation4 + $0x18] sm:$0x30]
  %v8442 = vpack.c.bf16 %v8438, %v8438
  %v8443 = vpack.c.bf16 %v8439, %v8439
  %v8444 = vpack.c.bf16 %v8440, %v8440
  %v8445 = vpack.c.bf16 %v8441, %v8441
  %v8446 = vld [vmem:[%s4 + $0x700] sm:$0xff]
  %v8447 = vld [vmem:[%s4 + $0x708] sm:$0xff]
  %v8448 = vld [vmem:[%s4 + $0x710] sm:$0xff]
  %v8449 = vld [vmem:[%s4 + $0x718] sm:$0xff]
  %v8450 = vld [vmem:[%s4 + $0x720] sm:$0xff]
  %v8451 = vld [vmem:[%s4 + $0x728] sm:$0xff]
  %v8452 = vld [vmem:[%s4 + $0x730] sm:$0xff]
  %v8453 = vld [vmem:[%s4 + $0x738] sm:$0xff]
  %v8454 = vld [vmem:[%s4 + $0x740] sm:$0xff]
  %v8455 = vld [vmem:[%s4 + $0x748] sm:$0xff]
  %v8456 = vld [vmem:[%s4 + $0x750] sm:$0xff]
  %v8457 = vld [vmem:[%s4 + $0x758] sm:$0xff]
  %v8458 = vld [vmem:[%s4 + $0x760] sm:$0xff]
  %v8459 = vld [vmem:[%s4 + $0x768] sm:$0xff]
  %v8460 = vld [vmem:[%s4 + $0x770] sm:$0xff]
  %v8461 = vld [vmem:[%s4 + $0x778] sm:$0xff]
  %v8462 = vld [vmem:[%s4 + $0x780] sm:$0xff]
  %v8463 = vld [vmem:[%s4 + $0x788] sm:$0xff]
  %v8464 = vld [vmem:[%s4 + $0x790] sm:$0xff]
  %v8465 = vld [vmem:[%s4 + $0x798] sm:$0xff]
  %v8466 = vld [vmem:[%s4 + $0x7a0] sm:$0xff]
  %v8467 = vld [vmem:[%s4 + $0x7a8] sm:$0xff]
  %v8468 = vld [vmem:[%s4 + $0x7b0] sm:$0xff]
  %v8469 = vld [vmem:[%s4 + $0x7b8] sm:$0xff]
  %v8470 = vld [vmem:[%s4 + $0x7c0] sm:$0xff]
  %v8471 = vld [vmem:[%s4 + $0x7c8] sm:$0xff]
  %v8472 = vld [vmem:[%s4 + $0x7d0] sm:$0xff]
  %v8473 = vld [vmem:[%s4 + $0x7d8] sm:$0xff]
  %v8474 = vld [vmem:[%s4 + $0x7e0] sm:$0xff]
  %v8475 = vld [vmem:[%s4 + $0x7e8] sm:$0xff]
  %v8476 = vld [vmem:[%s4 + $0x7f0] sm:$0xff]
  %v8477 = vld [vmem:[%s4 + $0x7f8] sm:$0xff]
  %v8478 = vld [vmem:[%s4 + $0x800] sm:$0xff]
  %v8479 = vld [vmem:[%s4 + $0x808] sm:$0xff]
  %v8480 = vld [vmem:[%s4 + $0x810] sm:$0xff]
  %v8481 = vld [vmem:[%s4 + $0x818] sm:$0xff]
  %v8482 = vld [vmem:[%s4 + $0x820] sm:$0xff]
  %v8483 = vld [vmem:[%s4 + $0x828] sm:$0xff]
  %v8484 = vld [vmem:[%s4 + $0x830] sm:$0xff]
  %v8485 = vld [vmem:[%s4 + $0x838] sm:$0xff]
  %v8486 = vld [vmem:[%s4 + $0x840] sm:$0xff]
  %v8487 = vld [vmem:[%s4 + $0x848] sm:$0xff]
  %v8488 = vld [vmem:[%s4 + $0x850] sm:$0xff]
  %v8489 = vld [vmem:[%s4 + $0x858] sm:$0xff]
  %v8490 = vld [vmem:[%s4 + $0x860] sm:$0xff]
  %v8491 = vld [vmem:[%s4 + $0x868] sm:$0xff]
  %v8492 = vld [vmem:[%s4 + $0x870] sm:$0xff]
  %v8493 = vld [vmem:[%s4 + $0x878] sm:$0xff]
  %v8494 = vld [vmem:[%s4 + $0x880] sm:$0xff]
  %v8495 = vld [vmem:[%s4 + $0x888] sm:$0xff]
  %v8496 = vld [vmem:[%s4 + $0x890] sm:$0xff]
  %v8497 = vld [vmem:[%s4 + $0x898] sm:$0xff]
  %v8498 = vld [vmem:[%s4 + $0x8a0] sm:$0xff]
  %v8499 = vld [vmem:[%s4 + $0x8a8] sm:$0xff]
  %v8500 = vld [vmem:[%s4 + $0x8b0] sm:$0xff]
  %v8501 = vld [vmem:[%s4 + $0x8b8] sm:$0xff]
  %v8502 = vld [vmem:[%s4 + $0x8c0] sm:$0xff]
  %v8503 = vld [vmem:[%s4 + $0x8c8] sm:$0xff]
  %v8504 = vld [vmem:[%s4 + $0x8d0] sm:$0xff]
  %v8505 = vld [vmem:[%s4 + $0x8d8] sm:$0xff]
  %v8506 = vld [vmem:[%s4 + $0x8e0] sm:$0xff]
  %v8507 = vld [vmem:[%s4 + $0x8e8] sm:$0xff]
  %v8508 = vld [vmem:[%s4 + $0x8f0] sm:$0xff]
  %v8509 = vld [vmem:[%s4 + $0x8f8] sm:$0xff]
  %v8510 = vld [vmem:[%s4 + $0x900] sm:$0xff]
  %v8511 = vld [vmem:[%s4 + $0x908] sm:$0xff]
  %v8512 = vld [vmem:[%s4 + $0x910] sm:$0xff]
  %v8513 = vld [vmem:[%s4 + $0x918] sm:$0xff]
  %v8514 = vld [vmem:[%s4 + $0x920] sm:$0xff]
  %v8515 = vld [vmem:[%s4 + $0x928] sm:$0xff]
  %v8516 = vld [vmem:[%s4 + $0x930] sm:$0xff]
  %v8517 = vld [vmem:[%s4 + $0x938] sm:$0xff]
  %v8518 = vld [vmem:[%s4 + $0x940] sm:$0xff]
  %v8519 = vld [vmem:[%s4 + $0x948] sm:$0xff]
  %v8520 = vld [vmem:[%s4 + $0x950] sm:$0xff]
  %v8521 = vld [vmem:[%s4 + $0x958] sm:$0xff]
  %v8522 = vld [vmem:[%s4 + $0x960] sm:$0xff]
  %v8523 = vld [vmem:[%s4 + $0x968] sm:$0xff]
  %v8524 = vld [vmem:[%s4 + $0x970] sm:$0xff]
  %v8525 = vld [vmem:[%s4 + $0x978] sm:$0xff]
  %v8526 = vld [vmem:[%s4 + $0x980] sm:$0xff]
  %v8527 = vld [vmem:[%s4 + $0x988] sm:$0xff]
  %v8528 = vld [vmem:[%s4 + $0x990] sm:$0xff]
  %v8529 = vld [vmem:[%s4 + $0x998] sm:$0xff]
  %v8530 = vld [vmem:[%s4 + $0x9a0] sm:$0xff]
  %v8531 = vld [vmem:[%s4 + $0x9a8] sm:$0xff]
  %v8532 = vld [vmem:[%s4 + $0x9b0] sm:$0xff]
  %v8533 = vld [vmem:[%s4 + $0x9b8] sm:$0xff]
  %v8534 = vld [vmem:[%s4 + $0x9c0] sm:$0xff]
  %v8535 = vld [vmem:[%s4 + $0x9c8] sm:$0xff]
  %v8536 = vld [vmem:[%s4 + $0x9d0] sm:$0xff]
  %v8537 = vld [vmem:[%s4 + $0x9d8] sm:$0xff]
  %v8538 = vld [vmem:[%s4 + $0x9e0] sm:$0xff]
  %v8539 = vld [vmem:[%s4 + $0x9e8] sm:$0xff]
  %v8540 = vld [vmem:[%s4 + $0x9f0] sm:$0xff]
  %v8541 = vld [vmem:[%s4 + $0x9f8] sm:$0xff]
  %v8542 = vld [vmem:[%s4 + $0xa00] sm:$0xff]
  %v8543 = vld [vmem:[%s4 + $0xa08] sm:$0xff]
  %v8544 = vld [vmem:[%s4 + $0xa10] sm:$0xff]
  %v8545 = vld [vmem:[%s4 + $0xa18] sm:$0xff]
  %v8546 = vld [vmem:[%s4 + $0xa20] sm:$0xff]
  %v8547 = vld [vmem:[%s4 + $0xa28] sm:$0xff]
  %v8548 = vld [vmem:[%s4 + $0xa30] sm:$0xff]
  %v8549 = vld [vmem:[%s4 + $0xa38] sm:$0xff]
  %v8550 = vld [vmem:[%s4 + $0xa40] sm:$0xff]
  %v8551 = vld [vmem:[%s4 + $0xa48] sm:$0xff]
  %v8552 = vld [vmem:[%s4 + $0xa50] sm:$0xff]
  %v8553 = vld [vmem:[%s4 + $0xa58] sm:$0xff]
  %v8554 = vld [vmem:[%s4 + $0xa60] sm:$0xff]
  %v8555 = vld [vmem:[%s4 + $0xa68] sm:$0xff]
  %v8556 = vld [vmem:[%s4 + $0xa70] sm:$0xff]
  %v8557 = vld [vmem:[%s4 + $0xa78] sm:$0xff]
  %v8562 = vrot.slane %v8442, 2
  %v8563 = vrot.slane %v8443, 2
  %v8564 = vrot.slane %v8444, 2
  %v8565 = vrot.slane %v8445, 2
  %v8681 = vunpack.c.l.b16 %v8446
  %v8682 = vunpack.c.h.b16 %v8446
  %v8683 = vunpack.c.l.b16 %v8447
  %v8684 = vunpack.c.h.b16 %v8447
  %v8685 = vunpack.c.l.b16 %v8448
  %v8686 = vunpack.c.h.b16 %v8448
  %v8687 = vunpack.c.l.b16 %v8449
  %v8688 = vunpack.c.h.b16 %v8449
  %v8689 = vunpack.c.l.b16 %v8450
  %v8690 = vunpack.c.h.b16 %v8450
  %v8691 = vunpack.c.l.b16 %v8451
  %v8692 = vunpack.c.h.b16 %v8451
  %v8693 = vunpack.c.l.b16 %v8452
  %v8694 = vunpack.c.h.b16 %v8452
  %v8695 = vunpack.c.l.b16 %v8453
  %v8696 = vunpack.c.h.b16 %v8453
  %v8697 = vunpack.c.l.b16 %v8454
  %v8698 = vunpack.c.h.b16 %v8454
  %v8699 = vunpack.c.l.b16 %v8455
  %v8700 = vunpack.c.h.b16 %v8455
  %v8701 = vunpack.c.l.b16 %v8456
  %v8702 = vunpack.c.h.b16 %v8456
  %v8703 = vunpack.c.l.b16 %v8457
  %v8704 = vunpack.c.h.b16 %v8457
  %v8705 = vunpack.c.l.b16 %v8458
  %v8706 = vunpack.c.h.b16 %v8458
  %v8707 = vunpack.c.l.b16 %v8459
  %v8708 = vunpack.c.h.b16 %v8459
  %v8709 = vunpack.c.l.b16 %v8460
  %v8710 = vunpack.c.h.b16 %v8460
  %v8711 = vunpack.c.l.b16 %v8461
  %v8712 = vunpack.c.h.b16 %v8461
  %v8713 = vunpack.c.l.b16 %v8462
  %v8714 = vunpack.c.h.b16 %v8462
  %v8715 = vunpack.c.l.b16 %v8463
  %v8716 = vunpack.c.h.b16 %v8463
  %v8717 = vunpack.c.l.b16 %v8464
  %v8718 = vunpack.c.h.b16 %v8464
  %v8719 = vunpack.c.l.b16 %v8465
  %v8720 = vunpack.c.h.b16 %v8465
  %v8721 = vunpack.c.l.b16 %v8466
  %v8722 = vunpack.c.h.b16 %v8466
  %v8723 = vunpack.c.l.b16 %v8467
  %v8724 = vunpack.c.h.b16 %v8467
  %v8725 = vunpack.c.l.b16 %v8468
  %v8726 = vunpack.c.h.b16 %v8468
  %v8727 = vunpack.c.l.b16 %v8469
  %v8728 = vunpack.c.h.b16 %v8469
  %v8729 = vunpack.c.l.b16 %v8470
  %v8730 = vunpack.c.h.b16 %v8470
  %v8731 = vunpack.c.l.b16 %v8471
  %v8732 = vunpack.c.h.b16 %v8471
  %v8733 = vunpack.c.l.b16 %v8472
  %v8734 = vunpack.c.h.b16 %v8472
  %v8735 = vunpack.c.l.b16 %v8473
  %v8736 = vunpack.c.h.b16 %v8473
  %v8737 = vunpack.c.l.b16 %v8474
  %v8738 = vunpack.c.h.b16 %v8474
  %v8739 = vunpack.c.l.b16 %v8475
  %v8740 = vunpack.c.h.b16 %v8475
  %v8741 = vunpack.c.l.b16 %v8476
  %v8742 = vunpack.c.h.b16 %v8476
  %v8743 = vunpack.c.l.b16 %v8477
  %v8744 = vunpack.c.h.b16 %v8477
  %v8745 = vunpack.c.l.b16 %v8478
  %v8746 = vunpack.c.h.b16 %v8478
  %v8747 = vunpack.c.l.b16 %v8479
  %v8748 = vunpack.c.h.b16 %v8479
  %v8749 = vunpack.c.l.b16 %v8480
  %v8750 = vunpack.c.h.b16 %v8480
  %v8751 = vunpack.c.l.b16 %v8481
  %v8752 = vunpack.c.h.b16 %v8481
  %v8753 = vunpack.c.l.b16 %v8482
  %v8754 = vunpack.c.h.b16 %v8482
  %v8755 = vunpack.c.l.b16 %v8483
  %v8756 = vunpack.c.h.b16 %v8483
  %v8757 = vunpack.c.l.b16 %v8484
  %v8758 = vunpack.c.h.b16 %v8484
  %v8759 = vunpack.c.l.b16 %v8485
  %v8760 = vunpack.c.h.b16 %v8485
  %v8761 = vunpack.c.l.b16 %v8486
  %v8762 = vunpack.c.h.b16 %v8486
  %v8763 = vunpack.c.l.b16 %v8487
  %v8764 = vunpack.c.h.b16 %v8487
  %v8765 = vunpack.c.l.b16 %v8488
  %v8766 = vunpack.c.h.b16 %v8488
  %v8767 = vunpack.c.l.b16 %v8489
  %v8768 = vunpack.c.h.b16 %v8489
  %v8769 = vunpack.c.l.b16 %v8490
  %v8770 = vunpack.c.h.b16 %v8490
  %v8771 = vunpack.c.l.b16 %v8491
  %v8772 = vunpack.c.h.b16 %v8491
  %v8773 = vunpack.c.l.b16 %v8492
  %v8774 = vunpack.c.h.b16 %v8492
  %v8775 = vunpack.c.l.b16 %v8493
  %v8776 = vunpack.c.h.b16 %v8493
  %v8777 = vunpack.c.l.b16 %v8494
  %v8778 = vunpack.c.h.b16 %v8494
  %v8779 = vunpack.c.l.b16 %v8495
  %v8780 = vunpack.c.h.b16 %v8495
  %v8781 = vunpack.c.l.b16 %v8496
  %v8782 = vunpack.c.h.b16 %v8496
  %v8783 = vunpack.c.l.b16 %v8497
  %v8784 = vunpack.c.h.b16 %v8497
  %v8785 = vunpack.c.l.b16 %v8498
  %v8786 = vunpack.c.h.b16 %v8498
  %v8787 = vunpack.c.l.b16 %v8499
  %v8788 = vunpack.c.h.b16 %v8499
  %v8789 = vunpack.c.l.b16 %v8500
  %v8790 = vunpack.c.h.b16 %v8500
  %v8791 = vunpack.c.l.b16 %v8501
  %v8792 = vunpack.c.h.b16 %v8501
  %v8793 = vunpack.c.l.b16 %v8502
  %v8794 = vunpack.c.h.b16 %v8502
  %v8795 = vunpack.c.l.b16 %v8503
  %v8796 = vunpack.c.h.b16 %v8503
  %v8797 = vunpack.c.l.b16 %v8504
  %v8798 = vunpack.c.h.b16 %v8504
  %v8799 = vunpack.c.l.b16 %v8505
  %v8800 = vunpack.c.h.b16 %v8505
  %v8801 = vunpack.c.l.b16 %v8506
  %v8802 = vunpack.c.h.b16 %v8506
  %v8803 = vunpack.c.l.b16 %v8507
  %v8804 = vunpack.c.h.b16 %v8507
  %v8805 = vunpack.c.l.b16 %v8508
  %v8806 = vunpack.c.h.b16 %v8508
  %v8807 = vunpack.c.l.b16 %v8509
  %v8808 = vunpack.c.h.b16 %v8509
  %v8809 = vunpack.c.l.b16 %v8510
  %v8810 = vunpack.c.h.b16 %v8510
  %v8811 = vunpack.c.l.b16 %v8511
  %v8812 = vunpack.c.h.b16 %v8511
  %v8813 = vunpack.c.l.b16 %v8512
  %v8814 = vunpack.c.h.b16 %v8512
  %v8815 = vunpack.c.l.b16 %v8513
  %v8816 = vunpack.c.h.b16 %v8513
  %v8817 = vunpack.c.l.b16 %v8514
  %v8818 = vunpack.c.h.b16 %v8514
  %v8819 = vunpack.c.l.b16 %v8515
  %v8820 = vunpack.c.h.b16 %v8515
  %v8821 = vunpack.c.l.b16 %v8516
  %v8822 = vunpack.c.h.b16 %v8516
  %v8823 = vunpack.c.l.b16 %v8517
  %v8824 = vunpack.c.h.b16 %v8517
  %v8825 = vunpack.c.l.b16 %v8518
  %v8826 = vunpack.c.h.b16 %v8518
  %v8827 = vunpack.c.l.b16 %v8519
  %v8828 = vunpack.c.h.b16 %v8519
  %v8829 = vunpack.c.l.b16 %v8520
  %v8830 = vunpack.c.h.b16 %v8520
  %v8831 = vunpack.c.l.b16 %v8521
  %v8832 = vunpack.c.h.b16 %v8521
  %v8833 = vunpack.c.l.b16 %v8522
  %v8834 = vunpack.c.h.b16 %v8522
  %v8835 = vunpack.c.l.b16 %v8523
  %v8836 = vunpack.c.h.b16 %v8523
  %v8837 = vunpack.c.l.b16 %v8524
  %v8838 = vunpack.c.h.b16 %v8524
  %v8839 = vunpack.c.l.b16 %v8525
  %v8840 = vunpack.c.h.b16 %v8525
  %v8841 = vunpack.c.l.b16 %v8526
  %v8842 = vunpack.c.h.b16 %v8526
  %v8843 = vunpack.c.l.b16 %v8527
  %v8844 = vunpack.c.h.b16 %v8527
  %v8845 = vunpack.c.l.b16 %v8528
  %v8846 = vunpack.c.h.b16 %v8528
  %v8847 = vunpack.c.l.b16 %v8529
  %v8848 = vunpack.c.h.b16 %v8529
  %v8849 = vunpack.c.l.b16 %v8530
  %v8850 = vunpack.c.h.b16 %v8530
  %v8851 = vunpack.c.l.b16 %v8531
  %v8852 = vunpack.c.h.b16 %v8531
  %v8853 = vunpack.c.l.b16 %v8532
  %v8854 = vunpack.c.h.b16 %v8532
  %v8855 = vunpack.c.l.b16 %v8533
  %v8856 = vunpack.c.h.b16 %v8533
  %v8857 = vunpack.c.l.b16 %v8534
  %v8858 = vunpack.c.h.b16 %v8534
  %v8859 = vunpack.c.l.b16 %v8535
  %v8860 = vunpack.c.h.b16 %v8535
  %v8861 = vunpack.c.l.b16 %v8536
  %v8862 = vunpack.c.h.b16 %v8536
  %v8863 = vunpack.c.l.b16 %v8537
  %v8864 = vunpack.c.h.b16 %v8537
  %v8865 = vunpack.c.l.b16 %v8538
  %v8866 = vunpack.c.h.b16 %v8538
  %v8867 = vunpack.c.l.b16 %v8539
  %v8868 = vunpack.c.h.b16 %v8539
  %v8869 = vunpack.c.l.b16 %v8540
  %v8870 = vunpack.c.h.b16 %v8540
  %v8871 = vunpack.c.l.b16 %v8541
  %v8872 = vunpack.c.h.b16 %v8541
  %v8873 = vunpack.c.l.b16 %v8542
  %v8874 = vunpack.c.h.b16 %v8542
  %v8875 = vunpack.c.l.b16 %v8543
  %v8876 = vunpack.c.h.b16 %v8543
  %v8877 = vunpack.c.l.b16 %v8544
  %v8878 = vunpack.c.h.b16 %v8544
  %v8879 = vunpack.c.l.b16 %v8545
  %v8880 = vunpack.c.h.b16 %v8545
  %v8881 = vunpack.c.l.b16 %v8546
  %v8882 = vunpack.c.h.b16 %v8546
  %v8883 = vunpack.c.l.b16 %v8547
  %v8884 = vunpack.c.h.b16 %v8547
  %v8885 = vunpack.c.l.b16 %v8548
  %v8886 = vunpack.c.h.b16 %v8548
  %v8887 = vunpack.c.l.b16 %v8549
  %v8888 = vunpack.c.h.b16 %v8549
  %v8889 = vunpack.c.l.b16 %v8550
  %v8890 = vunpack.c.h.b16 %v8550
  %v8891 = vunpack.c.l.b16 %v8551
  %v8892 = vunpack.c.h.b16 %v8551
  %v8893 = vunpack.c.l.b16 %v8552
  %v8894 = vunpack.c.h.b16 %v8552
  %v8895 = vunpack.c.l.b16 %v8553
  %v8896 = vunpack.c.h.b16 %v8553
  %v8897 = vunpack.c.l.b16 %v8554
  %v8898 = vunpack.c.h.b16 %v8554
  %v8899 = vunpack.c.l.b16 %v8555
  %v8900 = vunpack.c.h.b16 %v8555
  %v8901 = vunpack.c.l.b16 %v8556
  %v8902 = vunpack.c.h.b16 %v8556
  %v8903 = vunpack.c.l.b16 %v8557
  %v8904 = vunpack.c.h.b16 %v8557
  %v8905 = vpack.c.b16 %v8685, %v8681
  %v8906 = vpack.c.b16 %v8686, %v8682
  %v8907 = vpack.c.b16 %v8687, %v8683
  %v8908 = vpack.c.b16 %v8688, %v8684
  %v8909 = vpack.c.b16 %v8693, %v8689
  %v8910 = vpack.c.b16 %v8694, %v8690
  %v8911 = vpack.c.b16 %v8695, %v8691
  %v8912 = vpack.c.b16 %v8696, %v8692
  %v8913 = vpack.c.b16 %v8701, %v8697
  %v8914 = vpack.c.b16 %v8702, %v8698
  %v8915 = vpack.c.b16 %v8703, %v8699
  %v8916 = vpack.c.b16 %v8704, %v8700
  %v8917 = vpack.c.b16 %v8709, %v8705
  %v8918 = vpack.c.b16 %v8710, %v8706
  %v8919 = vpack.c.b16 %v8711, %v8707
  %v8920 = vpack.c.b16 %v8712, %v8708
  %v8921 = vpack.c.b16 %v8717, %v8713
  %v8922 = vpack.c.b16 %v8718, %v8714
  %v8923 = vpack.c.b16 %v8719, %v8715
  %v8924 = vpack.c.b16 %v8720, %v8716
  %v8925 = vpack.c.b16 %v8725, %v8721
  %v8926 = vpack.c.b16 %v8726, %v8722
  %v8927 = vpack.c.b16 %v8727, %v8723
  %v8928 = vpack.c.b16 %v8728, %v8724
  %v8929 = vpack.c.b16 %v8733, %v8729
  %v8930 = vpack.c.b16 %v8734, %v8730
  %v8931 = vpack.c.b16 %v8735, %v8731
  %v8932 = vpack.c.b16 %v8736, %v8732
  %v8933 = vpack.c.b16 %v8741, %v8737
  %v8934 = vpack.c.b16 %v8742, %v8738
  %v8935 = vpack.c.b16 %v8743, %v8739
  %v8936 = vpack.c.b16 %v8744, %v8740
  %v8937 = vpack.c.b16 %v8749, %v8745
  %v8938 = vpack.c.b16 %v8750, %v8746
  %v8939 = vpack.c.b16 %v8751, %v8747
  %v8940 = vpack.c.b16 %v8752, %v8748
  %v8941 = vpack.c.b16 %v8757, %v8753
  %v8942 = vpack.c.b16 %v8758, %v8754
  %v8943 = vpack.c.b16 %v8759, %v8755
  %v8944 = vpack.c.b16 %v8760, %v8756
  %v8945 = vpack.c.b16 %v8765, %v8761
  %v8946 = vpack.c.b16 %v8766, %v8762
  %v8947 = vpack.c.b16 %v8767, %v8763
  %v8948 = vpack.c.b16 %v8768, %v8764
  %v8949 = vpack.c.b16 %v8773, %v8769
  %v8950 = vpack.c.b16 %v8774, %v8770
  %v8951 = vpack.c.b16 %v8775, %v8771
  %v8952 = vpack.c.b16 %v8776, %v8772
  %v8953 = vpack.c.b16 %v8781, %v8777
  %v8954 = vpack.c.b16 %v8782, %v8778
  %v8955 = vpack.c.b16 %v8783, %v8779
  %v8956 = vpack.c.b16 %v8784, %v8780
  %v8957 = vpack.c.b16 %v8789, %v8785
  %v8958 = vpack.c.b16 %v8790, %v8786
  %v8959 = vpack.c.b16 %v8791, %v8787
  %v8960 = vpack.c.b16 %v8792, %v8788
  %v8961 = vpack.c.b16 %v8797, %v8793
  %v8962 = vpack.c.b16 %v8798, %v8794
  %v8963 = vpack.c.b16 %v8799, %v8795
  %v8964 = vpack.c.b16 %v8800, %v8796
  %v8965 = vpack.c.b16 %v8805, %v8801
  %v8966 = vpack.c.b16 %v8806, %v8802
  %v8967 = vpack.c.b16 %v8807, %v8803
  %v8968 = vpack.c.b16 %v8808, %v8804
  %v8969 = vpack.c.b16 %v8813, %v8809
  %v8970 = vpack.c.b16 %v8814, %v8810
  %v8971 = vpack.c.b16 %v8815, %v8811
  %v8972 = vpack.c.b16 %v8816, %v8812
  %v8973 = vpack.c.b16 %v8821, %v8817
  %v8974 = vpack.c.b16 %v8822, %v8818
  %v8975 = vpack.c.b16 %v8823, %v8819
  %v8976 = vpack.c.b16 %v8824, %v8820
  %v8977 = vpack.c.b16 %v8829, %v8825
  %v8978 = vpack.c.b16 %v8830, %v8826
  %v8979 = vpack.c.b16 %v8831, %v8827
  %v8980 = vpack.c.b16 %v8832, %v8828
  %v8981 = vpack.c.b16 %v8837, %v8833
  %v8982 = vpack.c.b16 %v8838, %v8834
  %v8983 = vpack.c.b16 %v8839, %v8835
  %v8984 = vpack.c.b16 %v8840, %v8836
  %v8985 = vpack.c.b16 %v8845, %v8841
  %v8986 = vpack.c.b16 %v8846, %v8842
  %v8987 = vpack.c.b16 %v8847, %v8843
  %v8988 = vpack.c.b16 %v8848, %v8844
  %v8989 = vpack.c.b16 %v8853, %v8849
  %v8990 = vpack.c.b16 %v8854, %v8850
  %v8991 = vpack.c.b16 %v8855, %v8851
  %v8992 = vpack.c.b16 %v8856, %v8852
  %v8993 = vpack.c.b16 %v8861, %v8857
  %v8994 = vpack.c.b16 %v8862, %v8858
  %v8995 = vpack.c.b16 %v8863, %v8859
  %v8996 = vpack.c.b16 %v8864, %v8860
  %v8997 = vpack.c.b16 %v8869, %v8865
  %v8998 = vpack.c.b16 %v8870, %v8866
  %v8999 = vpack.c.b16 %v8871, %v8867
  %v9000 = vpack.c.b16 %v8872, %v8868
  %v9001 = vpack.c.b16 %v8877, %v8873
  %v9002 = vpack.c.b16 %v8878, %v8874
  %v9003 = vpack.c.b16 %v8879, %v8875
  %v9004 = vpack.c.b16 %v8880, %v8876
  %v9005 = vpack.c.b16 %v8885, %v8881
  %v9006 = vpack.c.b16 %v8886, %v8882
  %v9007 = vpack.c.b16 %v8887, %v8883
  %v9008 = vpack.c.b16 %v8888, %v8884
  %v9009 = vpack.c.b16 %v8893, %v8889
  %v9010 = vpack.c.b16 %v8894, %v8890
  %v9011 = vpack.c.b16 %v8895, %v8891
  %v9012 = vpack.c.b16 %v8896, %v8892
  %v9013 = vpack.c.b16 %v8901, %v8897
  %v9014 = vpack.c.b16 %v8902, %v8898
  %v9015 = vpack.c.b16 %v8903, %v8899
  %v9016 = vpack.c.b16 %v8904, %v8900
  %v9130 = vsel %vm537, %v8565, 0
  %9132 = vmatprep.subr.bf16.mxu0 %v8906
  %9133 = vmatpush1.bf16.msra.mxu0 %v8905
  %9134 = vmatprep.subr.bf16.mxu0 %v8910
  %9135 = vmatpush1.bf16.msra.mxu0 %v8909
  %9136 = vmatprep.subr.bf16.mxu0 %v8914
  %9137 = vmatpush1.bf16.msra.mxu0 %v8913
  %9138 = vmatprep.subr.bf16.mxu0 %v8918
  %9139 = vmatpush1.bf16.msra.mxu0 %v8917
  %9140 = vmatprep.subr.bf16.mxu0 %v8922
  %9141 = vmatpush1.bf16.msra.mxu0 %v8921
  %9142 = vmatprep.subr.bf16.mxu0 %v8926
  %9143 = vmatpush1.bf16.msra.mxu0 %v8925
  %9144 = vmatprep.subr.bf16.mxu0 %v8930
  %9145 = vmatpush1.bf16.msra.mxu0 %v8929
  %9146 = vmatprep.subr.bf16.mxu0 %v8934
  %9147 = vmatpush1.bf16.msra.mxu0 %v8933
  %9148 = vmatprep.subr.bf16.mxu0 %v8938
  %9149 = vmatpush1.bf16.msra.mxu0 %v8937
  %9150 = vmatprep.subr.bf16.mxu0 %v8942
  %9151 = vmatpush1.bf16.msra.mxu0 %v8941
  %9152 = vmatprep.subr.bf16.mxu0 %v8946
  %9153 = vmatpush1.bf16.msra.mxu0 %v8945
  %9154 = vmatprep.subr.bf16.mxu0 %v8950
  %9155 = vmatpush1.bf16.msra.mxu0 %v8949
  %9156 = vmatprep.subr.bf16.mxu0 %v8954
  %9157 = vmatpush1.bf16.msra.mxu0 %v8953
  %9158 = vmatprep.subr.bf16.mxu0 %v8958
  %9159 = vmatpush1.bf16.msra.mxu0 %v8957
  %9160 = vmatprep.subr.bf16.mxu0 %v8962
  %9161 = vmatpush1.bf16.msra.mxu0 %v8961
  %9162 = vmatprep.subr.bf16.mxu0 %v8966
  %9163 = vmatpush1.bf16.msra.mxu0 %v8965
  %9164 = vmatprep.mubr.bf16.mxu0 %v8563
  %9165 = vmatmul.mubr.bf16.gmra.mrb[0].mxu0 %v8562
  %v9166 = vpop.f32.mrb[0].mxu0
  %v9167 = vadd.f32 0.0, %v9166
  %v9168 = vpop.f32.mrb[0].mxu0
  %v9169 = vadd.f32 0.0, %v9168
  %v9170 = vpop.f32.mrb[0].mxu0
  %v9171 = vpop.f32.mrb[0].mxu0
  %9172 = vdwg.mxu0
  %9173 = vmatprep.subr.bf16.mxu0 %v8970
  %9174 = vmatpush1.bf16.msra.mxu0 %v8969
  %9175 = vmatprep.subr.bf16.mxu0 %v8974
  %9176 = vmatpush1.bf16.msra.mxu0 %v8973
  %9177 = vmatprep.subr.bf16.mxu0 %v8978
  %9178 = vmatpush1.bf16.msra.mxu0 %v8977
  %9179 = vmatprep.subr.bf16.mxu0 %v8982
  %9180 = vmatpush1.bf16.msra.mxu0 %v8981
  %9181 = vmatprep.subr.bf16.mxu0 %v8986
  %9182 = vmatpush1.bf16.msra.mxu0 %v8985
  %9183 = vmatprep.subr.bf16.mxu0 %v8990
  %9184 = vmatpush1.bf16.msra.mxu0 %v8989
  %9185 = vmatprep.subr.bf16.mxu0 %v8994
  %9186 = vmatpush1.bf16.msra.mxu0 %v8993
  %9187 = vmatprep.subr.bf16.mxu0 %v8998
  %9188 = vmatpush1.bf16.msra.mxu0 %v8997
  %9189 = vmatprep.subr.bf16.mxu0 %v9002
  %9190 = vmatpush1.bf16.msra.mxu0 %v9001
  %9191 = vmatprep.subr.bf16.mxu0 %v9006
  %9192 = vmatpush1.bf16.msra.mxu0 %v9005
  %9193 = vmatprep.subr.bf16.mxu0 %v9010
  %9194 = vmatpush1.bf16.msra.mxu0 %v9009
  %9195 = vmatprep.subr.bf16.mxu0 %v9014
  %9196 = vmatpush1.bf16.msra.mxu0 %v9013
  %9197 = vmatprep.subr.bf16.mxu0 0
  %9198 = vmatpush1.bf16.msra.mxu0 0
  %9199 = vmatprep.subr.bf16.mxu0 0
  %9200 = vmatpush1.bf16.msra.mxu0 0
  %9201 = vmatprep.subr.bf16.mxu0 0
  %9202 = vmatpush1.bf16.msra.mxu0 0
  %9203 = vmatprep.subr.bf16.mxu0 0
  %9204 = vmatpush1.bf16.msra.mxu0 0
  %9205 = vmatprep.mubr.bf16.mxu0 %v9130
  %9206 = vmatmul.mubr.bf16.gmra.mrb[0].mxu0 %v8564
  %v9207 = vpop.f32.mrb[0].mxu0
  %v9208 = vadd.f32 %v9167, %v9207
  %v9209 = vpop.f32.mrb[0].mxu0
  %v9210 = vadd.f32 %v9169, %v9209
  %v9211 = vpop.f32.mrb[0].mxu0
  %v9212 = vpop.f32.mrb[0].mxu0
  %9213 = vdwg.mxu0
  %9214 = vmatprep.subr.bf16.mxu0 %v8908
  %9215 = vmatpush1.bf16.msra.mxu0 %v8907
  %9216 = vmatprep.subr.bf16.mxu0 %v8912
  %9217 = vmatpush1.bf16.msra.mxu0 %v8911
  %9218 = vmatprep.subr.bf16.mxu0 %v8916
  %9219 = vmatpush1.bf16.msra.mxu0 %v8915
  %9220 = vmatprep.subr.bf16.mxu0 %v8920
  %9221 = vmatpush1.bf16.msra.mxu0 %v8919
  %9222 = vmatprep.subr.bf16.mxu0 %v8924
  %9223 = vmatpush1.bf16.msra.mxu0 %v8923
  %9224 = vmatprep.subr.bf16.mxu0 %v8928
  %9225 = vmatpush1.bf16.msra.mxu0 %v8927
  %9226 = vmatprep.subr.bf16.mxu0 %v8932
  %9227 = vmatpush1.bf16.msra.mxu0 %v8931
  %9228 = vmatprep.subr.bf16.mxu0 %v8936
  %9229 = vmatpush1.bf16.msra.mxu0 %v8935
  %9230 = vmatprep.subr.bf16.mxu0 %v8940
  %9231 = vmatpush1.bf16.msra.mxu0 %v8939
  %9232 = vmatprep.subr.bf16.mxu0 %v8944
  %9233 = vmatpush1.bf16.msra.mxu0 %v8943
  %9234 = vmatprep.subr.bf16.mxu0 %v8948
  %9235 = vmatpush1.bf16.msra.mxu0 %v8947
  %9236 = vmatprep.subr.bf16.mxu0 %v8952
  %9237 = vmatpush1.bf16.msra.mxu0 %v8951
  %9238 = vmatprep.subr.bf16.mxu0 %v8956
  %9239 = vmatpush1.bf16.msra.mxu0 %v8955
  %9240 = vmatprep.subr.bf16.mxu0 %v8960
  %9241 = vmatpush1.bf16.msra.mxu0 %v8959
  %9242 = vmatprep.subr.bf16.mxu0 %v8964
  %9243 = vmatpush1.bf16.msra.mxu0 %v8963
  %9244 = vmatprep.subr.bf16.mxu0 %v8968
  %9245 = vmatpush1.bf16.msra.mxu0 %v8967
  %9246 = vmatprep.mubr.bf16.mxu0 %v8563
  %9247 = vmatmul.mubr.bf16.gmra.mrb[0].mxu0 %v8562
  %v9248 = vpop.f32.mrb[0].mxu0
  %v9249 = vadd.f32 0.0, %v9248
  %v9250 = vpop.f32.mrb[0].mxu0
  %v9251 = vadd.f32 0.0, %v9250
  %v9252 = vpop.f32.mrb[0].mxu0
  %v9253 = vpop.f32.mrb[0].mxu0
  %9254 = vdwg.mxu0
  %9255 = vmatprep.subr.bf16.mxu0 %v8972
  %9256 = vmatpush1.bf16.msra.mxu0 %v8971
  %9257 = vmatprep.subr.bf16.mxu0 %v8976
  %9258 = vmatpush1.bf16.msra.mxu0 %v8975
  %9259 = vmatprep.subr.bf16.mxu0 %v8980
  %9260 = vmatpush1.bf16.msra.mxu0 %v8979
  %9261 = vmatprep.subr.bf16.mxu0 %v8984
  %9262 = vmatpush1.bf16.msra.mxu0 %v8983
  %9263 = vmatprep.subr.bf16.mxu0 %v8988
  %9264 = vmatpush1.bf16.msra.mxu0 %v8987
  %9265 = vmatprep.subr.bf16.mxu0 %v8992
  %9266 = vmatpush1.bf16.msra.mxu0 %v8991
  %9267 = vmatprep.subr.bf16.mxu0 %v8996
  %9268 = vmatpush1.bf16.msra.mxu0 %v8995
  %9269 = vmatprep.subr.bf16.mxu0 %v9000
  %9270 = vmatpush1.bf16.msra.mxu0 %v8999
  %9271 = vmatprep.subr.bf16.mxu0 %v9004
  %9272 = vmatpush1.bf16.msra.mxu0 %v9003
  %9273 = vmatprep.subr.bf16.mxu0 %v9008
  %9274 = vmatpush1.bf16.msra.mxu0 %v9007
  %9275 = vmatprep.subr.bf16.mxu0 %v9012
  %9276 = vmatpush1.bf16.msra.mxu0 %v9011
  %9277 = vmatprep.subr.bf16.mxu0 %v9016
  %9278 = vmatpush1.bf16.msra.mxu0 %v9015
  %9279 = vmatprep.subr.bf16.mxu0 0
  %9280 = vmatpush1.bf16.msra.mxu0 0
  %9281 = vmatprep.subr.bf16.mxu0 0
  %9282 = vmatpush1.bf16.msra.mxu0 0
  %9283 = vmatprep.subr.bf16.mxu0 0
  %9284 = vmatpush1.bf16.msra.mxu0 0
  %9285 = vmatprep.subr.bf16.mxu0 0
  %9286 = vmatpush1.bf16.msra.mxu0 0
  %9287 = vmatprep.mubr.bf16.mxu0 %v9130
  %9288 = vmatmul.mubr.bf16.gmra.mrb[0].mxu0 %v8564
  %v9289 = vpop.f32.mrb[0].mxu0
  %v9290 = vadd.f32 %v9249, %v9289
  %v9291 = vpop.f32.mrb[0].mxu0
  %v9292 = vadd.f32 %v9251, %v9291
  %v9293 = vpop.f32.mrb[0].mxu0
  %v9294 = vpop.f32.mrb[0].mxu0
  %9295 = vdwg.mxu0
  %v9296 = vadd.f32 %v8350, %v9208
  %v9297 = vadd.f32 %v8352, %v9210
  %v9298 = vadd.f32 %v8432, %v9290
  %v9299 = vadd.f32 %v8434, %v9292
  %v9300 = vld [vmem:[#allocation4] sm:$0xc0]
  %v9301 = vld [vmem:[#allocation4 + $0x8] sm:$0xc0]
  %v9302 = vld [vmem:[#allocation4 + $0x10] sm:$0xc0]
  %v9303 = vld [vmem:[#allocation4 + $0x18] sm:$0xc0]
  %v9304 = vpack.c.bf16 %v9300, %v9300
  %v9305 = vpack.c.bf16 %v9301, %v9301
  %v9306 = vpack.c.bf16 %v9302, %v9302
  %v9307 = vpack.c.bf16 %v9303, %v9303
  %v9308 = vld [vmem:[%s4 + $0xa80] sm:$0xff]
  %v9309 = vld [vmem:[%s4 + $0xa88] sm:$0xff]
  %v9310 = vld [vmem:[%s4 + $0xa90] sm:$0xff]
  %v9311 = vld [vmem:[%s4 + $0xa98] sm:$0xff]
  %v9312 = vld [vmem:[%s4 + $0xaa0] sm:$0xff]
  %v9313 = vld [vmem:[%s4 + $0xaa8] sm:$0xff]
  %v9314 = vld [vmem:[%s4 + $0xab0] sm:$0xff]
  %v9315 = vld [vmem:[%s4 + $0xab8] sm:$0xff]
  %v9316 = vld [vmem:[%s4 + $0xac0] sm:$0xff]
  %v9317 = vld [vmem:[%s4 + $0xac8] sm:$0xff]
  %v9318 = vld [vmem:[%s4 + $0xad0] sm:$0xff]
  %v9319 = vld [vmem:[%s4 + $0xad8] sm:$0xff]
  %v9320 = vld [vmem:[%s4 + $0xae0] sm:$0xff]
  %v9321 = vld [vmem:[%s4 + $0xae8] sm:$0xff]
  %v9322 = vld [vmem:[%s4 + $0xaf0] sm:$0xff]
  %v9323 = vld [vmem:[%s4 + $0xaf8] sm:$0xff]
  %v9324 = vld [vmem:[%s4 + $0xb00] sm:$0xff]
  %v9325 = vld [vmem:[%s4 + $0xb08] sm:$0xff]
  %v9326 = vld [vmem:[%s4 + $0xb10] sm:$0xff]
  %v9327 = vld [vmem:[%s4 + $0xb18] sm:$0xff]
  %v9328 = vld [vmem:[%s4 + $0xb20] sm:$0xff]
  %v9329 = vld [vmem:[%s4 + $0xb28] sm:$0xff]
  %v9330 = vld [vmem:[%s4 + $0xb30] sm:$0xff]
  %v9331 = vld [vmem:[%s4 + $0xb38] sm:$0xff]
  %v9332 = vld [vmem:[%s4 + $0xb40] sm:$0xff]
  %v9333 = vld [vmem:[%s4 + $0xb48] sm:$0xff]
  %v9334 = vld [vmem:[%s4 + $0xb50] sm:$0xff]
  %v9335 = vld [vmem:[%s4 + $0xb58] sm:$0xff]
  %v9336 = vld [vmem:[%s4 + $0xb60] sm:$0xff]
  %v9337 = vld [vmem:[%s4 + $0xb68] sm:$0xff]
  %v9338 = vld [vmem:[%s4 + $0xb70] sm:$0xff]
  %v9339 = vld [vmem:[%s4 + $0xb78] sm:$0xff]
  %v9340 = vld [vmem:[%s4 + $0xb80] sm:$0xff]
  %v9341 = vld [vmem:[%s4 + $0xb88] sm:$0xff]
  %v9342 = vld [vmem:[%s4 + $0xb90] sm:$0xff]
  %v9343 = vld [vmem:[%s4 + $0xb98] sm:$0xff]
  %v9344 = vld [vmem:[%s4 + $0xba0] sm:$0xff]
  %v9345 = vld [vmem:[%s4 + $0xba8] sm:$0xff]
  %v9346 = vld [vmem:[%s4 + $0xbb0] sm:$0xff]
  %v9347 = vld [vmem:[%s4 + $0xbb8] sm:$0xff]
  %v9348 = vld [vmem:[%s4 + $0xbc0] sm:$0xff]
  %v9349 = vld [vmem:[%s4 + $0xbc8] sm:$0xff]
  %v9350 = vld [vmem:[%s4 + $0xbd0] sm:$0xff]
  %v9351 = vld [vmem:[%s4 + $0xbd8] sm:$0xff]
  %v9352 = vld [vmem:[%s4 + $0xbe0] sm:$0xff]
  %v9353 = vld [vmem:[%s4 + $0xbe8] sm:$0xff]
  %v9354 = vld [vmem:[%s4 + $0xbf0] sm:$0xff]
  %v9355 = vld [vmem:[%s4 + $0xbf8] sm:$0xff]
  %v9356 = vld [vmem:[%s4 + $0xc00] sm:$0xff]
  %v9357 = vld [vmem:[%s4 + $0xc08] sm:$0xff]
  %v9358 = vld [vmem:[%s4 + $0xc10] sm:$0xff]
  %v9359 = vld [vmem:[%s4 + $0xc18] sm:$0xff]
  %v9360 = vld [vmem:[%s4 + $0xc20] sm:$0xff]
  %v9361 = vld [vmem:[%s4 + $0xc28] sm:$0xff]
  %v9362 = vld [vmem:[%s4 + $0xc30] sm:$0xff]
  %v9363 = vld [vmem:[%s4 + $0xc38] sm:$0xff]
  %v9364 = vld [vmem:[%s4 + $0xc40] sm:$0xff]
  %v9365 = vld [vmem:[%s4 + $0xc48] sm:$0xff]
  %v9366 = vld [vmem:[%s4 + $0xc50] sm:$0xff]
  %v9367 = vld [vmem:[%s4 + $0xc58] sm:$0xff]
  %v9368 = vld [vmem:[%s4 + $0xc60] sm:$0xff]
  %v9369 = vld [vmem:[%s4 + $0xc68] sm:$0xff]
  %v9370 = vld [vmem:[%s4 + $0xc70] sm:$0xff]
  %v9371 = vld [vmem:[%s4 + $0xc78] sm:$0xff]
  %v9372 = vld [vmem:[%s4 + $0xc80] sm:$0xff]
  %v9373 = vld [vmem:[%s4 + $0xc88] sm:$0xff]
  %v9374 = vld [vmem:[%s4 + $0xc90] sm:$0xff]
  %v9375 = vld [vmem:[%s4 + $0xc98] sm:$0xff]
  %v9376 = vld [vmem:[%s4 + $0xca0] sm:$0xff]
  %v9377 = vld [vmem:[%s4 + $0xca8] sm:$0xff]
  %v9378 = vld [vmem:[%s4 + $0xcb0] sm:$0xff]
  %v9379 = vld [vmem:[%s4 + $0xcb8] sm:$0xff]
  %v9380 = vld [vmem:[%s4 + $0xcc0] sm:$0xff]
  %v9381 = vld [vmem:[%s4 + $0xcc8] sm:$0xff]
  %v9382 = vld [vmem:[%s4 + $0xcd0] sm:$0xff]
  %v9383 = vld [vmem:[%s4 + $0xcd8] sm:$0xff]
  %v9384 = vld [vmem:[%s4 + $0xce0] sm:$0xff]
  %v9385 = vld [vmem:[%s4 + $0xce8] sm:$0xff]
  %v9386 = vld [vmem:[%s4 + $0xcf0] sm:$0xff]
  %v9387 = vld [vmem:[%s4 + $0xcf8] sm:$0xff]
  %v9388 = vld [vmem:[%s4 + $0xd00] sm:$0xff]
  %v9389 = vld [vmem:[%s4 + $0xd08] sm:$0xff]
  %v9390 = vld [vmem:[%s4 + $0xd10] sm:$0xff]
  %v9391 = vld [vmem:[%s4 + $0xd18] sm:$0xff]
  %v9392 = vld [vmem:[%s4 + $0xd20] sm:$0xff]
  %v9393 = vld [vmem:[%s4 + $0xd28] sm:$0xff]
  %v9394 = vld [vmem:[%s4 + $0xd30] sm:$0xff]
  %v9395 = vld [vmem:[%s4 + $0xd38] sm:$0xff]
  %v9396 = vld [vmem:[%s4 + $0xd40] sm:$0xff]
  %v9397 = vld [vmem:[%s4 + $0xd48] sm:$0xff]
  %v9398 = vld [vmem:[%s4 + $0xd50] sm:$0xff]
  %v9399 = vld [vmem:[%s4 + $0xd58] sm:$0xff]
  %v9400 = vld [vmem:[%s4 + $0xd60] sm:$0xff]
  %v9401 = vld [vmem:[%s4 + $0xd68] sm:$0xff]
  %v9402 = vld [vmem:[%s4 + $0xd70] sm:$0xff]
  %v9403 = vld [vmem:[%s4 + $0xd78] sm:$0xff]
  %v9404 = vld [vmem:[%s4 + $0xd80] sm:$0xff]
  %v9405 = vld [vmem:[%s4 + $0xd88] sm:$0xff]
  %v9406 = vld [vmem:[%s4 + $0xd90] sm:$0xff]
  %v9407 = vld [vmem:[%s4 + $0xd98] sm:$0xff]
  %v9408 = vld [vmem:[%s4 + $0xda0] sm:$0xff]
  %v9409 = vld [vmem:[%s4 + $0xda8] sm:$0xff]
  %v9410 = vld [vmem:[%s4 + $0xdb0] sm:$0xff]
  %v9411 = vld [vmem:[%s4 + $0xdb8] sm:$0xff]
  %v9412 = vld [vmem:[%s4 + $0xdc0] sm:$0xff]
  %v9413 = vld [vmem:[%s4 + $0xdc8] sm:$0xff]
  %v9414 = vld [vmem:[%s4 + $0xdd0] sm:$0xff]
  %v9415 = vld [vmem:[%s4 + $0xdd8] sm:$0xff]
  %v9416 = vld [vmem:[%s4 + $0xde0] sm:$0xff]
  %v9417 = vld [vmem:[%s4 + $0xde8] sm:$0xff]
  %v9418 = vld [vmem:[%s4 + $0xdf0] sm:$0xff]
  %v9419 = vld [vmem:[%s4 + $0xdf8] sm:$0xff]
  %v9424 = vrot.slane %v9304, 3
  %v9425 = vrot.slane %v9305, 3
  %v9426 = vrot.slane %v9306, 3
  %v9427 = vrot.slane %v9307, 3
  %v9543 = vunpack.c.l.b16 %v9308
  %v9544 = vunpack.c.h.b16 %v9308
  %v9545 = vunpack.c.l.b16 %v9309
  %v9546 = vunpack.c.h.b16 %v9309
  %v9547 = vunpack.c.l.b16 %v9310
  %v9548 = vunpack.c.h.b16 %v9310
  %v9549 = vunpack.c.l.b16 %v9311
  %v9550 = vunpack.c.h.b16 %v9311
  %v9551 = vunpack.c.l.b16 %v9312
  %v9552 = vunpack.c.h.b16 %v9312
  %v9553 = vunpack.c.l.b16 %v9313
  %v9554 = vunpack.c.h.b16 %v9313
  %v9555 = vunpack.c.l.b16 %v9314
  %v9556 = vunpack.c.h.b16 %v9314
  %v9557 = vunpack.c.l.b16 %v9315
  %v9558 = vunpack.c.h.b16 %v9315
  %v9559 = vunpack.c.l.b16 %v9316
  %v9560 = vunpack.c.h.b16 %v9316
  %v9561 = vunpack.c.l.b16 %v9317
  %v9562 = vunpack.c.h.b16 %v9317
  %v9563 = vunpack.c.l.b16 %v9318
  %v9564 = vunpack.c.h.b16 %v9318
  %v9565 = vunpack.c.l.b16 %v9319
  %v9566 = vunpack.c.h.b16 %v9319
  %v9567 = vunpack.c.l.b16 %v9320
  %v9568 = vunpack.c.h.b16 %v9320
  %v9569 = vunpack.c.l.b16 %v9321
  %v9570 = vunpack.c.h.b16 %v9321
  %v9571 = vunpack.c.l.b16 %v9322
  %v9572 = vunpack.c.h.b16 %v9322
  %v9573 = vunpack.c.l.b16 %v9323
  %v9574 = vunpack.c.h.b16 %v9323
  %v9575 = vunpack.c.l.b16 %v9324
  %v9576 = vunpack.c.h.b16 %v9324
  %v9577 = vunpack.c.l.b16 %v9325
  %v9578 = vunpack.c.h.b16 %v9325
  %v9579 = vunpack.c.l.b16 %v9326
  %v9580 = vunpack.c.h.b16 %v9326
  %v9581 = vunpack.c.l.b16 %v9327
  %v9582 = vunpack.c.h.b16 %v9327
  %v9583 = vunpack.c.l.b16 %v9328
  %v9584 = vunpack.c.h.b16 %v9328
  %v9585 = vunpack.c.l.b16 %v9329
  %v9586 = vunpack.c.h.b16 %v9329
  %v9587 = vunpack.c.l.b16 %v9330
  %v9588 = vunpack.c.h.b16 %v9330
  %v9589 = vunpack.c.l.b16 %v9331
  %v9590 = vunpack.c.h.b16 %v9331
  %v9591 = vunpack.c.l.b16 %v9332
  %v9592 = vunpack.c.h.b16 %v9332
  %v9593 = vunpack.c.l.b16 %v9333
  %v9594 = vunpack.c.h.b16 %v9333
  %v9595 = vunpack.c.l.b16 %v9334
  %v9596 = vunpack.c.h.b16 %v9334
  %v9597 = vunpack.c.l.b16 %v9335
  %v9598 = vunpack.c.h.b16 %v9335
  %v9599 = vunpack.c.l.b16 %v9336
  %v9600 = vunpack.c.h.b16 %v9336
  %v9601 = vunpack.c.l.b16 %v9337
  %v9602 = vunpack.c.h.b16 %v9337
  %v9603 = vunpack.c.l.b16 %v9338
  %v9604 = vunpack.c.h.b16 %v9338
  %v9605 = vunpack.c.l.b16 %v9339
  %v9606 = vunpack.c.h.b16 %v9339
  %v9607 = vunpack.c.l.b16 %v9340
  %v9608 = vunpack.c.h.b16 %v9340
  %v9609 = vunpack.c.l.b16 %v9341
  %v9610 = vunpack.c.h.b16 %v9341
  %v9611 = vunpack.c.l.b16 %v9342
  %v9612 = vunpack.c.h.b16 %v9342
  %v9613 = vunpack.c.l.b16 %v9343
  %v9614 = vunpack.c.h.b16 %v9343
  %v9615 = vunpack.c.l.b16 %v9344
  %v9616 = vunpack.c.h.b16 %v9344
  %v9617 = vunpack.c.l.b16 %v9345
  %v9618 = vunpack.c.h.b16 %v9345
  %v9619 = vunpack.c.l.b16 %v9346
  %v9620 = vunpack.c.h.b16 %v9346
  %v9621 = vunpack.c.l.b16 %v9347
  %v9622 = vunpack.c.h.b16 %v9347
  %v9623 = vunpack.c.l.b16 %v9348
  %v9624 = vunpack.c.h.b16 %v9348
  %v9625 = vunpack.c.l.b16 %v9349
  %v9626 = vunpack.c.h.b16 %v9349
  %v9627 = vunpack.c.l.b16 %v9350
  %v9628 = vunpack.c.h.b16 %v9350
  %v9629 = vunpack.c.l.b16 %v9351
  %v9630 = vunpack.c.h.b16 %v9351
  %v9631 = vunpack.c.l.b16 %v9352
  %v9632 = vunpack.c.h.b16 %v9352
  %v9633 = vunpack.c.l.b16 %v9353
  %v9634 = vunpack.c.h.b16 %v9353
  %v9635 = vunpack.c.l.b16 %v9354
  %v9636 = vunpack.c.h.b16 %v9354
  %v9637 = vunpack.c.l.b16 %v9355
  %v9638 = vunpack.c.h.b16 %v9355
  %v9639 = vunpack.c.l.b16 %v9356
  %v9640 = vunpack.c.h.b16 %v9356
  %v9641 = vunpack.c.l.b16 %v9357
  %v9642 = vunpack.c.h.b16 %v9357
  %v9643 = vunpack.c.l.b16 %v9358
  %v9644 = vunpack.c.h.b16 %v9358
  %v9645 = vunpack.c.l.b16 %v9359
  %v9646 = vunpack.c.h.b16 %v9359
  %v9647 = vunpack.c.l.b16 %v9360
  %v9648 = vunpack.c.h.b16 %v9360
  %v9649 = vunpack.c.l.b16 %v9361
  %v9650 = vunpack.c.h.b16 %v9361
  %v9651 = vunpack.c.l.b16 %v9362
  %v9652 = vunpack.c.h.b16 %v9362
  %v9653 = vunpack.c.l.b16 %v9363
  %v9654 = vunpack.c.h.b16 %v9363
  %v9655 = vunpack.c.l.b16 %v9364
  %v9656 = vunpack.c.h.b16 %v9364
  %v9657 = vunpack.c.l.b16 %v9365
  %v9658 = vunpack.c.h.b16 %v9365
  %v9659 = vunpack.c.l.b16 %v9366
  %v9660 = vunpack.c.h.b16 %v9366
  %v9661 = vunpack.c.l.b16 %v9367
  %v9662 = vunpack.c.h.b16 %v9367
  %v9663 = vunpack.c.l.b16 %v9368
  %v9664 = vunpack.c.h.b16 %v9368
  %v9665 = vunpack.c.l.b16 %v9369
  %v9666 = vunpack.c.h.b16 %v9369
  %v9667 = vunpack.c.l.b16 %v9370
  %v9668 = vunpack.c.h.b16 %v9370
  %v9669 = vunpack.c.l.b16 %v9371
  %v9670 = vunpack.c.h.b16 %v9371
  %v9671 = vunpack.c.l.b16 %v9372
  %v9672 = vunpack.c.h.b16 %v9372
  %v9673 = vunpack.c.l.b16 %v9373
  %v9674 = vunpack.c.h.b16 %v9373
  %v9675 = vunpack.c.l.b16 %v9374
  %v9676 = vunpack.c.h.b16 %v9374
  %v9677 = vunpack.c.l.b16 %v9375
  %v9678 = vunpack.c.h.b16 %v9375
  %v9679 = vunpack.c.l.b16 %v9376
  %v9680 = vunpack.c.h.b16 %v9376
  %v9681 = vunpack.c.l.b16 %v9377
  %v9682 = vunpack.c.h.b16 %v9377
  %v9683 = vunpack.c.l.b16 %v9378
  %v9684 = vunpack.c.h.b16 %v9378
  %v9685 = vunpack.c.l.b16 %v9379
  %v9686 = vunpack.c.h.b16 %v9379
  %v9687 = vunpack.c.l.b16 %v9380
  %v9688 = vunpack.c.h.b16 %v9380
  %v9689 = vunpack.c.l.b16 %v9381
  %v9690 = vunpack.c.h.b16 %v9381
  %v9691 = vunpack.c.l.b16 %v9382
  %v9692 = vunpack.c.h.b16 %v9382
  %v9693 = vunpack.c.l.b16 %v9383
  %v9694 = vunpack.c.h.b16 %v9383
  %v9695 = vunpack.c.l.b16 %v9384
  %v9696 = vunpack.c.h.b16 %v9384
  %v9697 = vunpack.c.l.b16 %v9385
  %v9698 = vunpack.c.h.b16 %v9385
  %v9699 = vunpack.c.l.b16 %v9386
  %v9700 = vunpack.c.h.b16 %v9386
  %v9701 = vunpack.c.l.b16 %v9387
  %v9702 = vunpack.c.h.b16 %v9387
  %v9703 = vunpack.c.l.b16 %v9388
  %v9704 = vunpack.c.h.b16 %v9388
  %v9705 = vunpack.c.l.b16 %v9389
  %v9706 = vunpack.c.h.b16 %v9389
  %v9707 = vunpack.c.l.b16 %v9390
  %v9708 = vunpack.c.h.b16 %v9390
  %v9709 = vunpack.c.l.b16 %v9391
  %v9710 = vunpack.c.h.b16 %v9391
  %v9711 = vunpack.c.l.b16 %v9392
  %v9712 = vunpack.c.h.b16 %v9392
  %v9713 = vunpack.c.l.b16 %v9393
  %v9714 = vunpack.c.h.b16 %v9393
  %v9715 = vunpack.c.l.b16 %v9394
  %v9716 = vunpack.c.h.b16 %v9394
  %v9717 = vunpack.c.l.b16 %v9395
  %v9718 = vunpack.c.h.b16 %v9395
  %v9719 = vunpack.c.l.b16 %v9396
  %v9720 = vunpack.c.h.b16 %v9396
  %v9721 = vunpack.c.l.b16 %v9397
  %v9722 = vunpack.c.h.b16 %v9397
  %v9723 = vunpack.c.l.b16 %v9398
  %v9724 = vunpack.c.h.b16 %v9398
  %v9725 = vunpack.c.l.b16 %v9399
  %v9726 = vunpack.c.h.b16 %v9399
  %v9727 = vunpack.c.l.b16 %v9400
  %v9728 = vunpack.c.h.b16 %v9400
  %v9729 = vunpack.c.l.b16 %v9401
  %v9730 = vunpack.c.h.b16 %v9401
  %v9731 = vunpack.c.l.b16 %v9402
  %v9732 = vunpack.c.h.b16 %v9402
  %v9733 = vunpack.c.l.b16 %v9403
  %v9734 = vunpack.c.h.b16 %v9403
  %v9735 = vunpack.c.l.b16 %v9404
  %v9736 = vunpack.c.h.b16 %v9404
  %v9737 = vunpack.c.l.b16 %v9405
  %v9738 = vunpack.c.h.b16 %v9405
  %v9739 = vunpack.c.l.b16 %v9406
  %v9740 = vunpack.c.h.b16 %v9406
  %v9741 = vunpack.c.l.b16 %v9407
  %v9742 = vunpack.c.h.b16 %v9407
  %v9743 = vunpack.c.l.b16 %v9408
  %v9744 = vunpack.c.h.b16 %v9408
  %v9745 = vunpack.c.l.b16 %v9409
  %v9746 = vunpack.c.h.b16 %v9409
  %v9747 = vunpack.c.l.b16 %v9410
  %v9748 = vunpack.c.h.b16 %v9410
  %v9749 = vunpack.c.l.b16 %v9411
  %v9750 = vunpack.c.h.b16 %v9411
  %v9751 = vunpack.c.l.b16 %v9412
  %v9752 = vunpack.c.h.b16 %v9412
  %v9753 = vunpack.c.l.b16 %v9413
  %v9754 = vunpack.c.h.b16 %v9413
  %v9755 = vunpack.c.l.b16 %v9414
  %v9756 = vunpack.c.h.b16 %v9414
  %v9757 = vunpack.c.l.b16 %v9415
  %v9758 = vunpack.c.h.b16 %v9415
  %v9759 = vunpack.c.l.b16 %v9416
  %v9760 = vunpack.c.h.b16 %v9416
  %v9761 = vunpack.c.l.b16 %v9417
  %v9762 = vunpack.c.h.b16 %v9417
  %v9763 = vunpack.c.l.b16 %v9418
  %v9764 = vunpack.c.h.b16 %v9418
  %v9765 = vunpack.c.l.b16 %v9419
  %v9766 = vunpack.c.h.b16 %v9419
  %v9767 = vpack.c.b16 %v9547, %v9543
  %v9768 = vpack.c.b16 %v9548, %v9544
  %v9769 = vpack.c.b16 %v9549, %v9545
  %v9770 = vpack.c.b16 %v9550, %v9546
  %v9771 = vpack.c.b16 %v9555, %v9551
  %v9772 = vpack.c.b16 %v9556, %v9552
  %v9773 = vpack.c.b16 %v9557, %v9553
  %v9774 = vpack.c.b16 %v9558, %v9554
  %v9775 = vpack.c.b16 %v9563, %v9559
  %v9776 = vpack.c.b16 %v9564, %v9560
  %v9777 = vpack.c.b16 %v9565, %v9561
  %v9778 = vpack.c.b16 %v9566, %v9562
  %v9779 = vpack.c.b16 %v9571, %v9567
  %v9780 = vpack.c.b16 %v9572, %v9568
  %v9781 = vpack.c.b16 %v9573, %v9569
  %v9782 = vpack.c.b16 %v9574, %v9570
  %v9783 = vpack.c.b16 %v9579, %v9575
  %v9784 = vpack.c.b16 %v9580, %v9576
  %v9785 = vpack.c.b16 %v9581, %v9577
  %v9786 = vpack.c.b16 %v9582, %v9578
  %v9787 = vpack.c.b16 %v9587, %v9583
  %v9788 = vpack.c.b16 %v9588, %v9584
  %v9789 = vpack.c.b16 %v9589, %v9585
  %v9790 = vpack.c.b16 %v9590, %v9586
  %v9791 = vpack.c.b16 %v9595, %v9591
  %v9792 = vpack.c.b16 %v9596, %v9592
  %v9793 = vpack.c.b16 %v9597, %v9593
  %v9794 = vpack.c.b16 %v9598, %v9594
  %v9795 = vpack.c.b16 %v9603, %v9599
  %v9796 = vpack.c.b16 %v9604, %v9600
  %v9797 = vpack.c.b16 %v9605, %v9601
  %v9798 = vpack.c.b16 %v9606, %v9602
  %v9799 = vpack.c.b16 %v9611, %v9607
  %v9800 = vpack.c.b16 %v9612, %v9608
  %v9801 = vpack.c.b16 %v9613, %v9609
  %v9802 = vpack.c.b16 %v9614, %v9610
  %v9803 = vpack.c.b16 %v9619, %v9615
  %v9804 = vpack.c.b16 %v9620, %v9616
  %v9805 = vpack.c.b16 %v9621, %v9617
  %v9806 = vpack.c.b16 %v9622, %v9618
  %v9807 = vpack.c.b16 %v9627, %v9623
  %v9808 = vpack.c.b16 %v9628, %v9624
  %v9809 = vpack.c.b16 %v9629, %v9625
  %v9810 = vpack.c.b16 %v9630, %v9626
  %v9811 = vpack.c.b16 %v9635, %v9631
  %v9812 = vpack.c.b16 %v9636, %v9632
  %v9813 = vpack.c.b16 %v9637, %v9633
  %v9814 = vpack.c.b16 %v9638, %v9634
  %v9815 = vpack.c.b16 %v9643, %v9639
  %v9816 = vpack.c.b16 %v9644, %v9640
  %v9817 = vpack.c.b16 %v9645, %v9641
  %v9818 = vpack.c.b16 %v9646, %v9642
  %v9819 = vpack.c.b16 %v9651, %v9647
  %v9820 = vpack.c.b16 %v9652, %v9648
  %v9821 = vpack.c.b16 %v9653, %v9649
  %v9822 = vpack.c.b16 %v9654, %v9650
  %v9823 = vpack.c.b16 %v9659, %v9655
  %v9824 = vpack.c.b16 %v9660, %v9656
  %v9825 = vpack.c.b16 %v9661, %v9657
  %v9826 = vpack.c.b16 %v9662, %v9658
  %v9827 = vpack.c.b16 %v9667, %v9663
  %v9828 = vpack.c.b16 %v9668, %v9664
  %v9829 = vpack.c.b16 %v9669, %v9665
  %v9830 = vpack.c.b16 %v9670, %v9666
  %v9831 = vpack.c.b16 %v9675, %v9671
  %v9832 = vpack.c.b16 %v9676, %v9672
  %v9833 = vpack.c.b16 %v9677, %v9673
  %v9834 = vpack.c.b16 %v9678, %v9674
  %v9835 = vpack.c.b16 %v9683, %v9679
  %v9836 = vpack.c.b16 %v9684, %v9680
  %v9837 = vpack.c.b16 %v9685, %v9681
  %v9838 = vpack.c.b16 %v9686, %v9682
  %v9839 = vpack.c.b16 %v9691, %v9687
  %v9840 = vpack.c.b16 %v9692, %v9688
  %v9841 = vpack.c.b16 %v9693, %v9689
  %v9842 = vpack.c.b16 %v9694, %v9690
  %v9843 = vpack.c.b16 %v9699, %v9695
  %v9844 = vpack.c.b16 %v9700, %v9696
  %v9845 = vpack.c.b16 %v9701, %v9697
  %v9846 = vpack.c.b16 %v9702, %v9698
  %v9847 = vpack.c.b16 %v9707, %v9703
  %v9848 = vpack.c.b16 %v9708, %v9704
  %v9849 = vpack.c.b16 %v9709, %v9705
  %v9850 = vpack.c.b16 %v9710, %v9706
  %v9851 = vpack.c.b16 %v9715, %v9711
  %v9852 = vpack.c.b16 %v9716, %v9712
  %v9853 = vpack.c.b16 %v9717, %v9713
  %v9854 = vpack.c.b16 %v9718, %v9714
  %v9855 = vpack.c.b16 %v9723, %v9719
  %v9856 = vpack.c.b16 %v9724, %v9720
  %v9857 = vpack.c.b16 %v9725, %v9721
  %v9858 = vpack.c.b16 %v9726, %v9722
  %v9859 = vpack.c.b16 %v9731, %v9727
  %v9860 = vpack.c.b16 %v9732, %v9728
  %v9861 = vpack.c.b16 %v9733, %v9729
  %v9862 = vpack.c.b16 %v9734, %v9730
  %v9863 = vpack.c.b16 %v9739, %v9735
  %v9864 = vpack.c.b16 %v9740, %v9736
  %v9865 = vpack.c.b16 %v9741, %v9737
  %v9866 = vpack.c.b16 %v9742, %v9738
  %v9867 = vpack.c.b16 %v9747, %v9743
  %v9868 = vpack.c.b16 %v9748, %v9744
  %v9869 = vpack.c.b16 %v9749, %v9745
  %v9870 = vpack.c.b16 %v9750, %v9746
  %v9871 = vpack.c.b16 %v9755, %v9751
  %v9872 = vpack.c.b16 %v9756, %v9752
  %v9873 = vpack.c.b16 %v9757, %v9753
  %v9874 = vpack.c.b16 %v9758, %v9754
  %v9875 = vpack.c.b16 %v9763, %v9759
  %v9876 = vpack.c.b16 %v9764, %v9760
  %v9877 = vpack.c.b16 %v9765, %v9761
  %v9878 = vpack.c.b16 %v9766, %v9762
  %v9992 = vsel %vm537, %v9427, 0
  %9994 = vmatprep.subr.bf16.mxu0 %v9768
  %9995 = vmatpush1.bf16.msra.mxu0 %v9767
  %9996 = vmatprep.subr.bf16.mxu0 %v9772
  %9997 = vmatpush1.bf16.msra.mxu0 %v9771
  %9998 = vmatprep.subr.bf16.mxu0 %v9776
  %9999 = vmatpush1.bf16.msra.mxu0 %v9775
  %10000 = vmatprep.subr.bf16.mxu0 %v9780
  %10001 = vmatpush1.bf16.msra.mxu0 %v9779
  %10002 = vmatprep.subr.bf16.mxu0 %v9784
  %10003 = vmatpush1.bf16.msra.mxu0 %v9783
  %10004 = vmatprep.subr.bf16.mxu0 %v9788
  %10005 = vmatpush1.bf16.msra.mxu0 %v9787
  %10006 = vmatprep.subr.bf16.mxu0 %v9792
  %10007 = vmatpush1.bf16.msra.mxu0 %v9791
  %10008 = vmatprep.subr.bf16.mxu0 %v9796
  %10009 = vmatpush1.bf16.msra.mxu0 %v9795
  %10010 = vmatprep.subr.bf16.mxu0 %v9800
  %10011 = vmatpush1.bf16.msra.mxu0 %v9799
  %10012 = vmatprep.subr.bf16.mxu0 %v9804
  %10013 = vmatpush1.bf16.msra.mxu0 %v9803
  %10014 = vmatprep.subr.bf16.mxu0 %v9808
  %10015 = vmatpush1.bf16.msra.mxu0 %v9807
  %10016 = vmatprep.subr.bf16.mxu0 %v9812
  %10017 = vmatpush1.bf16.msra.mxu0 %v9811
  %10018 = vmatprep.subr.bf16.mxu0 %v9816
  %10019 = vmatpush1.bf16.msra.mxu0 %v9815
  %10020 = vmatprep.subr.bf16.mxu0 %v9820
  %10021 = vmatpush1.bf16.msra.mxu0 %v9819
  %10022 = vmatprep.subr.bf16.mxu0 %v9824
  %10023 = vmatpush1.bf16.msra.mxu0 %v9823
  %10024 = vmatprep.subr.bf16.mxu0 %v9828
  %10025 = vmatpush1.bf16.msra.mxu0 %v9827
  %10026 = vmatprep.mubr.bf16.mxu0 %v9425
  %10027 = vmatmul.mubr.bf16.gmra.mrb[0].mxu0 %v9424
  %v10028 = vpop.f32.mrb[0].mxu0
  %v10029 = vadd.f32 0.0, %v10028
  %v10030 = vpop.f32.mrb[0].mxu0
  %v10031 = vadd.f32 0.0, %v10030
  %v10032 = vpop.f32.mrb[0].mxu0
  %v10033 = vpop.f32.mrb[0].mxu0
  %10034 = vdwg.mxu0
  %10035 = vmatprep.subr.bf16.mxu0 %v9832
  %10036 = vmatpush1.bf16.msra.mxu0 %v9831
  %10037 = vmatprep.subr.bf16.mxu0 %v9836
  %10038 = vmatpush1.bf16.msra.mxu0 %v9835
  %10039 = vmatprep.subr.bf16.mxu0 %v9840
  %10040 = vmatpush1.bf16.msra.mxu0 %v9839
  %10041 = vmatprep.subr.bf16.mxu0 %v9844
  %10042 = vmatpush1.bf16.msra.mxu0 %v9843
  %10043 = vmatprep.subr.bf16.mxu0 %v9848
  %10044 = vmatpush1.bf16.msra.mxu0 %v9847
  %10045 = vmatprep.subr.bf16.mxu0 %v9852
  %10046 = vmatpush1.bf16.msra.mxu0 %v9851
  %10047 = vmatprep.subr.bf16.mxu0 %v9856
  %10048 = vmatpush1.bf16.msra.mxu0 %v9855
  %10049 = vmatprep.subr.bf16.mxu0 %v9860
  %10050 = vmatpush1.bf16.msra.mxu0 %v9859
  %10051 = vmatprep.subr.bf16.mxu0 %v9864
  %10052 = vmatpush1.bf16.msra.mxu0 %v9863
  %10053 = vmatprep.subr.bf16.mxu0 %v9868
  %10054 = vmatpush1.bf16.msra.mxu0 %v9867
  %10055 = vmatprep.subr.bf16.mxu0 %v9872
  %10056 = vmatpush1.bf16.msra.mxu0 %v9871
  %10057 = vmatprep.subr.bf16.mxu0 %v9876
  %10058 = vmatpush1.bf16.msra.mxu0 %v9875
  %10059 = vmatprep.subr.bf16.mxu0 0
  %10060 = vmatpush1.bf16.msra.mxu0 0
  %10061 = vmatprep.subr.bf16.mxu0 0
  %10062 = vmatpush1.bf16.msra.mxu0 0
  %10063 = vmatprep.subr.bf16.mxu0 0
  %10064 = vmatpush1.bf16.msra.mxu0 0
  %10065 = vmatprep.subr.bf16.mxu0 0
  %10066 = vmatpush1.bf16.msra.mxu0 0
  %10067 = vmatprep.mubr.bf16.mxu0 %v9992
  %10068 = vmatmul.mubr.bf16.gmra.mrb[0].mxu0 %v9426
  %v10069 = vpop.f32.mrb[0].mxu0
  %v10070 = vadd.f32 %v10029, %v10069
  %v10071 = vpop.f32.mrb[0].mxu0
  %v10072 = vadd.f32 %v10031, %v10071
  %v10073 = vpop.f32.mrb[0].mxu0
  %v10074 = vpop.f32.mrb[0].mxu0
  %10075 = vdwg.mxu0
  %10076 = vmatprep.subr.bf16.mxu0 %v9770
  %10077 = vmatpush1.bf16.msra.mxu0 %v9769
  %10078 = vmatprep.subr.bf16.mxu0 %v9774
  %10079 = vmatpush1.bf16.msra.mxu0 %v9773
  %10080 = vmatprep.subr.bf16.mxu0 %v9778
  %10081 = vmatpush1.bf16.msra.mxu0 %v9777
  %10082 = vmatprep.subr.bf16.mxu0 %v9782
  %10083 = vmatpush1.bf16.msra.mxu0 %v9781
  %10084 = vmatprep.subr.bf16.mxu0 %v9786
  %10085 = vmatpush1.bf16.msra.mxu0 %v9785
  %10086 = vmatprep.subr.bf16.mxu0 %v9790
  %10087 = vmatpush1.bf16.msra.mxu0 %v9789
  %10088 = vmatprep.subr.bf16.mxu0 %v9794
  %10089 = vmatpush1.bf16.msra.mxu0 %v9793
  %10090 = vmatprep.subr.bf16.mxu0 %v9798
  %10091 = vmatpush1.bf16.msra.mxu0 %v9797
  %10092 = vmatprep.subr.bf16.mxu0 %v9802
  %10093 = vmatpush1.bf16.msra.mxu0 %v9801
  %10094 = vmatprep.subr.bf16.mxu0 %v9806
  %10095 = vmatpush1.bf16.msra.mxu0 %v9805
  %10096 = vmatprep.subr.bf16.mxu0 %v9810
  %10097 = vmatpush1.bf16.msra.mxu0 %v9809
  %10098 = vmatprep.subr.bf16.mxu0 %v9814
  %10099 = vmatpush1.bf16.msra.mxu0 %v9813
  %10100 = vmatprep.subr.bf16.mxu0 %v9818
  %10101 = vmatpush1.bf16.msra.mxu0 %v9817
  %10102 = vmatprep.subr.bf16.mxu0 %v9822
  %10103 = vmatpush1.bf16.msra.mxu0 %v9821
  %10104 = vmatprep.subr.bf16.mxu0 %v9826
  %10105 = vmatpush1.bf16.msra.mxu0 %v9825
  %10106 = vmatprep.subr.bf16.mxu0 %v9830
  %10107 = vmatpush1.bf16.msra.mxu0 %v9829
  %10108 = vmatprep.mubr.bf16.mxu0 %v9425
  %10109 = vmatmul.mubr.bf16.gmra.mrb[0].mxu0 %v9424
  %v10110 = vpop.f32.mrb[0].mxu0
  %v10111 = vadd.f32 0.0, %v10110
  %v10112 = vpop.f32.mrb[0].mxu0
  %v10113 = vadd.f32 0.0, %v10112
  %v10114 = vpop.f32.mrb[0].mxu0
  %v10115 = vpop.f32.mrb[0].mxu0
  %10116 = vdwg.mxu0
  %10117 = vmatprep.subr.bf16.mxu0 %v9834
  %10118 = vmatpush1.bf16.msra.mxu0 %v9833
  %10119 = vmatprep.subr.bf16.mxu0 %v9838
  %10120 = vmatpush1.bf16.msra.mxu0 %v9837
  %10121 = vmatprep.subr.bf16.mxu0 %v9842
  %10122 = vmatpush1.bf16.msra.mxu0 %v9841
  %10123 = vmatprep.subr.bf16.mxu0 %v9846
  %10124 = vmatpush1.bf16.msra.mxu0 %v9845
  %10125 = vmatprep.subr.bf16.mxu0 %v9850
  %10126 = vmatpush1.bf16.msra.mxu0 %v9849
  %10127 = vmatprep.subr.bf16.mxu0 %v9854
  %10128 = vmatpush1.bf16.msra.mxu0 %v9853
  %10129 = vmatprep.subr.bf16.mxu0 %v9858
  %10130 = vmatpush1.bf16.msra.mxu0 %v9857
  %10131 = vmatprep.subr.bf16.mxu0 %v9862
  %10132 = vmatpush1.bf16.msra.mxu0 %v9861
  %10133 = vmatprep.subr.bf16.mxu0 %v9866
  %10134 = vmatpush1.bf16.msra.mxu0 %v9865
  %10135 = vmatprep.subr.bf16.mxu0 %v9870
  %10136 = vmatpush1.bf16.msra.mxu0 %v9869
  %10137 = vmatprep.subr.bf16.mxu0 %v9874
  %10138 = vmatpush1.bf16.msra.mxu0 %v9873
  %10139 = vmatprep.subr.bf16.mxu0 %v9878
  %10140 = vmatpush1.bf16.msra.mxu0 %v9877
  %10141 = vmatprep.subr.bf16.mxu0 0
  %10142 = vmatpush1.bf16.msra.mxu0 0
  %10143 = vmatprep.subr.bf16.mxu0 0
  %10144 = vmatpush1.bf16.msra.mxu0 0
  %10145 = vmatprep.subr.bf16.mxu0 0
  %10146 = vmatpush1.bf16.msra.mxu0 0
  %10147 = vmatprep.subr.bf16.mxu0 0
  %10148 = vmatpush1.bf16.msra.mxu0 0
  %10149 = vmatprep.mubr.bf16.mxu0 %v9992
  %10150 = vmatmul.mubr.bf16.gmra.mrb[0].mxu0 %v9426
  %v10151 = vpop.f32.mrb[0].mxu0
  %v10152 = vadd.f32 %v10111, %v10151
  %v10153 = vpop.f32.mrb[0].mxu0
  %v10154 = vadd.f32 %v10113, %v10153
  %v10155 = vpop.f32.mrb[0].mxu0
  %v10156 = vpop.f32.mrb[0].mxu0
  %10157 = vdwg.mxu0
  %v10158 = vadd.f32 %v9296, %v10070
  %v10159 = vadd.f32 %v9297, %v10072
  %v10160 = vadd.f32 %v9298, %v10152
  %v10161 = vadd.f32 %v9299, %v10154
  %v10162 = vld [vmem:[#allocation4 + $0x20] sm:$0x3]
  %v10163 = vld [vmem:[#allocation4 + $0x28] sm:$0x3]
  %v10164 = vld [vmem:[#allocation4 + $0x30] sm:$0x3]
  %v10165 = vld [vmem:[#allocation4 + $0x38] sm:$0x3]
  %v10166 = vpack.c.bf16 %v10162, %v10162
  %v10167 = vpack.c.bf16 %v10163, %v10163
  %v10168 = vpack.c.bf16 %v10164, %v10164
  %v10169 = vpack.c.bf16 %v10165, %v10165
  %v10170 = vld [vmem:[%s4 + $0xe00] sm:$0xff]
  %v10171 = vld [vmem:[%s4 + $0xe08] sm:$0xff]
  %v10172 = vld [vmem:[%s4 + $0xe10] sm:$0xff]
  %v10173 = vld [vmem:[%s4 + $0xe18] sm:$0xff]
  %v10174 = vld [vmem:[%s4 + $0xe20] sm:$0xff]
  %v10175 = vld [vmem:[%s4 + $0xe28] sm:$0xff]
  %v10176 = vld [vmem:[%s4 + $0xe30] sm:$0xff]
  %v10177 = vld [vmem:[%s4 + $0xe38] sm:$0xff]
  %v10178 = vld [vmem:[%s4 + $0xe40] sm:$0xff]
  %v10179 = vld [vmem:[%s4 + $0xe48] sm:$0xff]
  %v10180 = vld [vmem:[%s4 + $0xe50] sm:$0xff]
  %v10181 = vld [vmem:[%s4 + $0xe58] sm:$0xff]
  %v10182 = vld [vmem:[%s4 + $0xe60] sm:$0xff]
  %v10183 = vld [vmem:[%s4 + $0xe68] sm:$0xff]
  %v10184 = vld [vmem:[%s4 + $0xe70] sm:$0xff]
  %v10185 = vld [vmem:[%s4 + $0xe78] sm:$0xff]
  %v10186 = vld [vmem:[%s4 + $0xe80] sm:$0xff]
  %v10187 = vld [vmem:[%s4 + $0xe88] sm:$0xff]
  %v10188 = vld [vmem:[%s4 + $0xe90] sm:$0xff]
  %v10189 = vld [vmem:[%s4 + $0xe98] sm:$0xff]
  %v10190 = vld [vmem:[%s4 + $0xea0] sm:$0xff]
  %v10191 = vld [vmem:[%s4 + $0xea8] sm:$0xff]
  %v10192 = vld [vmem:[%s4 + $0xeb0] sm:$0xff]
  %v10193 = vld [vmem:[%s4 + $0xeb8] sm:$0xff]
  %v10194 = vld [vmem:[%s4 + $0xec0] sm:$0xff]
  %v10195 = vld [vmem:[%s4 + $0xec8] sm:$0xff]
  %v10196 = vld [vmem:[%s4 + $0xed0] sm:$0xff]
  %v10197 = vld [vmem:[%s4 + $0xed8] sm:$0xff]
  %v10198 = vld [vmem:[%s4 + $0xee0] sm:$0xff]
  %v10199 = vld [vmem:[%s4 + $0xee8] sm:$0xff]
  %v10200 = vld [vmem:[%s4 + $0xef0] sm:$0xff]
  %v10201 = vld [vmem:[%s4 + $0xef8] sm:$0xff]
  %v10202 = vld [vmem:[%s4 + $0xf00] sm:$0xff]
  %v10203 = vld [vmem:[%s4 + $0xf08] sm:$0xff]
  %v10204 = vld [vmem:[%s4 + $0xf10] sm:$0xff]
  %v10205 = vld [vmem:[%s4 + $0xf18] sm:$0xff]
  %v10206 = vld [vmem:[%s4 + $0xf20] sm:$0xff]
  %v10207 = vld [vmem:[%s4 + $0xf28] sm:$0xff]
  %v10208 = vld [vmem:[%s4 + $0xf30] sm:$0xff]
  %v10209 = vld [vmem:[%s4 + $0xf38] sm:$0xff]
  %v10210 = vld [vmem:[%s4 + $0xf40] sm:$0xff]
  %v10211 = vld [vmem:[%s4 + $0xf48] sm:$0xff]
  %v10212 = vld [vmem:[%s4 + $0xf50] sm:$0xff]
  %v10213 = vld [vmem:[%s4 + $0xf58] sm:$0xff]
  %v10214 = vld [vmem:[%s4 + $0xf60] sm:$0xff]
  %v10215 = vld [vmem:[%s4 + $0xf68] sm:$0xff]
  %v10216 = vld [vmem:[%s4 + $0xf70] sm:$0xff]
  %v10217 = vld [vmem:[%s4 + $0xf78] sm:$0xff]
  %v10218 = vld [vmem:[%s4 + $0xf80] sm:$0xff]
  %v10219 = vld [vmem:[%s4 + $0xf88] sm:$0xff]
  %v10220 = vld [vmem:[%s4 + $0xf90] sm:$0xff]
  %v10221 = vld [vmem:[%s4 + $0xf98] sm:$0xff]
  %v10222 = vld [vmem:[%s4 + $0xfa0] sm:$0xff]
  %v10223 = vld [vmem:[%s4 + $0xfa8] sm:$0xff]
  %v10224 = vld [vmem:[%s4 + $0xfb0] sm:$0xff]
  %v10225 = vld [vmem:[%s4 + $0xfb8] sm:$0xff]
  %v10226 = vld [vmem:[%s4 + $0xfc0] sm:$0xff]
  %v10227 = vld [vmem:[%s4 + $0xfc8] sm:$0xff]
  %v10228 = vld [vmem:[%s4 + $0xfd0] sm:$0xff]
  %v10229 = vld [vmem:[%s4 + $0xfd8] sm:$0xff]
  %v10230 = vld [vmem:[%s4 + $0xfe0] sm:$0xff]
  %v10231 = vld [vmem:[%s4 + $0xfe8] sm:$0xff]
  %v10232 = vld [vmem:[%s4 + $0xff0] sm:$0xff]
  %v10233 = vld [vmem:[%s4 + $0xff8] sm:$0xff]
  %v10234 = vld [vmem:[%s4 + $0x1000] sm:$0xff]
  %v10235 = vld [vmem:[%s4 + $0x1008] sm:$0xff]
  %v10236 = vld [vmem:[%s4 + $0x1010] sm:$0xff]
  %v10237 = vld [vmem:[%s4 + $0x1018] sm:$0xff]
  %v10238 = vld [vmem:[%s4 + $0x1020] sm:$0xff]
  %v10239 = vld [vmem:[%s4 + $0x1028] sm:$0xff]
  %v10240 = vld [vmem:[%s4 + $0x1030] sm:$0xff]
  %v10241 = vld [vmem:[%s4 + $0x1038] sm:$0xff]
  %v10242 = vld [vmem:[%s4 + $0x1040] sm:$0xff]
  %v10243 = vld [vmem:[%s4 + $0x1048] sm:$0xff]
  %v10244 = vld [vmem:[%s4 + $0x1050] sm:$0xff]
  %v10245 = vld [vmem:[%s4 + $0x1058] sm:$0xff]
  %v10246 = vld [vmem:[%s4 + $0x1060] sm:$0xff]
  %v10247 = vld [vmem:[%s4 + $0x1068] sm:$0xff]
  %v10248 = vld [vmem:[%s4 + $0x1070] sm:$0xff]
  %v10249 = vld [vmem:[%s4 + $0x1078] sm:$0xff]
  %v10250 = vld [vmem:[%s4 + $0x1080] sm:$0xff]
  %v10251 = vld [vmem:[%s4 + $0x1088] sm:$0xff]
  %v10252 = vld [vmem:[%s4 + $0x1090] sm:$0xff]
  %v10253 = vld [vmem:[%s4 + $0x1098] sm:$0xff]
  %v10254 = vld [vmem:[%s4 + $0x10a0] sm:$0xff]
  %v10255 = vld [vmem:[%s4 + $0x10a8] sm:$0xff]
  %v10256 = vld [vmem:[%s4 + $0x10b0] sm:$0xff]
  %v10257 = vld [vmem:[%s4 + $0x10b8] sm:$0xff]
  %v10258 = vld [vmem:[%s4 + $0x10c0] sm:$0xff]
  %v10259 = vld [vmem:[%s4 + $0x10c8] sm:$0xff]
  %v10260 = vld [vmem:[%s4 + $0x10d0] sm:$0xff]
  %v10261 = vld [vmem:[%s4 + $0x10d8] sm:$0xff]
  %v10262 = vld [vmem:[%s4 + $0x10e0] sm:$0xff]
  %v10263 = vld [vmem:[%s4 + $0x10e8] sm:$0xff]
  %v10264 = vld [vmem:[%s4 + $0x10f0] sm:$0xff]
  %v10265 = vld [vmem:[%s4 + $0x10f8] sm:$0xff]
  %v10266 = vld [vmem:[%s4 + $0x1100] sm:$0xff]
  %v10267 = vld [vmem:[%s4 + $0x1108] sm:$0xff]
  %v10268 = vld [vmem:[%s4 + $0x1110] sm:$0xff]
  %v10269 = vld [vmem:[%s4 + $0x1118] sm:$0xff]
  %v10270 = vld [vmem:[%s4 + $0x1120] sm:$0xff]
  %v10271 = vld [vmem:[%s4 + $0x1128] sm:$0xff]
  %v10272 = vld [vmem:[%s4 + $0x1130] sm:$0xff]
  %v10273 = vld [vmem:[%s4 + $0x1138] sm:$0xff]
  %v10274 = vld [vmem:[%s4 + $0x1140] sm:$0xff]
  %v10275 = vld [vmem:[%s4 + $0x1148] sm:$0xff]
  %v10276 = vld [vmem:[%s4 + $0x1150] sm:$0xff]
  %v10277 = vld [vmem:[%s4 + $0x1158] sm:$0xff]
  %v10278 = vld [vmem:[%s4 + $0x1160] sm:$0xff]
  %v10279 = vld [vmem:[%s4 + $0x1168] sm:$0xff]
  %v10280 = vld [vmem:[%s4 + $0x1170] sm:$0xff]
  %v10281 = vld [vmem:[%s4 + $0x1178] sm:$0xff]
  %v10394 = vunpack.c.l.b16 %v10170
  %v10395 = vunpack.c.h.b16 %v10170
  %v10396 = vunpack.c.l.b16 %v10171
  %v10397 = vunpack.c.h.b16 %v10171
  %v10398 = vunpack.c.l.b16 %v10172
  %v10399 = vunpack.c.h.b16 %v10172
  %v10400 = vunpack.c.l.b16 %v10173
  %v10401 = vunpack.c.h.b16 %v10173
  %v10402 = vunpack.c.l.b16 %v10174
  %v10403 = vunpack.c.h.b16 %v10174
  %v10404 = vunpack.c.l.b16 %v10175
  %v10405 = vunpack.c.h.b16 %v10175
  %v10406 = vunpack.c.l.b16 %v10176
  %v10407 = vunpack.c.h.b16 %v10176
  %v10408 = vunpack.c.l.b16 %v10177
  %v10409 = vunpack.c.h.b16 %v10177
  %v10410 = vunpack.c.l.b16 %v10178
  %v10411 = vunpack.c.h.b16 %v10178
  %v10412 = vunpack.c.l.b16 %v10179
  %v10413 = vunpack.c.h.b16 %v10179
  %v10414 = vunpack.c.l.b16 %v10180
  %v10415 = vunpack.c.h.b16 %v10180
  %v10416 = vunpack.c.l.b16 %v10181
  %v10417 = vunpack.c.h.b16 %v10181
  %v10418 = vunpack.c.l.b16 %v10182
  %v10419 = vunpack.c.h.b16 %v10182
  %v10420 = vunpack.c.l.b16 %v10183
  %v10421 = vunpack.c.h.b16 %v10183
  %v10422 = vunpack.c.l.b16 %v10184
  %v10423 = vunpack.c.h.b16 %v10184
  %v10424 = vunpack.c.l.b16 %v10185
  %v10425 = vunpack.c.h.b16 %v10185
  %v10426 = vunpack.c.l.b16 %v10186
  %v10427 = vunpack.c.h.b16 %v10186
  %v10428 = vunpack.c.l.b16 %v10187
  %v10429 = vunpack.c.h.b16 %v10187
  %v10430 = vunpack.c.l.b16 %v10188
  %v10431 = vunpack.c.h.b16 %v10188
  %v10432 = vunpack.c.l.b16 %v10189
  %v10433 = vunpack.c.h.b16 %v10189
  %v10434 = vunpack.c.l.b16 %v10190
  %v10435 = vunpack.c.h.b16 %v10190
  %v10436 = vunpack.c.l.b16 %v10191
  %v10437 = vunpack.c.h.b16 %v10191
  %v10438 = vunpack.c.l.b16 %v10192
  %v10439 = vunpack.c.h.b16 %v10192
  %v10440 = vunpack.c.l.b16 %v10193
  %v10441 = vunpack.c.h.b16 %v10193
  %v10442 = vunpack.c.l.b16 %v10194
  %v10443 = vunpack.c.h.b16 %v10194
  %v10444 = vunpack.c.l.b16 %v10195
  %v10445 = vunpack.c.h.b16 %v10195
  %v10446 = vunpack.c.l.b16 %v10196
  %v10447 = vunpack.c.h.b16 %v10196
  %v10448 = vunpack.c.l.b16 %v10197
  %v10449 = vunpack.c.h.b16 %v10197
  %v10450 = vunpack.c.l.b16 %v10198
  %v10451 = vunpack.c.h.b16 %v10198
  %v10452 = vunpack.c.l.b16 %v10199
  %v10453 = vunpack.c.h.b16 %v10199
  %v10454 = vunpack.c.l.b16 %v10200
  %v10455 = vunpack.c.h.b16 %v10200
  %v10456 = vunpack.c.l.b16 %v10201
  %v10457 = vunpack.c.h.b16 %v10201
  %v10458 = vunpack.c.l.b16 %v10202
  %v10459 = vunpack.c.h.b16 %v10202
  %v10460 = vunpack.c.l.b16 %v10203
  %v10461 = vunpack.c.h.b16 %v10203
  %v10462 = vunpack.c.l.b16 %v10204
  %v10463 = vunpack.c.h.b16 %v10204
  %v10464 = vunpack.c.l.b16 %v10205
  %v10465 = vunpack.c.h.b16 %v10205
  %v10466 = vunpack.c.l.b16 %v10206
  %v10467 = vunpack.c.h.b16 %v10206
  %v10468 = vunpack.c.l.b16 %v10207
  %v10469 = vunpack.c.h.b16 %v10207
  %v10470 = vunpack.c.l.b16 %v10208
  %v10471 = vunpack.c.h.b16 %v10208
  %v10472 = vunpack.c.l.b16 %v10209
  %v10473 = vunpack.c.h.b16 %v10209
  %v10474 = vunpack.c.l.b16 %v10210
  %v10475 = vunpack.c.h.b16 %v10210
  %v10476 = vunpack.c.l.b16 %v10211
  %v10477 = vunpack.c.h.b16 %v10211
  %v10478 = vunpack.c.l.b16 %v10212
  %v10479 = vunpack.c.h.b16 %v10212
  %v10480 = vunpack.c.l.b16 %v10213
  %v10481 = vunpack.c.h.b16 %v10213
  %v10482 = vunpack.c.l.b16 %v10214
  %v10483 = vunpack.c.h.b16 %v10214
  %v10484 = vunpack.c.l.b16 %v10215
  %v10485 = vunpack.c.h.b16 %v10215
  %v10486 = vunpack.c.l.b16 %v10216
  %v10487 = vunpack.c.h.b16 %v10216
  %v10488 = vunpack.c.l.b16 %v10217
  %v10489 = vunpack.c.h.b16 %v10217
  %v10490 = vunpack.c.l.b16 %v10218
  %v10491 = vunpack.c.h.b16 %v10218
  %v10492 = vunpack.c.l.b16 %v10219
  %v10493 = vunpack.c.h.b16 %v10219
  %v10494 = vunpack.c.l.b16 %v10220
  %v10495 = vunpack.c.h.b16 %v10220
  %v10496 = vunpack.c.l.b16 %v10221
  %v10497 = vunpack.c.h.b16 %v10221
  %v10498 = vunpack.c.l.b16 %v10222
  %v10499 = vunpack.c.h.b16 %v10222
  %v10500 = vunpack.c.l.b16 %v10223
  %v10501 = vunpack.c.h.b16 %v10223
  %v10502 = vunpack.c.l.b16 %v10224
  %v10503 = vunpack.c.h.b16 %v10224
  %v10504 = vunpack.c.l.b16 %v10225
  %v10505 = vunpack.c.h.b16 %v10225
  %v10506 = vunpack.c.l.b16 %v10226
  %v10507 = vunpack.c.h.b16 %v10226
  %v10508 = vunpack.c.l.b16 %v10227
  %v10509 = vunpack.c.h.b16 %v10227
  %v10510 = vunpack.c.l.b16 %v10228
  %v10511 = vunpack.c.h.b16 %v10228
  %v10512 = vunpack.c.l.b16 %v10229
  %v10513 = vunpack.c.h.b16 %v10229
  %v10514 = vunpack.c.l.b16 %v10230
  %v10515 = vunpack.c.h.b16 %v10230
  %v10516 = vunpack.c.l.b16 %v10231
  %v10517 = vunpack.c.h.b16 %v10231
  %v10518 = vunpack.c.l.b16 %v10232
  %v10519 = vunpack.c.h.b16 %v10232
  %v10520 = vunpack.c.l.b16 %v10233
  %v10521 = vunpack.c.h.b16 %v10233
  %v10522 = vunpack.c.l.b16 %v10234
  %v10523 = vunpack.c.h.b16 %v10234
  %v10524 = vunpack.c.l.b16 %v10235
  %v10525 = vunpack.c.h.b16 %v10235
  %v10526 = vunpack.c.l.b16 %v10236
  %v10527 = vunpack.c.h.b16 %v10236
  %v10528 = vunpack.c.l.b16 %v10237
  %v10529 = vunpack.c.h.b16 %v10237
  %v10530 = vunpack.c.l.b16 %v10238
  %v10531 = vunpack.c.h.b16 %v10238
  %v10532 = vunpack.c.l.b16 %v10239
  %v10533 = vunpack.c.h.b16 %v10239
  %v10534 = vunpack.c.l.b16 %v10240
  %v10535 = vunpack.c.h.b16 %v10240
  %v10536 = vunpack.c.l.b16 %v10241
  %v10537 = vunpack.c.h.b16 %v10241
  %v10538 = vunpack.c.l.b16 %v10242
  %v10539 = vunpack.c.h.b16 %v10242
  %v10540 = vunpack.c.l.b16 %v10243
  %v10541 = vunpack.c.h.b16 %v10243
  %v10542 = vunpack.c.l.b16 %v10244
  %v10543 = vunpack.c.h.b16 %v10244
  %v10544 = vunpack.c.l.b16 %v10245
  %v10545 = vunpack.c.h.b16 %v10245
  %v10546 = vunpack.c.l.b16 %v10246
  %v10547 = vunpack.c.h.b16 %v10246
  %v10548 = vunpack.c.l.b16 %v10247
  %v10549 = vunpack.c.h.b16 %v10247
  %v10550 = vunpack.c.l.b16 %v10248
  %v10551 = vunpack.c.h.b16 %v10248
  %v10552 = vunpack.c.l.b16 %v10249
  %v10553 = vunpack.c.h.b16 %v10249
  %v10554 = vunpack.c.l.b16 %v10250
  %v10555 = vunpack.c.h.b16 %v10250
  %v10556 = vunpack.c.l.b16 %v10251
  %v10557 = vunpack.c.h.b16 %v10251
  %v10558 = vunpack.c.l.b16 %v10252
  %v10559 = vunpack.c.h.b16 %v10252
  %v10560 = vunpack.c.l.b16 %v10253
  %v10561 = vunpack.c.h.b16 %v10253
  %v10562 = vunpack.c.l.b16 %v10254
  %v10563 = vunpack.c.h.b16 %v10254
  %v10564 = vunpack.c.l.b16 %v10255
  %v10565 = vunpack.c.h.b16 %v10255
  %v10566 = vunpack.c.l.b16 %v10256
  %v10567 = vunpack.c.h.b16 %v10256
  %v10568 = vunpack.c.l.b16 %v10257
  %v10569 = vunpack.c.h.b16 %v10257
  %v10570 = vunpack.c.l.b16 %v10258
  %v10571 = vunpack.c.h.b16 %v10258
  %v10572 = vunpack.c.l.b16 %v10259
  %v10573 = vunpack.c.h.b16 %v10259
  %v10574 = vunpack.c.l.b16 %v10260
  %v10575 = vunpack.c.h.b16 %v10260
  %v10576 = vunpack.c.l.b16 %v10261
  %v10577 = vunpack.c.h.b16 %v10261
  %v10578 = vunpack.c.l.b16 %v10262
  %v10579 = vunpack.c.h.b16 %v10262
  %v10580 = vunpack.c.l.b16 %v10263
  %v10581 = vunpack.c.h.b16 %v10263
  %v10582 = vunpack.c.l.b16 %v10264
  %v10583 = vunpack.c.h.b16 %v10264
  %v10584 = vunpack.c.l.b16 %v10265
  %v10585 = vunpack.c.h.b16 %v10265
  %v10586 = vunpack.c.l.b16 %v10266
  %v10587 = vunpack.c.h.b16 %v10266
  %v10588 = vunpack.c.l.b16 %v10267
  %v10589 = vunpack.c.h.b16 %v10267
  %v10590 = vunpack.c.l.b16 %v10268
  %v10591 = vunpack.c.h.b16 %v10268
  %v10592 = vunpack.c.l.b16 %v10269
  %v10593 = vunpack.c.h.b16 %v10269
  %v10594 = vunpack.c.l.b16 %v10270
  %v10595 = vunpack.c.h.b16 %v10270
  %v10596 = vunpack.c.l.b16 %v10271
  %v10597 = vunpack.c.h.b16 %v10271
  %v10598 = vunpack.c.l.b16 %v10272
  %v10599 = vunpack.c.h.b16 %v10272
  %v10600 = vunpack.c.l.b16 %v10273
  %v10601 = vunpack.c.h.b16 %v10273
  %v10602 = vunpack.c.l.b16 %v10274
  %v10603 = vunpack.c.h.b16 %v10274
  %v10604 = vunpack.c.l.b16 %v10275
  %v10605 = vunpack.c.h.b16 %v10275
  %v10606 = vunpack.c.l.b16 %v10276
  %v10607 = vunpack.c.h.b16 %v10276
  %v10608 = vunpack.c.l.b16 %v10277
  %v10609 = vunpack.c.h.b16 %v10277
  %v10610 = vunpack.c.l.b16 %v10278
  %v10611 = vunpack.c.h.b16 %v10278
  %v10612 = vunpack.c.l.b16 %v10279
  %v10613 = vunpack.c.h.b16 %v10279
  %v10614 = vunpack.c.l.b16 %v10280
  %v10615 = vunpack.c.h.b16 %v10280
  %v10616 = vunpack.c.l.b16 %v10281
  %v10617 = vunpack.c.h.b16 %v10281
  %v10618 = vpack.c.b16 %v10398, %v10394
  %v10619 = vpack.c.b16 %v10399, %v10395
  %v10620 = vpack.c.b16 %v10400, %v10396
  %v10621 = vpack.c.b16 %v10401, %v10397
  %v10622 = vpack.c.b16 %v10406, %v10402
  %v10623 = vpack.c.b16 %v10407, %v10403
  %v10624 = vpack.c.b16 %v10408, %v10404
  %v10625 = vpack.c.b16 %v10409, %v10405
  %v10626 = vpack.c.b16 %v10414, %v10410
  %v10627 = vpack.c.b16 %v10415, %v10411
  %v10628 = vpack.c.b16 %v10416, %v10412
  %v10629 = vpack.c.b16 %v10417, %v10413
  %v10630 = vpack.c.b16 %v10422, %v10418
  %v10631 = vpack.c.b16 %v10423, %v10419
  %v10632 = vpack.c.b16 %v10424, %v10420
  %v10633 = vpack.c.b16 %v10425, %v10421
  %v10634 = vpack.c.b16 %v10430, %v10426
  %v10635 = vpack.c.b16 %v10431, %v10427
  %v10636 = vpack.c.b16 %v10432, %v10428
  %v10637 = vpack.c.b16 %v10433, %v10429
  %v10638 = vpack.c.b16 %v10438, %v10434
  %v10639 = vpack.c.b16 %v10439, %v10435
  %v10640 = vpack.c.b16 %v10440, %v10436
  %v10641 = vpack.c.b16 %v10441, %v10437
  %v10642 = vpack.c.b16 %v10446, %v10442
  %v10643 = vpack.c.b16 %v10447, %v10443
  %v10644 = vpack.c.b16 %v10448, %v10444
  %v10645 = vpack.c.b16 %v10449, %v10445
  %v10646 = vpack.c.b16 %v10454, %v10450
  %v10647 = vpack.c.b16 %v10455, %v10451
  %v10648 = vpack.c.b16 %v10456, %v10452
  %v10649 = vpack.c.b16 %v10457, %v10453
  %v10650 = vpack.c.b16 %v10462, %v10458
  %v10651 = vpack.c.b16 %v10463, %v10459
  %v10652 = vpack.c.b16 %v10464, %v10460
  %v10653 = vpack.c.b16 %v10465, %v10461
  %v10654 = vpack.c.b16 %v10470, %v10466
  %v10655 = vpack.c.b16 %v10471, %v10467
  %v10656 = vpack.c.b16 %v10472, %v10468
  %v10657 = vpack.c.b16 %v10473, %v10469
  %v10658 = vpack.c.b16 %v10478, %v10474
  %v10659 = vpack.c.b16 %v10479, %v10475
  %v10660 = vpack.c.b16 %v10480, %v10476
  %v10661 = vpack.c.b16 %v10481, %v10477
  %v10662 = vpack.c.b16 %v10486, %v10482
  %v10663 = vpack.c.b16 %v10487, %v10483
  %v10664 = vpack.c.b16 %v10488, %v10484
  %v10665 = vpack.c.b16 %v10489, %v10485
  %v10666 = vpack.c.b16 %v10494, %v10490
  %v10667 = vpack.c.b16 %v10495, %v10491
  %v10668 = vpack.c.b16 %v10496, %v10492
  %v10669 = vpack.c.b16 %v10497, %v10493
  %v10670 = vpack.c.b16 %v10502, %v10498
  %v10671 = vpack.c.b16 %v10503, %v10499
  %v10672 = vpack.c.b16 %v10504, %v10500
  %v10673 = vpack.c.b16 %v10505, %v10501
  %v10674 = vpack.c.b16 %v10510, %v10506
  %v10675 = vpack.c.b16 %v10511, %v10507
  %v10676 = vpack.c.b16 %v10512, %v10508
  %v10677 = vpack.c.b16 %v10513, %v10509
  %v10678 = vpack.c.b16 %v10518, %v10514
  %v10679 = vpack.c.b16 %v10519, %v10515
  %v10680 = vpack.c.b16 %v10520, %v10516
  %v10681 = vpack.c.b16 %v10521, %v10517
  %v10682 = vpack.c.b16 %v10526, %v10522
  %v10683 = vpack.c.b16 %v10527, %v10523
  %v10684 = vpack.c.b16 %v10528, %v10524
  %v10685 = vpack.c.b16 %v10529, %v10525
  %v10686 = vpack.c.b16 %v10534, %v10530
  %v10687 = vpack.c.b16 %v10535, %v10531
  %v10688 = vpack.c.b16 %v10536, %v10532
  %v10689 = vpack.c.b16 %v10537, %v10533
  %v10690 = vpack.c.b16 %v10542, %v10538
  %v10691 = vpack.c.b16 %v10543, %v10539
  %v10692 = vpack.c.b16 %v10544, %v10540
  %v10693 = vpack.c.b16 %v10545, %v10541
  %v10694 = vpack.c.b16 %v10550, %v10546
  %v10695 = vpack.c.b16 %v10551, %v10547
  %v10696 = vpack.c.b16 %v10552, %v10548
  %v10697 = vpack.c.b16 %v10553, %v10549
  %v10698 = vpack.c.b16 %v10558, %v10554
  %v10699 = vpack.c.b16 %v10559, %v10555
  %v10700 = vpack.c.b16 %v10560, %v10556
  %v10701 = vpack.c.b16 %v10561, %v10557
  %v10702 = vpack.c.b16 %v10566, %v10562
  %v10703 = vpack.c.b16 %v10567, %v10563
  %v10704 = vpack.c.b16 %v10568, %v10564
  %v10705 = vpack.c.b16 %v10569, %v10565
  %v10706 = vpack.c.b16 %v10574, %v10570
  %v10707 = vpack.c.b16 %v10575, %v10571
  %v10708 = vpack.c.b16 %v10576, %v10572
  %v10709 = vpack.c.b16 %v10577, %v10573
  %v10710 = vpack.c.b16 %v10582, %v10578
  %v10711 = vpack.c.b16 %v10583, %v10579
  %v10712 = vpack.c.b16 %v10584, %v10580
  %v10713 = vpack.c.b16 %v10585, %v10581
  %v10714 = vpack.c.b16 %v10590, %v10586
  %v10715 = vpack.c.b16 %v10591, %v10587
  %v10716 = vpack.c.b16 %v10592, %v10588
  %v10717 = vpack.c.b16 %v10593, %v10589
  %v10718 = vpack.c.b16 %v10598, %v10594
  %v10719 = vpack.c.b16 %v10599, %v10595
  %v10720 = vpack.c.b16 %v10600, %v10596
  %v10721 = vpack.c.b16 %v10601, %v10597
  %v10722 = vpack.c.b16 %v10606, %v10602
  %v10723 = vpack.c.b16 %v10607, %v10603
  %v10724 = vpack.c.b16 %v10608, %v10604
  %v10725 = vpack.c.b16 %v10609, %v10605
  %v10726 = vpack.c.b16 %v10614, %v10610
  %v10727 = vpack.c.b16 %v10615, %v10611
  %v10728 = vpack.c.b16 %v10616, %v10612
  %v10729 = vpack.c.b16 %v10617, %v10613
  %v10843 = vsel %vm537, %v10169, 0
  %10845 = vmatprep.subr.bf16.mxu0 %v10619
  %10846 = vmatpush1.bf16.msra.mxu0 %v10618
  %10847 = vmatprep.subr.bf16.mxu0 %v10623
  %10848 = vmatpush1.bf16.msra.mxu0 %v10622
  %10849 = vmatprep.subr.bf16.mxu0 %v10627
  %10850 = vmatpush1.bf16.msra.mxu0 %v10626
  %10851 = vmatprep.subr.bf16.mxu0 %v10631
  %10852 = vmatpush1.bf16.msra.mxu0 %v10630
  %10853 = vmatprep.subr.bf16.mxu0 %v10635
  %10854 = vmatpush1.bf16.msra.mxu0 %v10634
  %10855 = vmatprep.subr.bf16.mxu0 %v10639
  %10856 = vmatpush1.bf16.msra.mxu0 %v10638
  %10857 = vmatprep.subr.bf16.mxu0 %v10643
  %10858 = vmatpush1.bf16.msra.mxu0 %v10642
  %10859 = vmatprep.subr.bf16.mxu0 %v10647
  %10860 = vmatpush1.bf16.msra.mxu0 %v10646
  %10861 = vmatprep.subr.bf16.mxu0 %v10651
  %10862 = vmatpush1.bf16.msra.mxu0 %v10650
  %10863 = vmatprep.subr.bf16.mxu0 %v10655
  %10864 = vmatpush1.bf16.msra.mxu0 %v10654
  %10865 = vmatprep.subr.bf16.mxu0 %v10659
  %10866 = vmatpush1.bf16.msra.mxu0 %v10658
  %10867 = vmatprep.subr.bf16.mxu0 %v10663
  %10868 = vmatpush1.bf16.msra.mxu0 %v10662
  %10869 = vmatprep.subr.bf16.mxu0 %v10667
  %10870 = vmatpush1.bf16.msra.mxu0 %v10666
  %10871 = vmatprep.subr.bf16.mxu0 %v10671
  %10872 = vmatpush1.bf16.msra.mxu0 %v10670
  %10873 = vmatprep.subr.bf16.mxu0 %v10675
  %10874 = vmatpush1.bf16.msra.mxu0 %v10674
  %10875 = vmatprep.subr.bf16.mxu0 %v10679
  %10876 = vmatpush1.bf16.msra.mxu0 %v10678
  %10877 = vmatprep.mubr.bf16.mxu0 %v10167
  %10878 = vmatmul.mubr.bf16.gmra.mrb[0].mxu0 %v10166
  %v10879 = vpop.f32.mrb[0].mxu0
  %v10880 = vadd.f32 0.0, %v10879
  %v10881 = vpop.f32.mrb[0].mxu0
  %v10882 = vadd.f32 0.0, %v10881
  %v10883 = vpop.f32.mrb[0].mxu0
  %v10884 = vpop.f32.mrb[0].mxu0
  %10885 = vdwg.mxu0
  %10886 = vmatprep.subr.bf16.mxu0 %v10683
  %10887 = vmatpush1.bf16.msra.mxu0 %v10682
  %10888 = vmatprep.subr.bf16.mxu0 %v10687
  %10889 = vmatpush1.bf16.msra.mxu0 %v10686
  %10890 = vmatprep.subr.bf16.mxu0 %v10691
  %10891 = vmatpush1.bf16.msra.mxu0 %v10690
  %10892 = vmatprep.subr.bf16.mxu0 %v10695
  %10893 = vmatpush1.bf16.msra.mxu0 %v10694
  %10894 = vmatprep.subr.bf16.mxu0 %v10699
  %10895 = vmatpush1.bf16.msra.mxu0 %v10698
  %10896 = vmatprep.subr.bf16.mxu0 %v10703
  %10897 = vmatpush1.bf16.msra.mxu0 %v10702
  %10898 = vmatprep.subr.bf16.mxu0 %v10707
  %10899 = vmatpush1.bf16.msra.mxu0 %v10706
  %10900 = vmatprep.subr.bf16.mxu0 %v10711
  %10901 = vmatpush1.bf16.msra.mxu0 %v10710
  %10902 = vmatprep.subr.bf16.mxu0 %v10715
  %10903 = vmatpush1.bf16.msra.mxu0 %v10714
  %10904 = vmatprep.subr.bf16.mxu0 %v10719
  %10905 = vmatpush1.bf16.msra.mxu0 %v10718
  %10906 = vmatprep.subr.bf16.mxu0 %v10723
  %10907 = vmatpush1.bf16.msra.mxu0 %v10722
  %10908 = vmatprep.subr.bf16.mxu0 %v10727
  %10909 = vmatpush1.bf16.msra.mxu0 %v10726
  %10910 = vmatprep.subr.bf16.mxu0 0
  %10911 = vmatpush1.bf16.msra.mxu0 0
  %10912 = vmatprep.subr.bf16.mxu0 0
  %10913 = vmatpush1.bf16.msra.mxu0 0
  %10914 = vmatprep.subr.bf16.mxu0 0
  %10915 = vmatpush1.bf16.msra.mxu0 0
  %10916 = vmatprep.subr.bf16.mxu0 0
  %10917 = vmatpush1.bf16.msra.mxu0 0
  %10918 = vmatprep.mubr.bf16.mxu0 %v10843
  %10919 = vmatmul.mubr.bf16.gmra.mrb[0].mxu0 %v10168
  %v10920 = vpop.f32.mrb[0].mxu0
  %v10921 = vadd.f32 %v10880, %v10920
  %v10922 = vpop.f32.mrb[0].mxu0
  %v10923 = vadd.f32 %v10882, %v10922
  %v10924 = vpop.f32.mrb[0].mxu0
  %v10925 = vpop.f32.mrb[0].mxu0
  %10926 = vdwg.mxu0
  %10927 = vmatprep.subr.bf16.mxu0 %v10621
  %10928 = vmatpush1.bf16.msra.mxu0 %v10620
  %10929 = vmatprep.subr.bf16.mxu0 %v10625
  %10930 = vmatpush1.bf16.msra.mxu0 %v10624
  %10931 = vmatprep.subr.bf16.mxu0 %v10629
  %10932 = vmatpush1.bf16.msra.mxu0 %v10628
  %10933 = vmatprep.subr.bf16.mxu0 %v10633
  %10934 = vmatpush1.bf16.msra.mxu0 %v10632
  %10935 = vmatprep.subr.bf16.mxu0 %v10637
  %10936 = vmatpush1.bf16.msra.mxu0 %v10636
  %10937 = vmatprep.subr.bf16.mxu0 %v10641
  %10938 = vmatpush1.bf16.msra.mxu0 %v10640
  %10939 = vmatprep.subr.bf16.mxu0 %v10645
  %10940 = vmatpush1.bf16.msra.mxu0 %v10644
  %10941 = vmatprep.subr.bf16.mxu0 %v10649
  %10942 = vmatpush1.bf16.msra.mxu0 %v10648
  %10943 = vmatprep.subr.bf16.mxu0 %v10653
  %10944 = vmatpush1.bf16.msra.mxu0 %v10652
  %10945 = vmatprep.subr.bf16.mxu0 %v10657
  %10946 = vmatpush1.bf16.msra.mxu0 %v10656
  %10947 = vmatprep.subr.bf16.mxu0 %v10661
  %10948 = vmatpush1.bf16.msra.mxu0 %v10660
  %10949 = vmatprep.subr.bf16.mxu0 %v10665
  %10950 = vmatpush1.bf16.msra.mxu0 %v10664
  %10951 = vmatprep.subr.bf16.mxu0 %v10669
  %10952 = vmatpush1.bf16.msra.mxu0 %v10668
  %10953 = vmatprep.subr.bf16.mxu0 %v10673
  %10954 = vmatpush1.bf16.msra.mxu0 %v10672
  %10955 = vmatprep.subr.bf16.mxu0 %v10677
  %10956 = vmatpush1.bf16.msra.mxu0 %v10676
  %10957 = vmatprep.subr.bf16.mxu0 %v10681
  %10958 = vmatpush1.bf16.msra.mxu0 %v10680
  %10959 = vmatprep.mubr.bf16.mxu0 %v10167
  %10960 = vmatmul.mubr.bf16.gmra.mrb[0].mxu0 %v10166
  %v10961 = vpop.f32.mrb[0].mxu0
  %v10962 = vadd.f32 0.0, %v10961
  %v10963 = vpop.f32.mrb[0].mxu0
  %v10964 = vadd.f32 0.0, %v10963
  %v10965 = vpop.f32.mrb[0].mxu0
  %v10966 = vpop.f32.mrb[0].mxu0
  %10967 = vdwg.mxu0
  %10968 = vmatprep.subr.bf16.mxu0 %v10685
  %10969 = vmatpush1.bf16.msra.mxu0 %v10684
  %10970 = vmatprep.subr.bf16.mxu0 %v10689
  %10971 = vmatpush1.bf16.msra.mxu0 %v10688
  %10972 = vmatprep.subr.bf16.mxu0 %v10693
  %10973 = vmatpush1.bf16.msra.mxu0 %v10692
  %10974 = vmatprep.subr.bf16.mxu0 %v10697
  %10975 = vmatpush1.bf16.msra.mxu0 %v10696
  %10976 = vmatprep.subr.bf16.mxu0 %v10701
  %10977 = vmatpush1.bf16.msra.mxu0 %v10700
  %10978 = vmatprep.subr.bf16.mxu0 %v10705
  %10979 = vmatpush1.bf16.msra.mxu0 %v10704
  %10980 = vmatprep.subr.bf16.mxu0 %v10709
  %10981 = vmatpush1.bf16.msra.mxu0 %v10708
  %10982 = vmatprep.subr.bf16.mxu0 %v10713
  %10983 = vmatpush1.bf16.msra.mxu0 %v10712
  %10984 = vmatprep.subr.bf16.mxu0 %v10717
  %10985 = vmatpush1.bf16.msra.mxu0 %v10716
  %10986 = vmatprep.subr.bf16.mxu0 %v10721
  %10987 = vmatpush1.bf16.msra.mxu0 %v10720
  %10988 = vmatprep.subr.bf16.mxu0 %v10725
  %10989 = vmatpush1.bf16.msra.mxu0 %v10724
  %10990 = vmatprep.subr.bf16.mxu0 %v10729
  %10991 = vmatpush1.bf16.msra.mxu0 %v10728
  %10992 = vmatprep.subr.bf16.mxu0 0
  %10993 = vmatpush1.bf16.msra.mxu0 0
  %10994 = vmatprep.subr.bf16.mxu0 0
  %10995 = vmatpush1.bf16.msra.mxu0 0
  %10996 = vmatprep.subr.bf16.mxu0 0
  %10997 = vmatpush1.bf16.msra.mxu0 0
  %10998 = vmatprep.subr.bf16.mxu0 0
  %10999 = vmatpush1.bf16.msra.mxu0 0
  %11000 = vmatprep.mubr.bf16.mxu0 %v10843
  %11001 = vmatmul.mubr.bf16.gmra.mrb[0].mxu0 %v10168
  %v11002 = vpop.f32.mrb[0].mxu0
  %v11003 = vadd.f32 %v10962, %v11002
  %v11004 = vpop.f32.mrb[0].mxu0
  %v11005 = vadd.f32 %v10964, %v11004
  %v11006 = vpop.f32.mrb[0].mxu0
  %v11007 = vpop.f32.mrb[0].mxu0
  %11008 = vdwg.mxu0
  %v11009 = vadd.f32 %v10158, %v10921
  %v11010 = vadd.f32 %v10159, %v10923
  %v11011 = vadd.f32 %v10160, %v11003
  %v11012 = vadd.f32 %v10161, %v11005
  %v11013 = vld [vmem:[#allocation4 + $0x20] sm:$0xc]
  %v11014 = vld [vmem:[#allocation4 + $0x28] sm:$0xc]
  %v11015 = vld [vmem:[#allocation4 + $0x30] sm:$0xc]
  %v11016 = vld [vmem:[#allocation4 + $0x38] sm:$0xc]
  %v11017 = vpack.c.bf16 %v11013, %v11013
  %v11018 = vpack.c.bf16 %v11014, %v11014
  %v11019 = vpack.c.bf16 %v11015, %v11015
  %v11020 = vpack.c.bf16 %v11016, %v11016
  %v11021 = vld [vmem:[%s4 + $0x1180] sm:$0xff]
  %v11022 = vld [vmem:[%s4 + $0x1188] sm:$0xff]
  %v11023 = vld [vmem:[%s4 + $0x1190] sm:$0xff]
  %v11024 = vld [vmem:[%s4 + $0x1198] sm:$0xff]
  %v11025 = vld [vmem:[%s4 + $0x11a0] sm:$0xff]
  %v11026 = vld [vmem:[%s4 + $0x11a8] sm:$0xff]
  %v11027 = vld [vmem:[%s4 + $0x11b0] sm:$0xff]
  %v11028 = vld [vmem:[%s4 + $0x11b8] sm:$0xff]
  %v11029 = vld [vmem:[%s4 + $0x11c0] sm:$0xff]
  %v11030 = vld [vmem:[%s4 + $0x11c8] sm:$0xff]
  %v11031 = vld [vmem:[%s4 + $0x11d0] sm:$0xff]
  %v11032 = vld [vmem:[%s4 + $0x11d8] sm:$0xff]
  %v11033 = vld [vmem:[%s4 + $0x11e0] sm:$0xff]
  %v11034 = vld [vmem:[%s4 + $0x11e8] sm:$0xff]
  %v11035 = vld [vmem:[%s4 + $0x11f0] sm:$0xff]
  %v11036 = vld [vmem:[%s4 + $0x11f8] sm:$0xff]
  %v11037 = vld [vmem:[%s4 + $0x1200] sm:$0xff]
  %v11038 = vld [vmem:[%s4 + $0x1208] sm:$0xff]
  %v11039 = vld [vmem:[%s4 + $0x1210] sm:$0xff]
  %v11040 = vld [vmem:[%s4 + $0x1218] sm:$0xff]
  %v11041 = vld [vmem:[%s4 + $0x1220] sm:$0xff]
  %v11042 = vld [vmem:[%s4 + $0x1228] sm:$0xff]
  %v11043 = vld [vmem:[%s4 + $0x1230] sm:$0xff]
  %v11044 = vld [vmem:[%s4 + $0x1238] sm:$0xff]
  %v11045 = vld [vmem:[%s4 + $0x1240] sm:$0xff]
  %v11046 = vld [vmem:[%s4 + $0x1248] sm:$0xff]
  %v11047 = vld [vmem:[%s4 + $0x1250] sm:$0xff]
  %v11048 = vld [vmem:[%s4 + $0x1258] sm:$0xff]
  %v11049 = vld [vmem:[%s4 + $0x1260] sm:$0xff]
  %v11050 = vld [vmem:[%s4 + $0x1268] sm:$0xff]
  %v11051 = vld [vmem:[%s4 + $0x1270] sm:$0xff]
  %v11052 = vld [vmem:[%s4 + $0x1278] sm:$0xff]
  %v11053 = vld [vmem:[%s4 + $0x1280] sm:$0xff]
  %v11054 = vld [vmem:[%s4 + $0x1288] sm:$0xff]
  %v11055 = vld [vmem:[%s4 + $0x1290] sm:$0xff]
  %v11056 = vld [vmem:[%s4 + $0x1298] sm:$0xff]
  %v11057 = vld [vmem:[%s4 + $0x12a0] sm:$0xff]
  %v11058 = vld [vmem:[%s4 + $0x12a8] sm:$0xff]
  %v11059 = vld [vmem:[%s4 + $0x12b0] sm:$0xff]
  %v11060 = vld [vmem:[%s4 + $0x12b8] sm:$0xff]
  %v11061 = vld [vmem:[%s4 + $0x12c0] sm:$0xff]
  %v11062 = vld [vmem:[%s4 + $0x12c8] sm:$0xff]
  %v11063 = vld [vmem:[%s4 + $0x12d0] sm:$0xff]
  %v11064 = vld [vmem:[%s4 + $0x12d8] sm:$0xff]
  %v11065 = vld [vmem:[%s4 + $0x12e0] sm:$0xff]
  %v11066 = vld [vmem:[%s4 + $0x12e8] sm:$0xff]
  %v11067 = vld [vmem:[%s4 + $0x12f0] sm:$0xff]
  %v11068 = vld [vmem:[%s4 + $0x12f8] sm:$0xff]
  %v11069 = vld [vmem:[%s4 + $0x1300] sm:$0xff]
  %v11070 = vld [vmem:[%s4 + $0x1308] sm:$0xff]
  %v11071 = vld [vmem:[%s4 + $0x1310] sm:$0xff]
  %v11072 = vld [vmem:[%s4 + $0x1318] sm:$0xff]
  %v11073 = vld [vmem:[%s4 + $0x1320] sm:$0xff]
  %v11074 = vld [vmem:[%s4 + $0x1328] sm:$0xff]
  %v11075 = vld [vmem:[%s4 + $0x1330] sm:$0xff]
  %v11076 = vld [vmem:[%s4 + $0x1338] sm:$0xff]
  %v11077 = vld [vmem:[%s4 + $0x1340] sm:$0xff]
  %v11078 = vld [vmem:[%s4 + $0x1348] sm:$0xff]
  %v11079 = vld [vmem:[%s4 + $0x1350] sm:$0xff]
  %v11080 = vld [vmem:[%s4 + $0x1358] sm:$0xff]
  %v11081 = vld [vmem:[%s4 + $0x1360] sm:$0xff]
  %v11082 = vld [vmem:[%s4 + $0x1368] sm:$0xff]
  %v11083 = vld [vmem:[%s4 + $0x1370] sm:$0xff]
  %v11084 = vld [vmem:[%s4 + $0x1378] sm:$0xff]
  %v11085 = vld [vmem:[%s4 + $0x1380] sm:$0xff]
  %v11086 = vld [vmem:[%s4 + $0x1388] sm:$0xff]
  %v11087 = vld [vmem:[%s4 + $0x1390] sm:$0xff]
  %v11088 = vld [vmem:[%s4 + $0x1398] sm:$0xff]
  %v11089 = vld [vmem:[%s4 + $0x13a0] sm:$0xff]
  %v11090 = vld [vmem:[%s4 + $0x13a8] sm:$0xff]
  %v11091 = vld [vmem:[%s4 + $0x13b0] sm:$0xff]
  %v11092 = vld [vmem:[%s4 + $0x13b8] sm:$0xff]
  %v11093 = vld [vmem:[%s4 + $0x13c0] sm:$0xff]
  %v11094 = vld [vmem:[%s4 + $0x13c8] sm:$0xff]
  %v11095 = vld [vmem:[%s4 + $0x13d0] sm:$0xff]
  %v11096 = vld [vmem:[%s4 + $0x13d8] sm:$0xff]
  %v11097 = vld [vmem:[%s4 + $0x13e0] sm:$0xff]
  %v11098 = vld [vmem:[%s4 + $0x13e8] sm:$0xff]
  %v11099 = vld [vmem:[%s4 + $0x13f0] sm:$0xff]
  %v11100 = vld [vmem:[%s4 + $0x13f8] sm:$0xff]
  %v11101 = vld [vmem:[%s4 + $0x1400] sm:$0xff]
  %v11102 = vld [vmem:[%s4 + $0x1408] sm:$0xff]
  %v11103 = vld [vmem:[%s4 + $0x1410] sm:$0xff]
  %v11104 = vld [vmem:[%s4 + $0x1418] sm:$0xff]
  %v11105 = vld [vmem:[%s4 + $0x1420] sm:$0xff]
  %v11106 = vld [vmem:[%s4 + $0x1428] sm:$0xff]
  %v11107 = vld [vmem:[%s4 + $0x1430] sm:$0xff]
  %v11108 = vld [vmem:[%s4 + $0x1438] sm:$0xff]
  %v11109 = vld [vmem:[%s4 + $0x1440] sm:$0xff]
  %v11110 = vld [vmem:[%s4 + $0x1448] sm:$0xff]
  %v11111 = vld [vmem:[%s4 + $0x1450] sm:$0xff]
  %v11112 = vld [vmem:[%s4 + $0x1458] sm:$0xff]
  %v11113 = vld [vmem:[%s4 + $0x1460] sm:$0xff]
  %v11114 = vld [vmem:[%s4 + $0x1468] sm:$0xff]
  %v11115 = vld [vmem:[%s4 + $0x1470] sm:$0xff]
  %v11116 = vld [vmem:[%s4 + $0x1478] sm:$0xff]
  %v11117 = vld [vmem:[%s4 + $0x1480] sm:$0xff]
  %v11118 = vld [vmem:[%s4 + $0x1488] sm:$0xff]
  %v11119 = vld [vmem:[%s4 + $0x1490] sm:$0xff]
  %v11120 = vld [vmem:[%s4 + $0x1498] sm:$0xff]
  %v11121 = vld [vmem:[%s4 + $0x14a0] sm:$0xff]
  %v11122 = vld [vmem:[%s4 + $0x14a8] sm:$0xff]
  %v11123 = vld [vmem:[%s4 + $0x14b0] sm:$0xff]
  %v11124 = vld [vmem:[%s4 + $0x14b8] sm:$0xff]
  %v11125 = vld [vmem:[%s4 + $0x14c0] sm:$0xff]
  %v11126 = vld [vmem:[%s4 + $0x14c8] sm:$0xff]
  %v11127 = vld [vmem:[%s4 + $0x14d0] sm:$0xff]
  %v11128 = vld [vmem:[%s4 + $0x14d8] sm:$0xff]
  %v11129 = vld [vmem:[%s4 + $0x14e0] sm:$0xff]
  %v11130 = vld [vmem:[%s4 + $0x14e8] sm:$0xff]
  %v11131 = vld [vmem:[%s4 + $0x14f0] sm:$0xff]
  %v11132 = vld [vmem:[%s4 + $0x14f8] sm:$0xff]
  %v11137 = vrot.slane %v11017, 1
  %v11138 = vrot.slane %v11018, 1
  %v11139 = vrot.slane %v11019, 1
  %v11140 = vrot.slane %v11020, 1
  %v11256 = vunpack.c.l.b16 %v11021
  %v11257 = vunpack.c.h.b16 %v11021
  %v11258 = vunpack.c.l.b16 %v11022
  %v11259 = vunpack.c.h.b16 %v11022
  %v11260 = vunpack.c.l.b16 %v11023
  %v11261 = vunpack.c.h.b16 %v11023
  %v11262 = vunpack.c.l.b16 %v11024
  %v11263 = vunpack.c.h.b16 %v11024
  %v11264 = vunpack.c.l.b16 %v11025
  %v11265 = vunpack.c.h.b16 %v11025
  %v11266 = vunpack.c.l.b16 %v11026
  %v11267 = vunpack.c.h.b16 %v11026
  %v11268 = vunpack.c.l.b16 %v11027
  %v11269 = vunpack.c.h.b16 %v11027
  %v11270 = vunpack.c.l.b16 %v11028
  %v11271 = vunpack.c.h.b16 %v11028
  %v11272 = vunpack.c.l.b16 %v11029
  %v11273 = vunpack.c.h.b16 %v11029
  %v11274 = vunpack.c.l.b16 %v11030
  %v11275 = vunpack.c.h.b16 %v11030
  %v11276 = vunpack.c.l.b16 %v11031
  %v11277 = vunpack.c.h.b16 %v11031
  %v11278 = vunpack.c.l.b16 %v11032
  %v11279 = vunpack.c.h.b16 %v11032
  %v11280 = vunpack.c.l.b16 %v11033
  %v11281 = vunpack.c.h.b16 %v11033
  %v11282 = vunpack.c.l.b16 %v11034
  %v11283 = vunpack.c.h.b16 %v11034
  %v11284 = vunpack.c.l.b16 %v11035
  %v11285 = vunpack.c.h.b16 %v11035
  %v11286 = vunpack.c.l.b16 %v11036
  %v11287 = vunpack.c.h.b16 %v11036
  %v11288 = vunpack.c.l.b16 %v11037
  %v11289 = vunpack.c.h.b16 %v11037
  %v11290 = vunpack.c.l.b16 %v11038
  %v11291 = vunpack.c.h.b16 %v11038
  %v11292 = vunpack.c.l.b16 %v11039
  %v11293 = vunpack.c.h.b16 %v11039
  %v11294 = vunpack.c.l.b16 %v11040
  %v11295 = vunpack.c.h.b16 %v11040
  %v11296 = vunpack.c.l.b16 %v11041
  %v11297 = vunpack.c.h.b16 %v11041
  %v11298 = vunpack.c.l.b16 %v11042
  %v11299 = vunpack.c.h.b16 %v11042
  %v11300 = vunpack.c.l.b16 %v11043
  %v11301 = vunpack.c.h.b16 %v11043
  %v11302 = vunpack.c.l.b16 %v11044
  %v11303 = vunpack.c.h.b16 %v11044
  %v11304 = vunpack.c.l.b16 %v11045
  %v11305 = vunpack.c.h.b16 %v11045
  %v11306 = vunpack.c.l.b16 %v11046
  %v11307 = vunpack.c.h.b16 %v11046
  %v11308 = vunpack.c.l.b16 %v11047
  %v11309 = vunpack.c.h.b16 %v11047
  %v11310 = vunpack.c.l.b16 %v11048
  %v11311 = vunpack.c.h.b16 %v11048
  %v11312 = vunpack.c.l.b16 %v11049
  %v11313 = vunpack.c.h.b16 %v11049
  %v11314 = vunpack.c.l.b16 %v11050
  %v11315 = vunpack.c.h.b16 %v11050
  %v11316 = vunpack.c.l.b16 %v11051
  %v11317 = vunpack.c.h.b16 %v11051
  %v11318 = vunpack.c.l.b16 %v11052
  %v11319 = vunpack.c.h.b16 %v11052
  %v11320 = vunpack.c.l.b16 %v11053
  %v11321 = vunpack.c.h.b16 %v11053
  %v11322 = vunpack.c.l.b16 %v11054
  %v11323 = vunpack.c.h.b16 %v11054
  %v11324 = vunpack.c.l.b16 %v11055
  %v11325 = vunpack.c.h.b16 %v11055
  %v11326 = vunpack.c.l.b16 %v11056
  %v11327 = vunpack.c.h.b16 %v11056
  %v11328 = vunpack.c.l.b16 %v11057
  %v11329 = vunpack.c.h.b16 %v11057
  %v11330 = vunpack.c.l.b16 %v11058
  %v11331 = vunpack.c.h.b16 %v11058
  %v11332 = vunpack.c.l.b16 %v11059
  %v11333 = vunpack.c.h.b16 %v11059
  %v11334 = vunpack.c.l.b16 %v11060
  %v11335 = vunpack.c.h.b16 %v11060
  %v11336 = vunpack.c.l.b16 %v11061
  %v11337 = vunpack.c.h.b16 %v11061
  %v11338 = vunpack.c.l.b16 %v11062
  %v11339 = vunpack.c.h.b16 %v11062
  %v11340 = vunpack.c.l.b16 %v11063
  %v11341 = vunpack.c.h.b16 %v11063
  %v11342 = vunpack.c.l.b16 %v11064
  %v11343 = vunpack.c.h.b16 %v11064
  %v11344 = vunpack.c.l.b16 %v11065
  %v11345 = vunpack.c.h.b16 %v11065
  %v11346 = vunpack.c.l.b16 %v11066
  %v11347 = vunpack.c.h.b16 %v11066
  %v11348 = vunpack.c.l.b16 %v11067
  %v11349 = vunpack.c.h.b16 %v11067
  %v11350 = vunpack.c.l.b16 %v11068
  %v11351 = vunpack.c.h.b16 %v11068
  %v11352 = vunpack.c.l.b16 %v11069
  %v11353 = vunpack.c.h.b16 %v11069
  %v11354 = vunpack.c.l.b16 %v11070
  %v11355 = vunpack.c.h.b16 %v11070
  %v11356 = vunpack.c.l.b16 %v11071
  %v11357 = vunpack.c.h.b16 %v11071
  %v11358 = vunpack.c.l.b16 %v11072
  %v11359 = vunpack.c.h.b16 %v11072
  %v11360 = vunpack.c.l.b16 %v11073
  %v11361 = vunpack.c.h.b16 %v11073
  %v11362 = vunpack.c.l.b16 %v11074
  %v11363 = vunpack.c.h.b16 %v11074
  %v11364 = vunpack.c.l.b16 %v11075
  %v11365 = vunpack.c.h.b16 %v11075
  %v11366 = vunpack.c.l.b16 %v11076
  %v11367 = vunpack.c.h.b16 %v11076
  %v11368 = vunpack.c.l.b16 %v11077
  %v11369 = vunpack.c.h.b16 %v11077
  %v11370 = vunpack.c.l.b16 %v11078
  %v11371 = vunpack.c.h.b16 %v11078
  %v11372 = vunpack.c.l.b16 %v11079
  %v11373 = vunpack.c.h.b16 %v11079
  %v11374 = vunpack.c.l.b16 %v11080
  %v11375 = vunpack.c.h.b16 %v11080
  %v11376 = vunpack.c.l.b16 %v11081
  %v11377 = vunpack.c.h.b16 %v11081
  %v11378 = vunpack.c.l.b16 %v11082
  %v11379 = vunpack.c.h.b16 %v11082
  %v11380 = vunpack.c.l.b16 %v11083
  %v11381 = vunpack.c.h.b16 %v11083
  %v11382 = vunpack.c.l.b16 %v11084
  %v11383 = vunpack.c.h.b16 %v11084
  %v11384 = vunpack.c.l.b16 %v11085
  %v11385 = vunpack.c.h.b16 %v11085
  %v11386 = vunpack.c.l.b16 %v11086
  %v11387 = vunpack.c.h.b16 %v11086
  %v11388 = vunpack.c.l.b16 %v11087
  %v11389 = vunpack.c.h.b16 %v11087
  %v11390 = vunpack.c.l.b16 %v11088
  %v11391 = vunpack.c.h.b16 %v11088
  %v11392 = vunpack.c.l.b16 %v11089
  %v11393 = vunpack.c.h.b16 %v11089
  %v11394 = vunpack.c.l.b16 %v11090
  %v11395 = vunpack.c.h.b16 %v11090
  %v11396 = vunpack.c.l.b16 %v11091
  %v11397 = vunpack.c.h.b16 %v11091
  %v11398 = vunpack.c.l.b16 %v11092
  %v11399 = vunpack.c.h.b16 %v11092
  %v11400 = vunpack.c.l.b16 %v11093
  %v11401 = vunpack.c.h.b16 %v11093
  %v11402 = vunpack.c.l.b16 %v11094
  %v11403 = vunpack.c.h.b16 %v11094
  %v11404 = vunpack.c.l.b16 %v11095
  %v11405 = vunpack.c.h.b16 %v11095
  %v11406 = vunpack.c.l.b16 %v11096
  %v11407 = vunpack.c.h.b16 %v11096
  %v11408 = vunpack.c.l.b16 %v11097
  %v11409 = vunpack.c.h.b16 %v11097
  %v11410 = vunpack.c.l.b16 %v11098
  %v11411 = vunpack.c.h.b16 %v11098
  %v11412 = vunpack.c.l.b16 %v11099
  %v11413 = vunpack.c.h.b16 %v11099
  %v11414 = vunpack.c.l.b16 %v11100
  %v11415 = vunpack.c.h.b16 %v11100
  %v11416 = vunpack.c.l.b16 %v11101
  %v11417 = vunpack.c.h.b16 %v11101
  %v11418 = vunpack.c.l.b16 %v11102
  %v11419 = vunpack.c.h.b16 %v11102
  %v11420 = vunpack.c.l.b16 %v11103
  %v11421 = vunpack.c.h.b16 %v11103
  %v11422 = vunpack.c.l.b16 %v11104
  %v11423 = vunpack.c.h.b16 %v11104
  %v11424 = vunpack.c.l.b16 %v11105
  %v11425 = vunpack.c.h.b16 %v11105
  %v11426 = vunpack.c.l.b16 %v11106
  %v11427 = vunpack.c.h.b16 %v11106
  %v11428 = vunpack.c.l.b16 %v11107
  %v11429 = vunpack.c.h.b16 %v11107
  %v11430 = vunpack.c.l.b16 %v11108
  %v11431 = vunpack.c.h.b16 %v11108
  %v11432 = vunpack.c.l.b16 %v11109
  %v11433 = vunpack.c.h.b16 %v11109
  %v11434 = vunpack.c.l.b16 %v11110
  %v11435 = vunpack.c.h.b16 %v11110
  %v11436 = vunpack.c.l.b16 %v11111
  %v11437 = vunpack.c.h.b16 %v11111
  %v11438 = vunpack.c.l.b16 %v11112
  %v11439 = vunpack.c.h.b16 %v11112
  %v11440 = vunpack.c.l.b16 %v11113
  %v11441 = vunpack.c.h.b16 %v11113
  %v11442 = vunpack.c.l.b16 %v11114
  %v11443 = vunpack.c.h.b16 %v11114
  %v11444 = vunpack.c.l.b16 %v11115
  %v11445 = vunpack.c.h.b16 %v11115
  %v11446 = vunpack.c.l.b16 %v11116
  %v11447 = vunpack.c.h.b16 %v11116
  %v11448 = vunpack.c.l.b16 %v11117
  %v11449 = vunpack.c.h.b16 %v11117
  %v11450 = vunpack.c.l.b16 %v11118
  %v11451 = vunpack.c.h.b16 %v11118
  %v11452 = vunpack.c.l.b16 %v11119
  %v11453 = vunpack.c.h.b16 %v11119
  %v11454 = vunpack.c.l.b16 %v11120
  %v11455 = vunpack.c.h.b16 %v11120
  %v11456 = vunpack.c.l.b16 %v11121
  %v11457 = vunpack.c.h.b16 %v11121
  %v11458 = vunpack.c.l.b16 %v11122
  %v11459 = vunpack.c.h.b16 %v11122
  %v11460 = vunpack.c.l.b16 %v11123
  %v11461 = vunpack.c.h.b16 %v11123
  %v11462 = vunpack.c.l.b16 %v11124
  %v11463 = vunpack.c.h.b16 %v11124
  %v11464 = vunpack.c.l.b16 %v11125
  %v11465 = vunpack.c.h.b16 %v11125
  %v11466 = vunpack.c.l.b16 %v11126
  %v11467 = vunpack.c.h.b16 %v11126
  %v11468 = vunpack.c.l.b16 %v11127
  %v11469 = vunpack.c.h.b16 %v11127
  %v11470 = vunpack.c.l.b16 %v11128
  %v11471 = vunpack.c.h.b16 %v11128
  %v11472 = vunpack.c.l.b16 %v11129
  %v11473 = vunpack.c.h.b16 %v11129
  %v11474 = vunpack.c.l.b16 %v11130
  %v11475 = vunpack.c.h.b16 %v11130
  %v11476 = vunpack.c.l.b16 %v11131
  %v11477 = vunpack.c.h.b16 %v11131
  %v11478 = vunpack.c.l.b16 %v11132
  %v11479 = vunpack.c.h.b16 %v11132
  %v11480 = vpack.c.b16 %v11260, %v11256
  %v11481 = vpack.c.b16 %v11261, %v11257
  %v11482 = vpack.c.b16 %v11262, %v11258
  %v11483 = vpack.c.b16 %v11263, %v11259
  %v11484 = vpack.c.b16 %v11268, %v11264
  %v11485 = vpack.c.b16 %v11269, %v11265
  %v11486 = vpack.c.b16 %v11270, %v11266
  %v11487 = vpack.c.b16 %v11271, %v11267
  %v11488 = vpack.c.b16 %v11276, %v11272
  %v11489 = vpack.c.b16 %v11277, %v11273
  %v11490 = vpack.c.b16 %v11278, %v11274
  %v11491 = vpack.c.b16 %v11279, %v11275
  %v11492 = vpack.c.b16 %v11284, %v11280
  %v11493 = vpack.c.b16 %v11285, %v11281
  %v11494 = vpack.c.b16 %v11286, %v11282
  %v11495 = vpack.c.b16 %v11287, %v11283
  %v11496 = vpack.c.b16 %v11292, %v11288
  %v11497 = vpack.c.b16 %v11293, %v11289
  %v11498 = vpack.c.b16 %v11294, %v11290
  %v11499 = vpack.c.b16 %v11295, %v11291
  %v11500 = vpack.c.b16 %v11300, %v11296
  %v11501 = vpack.c.b16 %v11301, %v11297
  %v11502 = vpack.c.b16 %v11302, %v11298
  %v11503 = vpack.c.b16 %v11303, %v11299
  %v11504 = vpack.c.b16 %v11308, %v11304
  %v11505 = vpack.c.b16 %v11309, %v11305
  %v11506 = vpack.c.b16 %v11310, %v11306
  %v11507 = vpack.c.b16 %v11311, %v11307
  %v11508 = vpack.c.b16 %v11316, %v11312
  %v11509 = vpack.c.b16 %v11317, %v11313
  %v11510 = vpack.c.b16 %v11318, %v11314
  %v11511 = vpack.c.b16 %v11319, %v11315
  %v11512 = vpack.c.b16 %v11324, %v11320
  %v11513 = vpack.c.b16 %v11325, %v11321
  %v11514 = vpack.c.b16 %v11326, %v11322
  %v11515 = vpack.c.b16 %v11327, %v11323
  %v11516 = vpack.c.b16 %v11332, %v11328
  %v11517 = vpack.c.b16 %v11333, %v11329
  %v11518 = vpack.c.b16 %v11334, %v11330
  %v11519 = vpack.c.b16 %v11335, %v11331
  %v11520 = vpack.c.b16 %v11340, %v11336
  %v11521 = vpack.c.b16 %v11341, %v11337
  %v11522 = vpack.c.b16 %v11342, %v11338
  %v11523 = vpack.c.b16 %v11343, %v11339
  %v11524 = vpack.c.b16 %v11348, %v11344
  %v11525 = vpack.c.b16 %v11349, %v11345
  %v11526 = vpack.c.b16 %v11350, %v11346
  %v11527 = vpack.c.b16 %v11351, %v11347
  %v11528 = vpack.c.b16 %v11356, %v11352
  %v11529 = vpack.c.b16 %v11357, %v11353
  %v11530 = vpack.c.b16 %v11358, %v11354
  %v11531 = vpack.c.b16 %v11359, %v11355
  %v11532 = vpack.c.b16 %v11364, %v11360
  %v11533 = vpack.c.b16 %v11365, %v11361
  %v11534 = vpack.c.b16 %v11366, %v11362
  %v11535 = vpack.c.b16 %v11367, %v11363
  %v11536 = vpack.c.b16 %v11372, %v11368
  %v11537 = vpack.c.b16 %v11373, %v11369
  %v11538 = vpack.c.b16 %v11374, %v11370
  %v11539 = vpack.c.b16 %v11375, %v11371
  %v11540 = vpack.c.b16 %v11380, %v11376
  %v11541 = vpack.c.b16 %v11381, %v11377
  %v11542 = vpack.c.b16 %v11382, %v11378
  %v11543 = vpack.c.b16 %v11383, %v11379
  %v11544 = vpack.c.b16 %v11388, %v11384
  %v11545 = vpack.c.b16 %v11389, %v11385
  %v11546 = vpack.c.b16 %v11390, %v11386
  %v11547 = vpack.c.b16 %v11391, %v11387
  %v11548 = vpack.c.b16 %v11396, %v11392
  %v11549 = vpack.c.b16 %v11397, %v11393
  %v11550 = vpack.c.b16 %v11398, %v11394
  %v11551 = vpack.c.b16 %v11399, %v11395
  %v11552 = vpack.c.b16 %v11404, %v11400
  %v11553 = vpack.c.b16 %v11405, %v11401
  %v11554 = vpack.c.b16 %v11406, %v11402
  %v11555 = vpack.c.b16 %v11407, %v11403
  %v11556 = vpack.c.b16 %v11412, %v11408
  %v11557 = vpack.c.b16 %v11413, %v11409
  %v11558 = vpack.c.b16 %v11414, %v11410
  %v11559 = vpack.c.b16 %v11415, %v11411
  %v11560 = vpack.c.b16 %v11420, %v11416
  %v11561 = vpack.c.b16 %v11421, %v11417
  %v11562 = vpack.c.b16 %v11422, %v11418
  %v11563 = vpack.c.b16 %v11423, %v11419
  %v11564 = vpack.c.b16 %v11428, %v11424
  %v11565 = vpack.c.b16 %v11429, %v11425
  %v11566 = vpack.c.b16 %v11430, %v11426
  %v11567 = vpack.c.b16 %v11431, %v11427
  %v11568 = vpack.c.b16 %v11436, %v11432
  %v11569 = vpack.c.b16 %v11437, %v11433
  %v11570 = vpack.c.b16 %v11438, %v11434
  %v11571 = vpack.c.b16 %v11439, %v11435
  %v11572 = vpack.c.b16 %v11444, %v11440
  %v11573 = vpack.c.b16 %v11445, %v11441
  %v11574 = vpack.c.b16 %v11446, %v11442
  %v11575 = vpack.c.b16 %v11447, %v11443
  %v11576 = vpack.c.b16 %v11452, %v11448
  %v11577 = vpack.c.b16 %v11453, %v11449
  %v11578 = vpack.c.b16 %v11454, %v11450
  %v11579 = vpack.c.b16 %v11455, %v11451
  %v11580 = vpack.c.b16 %v11460, %v11456
  %v11581 = vpack.c.b16 %v11461, %v11457
  %v11582 = vpack.c.b16 %v11462, %v11458
  %v11583 = vpack.c.b16 %v11463, %v11459
  %v11584 = vpack.c.b16 %v11468, %v11464
  %v11585 = vpack.c.b16 %v11469, %v11465
  %v11586 = vpack.c.b16 %v11470, %v11466
  %v11587 = vpack.c.b16 %v11471, %v11467
  %v11588 = vpack.c.b16 %v11476, %v11472
  %v11589 = vpack.c.b16 %v11477, %v11473
  %v11590 = vpack.c.b16 %v11478, %v11474
  %v11591 = vpack.c.b16 %v11479, %v11475
  %v11705 = vsel %vm537, %v11140, 0
  %11707 = vmatprep.subr.bf16.mxu0 %v11481
  %11708 = vmatpush1.bf16.msra.mxu0 %v11480
  %11709 = vmatprep.subr.bf16.mxu0 %v11485
  %11710 = vmatpush1.bf16.msra.mxu0 %v11484
  %11711 = vmatprep.subr.bf16.mxu0 %v11489
  %11712 = vmatpush1.bf16.msra.mxu0 %v11488
  %11713 = vmatprep.subr.bf16.mxu0 %v11493
  %11714 = vmatpush1.bf16.msra.mxu0 %v11492
  %11715 = vmatprep.subr.bf16.mxu0 %v11497
  %11716 = vmatpush1.bf16.msra.mxu0 %v11496
  %11717 = vmatprep.subr.bf16.mxu0 %v11501
  %11718 = vmatpush1.bf16.msra.mxu0 %v11500
  %11719 = vmatprep.subr.bf16.mxu0 %v11505
  %11720 = vmatpush1.bf16.msra.mxu0 %v11504
  %11721 = vmatprep.subr.bf16.mxu0 %v11509
  %11722 = vmatpush1.bf16.msra.mxu0 %v11508
  %11723 = vmatprep.subr.bf16.mxu0 %v11513
  %11724 = vmatpush1.bf16.msra.mxu0 %v11512
  %11725 = vmatprep.subr.bf16.mxu0 %v11517
  %11726 = vmatpush1.bf16.msra.mxu0 %v11516
  %11727 = vmatprep.subr.bf16.mxu0 %v11521
  %11728 = vmatpush1.bf16.msra.mxu0 %v11520
  %11729 = vmatprep.subr.bf16.mxu0 %v11525
  %11730 = vmatpush1.bf16.msra.mxu0 %v11524
  %11731 = vmatprep.subr.bf16.mxu0 %v11529
  %11732 = vmatpush1.bf16.msra.mxu0 %v11528
  %11733 = vmatprep.subr.bf16.mxu0 %v11533
  %11734 = vmatpush1.bf16.msra.mxu0 %v11532
  %11735 = vmatprep.subr.bf16.mxu0 %v11537
  %11736 = vmatpush1.bf16.msra.mxu0 %v11536
  %11737 = vmatprep.subr.bf16.mxu0 %v11541
  %11738 = vmatpush1.bf16.msra.mxu0 %v11540
  %11739 = vmatprep.mubr.bf16.mxu0 %v11138
  %11740 = vmatmul.mubr.bf16.gmra.mrb[0].mxu0 %v11137
  %v11741 = vpop.f32.mrb[0].mxu0
  %v11742 = vadd.f32 0.0, %v11741
  %v11743 = vpop.f32.mrb[0].mxu0
  %v11744 = vadd.f32 0.0, %v11743
  %v11745 = vpop.f32.mrb[0].mxu0
  %v11746 = vpop.f32.mrb[0].mxu0
  %11747 = vdwg.mxu0
  %11748 = vmatprep.subr.bf16.mxu0 %v11545
  %11749 = vmatpush1.bf16.msra.mxu0 %v11544
  %11750 = vmatprep.subr.bf16.mxu0 %v11549
  %11751 = vmatpush1.bf16.msra.mxu0 %v11548
  %11752 = vmatprep.subr.bf16.mxu0 %v11553
  %11753 = vmatpush1.bf16.msra.mxu0 %v11552
  %11754 = vmatprep.subr.bf16.mxu0 %v11557
  %11755 = vmatpush1.bf16.msra.mxu0 %v11556
  %11756 = vmatprep.subr.bf16.mxu0 %v11561
  %11757 = vmatpush1.bf16.msra.mxu0 %v11560
  %11758 = vmatprep.subr.bf16.mxu0 %v11565
  %11759 = vmatpush1.bf16.msra.mxu0 %v11564
  %11760 = vmatprep.subr.bf16.mxu0 %v11569
  %11761 = vmatpush1.bf16.msra.mxu0 %v11568
  %11762 = vmatprep.subr.bf16.mxu0 %v11573
  %11763 = vmatpush1.bf16.msra.mxu0 %v11572
  %11764 = vmatprep.subr.bf16.mxu0 %v11577
  %11765 = vmatpush1.bf16.msra.mxu0 %v11576
  %11766 = vmatprep.subr.bf16.mxu0 %v11581
  %11767 = vmatpush1.bf16.msra.mxu0 %v11580
  %11768 = vmatprep.subr.bf16.mxu0 %v11585
  %11769 = vmatpush1.bf16.msra.mxu0 %v11584
  %11770 = vmatprep.subr.bf16.mxu0 %v11589
  %11771 = vmatpush1.bf16.msra.mxu0 %v11588
  %11772 = vmatprep.subr.bf16.mxu0 0
  %11773 = vmatpush1.bf16.msra.mxu0 0
  %11774 = vmatprep.subr.bf16.mxu0 0
  %11775 = vmatpush1.bf16.msra.mxu0 0
  %11776 = vmatprep.subr.bf16.mxu0 0
  %11777 = vmatpush1.bf16.msra.mxu0 0
  %11778 = vmatprep.subr.bf16.mxu0 0
  %11779 = vmatpush1.bf16.msra.mxu0 0
  %11780 = vmatprep.mubr.bf16.mxu0 %v11705
  %11781 = vmatmul.mubr.bf16.gmra.mrb[0].mxu0 %v11139
  %v11782 = vpop.f32.mrb[0].mxu0
  %v11783 = vadd.f32 %v11742, %v11782
  %v11784 = vpop.f32.mrb[0].mxu0
  %v11785 = vadd.f32 %v11744, %v11784
  %v11786 = vpop.f32.mrb[0].mxu0
  %v11787 = vpop.f32.mrb[0].mxu0
  %11788 = vdwg.mxu0
  %11789 = vmatprep.subr.bf16.mxu0 %v11483
  %11790 = vmatpush1.bf16.msra.mxu0 %v11482
  %11791 = vmatprep.subr.bf16.mxu0 %v11487
  %11792 = vmatpush1.bf16.msra.mxu0 %v11486
  %11793 = vmatprep.subr.bf16.mxu0 %v11491
  %11794 = vmatpush1.bf16.msra.mxu0 %v11490
  %11795 = vmatprep.subr.bf16.mxu0 %v11495
  %11796 = vmatpush1.bf16.msra.mxu0 %v11494
  %11797 = vmatprep.subr.bf16.mxu0 %v11499
  %11798 = vmatpush1.bf16.msra.mxu0 %v11498
  %11799 = vmatprep.subr.bf16.mxu0 %v11503
  %11800 = vmatpush1.bf16.msra.mxu0 %v11502
  %11801 = vmatprep.subr.bf16.mxu0 %v11507
  %11802 = vmatpush1.bf16.msra.mxu0 %v11506
  %11803 = vmatprep.subr.bf16.mxu0 %v11511
  %11804 = vmatpush1.bf16.msra.mxu0 %v11510
  %11805 = vmatprep.subr.bf16.mxu0 %v11515
  %11806 = vmatpush1.bf16.msra.mxu0 %v11514
  %11807 = vmatprep.subr.bf16.mxu0 %v11519
  %11808 = vmatpush1.bf16.msra.mxu0 %v11518
  %11809 = vmatprep.subr.bf16.mxu0 %v11523
  %11810 = vmatpush1.bf16.msra.mxu0 %v11522
  %11811 = vmatprep.subr.bf16.mxu0 %v11527
  %11812 = vmatpush1.bf16.msra.mxu0 %v11526
  %11813 = vmatprep.subr.bf16.mxu0 %v11531
  %11814 = vmatpush1.bf16.msra.mxu0 %v11530
  %11815 = vmatprep.subr.bf16.mxu0 %v11535
  %11816 = vmatpush1.bf16.msra.mxu0 %v11534
  %11817 = vmatprep.subr.bf16.mxu0 %v11539
  %11818 = vmatpush1.bf16.msra.mxu0 %v11538
  %11819 = vmatprep.subr.bf16.mxu0 %v11543
  %11820 = vmatpush1.bf16.msra.mxu0 %v11542
  %11821 = vmatprep.mubr.bf16.mxu0 %v11138
  %11822 = vmatmul.mubr.bf16.gmra.mrb[0].mxu0 %v11137
  %v11823 = vpop.f32.mrb[0].mxu0
  %v11824 = vadd.f32 0.0, %v11823
  %v11825 = vpop.f32.mrb[0].mxu0
  %v11826 = vadd.f32 0.0, %v11825
  %v11827 = vpop.f32.mrb[0].mxu0
  %v11828 = vpop.f32.mrb[0].mxu0
  %11829 = vdwg.mxu0
  %11830 = vmatprep.subr.bf16.mxu0 %v11547
  %11831 = vmatpush1.bf16.msra.mxu0 %v11546
  %11832 = vmatprep.subr.bf16.mxu0 %v11551
  %11833 = vmatpush1.bf16.msra.mxu0 %v11550
  %11834 = vmatprep.subr.bf16.mxu0 %v11555
  %11835 = vmatpush1.bf16.msra.mxu0 %v11554
  %11836 = vmatprep.subr.bf16.mxu0 %v11559
  %11837 = vmatpush1.bf16.msra.mxu0 %v11558
  %11838 = vmatprep.subr.bf16.mxu0 %v11563
  %11839 = vmatpush1.bf16.msra.mxu0 %v11562
  %11840 = vmatprep.subr.bf16.mxu0 %v11567
  %11841 = vmatpush1.bf16.msra.mxu0 %v11566
  %11842 = vmatprep.subr.bf16.mxu0 %v11571
  %11843 = vmatpush1.bf16.msra.mxu0 %v11570
  %11844 = vmatprep.subr.bf16.mxu0 %v11575
  %11845 = vmatpush1.bf16.msra.mxu0 %v11574
  %11846 = vmatprep.subr.bf16.mxu0 %v11579
  %11847 = vmatpush1.bf16.msra.mxu0 %v11578
  %11848 = vmatprep.subr.bf16.mxu0 %v11583
  %11849 = vmatpush1.bf16.msra.mxu0 %v11582
  %11850 = vmatprep.subr.bf16.mxu0 %v11587
  %11851 = vmatpush1.bf16.msra.mxu0 %v11586
  %11852 = vmatprep.subr.bf16.mxu0 %v11591
  %11853 = vmatpush1.bf16.msra.mxu0 %v11590
  %11854 = vmatprep.subr.bf16.mxu0 0
  %11855 = vmatpush1.bf16.msra.mxu0 0
  %11856 = vmatprep.subr.bf16.mxu0 0
  %11857 = vmatpush1.bf16.msra.mxu0 0
  %11858 = vmatprep.subr.bf16.mxu0 0
  %11859 = vmatpush1.bf16.msra.mxu0 0
  %11860 = vmatprep.subr.bf16.mxu0 0
  %11861 = vmatpush1.bf16.msra.mxu0 0
  %11862 = vmatprep.mubr.bf16.mxu0 %v11705
  %11863 = vmatmul.mubr.bf16.gmra.mrb[0].mxu0 %v11139
  %v11864 = vpop.f32.mrb[0].mxu0
  %v11865 = vadd.f32 %v11824, %v11864
  %v11866 = vpop.f32.mrb[0].mxu0
  %v11867 = vadd.f32 %v11826, %v11866
  %v11868 = vpop.f32.mrb[0].mxu0
  %v11869 = vpop.f32.mrb[0].mxu0
  %11870 = vdwg.mxu0
  %v11871 = vadd.f32 %v11009, %v11783
  %v11872 = vadd.f32 %v11010, %v11785
  %v11873 = vadd.f32 %v11011, %v11865
  %v11874 = vadd.f32 %v11012, %v11867
  %v11875 = vld [vmem:[#allocation4 + $0x20] sm:$0x30]
  %v11876 = vld [vmem:[#allocation4 + $0x28] sm:$0x30]
  %v11877 = vld [vmem:[#allocation4 + $0x30] sm:$0x30]
  %v11878 = vld [vmem:[#allocation4 + $0x38] sm:$0x30]
  %v11879 = vpack.c.bf16 %v11875, %v11875
  %v11880 = vpack.c.bf16 %v11876, %v11876
  %v11881 = vpack.c.bf16 %v11877, %v11877
  %v11882 = vpack.c.bf16 %v11878, %v11878
  %v11883 = vld [vmem:[%s4 + $0x1500] sm:$0xff]
  %v11884 = vld [vmem:[%s4 + $0x1508] sm:$0xff]
  %v11885 = vld [vmem:[%s4 + $0x1510] sm:$0xff]
  %v11886 = vld [vmem:[%s4 + $0x1518] sm:$0xff]
  %v11887 = vld [vmem:[%s4 + $0x1520] sm:$0xff]
  %v11888 = vld [vmem:[%s4 + $0x1528] sm:$0xff]
  %v11889 = vld [vmem:[%s4 + $0x1530] sm:$0xff]
  %v11890 = vld [vmem:[%s4 + $0x1538] sm:$0xff]
  %v11891 = vld [vmem:[%s4 + $0x1540] sm:$0xff]
  %v11892 = vld [vmem:[%s4 + $0x1548] sm:$0xff]
  %v11893 = vld [vmem:[%s4 + $0x1550] sm:$0xff]
  %v11894 = vld [vmem:[%s4 + $0x1558] sm:$0xff]
  %v11895 = vld [vmem:[%s4 + $0x1560] sm:$0xff]
  %v11896 = vld [vmem:[%s4 + $0x1568] sm:$0xff]
  %v11897 = vld [vmem:[%s4 + $0x1570] sm:$0xff]
  %v11898 = vld [vmem:[%s4 + $0x1578] sm:$0xff]
  %v11899 = vld [vmem:[%s4 + $0x1580] sm:$0xff]
  %v11900 = vld [vmem:[%s4 + $0x1588] sm:$0xff]
  %v11901 = vld [vmem:[%s4 + $0x1590] sm:$0xff]
  %v11902 = vld [vmem:[%s4 + $0x1598] sm:$0xff]
  %v11903 = vld [vmem:[%s4 + $0x15a0] sm:$0xff]
  %v11904 = vld [vmem:[%s4 + $0x15a8] sm:$0xff]
  %v11905 = vld [vmem:[%s4 + $0x15b0] sm:$0xff]
  %v11906 = vld [vmem:[%s4 + $0x15b8] sm:$0xff]
  %v11907 = vld [vmem:[%s4 + $0x15c0] sm:$0xff]
  %v11908 = vld [vmem:[%s4 + $0x15c8] sm:$0xff]
  %v11909 = vld [vmem:[%s4 + $0x15d0] sm:$0xff]
  %v11910 = vld [vmem:[%s4 + $0x15d8] sm:$0xff]
  %v11911 = vld [vmem:[%s4 + $0x15e0] sm:$0xff]
  %v11912 = vld [vmem:[%s4 + $0x15e8] sm:$0xff]
  %v11913 = vld [vmem:[%s4 + $0x15f0] sm:$0xff]
  %v11914 = vld [vmem:[%s4 + $0x15f8] sm:$0xff]
  %v11915 = vld [vmem:[%s4 + $0x1600] sm:$0xff]
  %v11916 = vld [vmem:[%s4 + $0x1608] sm:$0xff]
  %v11917 = vld [vmem:[%s4 + $0x1610] sm:$0xff]
  %v11918 = vld [vmem:[%s4 + $0x1618] sm:$0xff]
  %v11919 = vld [vmem:[%s4 + $0x1620] sm:$0xff]
  %v11920 = vld [vmem:[%s4 + $0x1628] sm:$0xff]
  %v11921 = vld [vmem:[%s4 + $0x1630] sm:$0xff]
  %v11922 = vld [vmem:[%s4 + $0x1638] sm:$0xff]
  %v11923 = vld [vmem:[%s4 + $0x1640] sm:$0xff]
  %v11924 = vld [vmem:[%s4 + $0x1648] sm:$0xff]
  %v11925 = vld [vmem:[%s4 + $0x1650] sm:$0xff]
  %v11926 = vld [vmem:[%s4 + $0x1658] sm:$0xff]
  %v11927 = vld [vmem:[%s4 + $0x1660] sm:$0xff]
  %v11928 = vld [vmem:[%s4 + $0x1668] sm:$0xff]
  %v11929 = vld [vmem:[%s4 + $0x1670] sm:$0xff]
  %v11930 = vld [vmem:[%s4 + $0x1678] sm:$0xff]
  %v11931 = vld [vmem:[%s4 + $0x1680] sm:$0xff]
  %v11932 = vld [vmem:[%s4 + $0x1688] sm:$0xff]
  %v11933 = vld [vmem:[%s4 + $0x1690] sm:$0xff]
  %v11934 = vld [vmem:[%s4 + $0x1698] sm:$0xff]
  %v11935 = vld [vmem:[%s4 + $0x16a0] sm:$0xff]
  %v11936 = vld [vmem:[%s4 + $0x16a8] sm:$0xff]
  %v11937 = vld [vmem:[%s4 + $0x16b0] sm:$0xff]
  %v11938 = vld [vmem:[%s4 + $0x16b8] sm:$0xff]
  %v11939 = vld [vmem:[%s4 + $0x16c0] sm:$0xff]
  %v11940 = vld [vmem:[%s4 + $0x16c8] sm:$0xff]
  %v11941 = vld [vmem:[%s4 + $0x16d0] sm:$0xff]
  %v11942 = vld [vmem:[%s4 + $0x16d8] sm:$0xff]
  %v11943 = vld [vmem:[%s4 + $0x16e0] sm:$0xff]
  %v11944 = vld [vmem:[%s4 + $0x16e8] sm:$0xff]
  %v11945 = vld [vmem:[%s4 + $0x16f0] sm:$0xff]
  %v11946 = vld [vmem:[%s4 + $0x16f8] sm:$0xff]
  %v11947 = vld [vmem:[%s4 + $0x1700] sm:$0xff]
  %v11948 = vld [vmem:[%s4 + $0x1708] sm:$0xff]
  %v11949 = vld [vmem:[%s4 + $0x1710] sm:$0xff]
  %v11950 = vld [vmem:[%s4 + $0x1718] sm:$0xff]
  %v11951 = vld [vmem:[%s4 + $0x1720] sm:$0xff]
  %v11952 = vld [vmem:[%s4 + $0x1728] sm:$0xff]
  %v11953 = vld [vmem:[%s4 + $0x1730] sm:$0xff]
  %v11954 = vld [vmem:[%s4 + $0x1738] sm:$0xff]
  %v11955 = vld [vmem:[%s4 + $0x1740] sm:$0xff]
  %v11956 = vld [vmem:[%s4 + $0x1748] sm:$0xff]
  %v11957 = vld [vmem:[%s4 + $0x1750] sm:$0xff]
  %v11958 = vld [vmem:[%s4 + $0x1758] sm:$0xff]
  %v11959 = vld [vmem:[%s4 + $0x1760] sm:$0xff]
  %v11960 = vld [vmem:[%s4 + $0x1768] sm:$0xff]
  %v11961 = vld [vmem:[%s4 + $0x1770] sm:$0xff]
  %v11962 = vld [vmem:[%s4 + $0x1778] sm:$0xff]
  %v11963 = vld [vmem:[%s4 + $0x1780] sm:$0xff]
  %v11964 = vld [vmem:[%s4 + $0x1788] sm:$0xff]
  %v11965 = vld [vmem:[%s4 + $0x1790] sm:$0xff]
  %v11966 = vld [vmem:[%s4 + $0x1798] sm:$0xff]
  %v11967 = vld [vmem:[%s4 + $0x17a0] sm:$0xff]
  %v11968 = vld [vmem:[%s4 + $0x17a8] sm:$0xff]
  %v11969 = vld [vmem:[%s4 + $0x17b0] sm:$0xff]
  %v11970 = vld [vmem:[%s4 + $0x17b8] sm:$0xff]
  %v11971 = vld [vmem:[%s4 + $0x17c0] sm:$0xff]
  %v11972 = vld [vmem:[%s4 + $0x17c8] sm:$0xff]
  %v11973 = vld [vmem:[%s4 + $0x17d0] sm:$0xff]
  %v11974 = vld [vmem:[%s4 + $0x17d8] sm:$0xff]
  %v11975 = vld [vmem:[%s4 + $0x17e0] sm:$0xff]
  %v11976 = vld [vmem:[%s4 + $0x17e8] sm:$0xff]
  %v11977 = vld [vmem:[%s4 + $0x17f0] sm:$0xff]
  %v11978 = vld [vmem:[%s4 + $0x17f8] sm:$0xff]
  %v11979 = vld [vmem:[%s4 + $0x1800] sm:$0xff]
  %v11980 = vld [vmem:[%s4 + $0x1808] sm:$0xff]
  %v11981 = vld [vmem:[%s4 + $0x1810] sm:$0xff]
  %v11982 = vld [vmem:[%s4 + $0x1818] sm:$0xff]
  %v11983 = vld [vmem:[%s4 + $0x1820] sm:$0xff]
  %v11984 = vld [vmem:[%s4 + $0x1828] sm:$0xff]
  %v11985 = vld [vmem:[%s4 + $0x1830] sm:$0xff]
  %v11986 = vld [vmem:[%s4 + $0x1838] sm:$0xff]
  %v11987 = vld [vmem:[%s4 + $0x1840] sm:$0xff]
  %v11988 = vld [vmem:[%s4 + $0x1848] sm:$0xff]
  %v11989 = vld [vmem:[%s4 + $0x1850] sm:$0xff]
  %v11990 = vld [vmem:[%s4 + $0x1858] sm:$0xff]
  %v11991 = vld [vmem:[%s4 + $0x1860] sm:$0xff]
  %v11992 = vld [vmem:[%s4 + $0x1868] sm:$0xff]
  %v11993 = vld [vmem:[%s4 + $0x1870] sm:$0xff]
  %v11994 = vld [vmem:[%s4 + $0x1878] sm:$0xff]
  %v11999 = vrot.slane %v11879, 2
  %v12000 = vrot.slane %v11880, 2
  %v12001 = vrot.slane %v11881, 2
  %v12002 = vrot.slane %v11882, 2
  %v12118 = vunpack.c.l.b16 %v11883
  %v12119 = vunpack.c.h.b16 %v11883
  %v12120 = vunpack.c.l.b16 %v11884
  %v12121 = vunpack.c.h.b16 %v11884
  %v12122 = vunpack.c.l.b16 %v11885
  %v12123 = vunpack.c.h.b16 %v11885
  %v12124 = vunpack.c.l.b16 %v11886
  %v12125 = vunpack.c.h.b16 %v11886
  %v12126 = vunpack.c.l.b16 %v11887
  %v12127 = vunpack.c.h.b16 %v11887
  %v12128 = vunpack.c.l.b16 %v11888
  %v12129 = vunpack.c.h.b16 %v11888
  %v12130 = vunpack.c.l.b16 %v11889
  %v12131 = vunpack.c.h.b16 %v11889
  %v12132 = vunpack.c.l.b16 %v11890
  %v12133 = vunpack.c.h.b16 %v11890
  %v12134 = vunpack.c.l.b16 %v11891
  %v12135 = vunpack.c.h.b16 %v11891
  %v12136 = vunpack.c.l.b16 %v11892
  %v12137 = vunpack.c.h.b16 %v11892
  %v12138 = vunpack.c.l.b16 %v11893
  %v12139 = vunpack.c.h.b16 %v11893
  %v12140 = vunpack.c.l.b16 %v11894
  %v12141 = vunpack.c.h.b16 %v11894
  %v12142 = vunpack.c.l.b16 %v11895
  %v12143 = vunpack.c.h.b16 %v11895
  %v12144 = vunpack.c.l.b16 %v11896
  %v12145 = vunpack.c.h.b16 %v11896
  %v12146 = vunpack.c.l.b16 %v11897
  %v12147 = vunpack.c.h.b16 %v11897
  %v12148 = vunpack.c.l.b16 %v11898
  %v12149 = vunpack.c.h.b16 %v11898
  %v12150 = vunpack.c.l.b16 %v11899
  %v12151 = vunpack.c.h.b16 %v11899
  %v12152 = vunpack.c.l.b16 %v11900
  %v12153 = vunpack.c.h.b16 %v11900
  %v12154 = vunpack.c.l.b16 %v11901
  %v12155 = vunpack.c.h.b16 %v11901
  %v12156 = vunpack.c.l.b16 %v11902
  %v12157 = vunpack.c.h.b16 %v11902
  %v12158 = vunpack.c.l.b16 %v11903
  %v12159 = vunpack.c.h.b16 %v11903
  %v12160 = vunpack.c.l.b16 %v11904
  %v12161 = vunpack.c.h.b16 %v11904
  %v12162 = vunpack.c.l.b16 %v11905
  %v12163 = vunpack.c.h.b16 %v11905
  %v12164 = vunpack.c.l.b16 %v11906
  %v12165 = vunpack.c.h.b16 %v11906
  %v12166 = vunpack.c.l.b16 %v11907
  %v12167 = vunpack.c.h.b16 %v11907
  %v12168 = vunpack.c.l.b16 %v11908
  %v12169 = vunpack.c.h.b16 %v11908
  %v12170 = vunpack.c.l.b16 %v11909
  %v12171 = vunpack.c.h.b16 %v11909
  %v12172 = vunpack.c.l.b16 %v11910
  %v12173 = vunpack.c.h.b16 %v11910
  %v12174 = vunpack.c.l.b16 %v11911
  %v12175 = vunpack.c.h.b16 %v11911
  %v12176 = vunpack.c.l.b16 %v11912
  %v12177 = vunpack.c.h.b16 %v11912
  %v12178 = vunpack.c.l.b16 %v11913
  %v12179 = vunpack.c.h.b16 %v11913
  %v12180 = vunpack.c.l.b16 %v11914
  %v12181 = vunpack.c.h.b16 %v11914
  %v12182 = vunpack.c.l.b16 %v11915
  %v12183 = vunpack.c.h.b16 %v11915
  %v12184 = vunpack.c.l.b16 %v11916
  %v12185 = vunpack.c.h.b16 %v11916
  %v12186 = vunpack.c.l.b16 %v11917
  %v12187 = vunpack.c.h.b16 %v11917
  %v12188 = vunpack.c.l.b16 %v11918
  %v12189 = vunpack.c.h.b16 %v11918
  %v12190 = vunpack.c.l.b16 %v11919
  %v12191 = vunpack.c.h.b16 %v11919
  %v12192 = vunpack.c.l.b16 %v11920
  %v12193 = vunpack.c.h.b16 %v11920
  %v12194 = vunpack.c.l.b16 %v11921
  %v12195 = vunpack.c.h.b16 %v11921
  %v12196 = vunpack.c.l.b16 %v11922
  %v12197 = vunpack.c.h.b16 %v11922
  %v12198 = vunpack.c.l.b16 %v11923
  %v12199 = vunpack.c.h.b16 %v11923
  %v12200 = vunpack.c.l.b16 %v11924
  %v12201 = vunpack.c.h.b16 %v11924
  %v12202 = vunpack.c.l.b16 %v11925
  %v12203 = vunpack.c.h.b16 %v11925
  %v12204 = vunpack.c.l.b16 %v11926
  %v12205 = vunpack.c.h.b16 %v11926
  %v12206 = vunpack.c.l.b16 %v11927
  %v12207 = vunpack.c.h.b16 %v11927
  %v12208 = vunpack.c.l.b16 %v11928
  %v12209 = vunpack.c.h.b16 %v11928
  %v12210 = vunpack.c.l.b16 %v11929
  %v12211 = vunpack.c.h.b16 %v11929
  %v12212 = vunpack.c.l.b16 %v11930
  %v12213 = vunpack.c.h.b16 %v11930
  %v12214 = vunpack.c.l.b16 %v11931
  %v12215 = vunpack.c.h.b16 %v11931
  %v12216 = vunpack.c.l.b16 %v11932
  %v12217 = vunpack.c.h.b16 %v11932
  %v12218 = vunpack.c.l.b16 %v11933
  %v12219 = vunpack.c.h.b16 %v11933
  %v12220 = vunpack.c.l.b16 %v11934
  %v12221 = vunpack.c.h.b16 %v11934
  %v12222 = vunpack.c.l.b16 %v11935
  %v12223 = vunpack.c.h.b16 %v11935
  %v12224 = vunpack.c.l.b16 %v11936
  %v12225 = vunpack.c.h.b16 %v11936
  %v12226 = vunpack.c.l.b16 %v11937
  %v12227 = vunpack.c.h.b16 %v11937
  %v12228 = vunpack.c.l.b16 %v11938
  %v12229 = vunpack.c.h.b16 %v11938
  %v12230 = vunpack.c.l.b16 %v11939
  %v12231 = vunpack.c.h.b16 %v11939
  %v12232 = vunpack.c.l.b16 %v11940
  %v12233 = vunpack.c.h.b16 %v11940
  %v12234 = vunpack.c.l.b16 %v11941
  %v12235 = vunpack.c.h.b16 %v11941
  %v12236 = vunpack.c.l.b16 %v11942
  %v12237 = vunpack.c.h.b16 %v11942
  %v12238 = vunpack.c.l.b16 %v11943
  %v12239 = vunpack.c.h.b16 %v11943
  %v12240 = vunpack.c.l.b16 %v11944
  %v12241 = vunpack.c.h.b16 %v11944
  %v12242 = vunpack.c.l.b16 %v11945
  %v12243 = vunpack.c.h.b16 %v11945
  %v12244 = vunpack.c.l.b16 %v11946
  %v12245 = vunpack.c.h.b16 %v11946
  %v12246 = vunpack.c.l.b16 %v11947
  %v12247 = vunpack.c.h.b16 %v11947
  %v12248 = vunpack.c.l.b16 %v11948
  %v12249 = vunpack.c.h.b16 %v11948
  %v12250 = vunpack.c.l.b16 %v11949
  %v12251 = vunpack.c.h.b16 %v11949
  %v12252 = vunpack.c.l.b16 %v11950
  %v12253 = vunpack.c.h.b16 %v11950
  %v12254 = vunpack.c.l.b16 %v11951
  %v12255 = vunpack.c.h.b16 %v11951
  %v12256 = vunpack.c.l.b16 %v11952
  %v12257 = vunpack.c.h.b16 %v11952
  %v12258 = vunpack.c.l.b16 %v11953
  %v12259 = vunpack.c.h.b16 %v11953
  %v12260 = vunpack.c.l.b16 %v11954
  %v12261 = vunpack.c.h.b16 %v11954
  %v12262 = vunpack.c.l.b16 %v11955
  %v12263 = vunpack.c.h.b16 %v11955
  %v12264 = vunpack.c.l.b16 %v11956
  %v12265 = vunpack.c.h.b16 %v11956
  %v12266 = vunpack.c.l.b16 %v11957
  %v12267 = vunpack.c.h.b16 %v11957
  %v12268 = vunpack.c.l.b16 %v11958
  %v12269 = vunpack.c.h.b16 %v11958
  %v12270 = vunpack.c.l.b16 %v11959
  %v12271 = vunpack.c.h.b16 %v11959
  %v12272 = vunpack.c.l.b16 %v11960
  %v12273 = vunpack.c.h.b16 %v11960
  %v12274 = vunpack.c.l.b16 %v11961
  %v12275 = vunpack.c.h.b16 %v11961
  %v12276 = vunpack.c.l.b16 %v11962
  %v12277 = vunpack.c.h.b16 %v11962
  %v12278 = vunpack.c.l.b16 %v11963
  %v12279 = vunpack.c.h.b16 %v11963
  %v12280 = vunpack.c.l.b16 %v11964
  %v12281 = vunpack.c.h.b16 %v11964
  %v12282 = vunpack.c.l.b16 %v11965
  %v12283 = vunpack.c.h.b16 %v11965
  %v12284 = vunpack.c.l.b16 %v11966
  %v12285 = vunpack.c.h.b16 %v11966
  %v12286 = vunpack.c.l.b16 %v11967
  %v12287 = vunpack.c.h.b16 %v11967
  %v12288 = vunpack.c.l.b16 %v11968
  %v12289 = vunpack.c.h.b16 %v11968
  %v12290 = vunpack.c.l.b16 %v11969
  %v12291 = vunpack.c.h.b16 %v11969
  %v12292 = vunpack.c.l.b16 %v11970
  %v12293 = vunpack.c.h.b16 %v11970
  %v12294 = vunpack.c.l.b16 %v11971
  %v12295 = vunpack.c.h.b16 %v11971
  %v12296 = vunpack.c.l.b16 %v11972
  %v12297 = vunpack.c.h.b16 %v11972
  %v12298 = vunpack.c.l.b16 %v11973
  %v12299 = vunpack.c.h.b16 %v11973
  %v12300 = vunpack.c.l.b16 %v11974
  %v12301 = vunpack.c.h.b16 %v11974
  %v12302 = vunpack.c.l.b16 %v11975
  %v12303 = vunpack.c.h.b16 %v11975
  %v12304 = vunpack.c.l.b16 %v11976
  %v12305 = vunpack.c.h.b16 %v11976
  %v12306 = vunpack.c.l.b16 %v11977
  %v12307 = vunpack.c.h.b16 %v11977
  %v12308 = vunpack.c.l.b16 %v11978
  %v12309 = vunpack.c.h.b16 %v11978
  %v12310 = vunpack.c.l.b16 %v11979
  %v12311 = vunpack.c.h.b16 %v11979
  %v12312 = vunpack.c.l.b16 %v11980
  %v12313 = vunpack.c.h.b16 %v11980
  %v12314 = vunpack.c.l.b16 %v11981
  %v12315 = vunpack.c.h.b16 %v11981
  %v12316 = vunpack.c.l.b16 %v11982
  %v12317 = vunpack.c.h.b16 %v11982
  %v12318 = vunpack.c.l.b16 %v11983
  %v12319 = vunpack.c.h.b16 %v11983
  %v12320 = vunpack.c.l.b16 %v11984
  %v12321 = vunpack.c.h.b16 %v11984
  %v12322 = vunpack.c.l.b16 %v11985
  %v12323 = vunpack.c.h.b16 %v11985
  %v12324 = vunpack.c.l.b16 %v11986
  %v12325 = vunpack.c.h.b16 %v11986
  %v12326 = vunpack.c.l.b16 %v11987
  %v12327 = vunpack.c.h.b16 %v11987
  %v12328 = vunpack.c.l.b16 %v11988
  %v12329 = vunpack.c.h.b16 %v11988
  %v12330 = vunpack.c.l.b16 %v11989
  %v12331 = vunpack.c.h.b16 %v11989
  %v12332 = vunpack.c.l.b16 %v11990
  %v12333 = vunpack.c.h.b16 %v11990
  %v12334 = vunpack.c.l.b16 %v11991
  %v12335 = vunpack.c.h.b16 %v11991
  %v12336 = vunpack.c.l.b16 %v11992
  %v12337 = vunpack.c.h.b16 %v11992
  %v12338 = vunpack.c.l.b16 %v11993
  %v12339 = vunpack.c.h.b16 %v11993
  %v12340 = vunpack.c.l.b16 %v11994
  %v12341 = vunpack.c.h.b16 %v11994
  %v12342 = vpack.c.b16 %v12122, %v12118
  %v12343 = vpack.c.b16 %v12123, %v12119
  %v12344 = vpack.c.b16 %v12124, %v12120
  %v12345 = vpack.c.b16 %v12125, %v12121
  %v12346 = vpack.c.b16 %v12130, %v12126
  %v12347 = vpack.c.b16 %v12131, %v12127
  %v12348 = vpack.c.b16 %v12132, %v12128
  %v12349 = vpack.c.b16 %v12133, %v12129
  %v12350 = vpack.c.b16 %v12138, %v12134
  %v12351 = vpack.c.b16 %v12139, %v12135
  %v12352 = vpack.c.b16 %v12140, %v12136
  %v12353 = vpack.c.b16 %v12141, %v12137
  %v12354 = vpack.c.b16 %v12146, %v12142
  %v12355 = vpack.c.b16 %v12147, %v12143
  %v12356 = vpack.c.b16 %v12148, %v12144
  %v12357 = vpack.c.b16 %v12149, %v12145
  %v12358 = vpack.c.b16 %v12154, %v12150
  %v12359 = vpack.c.b16 %v12155, %v12151
  %v12360 = vpack.c.b16 %v12156, %v12152
  %v12361 = vpack.c.b16 %v12157, %v12153
  %v12362 = vpack.c.b16 %v12162, %v12158
  %v12363 = vpack.c.b16 %v12163, %v12159
  %v12364 = vpack.c.b16 %v12164, %v12160
  %v12365 = vpack.c.b16 %v12165, %v12161
  %v12366 = vpack.c.b16 %v12170, %v12166
  %v12367 = vpack.c.b16 %v12171, %v12167
  %v12368 = vpack.c.b16 %v12172, %v12168
  %v12369 = vpack.c.b16 %v12173, %v12169
  %v12370 = vpack.c.b16 %v12178, %v12174
  %v12371 = vpack.c.b16 %v12179, %v12175
  %v12372 = vpack.c.b16 %v12180, %v12176
  %v12373 = vpack.c.b16 %v12181, %v12177
  %v12374 = vpack.c.b16 %v12186, %v12182
  %v12375 = vpack.c.b16 %v12187, %v12183
  %v12376 = vpack.c.b16 %v12188, %v12184
  %v12377 = vpack.c.b16 %v12189, %v12185
  %v12378 = vpack.c.b16 %v12194, %v12190
  %v12379 = vpack.c.b16 %v12195, %v12191
  %v12380 = vpack.c.b16 %v12196, %v12192
  %v12381 = vpack.c.b16 %v12197, %v12193
  %v12382 = vpack.c.b16 %v12202, %v12198
  %v12383 = vpack.c.b16 %v12203, %v12199
  %v12384 = vpack.c.b16 %v12204, %v12200
  %v12385 = vpack.c.b16 %v12205, %v12201
  %v12386 = vpack.c.b16 %v12210, %v12206
  %v12387 = vpack.c.b16 %v12211, %v12207
  %v12388 = vpack.c.b16 %v12212, %v12208
  %v12389 = vpack.c.b16 %v12213, %v12209
  %v12390 = vpack.c.b16 %v12218, %v12214
  %v12391 = vpack.c.b16 %v12219, %v12215
  %v12392 = vpack.c.b16 %v12220, %v12216
  %v12393 = vpack.c.b16 %v12221, %v12217
  %v12394 = vpack.c.b16 %v12226, %v12222
  %v12395 = vpack.c.b16 %v12227, %v12223
  %v12396 = vpack.c.b16 %v12228, %v12224
  %v12397 = vpack.c.b16 %v12229, %v12225
  %v12398 = vpack.c.b16 %v12234, %v12230
  %v12399 = vpack.c.b16 %v12235, %v12231
  %v12400 = vpack.c.b16 %v12236, %v12232
  %v12401 = vpack.c.b16 %v12237, %v12233
  %v12402 = vpack.c.b16 %v12242, %v12238
  %v12403 = vpack.c.b16 %v12243, %v12239
  %v12404 = vpack.c.b16 %v12244, %v12240
  %v12405 = vpack.c.b16 %v12245, %v12241
  %v12406 = vpack.c.b16 %v12250, %v12246
  %v12407 = vpack.c.b16 %v12251, %v12247
  %v12408 = vpack.c.b16 %v12252, %v12248
  %v12409 = vpack.c.b16 %v12253, %v12249
  %v12410 = vpack.c.b16 %v12258, %v12254
  %v12411 = vpack.c.b16 %v12259, %v12255
  %v12412 = vpack.c.b16 %v12260, %v12256
  %v12413 = vpack.c.b16 %v12261, %v12257
  %v12414 = vpack.c.b16 %v12266, %v12262
  %v12415 = vpack.c.b16 %v12267, %v12263
  %v12416 = vpack.c.b16 %v12268, %v12264
  %v12417 = vpack.c.b16 %v12269, %v12265
  %v12418 = vpack.c.b16 %v12274, %v12270
  %v12419 = vpack.c.b16 %v12275, %v12271
  %v12420 = vpack.c.b16 %v12276, %v12272
  %v12421 = vpack.c.b16 %v12277, %v12273
  %v12422 = vpack.c.b16 %v12282, %v12278
  %v12423 = vpack.c.b16 %v12283, %v12279
  %v12424 = vpack.c.b16 %v12284, %v12280
  %v12425 = vpack.c.b16 %v12285, %v12281
  %v12426 = vpack.c.b16 %v12290, %v12286
  %v12427 = vpack.c.b16 %v12291, %v12287
  %v12428 = vpack.c.b16 %v12292, %v12288
  %v12429 = vpack.c.b16 %v12293, %v12289
  %v12430 = vpack.c.b16 %v12298, %v12294
  %v12431 = vpack.c.b16 %v12299, %v12295
  %v12432 = vpack.c.b16 %v12300, %v12296
  %v12433 = vpack.c.b16 %v12301, %v12297
  %v12434 = vpack.c.b16 %v12306, %v12302
  %v12435 = vpack.c.b16 %v12307, %v12303
  %v12436 = vpack.c.b16 %v12308, %v12304
  %v12437 = vpack.c.b16 %v12309, %v12305
  %v12438 = vpack.c.b16 %v12314, %v12310
  %v12439 = vpack.c.b16 %v12315, %v12311
  %v12440 = vpack.c.b16 %v12316, %v12312
  %v12441 = vpack.c.b16 %v12317, %v12313
  %v12442 = vpack.c.b16 %v12322, %v12318
  %v12443 = vpack.c.b16 %v12323, %v12319
  %v12444 = vpack.c.b16 %v12324, %v12320
  %v12445 = vpack.c.b16 %v12325, %v12321
  %v12446 = vpack.c.b16 %v12330, %v12326
  %v12447 = vpack.c.b16 %v12331, %v12327
  %v12448 = vpack.c.b16 %v12332, %v12328
  %v12449 = vpack.c.b16 %v12333, %v12329
  %v12450 = vpack.c.b16 %v12338, %v12334
  %v12451 = vpack.c.b16 %v12339, %v12335
  %v12452 = vpack.c.b16 %v12340, %v12336
  %v12453 = vpack.c.b16 %v12341, %v12337
  %v12567 = vsel %vm537, %v12002, 0
  %12569 = vmatprep.subr.bf16.mxu0 %v12343
  %12570 = vmatpush1.bf16.msra.mxu0 %v12342
  %12571 = vmatprep.subr.bf16.mxu0 %v12347
  %12572 = vmatpush1.bf16.msra.mxu0 %v12346
  %12573 = vmatprep.subr.bf16.mxu0 %v12351
  %12574 = vmatpush1.bf16.msra.mxu0 %v12350
  %12575 = vmatprep.subr.bf16.mxu0 %v12355
  %12576 = vmatpush1.bf16.msra.mxu0 %v12354
  %12577 = vmatprep.subr.bf16.mxu0 %v12359
  %12578 = vmatpush1.bf16.msra.mxu0 %v12358
  %12579 = vmatprep.subr.bf16.mxu0 %v12363
  %12580 = vmatpush1.bf16.msra.mxu0 %v12362
  %12581 = vmatprep.subr.bf16.mxu0 %v12367
  %12582 = vmatpush1.bf16.msra.mxu0 %v12366
  %12583 = vmatprep.subr.bf16.mxu0 %v12371
  %12584 = vmatpush1.bf16.msra.mxu0 %v12370
  %12585 = vmatprep.subr.bf16.mxu0 %v12375
  %12586 = vmatpush1.bf16.msra.mxu0 %v12374
  %12587 = vmatprep.subr.bf16.mxu0 %v12379
  %12588 = vmatpush1.bf16.msra.mxu0 %v12378
  %12589 = vmatprep.subr.bf16.mxu0 %v12383
  %12590 = vmatpush1.bf16.msra.mxu0 %v12382
  %12591 = vmatprep.subr.bf16.mxu0 %v12387
  %12592 = vmatpush1.bf16.msra.mxu0 %v12386
  %12593 = vmatprep.subr.bf16.mxu0 %v12391
  %12594 = vmatpush1.bf16.msra.mxu0 %v12390
  %12595 = vmatprep.subr.bf16.mxu0 %v12395
  %12596 = vmatpush1.bf16.msra.mxu0 %v12394
  %12597 = vmatprep.subr.bf16.mxu0 %v12399
  %12598 = vmatpush1.bf16.msra.mxu0 %v12398
  %12599 = vmatprep.subr.bf16.mxu0 %v12403
  %12600 = vmatpush1.bf16.msra.mxu0 %v12402
  %12601 = vmatprep.mubr.bf16.mxu0 %v12000
  %12602 = vmatmul.mubr.bf16.gmra.mrb[0].mxu0 %v11999
  %v12603 = vpop.f32.mrb[0].mxu0
  %v12604 = vadd.f32 0.0, %v12603
  %v12605 = vpop.f32.mrb[0].mxu0
  %v12606 = vadd.f32 0.0, %v12605
  %v12607 = vpop.f32.mrb[0].mxu0
  %v12608 = vpop.f32.mrb[0].mxu0
  %12609 = vdwg.mxu0
  %12610 = vmatprep.subr.bf16.mxu0 %v12407
  %12611 = vmatpush1.bf16.msra.mxu0 %v12406
  %12612 = vmatprep.subr.bf16.mxu0 %v12411
  %12613 = vmatpush1.bf16.msra.mxu0 %v12410
  %12614 = vmatprep.subr.bf16.mxu0 %v12415
  %12615 = vmatpush1.bf16.msra.mxu0 %v12414
  %12616 = vmatprep.subr.bf16.mxu0 %v12419
  %12617 = vmatpush1.bf16.msra.mxu0 %v12418
  %12618 = vmatprep.subr.bf16.mxu0 %v12423
  %12619 = vmatpush1.bf16.msra.mxu0 %v12422
  %12620 = vmatprep.subr.bf16.mxu0 %v12427
  %12621 = vmatpush1.bf16.msra.mxu0 %v12426
  %12622 = vmatprep.subr.bf16.mxu0 %v12431
  %12623 = vmatpush1.bf16.msra.mxu0 %v12430
  %12624 = vmatprep.subr.bf16.mxu0 %v12435
  %12625 = vmatpush1.bf16.msra.mxu0 %v12434
  %12626 = vmatprep.subr.bf16.mxu0 %v12439
  %12627 = vmatpush1.bf16.msra.mxu0 %v12438
  %12628 = vmatprep.subr.bf16.mxu0 %v12443
  %12629 = vmatpush1.bf16.msra.mxu0 %v12442
  %12630 = vmatprep.subr.bf16.mxu0 %v12447
  %12631 = vmatpush1.bf16.msra.mxu0 %v12446
  %12632 = vmatprep.subr.bf16.mxu0 %v12451
  %12633 = vmatpush1.bf16.msra.mxu0 %v12450
  %12634 = vmatprep.subr.bf16.mxu0 0
  %12635 = vmatpush1.bf16.msra.mxu0 0
  %12636 = vmatprep.subr.bf16.mxu0 0
  %12637 = vmatpush1.bf16.msra.mxu0 0
  %12638 = vmatprep.subr.bf16.mxu0 0
  %12639 = vmatpush1.bf16.msra.mxu0 0
  %12640 = vmatprep.subr.bf16.mxu0 0
  %12641 = vmatpush1.bf16.msra.mxu0 0
  %12642 = vmatprep.mubr.bf16.mxu0 %v12567
  %12643 = vmatmul.mubr.bf16.gmra.mrb[0].mxu0 %v12001
  %v12644 = vpop.f32.mrb[0].mxu0
  %v12645 = vadd.f32 %v12604, %v12644
  %v12646 = vpop.f32.mrb[0].mxu0
  %v12647 = vadd.f32 %v12606, %v12646
  %v12648 = vpop.f32.mrb[0].mxu0
  %v12649 = vpop.f32.mrb[0].mxu0
  %12650 = vdwg.mxu0
  %12651 = vmatprep.subr.bf16.mxu0 %v12345
  %12652 = vmatpush1.bf16.msra.mxu0 %v12344
  %12653 = vmatprep.subr.bf16.mxu0 %v12349
  %12654 = vmatpush1.bf16.msra.mxu0 %v12348
  %12655 = vmatprep.subr.bf16.mxu0 %v12353
  %12656 = vmatpush1.bf16.msra.mxu0 %v12352
  %12657 = vmatprep.subr.bf16.mxu0 %v12357
  %12658 = vmatpush1.bf16.msra.mxu0 %v12356
  %12659 = vmatprep.subr.bf16.mxu0 %v12361
  %12660 = vmatpush1.bf16.msra.mxu0 %v12360
  %12661 = vmatprep.subr.bf16.mxu0 %v12365
  %12662 = vmatpush1.bf16.msra.mxu0 %v12364
  %12663 = vmatprep.subr.bf16.mxu0 %v12369
  %12664 = vmatpush1.bf16.msra.mxu0 %v12368
  %12665 = vmatprep.subr.bf16.mxu0 %v12373
  %12666 = vmatpush1.bf16.msra.mxu0 %v12372
  %12667 = vmatprep.subr.bf16.mxu0 %v12377
  %12668 = vmatpush1.bf16.msra.mxu0 %v12376
  %12669 = vmatprep.subr.bf16.mxu0 %v12381
  %12670 = vmatpush1.bf16.msra.mxu0 %v12380
  %12671 = vmatprep.subr.bf16.mxu0 %v12385
  %12672 = vmatpush1.bf16.msra.mxu0 %v12384
  %12673 = vmatprep.subr.bf16.mxu0 %v12389
  %12674 = vmatpush1.bf16.msra.mxu0 %v12388
  %12675 = vmatprep.subr.bf16.mxu0 %v12393
  %12676 = vmatpush1.bf16.msra.mxu0 %v12392
  %12677 = vmatprep.subr.bf16.mxu0 %v12397
  %12678 = vmatpush1.bf16.msra.mxu0 %v12396
  %12679 = vmatprep.subr.bf16.mxu0 %v12401
  %12680 = vmatpush1.bf16.msra.mxu0 %v12400
  %12681 = vmatprep.subr.bf16.mxu0 %v12405
  %12682 = vmatpush1.bf16.msra.mxu0 %v12404
  %12683 = vmatprep.mubr.bf16.mxu0 %v12000
  %12684 = vmatmul.mubr.bf16.gmra.mrb[0].mxu0 %v11999
  %v12685 = vpop.f32.mrb[0].mxu0
  %v12686 = vadd.f32 0.0, %v12685
  %v12687 = vpop.f32.mrb[0].mxu0
  %v12688 = vadd.f32 0.0, %v12687
  %v12689 = vpop.f32.mrb[0].mxu0
  %v12690 = vpop.f32.mrb[0].mxu0
  %12691 = vdwg.mxu0
  %12692 = vmatprep.subr.bf16.mxu0 %v12409
  %12693 = vmatpush1.bf16.msra.mxu0 %v12408
  %12694 = vmatprep.subr.bf16.mxu0 %v12413
  %12695 = vmatpush1.bf16.msra.mxu0 %v12412
  %12696 = vmatprep.subr.bf16.mxu0 %v12417
  %12697 = vmatpush1.bf16.msra.mxu0 %v12416
  %12698 = vmatprep.subr.bf16.mxu0 %v12421
  %12699 = vmatpush1.bf16.msra.mxu0 %v12420
  %12700 = vmatprep.subr.bf16.mxu0 %v12425
  %12701 = vmatpush1.bf16.msra.mxu0 %v12424
  %12702 = vmatprep.subr.bf16.mxu0 %v12429
  %12703 = vmatpush1.bf16.msra.mxu0 %v12428
  %12704 = vmatprep.subr.bf16.mxu0 %v12433
  %12705 = vmatpush1.bf16.msra.mxu0 %v12432
  %12706 = vmatprep.subr.bf16.mxu0 %v12437
  %12707 = vmatpush1.bf16.msra.mxu0 %v12436
  %12708 = vmatprep.subr.bf16.mxu0 %v12441
  %12709 = vmatpush1.bf16.msra.mxu0 %v12440
  %12710 = vmatprep.subr.bf16.mxu0 %v12445
  %12711 = vmatpush1.bf16.msra.mxu0 %v12444
  %12712 = vmatprep.subr.bf16.mxu0 %v12449
  %12713 = vmatpush1.bf16.msra.mxu0 %v12448
  %12714 = vmatprep.subr.bf16.mxu0 %v12453
  %12715 = vmatpush1.bf16.msra.mxu0 %v12452
  %12716 = vmatprep.subr.bf16.mxu0 0
  %12717 = vmatpush1.bf16.msra.mxu0 0
  %12718 = vmatprep.subr.bf16.mxu0 0
  %12719 = vmatpush1.bf16.msra.mxu0 0
  %12720 = vmatprep.subr.bf16.mxu0 0
  %12721 = vmatpush1.bf16.msra.mxu0 0
  %12722 = vmatprep.subr.bf16.mxu0 0
  %12723 = vmatpush1.bf16.msra.mxu0 0
  %12724 = vmatprep.mubr.bf16.mxu0 %v12567
  %12725 = vmatmul.mubr.bf16.gmra.mrb[0].mxu0 %v12001
  %v12726 = vpop.f32.mrb[0].mxu0
  %v12727 = vadd.f32 %v12686, %v12726
  %v12728 = vpop.f32.mrb[0].mxu0
  %v12729 = vadd.f32 %v12688, %v12728
  %v12730 = vpop.f32.mrb[0].mxu0
  %v12731 = vpop.f32.mrb[0].mxu0
  %12732 = vdwg.mxu0
  %v12733 = vadd.f32 %v11871, %v12645
  %v12734 = vadd.f32 %v11872, %v12647
  %v12735 = vadd.f32 %v11873, %v12727
  %v12736 = vadd.f32 %v11874, %v12729
  %v12737 = vld [vmem:[%s5] sm:$0xf]
  %v12739 = vlaneseq
  %v12740 = vshrl.u32 %v12739, 7
  %v12741 = vsub.s32 0, %v12740
  %v12742 = vrot.slane %v12737, %v12741
  %v12743 = vlaneseq
  %v12744 = vshrl.u32 %v12743, 7
  %v12745 = vsub.s32 1, %v12744
  %v12746 = vrot.slane %v12737, %v12745
  %v12747 = vlaneseq
  %v12748 = vshrl.u32 %v12747, 7
  %v12749 = vsub.s32 2, %v12748
  %v12750 = vrot.slane %v12737, %v12749
  %v12751 = vlaneseq
  %v12752 = vshrl.u32 %v12751, 7
  %v12753 = vsub.s32 3, %v12752
  %v12754 = vrot.slane %v12737, %v12753
  %v12759 = vadd.f32 %v12733, %v12742
  %v12760 = vadd.f32 %v12734, %v12746
  %v12761 = vadd.f32 %v12735, %v12750
  %v12762 = vadd.f32 %v12736, %v12754
  %v12763 = vsel %vm573, %v12759, 0.0
  %v12764 = vrot.slane %v12763, 4
  %v12765 = vadd.f32 %v12763, %v12764
  %v12766 = vrot.slane %v12765, 2
  %v12767 = vadd.f32 %v12765, %v12766
  %v12768 = vrot.slane %v12767, 1
  %v12769 = vadd.f32 %v12767, %v12768
  %v12770 = vsel %vm573, %v12760, 0.0
  %v12771 = vrot.slane %v12770, 4
  %v12772 = vadd.f32 %v12770, %v12771
  %v12773 = vrot.slane %v12772, 2
  %v12774 = vadd.f32 %v12772, %v12773
  %v12775 = vrot.slane %v12774, 1
  %v12776 = vadd.f32 %v12774, %v12775
  %v12777 = vsel %vm573, %v12761, 0.0
  %v12778 = vrot.slane %v12777, 4
  %v12779 = vadd.f32 %v12777, %v12778
  %v12780 = vrot.slane %v12779, 2
  %v12781 = vadd.f32 %v12779, %v12780
  %v12782 = vrot.slane %v12781, 1
  %v12783 = vadd.f32 %v12781, %v12782
  %v12784 = vsel %vm573, %v12762, 0.0
  %v12785 = vrot.slane %v12784, 4
  %v12786 = vadd.f32 %v12784, %v12785
  %v12787 = vrot.slane %v12786, 2
  %v12788 = vadd.f32 %v12786, %v12787
  %v12789 = vrot.slane %v12788, 1
  %v12790 = vadd.f32 %v12788, %v12789
  %v12791 = vrcp.pop 2.0
  %v12792 = vmul.f32 %v12769, %v12791
  %v12793 = vmul.f32 %v12776, %v12791
  %v12794 = vmul.f32 %v12783, %v12791
  %v12795 = vmul.f32 %v12790, %v12791
  %v12796 = vmul.f32 %v12759, %v12759
  %v12797 = vmul.f32 %v12760, %v12760
  %v12798 = vmul.f32 %v12761, %v12761
  %v12799 = vmul.f32 %v12762, %v12762
  %v12800 = vsel %vm573, %v12796, 0.0
  %v12801 = vrot.slane %v12800, 4
  %v12802 = vadd.f32 %v12800, %v12801
  %v12803 = vrot.slane %v12802, 2
  %v12804 = vadd.f32 %v12802, %v12803
  %v12805 = vrot.slane %v12804, 1
  %v12806 = vadd.f32 %v12804, %v12805
  %v12807 = vsel %vm573, %v12797, 0.0
  %v12808 = vrot.slane %v12807, 4
  %v12809 = vadd.f32 %v12807, %v12808
  %v12810 = vrot.slane %v12809, 2
  %v12811 = vadd.f32 %v12809, %v12810
  %v12812 = vrot.slane %v12811, 1
  %v12813 = vadd.f32 %v12811, %v12812
  %v12814 = vsel %vm573, %v12798, 0.0
  %v12815 = vrot.slane %v12814, 4
  %v12816 = vadd.f32 %v12814, %v12815
  %v12817 = vrot.slane %v12816, 2
  %v12818 = vadd.f32 %v12816, %v12817
  %v12819 = vrot.slane %v12818, 1
  %v12820 = vadd.f32 %v12818, %v12819
  %v12821 = vsel %vm573, %v12799, 0.0
  %v12822 = vrot.slane %v12821, 4
  %v12823 = vadd.f32 %v12821, %v12822
  %v12824 = vrot.slane %v12823, 2
  %v12825 = vadd.f32 %v12823, %v12824
  %v12826 = vrot.slane %v12825, 1
  %v12827 = vadd.f32 %v12825, %v12826
  %v12828 = vmul.f32 %v12806, %v12791
  %v12829 = vmul.f32 %v12813, %v12791
  %v12830 = vmul.f32 %v12820, %v12791
  %v12831 = vmul.f32 %v12827, %v12791
  %v12832 = vmul.f32 %v12792, %v12792
  %v12833 = vmul.f32 %v12793, %v12793
  %v12834 = vmul.f32 %v12794, %v12794
  %v12835 = vmul.f32 %v12795, %v12795
  %v12836 = vsub.f32 %v12828, %v12832
  %v12837 = vsub.f32 %v12829, %v12833
  %v12838 = vsub.f32 %v12830, %v12834
  %v12839 = vsub.f32 %v12831, %v12835
  %v12840 = vld [vmem:[%s8] sm:$0xf]
  %v12841 = vsub.f32 %v12759, %v12792
  %v12842 = vsub.f32 %v12760, %v12793
  %v12843 = vsub.f32 %v12761, %v12794
  %v12844 = vsub.f32 %v12762, %v12795
  %v12846 = vlaneseq
  %v12847 = vshrl.u32 %v12846, 7
  %v12848 = vsub.s32 0, %v12847
  %v12849 = vrot.slane %v12840, %v12848
  %v12850 = vlaneseq
  %v12851 = vshrl.u32 %v12850, 7
  %v12852 = vsub.s32 1, %v12851
  %v12853 = vrot.slane %v12840, %v12852
  %v12854 = vlaneseq
  %v12855 = vshrl.u32 %v12854, 7
  %v12856 = vsub.s32 2, %v12855
  %v12857 = vrot.slane %v12840, %v12856
  %v12858 = vlaneseq
  %v12859 = vshrl.u32 %v12858, 7
  %v12860 = vsub.s32 3, %v12859
  %v12861 = vrot.slane %v12840, %v12860
  %v12866 = vmul.f32 %v12849, %v12841
  %v12867 = vmul.f32 %v12853, %v12842
  %v12868 = vmul.f32 %v12857, %v12843
  %v12869 = vmul.f32 %v12861, %v12844
  %v12870 = vadd.f32 %v12836, 1e-05
  %v12871 = vadd.f32 %v12837, 1e-05
  %v12872 = vadd.f32 %v12838, 1e-05
  %v12873 = vadd.f32 %v12839, 1e-05
  %v12874 = vrsqrt.pop %v12870
  %v12875 = vrsqrt.pop %v12871
  %v12876 = vrsqrt.pop %v12872
  %v12877 = vrsqrt.pop %v12873
  %v12878 = vmul.f32 %v12866, %v12874
  %v12879 = vmul.f32 %v12867, %v12875
  %v12880 = vmul.f32 %v12868, %v12876
  %v12881 = vmul.f32 %v12869, %v12877
  %v12882 = vld [vmem:[%s9] sm:$0xf]
  %v12884 = vlaneseq
  %v12885 = vshrl.u32 %v12884, 7
  %v12886 = vsub.s32 0, %v12885
  %v12887 = vrot.slane %v12882, %v12886
  %v12888 = vlaneseq
  %v12889 = vshrl.u32 %v12888, 7
  %v12890 = vsub.s32 1, %v12889
  %v12891 = vrot.slane %v12882, %v12890
  %v12892 = vlaneseq
  %v12893 = vshrl.u32 %v12892, 7
  %v12894 = vsub.s32 2, %v12893
  %v12895 = vrot.slane %v12882, %v12894
  %v12896 = vlaneseq
  %v12897 = vshrl.u32 %v12896, 7
  %v12898 = vsub.s32 3, %v12897
  %v12899 = vrot.slane %v12882, %v12898
  %v12904 = vadd.f32 %v12878, %v12887
  %v12905 = vadd.f32 %v12879, %v12891
  %v12906 = vadd.f32 %v12880, %v12895
  %v12907 = vadd.f32 %v12881, %v12899
  %vm12908 = vcmp.gt.f32.partialorder %v12904, 0.0
  %vm12909 = vcmp.gt.f32.partialorder %v12905, 0.0
  %vm12910 = vcmp.gt.f32.partialorder %v12906, 0.0
  %vm12911 = vcmp.gt.f32.partialorder %v12907, 0.0
  %v12912 = vmul.f32 %v12904, 0.2
  %v12913 = vmul.f32 %v12905, 0.2
  %v12914 = vmul.f32 %v12906, 0.2
  %v12915 = vmul.f32 %v12907, 0.2
  %v12916 = vsel %vm12908, %v12904, %v12912
  %v12917 = vsel %vm12909, %v12905, %v12913
  %v12918 = vsel %vm12910, %v12906, %v12914
  %v12919 = vsel %vm12911, %v12907, %v12915
  %v12920 = vld [vmem:[%s10] sm:$0xf]
  %v12922 = vlaneseq
  %v12923 = vshrl.u32 %v12922, 7
  %v12924 = vsub.s32 0, %v12923
  %v12925 = vrot.slane %v12920, %v12924
  %v12926 = vlaneseq
  %v12927 = vshrl.u32 %v12926, 7
  %v12928 = vsub.s32 1, %v12927
  %v12929 = vrot.slane %v12920, %v12928
  %v12930 = vlaneseq
  %v12931 = vshrl.u32 %v12930, 7
  %v12932 = vsub.s32 2, %v12931
  %v12933 = vrot.slane %v12920, %v12932
  %v12934 = vlaneseq
  %v12935 = vshrl.u32 %v12934, 7
  %v12936 = vsub.s32 3, %v12935
  %v12937 = vrot.slane %v12920, %v12936
  %v12942 = vmul.f32 %v12916, %v12925
  %v12943 = vmul.f32 %v12917, %v12929
  %v12944 = vmul.f32 %v12918, %v12933
  %v12945 = vmul.f32 %v12919, %v12937
  %v12946 = vsel %vm573, %v12942, 0.0
  %v12947 = vsel %vm573, %v12943, 0.0
  %v12948 = vadd.f32 %v12946, %v12947
  %v12949 = vsel %vm573, %v12944, 0.0
  %v12950 = vadd.f32 %v12948, %v12949
  %v12951 = vsel %vm573, %v12945, 0.0
  %v12952 = vadd.f32 %v12950, %v12951
  %12953 = vadd.xlane.f32.xlu0 %v12952
  %v12954 = vpop.xlane.xlu0 %12953
  %v12955 = vld [vmem:[#allocation5] sm:$0x1]
  %v12957 = vlaneseq
  %v12958 = vshrl.u32 %v12957, 7
  %v12959 = vsub.s32 0, %v12958
  %v12960 = vrot.slane %v12955, %v12959
  %v12962 = vadd.f32 %v12954, %v12960
  %vm12963 = vcmask 1024
  %12964 = vst.msk [vmem:[%s12] sm:$0x3] %vm12963, %v12962
  // Predicated region
  $region50: #{discriminator_forward.1} parent=0 // pred_check
    _
  $region51: #{discriminator_forward.1} parent=0 // pred_check_branch
    %12966 = sbr.rel (0) target = $region53
  $region52: #{discriminator_forward.1} parent=0 // pred_region
    _
  $region53: #{discriminator_forward.1} parent=0 // pred_fallthru
    _
  // Predicated region
  $region54: #{discriminator_forward.1} parent=0 // pred_check
    _
  $region55: #{discriminator_forward.1} parent=0 // pred_check_branch
    %12968 = sbr.rel (0) target = $region57
  $region56: #{discriminator_forward.1} parent=0 // pred_region
    _
  $region57: #{discriminator_forward.1} parent=0 // pred_fallthru
    _

</llo_original>
